<compile_context>
chip_gen: v5e
topology: v5e:2x2
jax: 0.10.0
libtpu: 0.0.40
codegen_flags: <defaults>
</compile_context>

<pallas_src>
import functools
import math

import jax
import jax.numpy as jnp
from jax.experimental import pallas as pl
from jax.experimental.pallas import tpu as pltpu

_NEG_SLOPE = 0.01  # nn.LeakyReLU() default negative_slope


def _leaky(x):
    # leaky_relu(x) == max(x, slope * x) for 0 < slope < 1
    return jnp.maximum(x, _NEG_SLOPE * x)


def _gconv_net_kernel(s_oh_ref, o_oh_ref, s_ohT_ref, o_ohT_ref, invc_ref,
                      obj_in_ref, pred_in_ref,
                      w1a_so_ref, w1a_p_ref, b1a_ref,
                      w1b_ref, b1b_ref,
                      w2a_ref, b2a_ref, w2b_ref, b2b_ref,
                      obj_out_ref, pred_out_ref,
                      *, num_layers, hidden_dim, pred_dim, transform_residual):
    f32, bf16 = jnp.float32, jnp.bfloat16
    H, Dp = hidden_dim, pred_dim

    # Graph-structure operands: loaded once, reused by every layer.
    s_oh = s_oh_ref[...]        # (Tg, Og) bf16 one-hot (subject gather)
    o_oh = o_oh_ref[...]        # (Tg, Og) bf16 one-hot (object gather)
    s_ohT = s_ohT_ref[...]      # (Og, Tg) bf16 (subject scatter_add)
    o_ohT = o_ohT_ref[...]      # (Og, Tg) bf16 (object scatter_add)
    inv_counts = invc_ref[...]  # (Og, 1) f32 = 1 / clamp(counts, 1)

    obj = obj_in_ref[...]       # (Og, D)  f32
    pred = pred_in_ref[...]     # (Tg, Dp) f32

    # Statically unrolled layer loop; ref[l] selects that layer's weights in VMEM.
    for l in range(num_layers):
        obj_bf = obj.astype(bf16)
        pred_bf = pred.astype(bf16)

        # --- net1 Linear(3D, H), concat-free: project in obj domain, then gather ---
        obj_proj = jnp.dot(obj_bf, w1a_so_ref[l], preferred_element_type=f32)  # (Og, 2H)
        obj_ps = obj_proj[:, :H].astype(bf16)        # subject-path projection
        obj_po = obj_proj[:, H:].astype(bf16)        # object-path projection
        s_proj = jnp.dot(s_oh, obj_ps, preferred_element_type=f32)             # (Tg, H)
        o_proj = jnp.dot(o_oh, obj_po, preferred_element_type=f32)             # (Tg, H)
        p_proj = jnp.dot(pred_bf, w1a_p_ref[l], preferred_element_type=f32)    # (Tg, H)

        h1 = _leaky(s_proj + p_proj + o_proj + b1a_ref[l])
        h1_bf = h1.astype(bf16)

        # --- net1 Linear(H, 2H+Dp): single fused matmul, 128-aligned f32 slices ---
        new_t = jnp.dot(h1_bf, w1b_ref[l], preferred_element_type=f32) + b1b_ref[l]
        new_s = new_t[:, :H]
        new_p = _leaky(new_t[:, H:H + Dp])
        new_o = new_t[:, H + Dp:]

        # --- scatter_add pooling via transposed one-hots, 'avg' via f32 1/n -------
        pooled = (jnp.dot(s_ohT, new_s.astype(bf16), preferred_element_type=f32)
                  + jnp.dot(o_ohT, new_o.astype(bf16), preferred_element_type=f32))
        pooled = pooled * inv_counts

        # --- net2: LeakyReLU -> Linear(H,H) -> LeakyReLU -> Linear(H,D) -----------
        x = _leaky(pooled)
        x = _leaky(jnp.dot(x.astype(bf16), w2a_ref[l],
                           preferred_element_type=f32) + b2a_ref[l])
        new_obj = jnp.dot(x.astype(bf16), w2b_ref[l],
                          preferred_element_type=f32) + b2b_ref[l]

        if transform_residual:
            new_obj = new_obj + obj
            new_p = new_p + pred

        obj, pred = new_obj, new_p

    obj_out_ref[...] = obj
    pred_out_ref[...] = pred


def graph_triple_conv_net_batched(obj_vecs, pred_vecs, edges, params,
                                  transform_residual=False):
    """Fused GraphTripleConvNet over a batch of B independent graphs.

    obj_vecs: (B, Og, D), pred_vecs: (B, Tg, Dp), edges: (B, Tg, 2) with per-graph
    local object indices.  Equivalent to the flat module forward on the concatenated
    batch (block-diagonal gather/scatter).
    """
    B, Og, D = obj_vecs.shape
    _, Tg, Dp = pred_vecs.shape
    L = len(params)
    H = params[0]['w1a'].shape[1]
    Do = params[0]['w2b'].shape[1]
    # Module config (input_dim_pred=None, output_dim=None) implies Dp == D == Do.
    assert Dp == D, "w1a/w1b column splits assume pred dim == obj dim"
    assert params[0]['w1a'].shape[0] == 2 * D + Dp
    assert params[0]['w1b'].shape[1] == 2 * H + Dp

    obj_vecs = obj_vecs.astype(jnp.float32)
    pred_vecs = pred_vecs.astype(jnp.float32)
    s_idx = edges[..., 0].astype(jnp.int32)   # (B, Tg)
    o_idx = edges[..., 1].astype(jnp.int32)   # (B, Tg)

    # Edge-only quantities, computed once and reused by every layer.
    obj_ids = jnp.arange(Og, dtype=jnp.int32)
    s_oh = (s_idx[:, :, None] == obj_ids[None, None, :]).astype(jnp.bfloat16)   # (B,Tg,Og)
    o_oh = (o_idx[:, :, None] == obj_ids[None, None, :]).astype(jnp.bfloat16)   # (B,Tg,Og)
    s_ohT = (obj_ids[None, :, None] == s_idx[:, None, :]).astype(jnp.bfloat16)  # (B,Og,Tg)
    o_ohT = (obj_ids[None, :, None] == o_idx[:, None, :]).astype(jnp.bfloat16)  # (B,Og,Tg)
    counts = (s_oh.astype(jnp.float32).sum(axis=1)
              + o_oh.astype(jnp.float32).sum(axis=1))                           # (B, Og)
    inv_counts = (1.0 / jnp.maximum(counts, 1.0))[..., None]                    # (B, Og, 1)

    # Stack per-layer weights along a leading L axis (all layers stay VMEM-resident).
    stack = lambda name: jnp.stack([p[name] for p in params], axis=0)
    w1a, b1a = stack('w1a'), stack('b1a')      # (L, 3D, H), (L, 1, H)
    w1b, b1b = stack('w1b'), stack('b1b')      # (L, H, 2H+Dp), (L, 1, 2H+Dp)
    w2a, b2a = stack('w2a'), stack('b2a')      # (L, H, H), (L, 1, H)
    w2b, b2b = stack('w2b'), stack('b2b')      # (L, H, Do), (L, 1, Do)

    bf = jnp.bfloat16
    # Fuse the subject/object blocks of net1's first Linear into one (D, 2H) weight.
    w1a_so = jnp.concatenate([w1a[:, :D, :], w1a[:, D + Dp:, :]], axis=-1).astype(bf)
    w1a_p = w1a[:, D:D + Dp, :].astype(bf)
    w1b_bf = w1b.astype(bf)                    # fused (H, 2H+Dp) second Linear
    w2a_bf = w2a.astype(bf)
    w2b_bf = w2b.astype(bf)

    def batch_spec(shape):   # one graph per grid step; leading batch dim squeezed
        nd = len(shape)
        return pl.BlockSpec((None,) + shape, lambda b, nd=nd: (b,) + (0,) * nd)

    def const_spec(shape):   # same whole-array block at every grid step (weights)
        nd = len(shape)
        return pl.BlockSpec(shape, lambda b, nd=nd: (0,) * nd)

    in_specs = [
        batch_spec((Tg, Og)), batch_spec((Tg, Og)),
        batch_spec((Og, Tg)), batch_spec((Og, Tg)),
        batch_spec((Og, 1)),
        batch_spec((Og, D)), batch_spec((Tg, Dp)),
        const_spec((L, D, 2 * H)), const_spec((L, Dp, H)), const_spec((L, 1, H)),
        const_spec((L, H, 2 * H + Dp)), const_spec((L, 1, 2 * H + Dp)),
        const_spec((L, H, H)), const_spec((L, 1, H)),
        const_spec((L, H, Do)), const_spec((L, 1, Do)),
    ]
    out_specs = (batch_spec((Og, Do)), batch_spec((Tg, Dp)))

    # Reuse the obj/pred HBM buffers for the outputs (shapes/dtypes match).
    io_aliases = {6: 1}
    if Do == D:
        io_aliases[5] = 0

    kernel = functools.partial(_gconv_net_kernel,
                               num_layers=L, hidden_dim=H, pred_dim=Dp,
                               transform_residual=transform_residual)

    new_obj, new_pred = pl.pallas_call(
        kernel,
        grid=(B,),
        in_specs=in_specs,
        out_specs=out_specs,
        out_shape=(jax.ShapeDtypeStruct((B, Og, Do), jnp.float32),
                   jax.ShapeDtypeStruct((B, Tg, Dp), jnp.float32)),
        input_output_aliases=io_aliases,
        compiler_params=pltpu.CompilerParams(
            dimension_semantics=("parallel",)),   # graphs are independent -> 2 TCs on v7x
    )(s_oh, o_oh, s_ohT, o_ohT, inv_counts,
      obj_vecs, pred_vecs,
      w1a_so, w1a_p, b1a,
      w1b_bf, b1b,
      w2a_bf, b2a, w2b_bf, b2b)
    return new_obj, new_pred


def graph_triple_conv_net(obj_vecs, pred_vecs, edges, params,
                          transform_residual=False):
    """Module-equivalent flat forward: obj_vecs (O, D), pred_vecs (T, Dp), edges (T, 2)."""
    new_obj, new_pred = graph_triple_conv_net_batched(
        obj_vecs[None], pred_vecs[None], edges[None], params,
        transform_residual=transform_residual)
    return new_obj[0], new_pred[0]


# ---------------------------------------------------------------------------
# Param init matching the PyTorch module (kaiming_normal_ weights, default bias)
# ---------------------------------------------------------------------------
def _kaiming_linear(key, fan_in, fan_out):
    wkey, bkey = jax.random.split(key)
    std = math.sqrt(2.0 / fan_in)                       # kaiming_normal_ (fan_in, relu gain)
    w = jax.random.normal(wkey, (fan_in, fan_out), jnp.float32) * std
    bound = 1.0 / math.sqrt(fan_in)                     # default nn.Linear bias init
    b = jax.random.uniform(bkey, (1, fan_out), jnp.float32, -bound, bound)
    return w, b


def init_gconv_net_params(key, input_dim, hidden_dim, num_layers):
    D, H = input_dim, hidden_dim
    params = []
    for _ in range(num_layers):
        key, k1, k2, k3, k4 = jax.random.split(key, 5)
        w1a, b1a = _kaiming_linear(k1, 3 * D, H)          # net1.Linear(3D, H)
        w1b, b1b = _kaiming_linear(k2, H, 2 * H + D)      # net1.Linear(H, 2H + Dout_pred)
        w2a, b2a = _kaiming_linear(k3, H, H)              # net2.Linear(H, H)
        w2b, b2b = _kaiming_linear(k4, H, D)              # net2.Linear(H, Dout)
        params.append(dict(w1a=w1a, b1a=b1a, w1b=w1b, b1b=b1b,
                           w2a=w2a, b2a=b2a, w2b=w2b, b2b=b2b))
    return params


# Pure-JAX (fp32) reference of the same flat forward, for a loose sanity check.
def _reference(obj_vecs, pred_vecs, edges, params):
    H = params[0]['w1a'].shape[1]
    D = obj_vecs.shape[1]
    O = obj_vecs.shape[0]
    s_idx = edges[:, 0]
    o_idx = edges[:, 1]
    for p in params:
        cur_t = jnp.concatenate([obj_vecs[s_idx], pred_vecs, obj_vecs[o_idx]], axis=1)
        h1 = _leaky(cur_t @ p['w1a'] + p['b1a'])
        new_t = h1 @ p['w1b'] + p['b1b']
        new_s = new_t[:, :H]
        new_p = _leaky(new_t[:, H:H + D])
        new_o = new_t[:, H + D:]
        pooled = jnp.zeros((O, H), jnp.float32).at[s_idx].add(new_s).at[o_idx].add(new_o)
        counts = jnp.zeros((O,), jnp.float32).at[s_idx].add(1.0).at[o_idx].add(1.0)
        pooled = pooled / jnp.maximum(counts, 1.0)[:, None]
        x = _leaky(pooled)
        x = _leaky(x @ p['w2a'] + p['b2a'])
        obj_vecs = x @ p['w2b'] + p['b2b']
        pred_vecs = new_p
    return obj_vecs, pred_vecs


if __name__ == "__main__":
    key = jax.random.PRNGKey(0)
    B = 2                      # graphs per batch -> parallel grid axis (2 TCs on v7x)
    Og, Tg = 128, 256          # objects / triples per graph (MXU-row friendly)
    D, H = 128, 128            # input_dim, hidden_dim (lane-aligned)
    num_layers = 3

    k_obj, k_pred, k_edge, k_param = jax.random.split(key, 4)
    obj_vecs = jax.random.normal(k_obj, (B, Og, D), jnp.float32)
    pred_vecs = jax.random.normal(k_pred, (B, Tg, D), jnp.float32)
    edges = jax.random.randint(k_edge, (B, Tg, 2), 0, Og, jnp.int32)
    params = init_gconv_net_params(k_param, D, H, num_layers)

    new_obj, new_pred = graph_triple_conv_net_batched(obj_vecs, pred_vecs, edges, params)
    jax.block_until_ready((new_obj, new_pred))

    assert new_obj.shape == (B, Og, D) and new_pred.shape == (B, Tg, D)
    assert new_obj.dtype == jnp.float32 and new_pred.dtype == jnp.float32
    assert bool(jnp.all(jnp.isfinite(new_obj))) and bool(jnp.all(jnp.isfinite(new_pred)))

    # The batched (block-diagonal) kernel must match the flat module forward on the
    # concatenated batch (loose tolerance: bf16 MXU operands with f32 accumulation).
    flat_obj = obj_vecs.reshape(B * Og, D)
    flat_pred = pred_vecs.reshape(B * Tg, D)
    flat_edges = (edges + (jnp.arange(B, dtype=jnp.int32) * Og)[:, None, None]
                  ).reshape(B * Tg, 2)
    ref_obj, ref_pred = _reference(flat_obj, flat_pred, flat_edges, params)
    ref_obj_b = ref_obj.reshape(B, Og, D)
    ref_pred_b = ref_pred.reshape(B, Tg, D)

    def _close(a, b):
        tol = 0.2 + 0.06 * jnp.abs(b)
        return bool(jnp.all(jnp.abs(a - b) <= tol))

    assert _close(new_obj, ref_obj_b) and _close(new_pred, ref_pred_b)

    # Also exercise the flat, module-signature entry point on the concatenated batch.
    flat_new_obj, flat_new_pred = graph_triple_conv_net(flat_obj, flat_pred,
                                                        flat_edges, params)
    jax.block_until_ready((flat_new_obj, flat_new_pred))
    assert _close(flat_new_obj, ref_obj) and _close(flat_new_pred, ref_pred)

    print("KERNEL_OK")
</pallas_src>

<mosaic_0001>
module attributes {stable_mosaic.version = 11 : i64} {
  func.func @_gconv_net_kernel(%arg0: i32, %arg1: memref<1x256x128xbf16, #tpu.memory_space<vmem>>, %arg2: memref<1x256x128xbf16, #tpu.memory_space<vmem>>, %arg3: memref<1x128x256xbf16, #tpu.memory_space<vmem>>, %arg4: memref<1x128x256xbf16, #tpu.memory_space<vmem>>, %arg5: memref<1x128x1xf32, #tpu.memory_space<vmem>>, %arg6: memref<1x128x128xf32, #tpu.memory_space<vmem>>, %arg7: memref<1x256x128xf32, #tpu.memory_space<vmem>>, %arg8: memref<3x128x256xbf16, #tpu.memory_space<vmem>>, %arg9: memref<3x128x128xbf16, #tpu.memory_space<vmem>>, %arg10: memref<3x1x128xf32, #tpu.memory_space<vmem>>, %arg11: memref<3x128x384xbf16, #tpu.memory_space<vmem>>, %arg12: memref<3x1x384xf32, #tpu.memory_space<vmem>>, %arg13: memref<3x128x128xbf16, #tpu.memory_space<vmem>>, %arg14: memref<3x1x128xf32, #tpu.memory_space<vmem>>, %arg15: memref<3x128x128xbf16, #tpu.memory_space<vmem>>, %arg16: memref<3x1x128xf32, #tpu.memory_space<vmem>>, %arg17: memref<1x128x128xf32, #tpu.memory_space<vmem>>, %arg18: memref<1x256x128xf32, #tpu.memory_space<vmem>>) attributes {dimension_semantics = [#tpu.dimension_semantics<parallel>], iteration_bounds = array<i64: 2>, scalar_prefetch = 0 : i64, scratch_operands = 0 : i64, tpu.core_type = #tpu.core_type<tc>, window_params = [{transform_indices = @transform_0, window_bounds = array<i64: 1, 256, 128>}, {transform_indices = @transform_1, window_bounds = array<i64: 1, 256, 128>}, {transform_indices = @transform_2, window_bounds = array<i64: 1, 128, 256>}, {transform_indices = @transform_3, window_bounds = array<i64: 1, 128, 256>}, {transform_indices = @transform_4, window_bounds = array<i64: 1, 128, 1>}, {transform_indices = @transform_5, window_bounds = array<i64: 1, 128, 128>}, {transform_indices = @transform_6, window_bounds = array<i64: 1, 256, 128>}, {pipeline_mode = #tpu.pipeline_mode<synchronous>, transform_indices = @transform_7, window_bounds = array<i64: 3, 128, 256>}, {pipeline_mode = #tpu.pipeline_mode<synchronous>, transform_indices = @transform_8, window_bounds = array<i64: 3, 128, 128>}, {pipeline_mode = #tpu.pipeline_mode<synchronous>, transform_indices = @transform_9, window_bounds = array<i64: 3, 1, 128>}, {pipeline_mode = #tpu.pipeline_mode<synchronous>, transform_indices = @transform_10, window_bounds = array<i64: 3, 128, 384>}, {pipeline_mode = #tpu.pipeline_mode<synchronous>, transform_indices = @transform_11, window_bounds = array<i64: 3, 1, 384>}, {pipeline_mode = #tpu.pipeline_mode<synchronous>, transform_indices = @transform_12, window_bounds = array<i64: 3, 128, 128>}, {pipeline_mode = #tpu.pipeline_mode<synchronous>, transform_indices = @transform_13, window_bounds = array<i64: 3, 1, 128>}, {pipeline_mode = #tpu.pipeline_mode<synchronous>, transform_indices = @transform_14, window_bounds = array<i64: 3, 128, 128>}, {pipeline_mode = #tpu.pipeline_mode<synchronous>, transform_indices = @transform_15, window_bounds = array<i64: 3, 1, 128>}, {transform_indices = @transform_16, window_bounds = array<i64: 1, 128, 128>}, {transform_indices = @transform_17, window_bounds = array<i64: 1, 256, 128>}]} {
    %c0 = arith.constant 0 : index
    %c0_0 = arith.constant 0 : index
    %c0_1 = arith.constant 0 : index
    %0 = vector.load %arg1[%c0, %c0_0, %c0_1] : memref<1x256x128xbf16, #tpu.memory_space<vmem>>, vector<1x256x128xbf16>
    %1 = vector.shape_cast %0 : vector<1x256x128xbf16> to vector<256x128xbf16>
    %c0_2 = arith.constant 0 : index
    %c0_3 = arith.constant 0 : index
    %c0_4 = arith.constant 0 : index
    %2 = vector.load %arg2[%c0_2, %c0_3, %c0_4] : memref<1x256x128xbf16, #tpu.memory_space<vmem>>, vector<1x256x128xbf16>
    %3 = vector.shape_cast %2 : vector<1x256x128xbf16> to vector<256x128xbf16>
    %c0_5 = arith.constant 0 : index
    %c0_6 = arith.constant 0 : index
    %c0_7 = arith.constant 0 : index
    %4 = vector.load %arg3[%c0_5, %c0_6, %c0_7] : memref<1x128x256xbf16, #tpu.memory_space<vmem>>, vector<1x128x256xbf16>
    %5 = vector.shape_cast %4 : vector<1x128x256xbf16> to vector<128x256xbf16>
    %c0_8 = arith.constant 0 : index
    %c0_9 = arith.constant 0 : index
    %c0_10 = arith.constant 0 : index
    %6 = vector.load %arg4[%c0_8, %c0_9, %c0_10] : memref<1x128x256xbf16, #tpu.memory_space<vmem>>, vector<1x128x256xbf16>
    %7 = vector.shape_cast %6 : vector<1x128x256xbf16> to vector<128x256xbf16>
    %c0_11 = arith.constant 0 : index
    %c0_12 = arith.constant 0 : index
    %c0_13 = arith.constant 0 : index
    %8 = vector.load %arg5[%c0_11, %c0_12, %c0_13] : memref<1x128x1xf32, #tpu.memory_space<vmem>>, vector<1x128x1xf32>
    %9 = vector.shape_cast %8 : vector<1x128x1xf32> to vector<128x1xf32>
    %c0_14 = arith.constant 0 : index
    %c0_15 = arith.constant 0 : index
    %c0_16 = arith.constant 0 : index
    %10 = vector.load %arg6[%c0_14, %c0_15, %c0_16] : memref<1x128x128xf32, #tpu.memory_space<vmem>>, vector<1x128x128xf32>
    %11 = vector.shape_cast %10 : vector<1x128x128xf32> to vector<128x128xf32>
    %c0_17 = arith.constant 0 : index
    %c0_18 = arith.constant 0 : index
    %c0_19 = arith.constant 0 : index
    %12 = vector.load %arg7[%c0_17, %c0_18, %c0_19] : memref<1x256x128xf32, #tpu.memory_space<vmem>>, vector<1x256x128xf32>
    %13 = vector.shape_cast %12 : vector<1x256x128xf32> to vector<256x128xf32>
    %14 = arith.truncf %11 : vector<128x128xf32> to vector<128x128xbf16>
    %15 = arith.truncf %13 : vector<256x128xf32> to vector<256x128xbf16>
    %c0_20 = arith.constant 0 : index
    %c0_21 = arith.constant 0 : index
    %c0_22 = arith.constant 0 : index
    %16 = vector.load %arg8[%c0_20, %c0_21, %c0_22] : memref<3x128x256xbf16, #tpu.memory_space<vmem>>, vector<1x128x256xbf16>
    %17 = vector.shape_cast %16 : vector<1x128x256xbf16> to vector<128x256xbf16>
    %cst = arith.constant dense<0.000000e+00> : vector<128x256xf32>
    %18 = tpu.matmul %14, %17, %cst {dimension_numbers = #tpu.dot_dimension_numbers<[1], [0], [0], [1], [0, 0, 1, 1], [], []>} : vector<128x128xbf16>, vector<128x256xbf16>, vector<128x256xf32> -> vector<128x256xf32>
    %19 = vector.extract_strided_slice %18 {offsets = [0, 0], sizes = [128, 128], strides = [1, 1]} : vector<128x256xf32> to vector<128x128xf32>
    %20 = arith.truncf %19 : vector<128x128xf32> to vector<128x128xbf16>
    %21 = vector.extract_strided_slice %18 {offsets = [0, 128], sizes = [128, 128], strides = [1, 1]} : vector<128x256xf32> to vector<128x128xf32>
    %22 = arith.truncf %21 : vector<128x128xf32> to vector<128x128xbf16>
    %cst_23 = arith.constant dense<0.000000e+00> : vector<256x128xf32>
    %23 = tpu.matmul %1, %20, %cst_23 {dimension_numbers = #tpu.dot_dimension_numbers<[1], [0], [0], [1], [0, 0, 1, 1], [], []>} : vector<256x128xbf16>, vector<128x128xbf16>, vector<256x128xf32> -> vector<256x128xf32>
    %cst_24 = arith.constant dense<0.000000e+00> : vector<256x128xf32>
    %24 = tpu.matmul %3, %22, %cst_24 {dimension_numbers = #tpu.dot_dimension_numbers<[1], [0], [0], [1], [0, 0, 1, 1], [], []>} : vector<256x128xbf16>, vector<128x128xbf16>, vector<256x128xf32> -> vector<256x128xf32>
    %c0_25 = arith.constant 0 : index
    %c0_26 = arith.constant 0 : index
    %c0_27 = arith.constant 0 : index
    %25 = vector.load %arg9[%c0_25, %c0_26, %c0_27] : memref<3x128x128xbf16, #tpu.memory_space<vmem>>, vector<1x128x128xbf16>
    %26 = vector.shape_cast %25 : vector<1x128x128xbf16> to vector<128x128xbf16>
    %cst_28 = arith.constant dense<0.000000e+00> : vector<256x128xf32>
    %27 = tpu.matmul %15, %26, %cst_28 {dimension_numbers = #tpu.dot_dimension_numbers<[1], [0], [0], [1], [0, 0, 1, 1], [], []>} : vector<256x128xbf16>, vector<128x128xbf16>, vector<256x128xf32> -> vector<256x128xf32>
    %28 = arith.addf %23, %27 : vector<256x128xf32>
    %29 = arith.addf %28, %24 : vector<256x128xf32>
    %c0_29 = arith.constant 0 : index
    %c0_30 = arith.constant 0 : index
    %c0_31 = arith.constant 0 : index
    %30 = vector.load %arg10[%c0_29, %c0_30, %c0_31] : memref<3x1x128xf32, #tpu.memory_space<vmem>>, vector<1x1x128xf32>
    %31 = vector.shape_cast %30 : vector<1x1x128xf32> to vector<1x128xf32>
    %32 = vector.broadcast %31 : vector<1x128xf32> to vector<256x128xf32>
    %33 = arith.addf %29, %32 : vector<256x128xf32>
    %cst_32 = arith.constant 0.00999999977 : f32
    %34 = vector.broadcast %cst_32 : f32 to vector<256x128xf32>
    %35 = arith.mulf %34, %33 : vector<256x128xf32>
    %36 = arith.maximumf %33, %35 : vector<256x128xf32>
    %37 = arith.truncf %36 : vector<256x128xf32> to vector<256x128xbf16>
    %c0_33 = arith.constant 0 : index
    %c0_34 = arith.constant 0 : index
    %c0_35 = arith.constant 0 : index
    %38 = vector.load %arg11[%c0_33, %c0_34, %c0_35] : memref<3x128x384xbf16, #tpu.memory_space<vmem>>, vector<1x128x384xbf16>
    %39 = vector.shape_cast %38 : vector<1x128x384xbf16> to vector<128x384xbf16>
    %cst_36 = arith.constant dense<0.000000e+00> : vector<256x384xf32>
    %40 = tpu.matmul %37, %39, %cst_36 {dimension_numbers = #tpu.dot_dimension_numbers<[1], [0], [0], [1], [0, 0, 1, 1], [], []>} : vector<256x128xbf16>, vector<128x384xbf16>, vector<256x384xf32> -> vector<256x384xf32>
    %c0_37 = arith.constant 0 : index
    %c0_38 = arith.constant 0 : index
    %c0_39 = arith.constant 0 : index
    %41 = vector.load %arg12[%c0_37, %c0_38, %c0_39] : memref<3x1x384xf32, #tpu.memory_space<vmem>>, vector<1x1x384xf32>
    %42 = vector.shape_cast %41 : vector<1x1x384xf32> to vector<1x384xf32>
    %43 = vector.broadcast %42 : vector<1x384xf32> to vector<256x384xf32>
    %44 = arith.addf %40, %43 : vector<256x384xf32>
    %45 = vector.extract_strided_slice %44 {offsets = [0, 0], sizes = [256, 128], strides = [1, 1]} : vector<256x384xf32> to vector<256x128xf32>
    %46 = vector.extract_strided_slice %44 {offsets = [0, 128], sizes = [256, 128], strides = [1, 1]} : vector<256x384xf32> to vector<256x128xf32>
    %cst_40 = arith.constant 0.00999999977 : f32
    %47 = vector.broadcast %cst_40 : f32 to vector<256x128xf32>
    %48 = arith.mulf %47, %46 : vector<256x128xf32>
    %49 = arith.maximumf %46, %48 : vector<256x128xf32>
    %50 = vector.extract_strided_slice %44 {offsets = [0, 256], sizes = [256, 128], strides = [1, 1]} : vector<256x384xf32> to vector<256x128xf32>
    %51 = arith.truncf %45 : vector<256x128xf32> to vector<256x128xbf16>
    %cst_41 = arith.constant dense<0.000000e+00> : vector<128x128xf32>
    %52 = tpu.matmul %5, %51, %cst_41 {dimension_numbers = #tpu.dot_dimension_numbers<[1], [0], [0], [1], [0, 0, 1, 1], [], []>} : vector<128x256xbf16>, vector<256x128xbf16>, vector<128x128xf32> -> vector<128x128xf32>
    %53 = arith.truncf %50 : vector<256x128xf32> to vector<256x128xbf16>
    %cst_42 = arith.constant dense<0.000000e+00> : vector<128x128xf32>
    %54 = tpu.matmul %7, %53, %cst_42 {dimension_numbers = #tpu.dot_dimension_numbers<[1], [0], [0], [1], [0, 0, 1, 1], [], []>} : vector<128x256xbf16>, vector<256x128xbf16>, vector<128x128xf32> -> vector<128x128xf32>
    %55 = arith.addf %52, %54 : vector<128x128xf32>
    %56 = vector.broadcast %9 : vector<128x1xf32> to vector<128x128xf32>
    %57 = arith.mulf %55, %56 : vector<128x128xf32>
    %cst_43 = arith.constant 0.00999999977 : f32
    %58 = vector.broadcast %cst_43 : f32 to vector<128x128xf32>
    %59 = arith.mulf %58, %57 : vector<128x128xf32>
    %60 = arith.maximumf %57, %59 : vector<128x128xf32>
    %61 = arith.truncf %60 : vector<128x128xf32> to vector<128x128xbf16>
    %c0_44 = arith.constant 0 : index
    %c0_45 = arith.constant 0 : index
    %c0_46 = arith.constant 0 : index
    %62 = vector.load %arg13[%c0_44, %c0_45, %c0_46] : memref<3x128x128xbf16, #tpu.memory_space<vmem>>, vector<1x128x128xbf16>
    %63 = vector.shape_cast %62 : vector<1x128x128xbf16> to vector<128x128xbf16>
    %cst_47 = arith.constant dense<0.000000e+00> : vector<128x128xf32>
    %64 = tpu.matmul %61, %63, %cst_47 {dimension_numbers = #tpu.dot_dimension_numbers<[1], [0], [0], [1], [0, 0, 1, 1], [], []>} : vector<128x128xbf16>, vector<128x128xbf16>, vector<128x128xf32> -> vector<128x128xf32>
    %c0_48 = arith.constant 0 : index
    %c0_49 = arith.constant 0 : index
    %c0_50 = arith.constant 0 : index
    %65 = vector.load %arg14[%c0_48, %c0_49, %c0_50] : memref<3x1x128xf32, #tpu.memory_space<vmem>>, vector<1x1x128xf32>
    %66 = vector.shape_cast %65 : vector<1x1x128xf32> to vector<1x128xf32>
    %67 = vector.broadcast %66 : vector<1x128xf32> to vector<128x128xf32>
    %68 = arith.addf %64, %67 : vector<128x128xf32>
    %cst_51 = arith.constant 0.00999999977 : f32
    %69 = vector.broadcast %cst_51 : f32 to vector<128x128xf32>
    %70 = arith.mulf %69, %68 : vector<128x128xf32>
    %71 = arith.maximumf %68, %70 : vector<128x128xf32>
    %72 = arith.truncf %71 : vector<128x128xf32> to vector<128x128xbf16>
    %c0_52 = arith.constant 0 : index
    %c0_53 = arith.constant 0 : index
    %c0_54 = arith.constant 0 : index
    %73 = vector.load %arg15[%c0_52, %c0_53, %c0_54] : memref<3x128x128xbf16, #tpu.memory_space<vmem>>, vector<1x128x128xbf16>
    %74 = vector.shape_cast %73 : vector<1x128x128xbf16> to vector<128x128xbf16>
    %cst_55 = arith.constant dense<0.000000e+00> : vector<128x128xf32>
    %75 = tpu.matmul %72, %74, %cst_55 {dimension_numbers = #tpu.dot_dimension_numbers<[1], [0], [0], [1], [0, 0, 1, 1], [], []>} : vector<128x128xbf16>, vector<128x128xbf16>, vector<128x128xf32> -> vector<128x128xf32>
    %c0_56 = arith.constant 0 : index
    %c0_57 = arith.constant 0 : index
    %c0_58 = arith.constant 0 : index
    %76 = vector.load %arg16[%c0_56, %c0_57, %c0_58] : memref<3x1x128xf32, #tpu.memory_space<vmem>>, vector<1x1x128xf32>
    %77 = vector.shape_cast %76 : vector<1x1x128xf32> to vector<1x128xf32>
    %78 = vector.broadcast %77 : vector<1x128xf32> to vector<128x128xf32>
    %79 = arith.addf %75, %78 : vector<128x128xf32>
    %80 = arith.truncf %79 : vector<128x128xf32> to vector<128x128xbf16>
    %81 = arith.truncf %49 : vector<256x128xf32> to vector<256x128xbf16>
    %c1 = arith.constant 1 : index
    %c0_59 = arith.constant 0 : index
    %c0_60 = arith.constant 0 : index
    %82 = vector.load %arg8[%c1, %c0_59, %c0_60] : memref<3x128x256xbf16, #tpu.memory_space<vmem>>, vector<1x128x256xbf16>
    %83 = vector.shape_cast %82 : vector<1x128x256xbf16> to vector<128x256xbf16>
    %cst_61 = arith.constant dense<0.000000e+00> : vector<128x256xf32>
    %84 = tpu.matmul %80, %83, %cst_61 {dimension_numbers = #tpu.dot_dimension_numbers<[1], [0], [0], [1], [0, 0, 1, 1], [], []>} : vector<128x128xbf16>, vector<128x256xbf16>, vector<128x256xf32> -> vector<128x256xf32>
    %85 = vector.extract_strided_slice %84 {offsets = [0, 0], sizes = [128, 128], strides = [1, 1]} : vector<128x256xf32> to vector<128x128xf32>
    %86 = arith.truncf %85 : vector<128x128xf32> to vector<128x128xbf16>
    %87 = vector.extract_strided_slice %84 {offsets = [0, 128], sizes = [128, 128], strides = [1, 1]} : vector<128x256xf32> to vector<128x128xf32>
    %88 = arith.truncf %87 : vector<128x128xf32> to vector<128x128xbf16>
    %cst_62 = arith.constant dense<0.000000e+00> : vector<256x128xf32>
    %89 = tpu.matmul %1, %86, %cst_62 {dimension_numbers = #tpu.dot_dimension_numbers<[1], [0], [0], [1], [0, 0, 1, 1], [], []>} : vector<256x128xbf16>, vector<128x128xbf16>, vector<256x128xf32> -> vector<256x128xf32>
    %cst_63 = arith.constant dense<0.000000e+00> : vector<256x128xf32>
    %90 = tpu.matmul %3, %88, %cst_63 {dimension_numbers = #tpu.dot_dimension_numbers<[1], [0], [0], [1], [0, 0, 1, 1], [], []>} : vector<256x128xbf16>, vector<128x128xbf16>, vector<256x128xf32> -> vector<256x128xf32>
    %c1_64 = arith.constant 1 : index
    %c0_65 = arith.constant 0 : index
    %c0_66 = arith.constant 0 : index
    %91 = vector.load %arg9[%c1_64, %c0_65, %c0_66] : memref<3x128x128xbf16, #tpu.memory_space<vmem>>, vector<1x128x128xbf16>
    %92 = vector.shape_cast %91 : vector<1x128x128xbf16> to vector<128x128xbf16>
    %cst_67 = arith.constant dense<0.000000e+00> : vector<256x128xf32>
    %93 = tpu.matmul %81, %92, %cst_67 {dimension_numbers = #tpu.dot_dimension_numbers<[1], [0], [0], [1], [0, 0, 1, 1], [], []>} : vector<256x128xbf16>, vector<128x128xbf16>, vector<256x128xf32> -> vector<256x128xf32>
    %94 = arith.addf %89, %93 : vector<256x128xf32>
    %95 = arith.addf %94, %90 : vector<256x128xf32>
    %c1_68 = arith.constant 1 : index
    %c0_69 = arith.constant 0 : index
    %c0_70 = arith.constant 0 : index
    %96 = vector.load %arg10[%c1_68, %c0_69, %c0_70] : memref<3x1x128xf32, #tpu.memory_space<vmem>>, vector<1x1x128xf32>
    %97 = vector.shape_cast %96 : vector<1x1x128xf32> to vector<1x128xf32>
    %98 = vector.broadcast %97 : vector<1x128xf32> to vector<256x128xf32>
    %99 = arith.addf %95, %98 : vector<256x128xf32>
    %cst_71 = arith.constant 0.00999999977 : f32
    %100 = vector.broadcast %cst_71 : f32 to vector<256x128xf32>
    %101 = arith.mulf %100, %99 : vector<256x128xf32>
    %102 = arith.maximumf %99, %101 : vector<256x128xf32>
    %103 = arith.truncf %102 : vector<256x128xf32> to vector<256x128xbf16>
    %c1_72 = arith.constant 1 : index
    %c0_73 = arith.constant 0 : index
    %c0_74 = arith.constant 0 : index
    %104 = vector.load %arg11[%c1_72, %c0_73, %c0_74] : memref<3x128x384xbf16, #tpu.memory_space<vmem>>, vector<1x128x384xbf16>
    %105 = vector.shape_cast %104 : vector<1x128x384xbf16> to vector<128x384xbf16>
    %cst_75 = arith.constant dense<0.000000e+00> : vector<256x384xf32>
    %106 = tpu.matmul %103, %105, %cst_75 {dimension_numbers = #tpu.dot_dimension_numbers<[1], [0], [0], [1], [0, 0, 1, 1], [], []>} : vector<256x128xbf16>, vector<128x384xbf16>, vector<256x384xf32> -> vector<256x384xf32>
    %c1_76 = arith.constant 1 : index
    %c0_77 = arith.constant 0 : index
    %c0_78 = arith.constant 0 : index
    %107 = vector.load %arg12[%c1_76, %c0_77, %c0_78] : memref<3x1x384xf32, #tpu.memory_space<vmem>>, vector<1x1x384xf32>
    %108 = vector.shape_cast %107 : vector<1x1x384xf32> to vector<1x384xf32>
    %109 = vector.broadcast %108 : vector<1x384xf32> to vector<256x384xf32>
    %110 = arith.addf %106, %109 : vector<256x384xf32>
    %111 = vector.extract_strided_slice %110 {offsets = [0, 0], sizes = [256, 128], strides = [1, 1]} : vector<256x384xf32> to vector<256x128xf32>
    %112 = vector.extract_strided_slice %110 {offsets = [0, 128], sizes = [256, 128], strides = [1, 1]} : vector<256x384xf32> to vector<256x128xf32>
    %cst_79 = arith.constant 0.00999999977 : f32
    %113 = vector.broadcast %cst_79 : f32 to vector<256x128xf32>
    %114 = arith.mulf %113, %112 : vector<256x128xf32>
    %115 = arith.maximumf %112, %114 : vector<256x128xf32>
    %116 = vector.extract_strided_slice %110 {offsets = [0, 256], sizes = [256, 128], strides = [1, 1]} : vector<256x384xf32> to vector<256x128xf32>
    %117 = arith.truncf %111 : vector<256x128xf32> to vector<256x128xbf16>
    %cst_80 = arith.constant dense<0.000000e+00> : vector<128x128xf32>
    %118 = tpu.matmul %5, %117, %cst_80 {dimension_numbers = #tpu.dot_dimension_numbers<[1], [0], [0], [1], [0, 0, 1, 1], [], []>} : vector<128x256xbf16>, vector<256x128xbf16>, vector<128x128xf32> -> vector<128x128xf32>
    %119 = arith.truncf %116 : vector<256x128xf32> to vector<256x128xbf16>
    %cst_81 = arith.constant dense<0.000000e+00> : vector<128x128xf32>
    %120 = tpu.matmul %7, %119, %cst_81 {dimension_numbers = #tpu.dot_dimension_numbers<[1], [0], [0], [1], [0, 0, 1, 1], [], []>} : vector<128x256xbf16>, vector<256x128xbf16>, vector<128x128xf32> -> vector<128x128xf32>
    %121 = arith.addf %118, %120 : vector<128x128xf32>
    %122 = vector.broadcast %9 : vector<128x1xf32> to vector<128x128xf32>
    %123 = arith.mulf %121, %122 : vector<128x128xf32>
    %cst_82 = arith.constant 0.00999999977 : f32
    %124 = vector.broadcast %cst_82 : f32 to vector<128x128xf32>
    %125 = arith.mulf %124, %123 : vector<128x128xf32>
    %126 = arith.maximumf %123, %125 : vector<128x128xf32>
    %127 = arith.truncf %126 : vector<128x128xf32> to vector<128x128xbf16>
    %c1_83 = arith.constant 1 : index
    %c0_84 = arith.constant 0 : index
    %c0_85 = arith.constant 0 : index
    %128 = vector.load %arg13[%c1_83, %c0_84, %c0_85] : memref<3x128x128xbf16, #tpu.memory_space<vmem>>, vector<1x128x128xbf16>
    %129 = vector.shape_cast %128 : vector<1x128x128xbf16> to vector<128x128xbf16>
    %cst_86 = arith.constant dense<0.000000e+00> : vector<128x128xf32>
    %130 = tpu.matmul %127, %129, %cst_86 {dimension_numbers = #tpu.dot_dimension_numbers<[1], [0], [0], [1], [0, 0, 1, 1], [], []>} : vector<128x128xbf16>, vector<128x128xbf16>, vector<128x128xf32> -> vector<128x128xf32>
    %c1_87 = arith.constant 1 : index
    %c0_88 = arith.constant 0 : index
    %c0_89 = arith.constant 0 : index
    %131 = vector.load %arg14[%c1_87, %c0_88, %c0_89] : memref<3x1x128xf32, #tpu.memory_space<vmem>>, vector<1x1x128xf32>
    %132 = vector.shape_cast %131 : vector<1x1x128xf32> to vector<1x128xf32>
    %133 = vector.broadcast %132 : vector<1x128xf32> to vector<128x128xf32>
    %134 = arith.addf %130, %133 : vector<128x128xf32>
    %cst_90 = arith.constant 0.00999999977 : f32
    %135 = vector.broadcast %cst_90 : f32 to vector<128x128xf32>
    %136 = arith.mulf %135, %134 : vector<128x128xf32>
    %137 = arith.maximumf %134, %136 : vector<128x128xf32>
    %138 = arith.truncf %137 : vector<128x128xf32> to vector<128x128xbf16>
    %c1_91 = arith.constant 1 : index
    %c0_92 = arith.constant 0 : index
    %c0_93 = arith.constant 0 : index
    %139 = vector.load %arg15[%c1_91, %c0_92, %c0_93] : memref<3x128x128xbf16, #tpu.memory_space<vmem>>, vector<1x128x128xbf16>
    %140 = vector.shape_cast %139 : vector<1x128x128xbf16> to vector<128x128xbf16>
    %cst_94 = arith.constant dense<0.000000e+00> : vector<128x128xf32>
    %141 = tpu.matmul %138, %140, %cst_94 {dimension_numbers = #tpu.dot_dimension_numbers<[1], [0], [0], [1], [0, 0, 1, 1], [], []>} : vector<128x128xbf16>, vector<128x128xbf16>, vector<128x128xf32> -> vector<128x128xf32>
    %c1_95 = arith.constant 1 : index
    %c0_96 = arith.constant 0 : index
    %c0_97 = arith.constant 0 : index
    %142 = vector.load %arg16[%c1_95, %c0_96, %c0_97] : memref<3x1x128xf32, #tpu.memory_space<vmem>>, vector<1x1x128xf32>
    %143 = vector.shape_cast %142 : vector<1x1x128xf32> to vector<1x128xf32>
    %144 = vector.broadcast %143 : vector<1x128xf32> to vector<128x128xf32>
    %145 = arith.addf %141, %144 : vector<128x128xf32>
    %146 = arith.truncf %145 : vector<128x128xf32> to vector<128x128xbf16>
    %147 = arith.truncf %115 : vector<256x128xf32> to vector<256x128xbf16>
    %c2 = arith.constant 2 : index
    %c0_98 = arith.constant 0 : index
    %c0_99 = arith.constant 0 : index
    %148 = vector.load %arg8[%c2, %c0_98, %c0_99] : memref<3x128x256xbf16, #tpu.memory_space<vmem>>, vector<1x128x256xbf16>
    %149 = vector.shape_cast %148 : vector<1x128x256xbf16> to vector<128x256xbf16>
    %cst_100 = arith.constant dense<0.000000e+00> : vector<128x256xf32>
    %150 = tpu.matmul %146, %149, %cst_100 {dimension_numbers = #tpu.dot_dimension_numbers<[1], [0], [0], [1], [0, 0, 1, 1], [], []>} : vector<128x128xbf16>, vector<128x256xbf16>, vector<128x256xf32> -> vector<128x256xf32>
    %151 = vector.extract_strided_slice %150 {offsets = [0, 0], sizes = [128, 128], strides = [1, 1]} : vector<128x256xf32> to vector<128x128xf32>
    %152 = arith.truncf %151 : vector<128x128xf32> to vector<128x128xbf16>
    %153 = vector.extract_strided_slice %150 {offsets = [0, 128], sizes = [128, 128], strides = [1, 1]} : vector<128x256xf32> to vector<128x128xf32>
    %154 = arith.truncf %153 : vector<128x128xf32> to vector<128x128xbf16>
    %cst_101 = arith.constant dense<0.000000e+00> : vector<256x128xf32>
    %155 = tpu.matmul %1, %152, %cst_101 {dimension_numbers = #tpu.dot_dimension_numbers<[1], [0], [0], [1], [0, 0, 1, 1], [], []>} : vector<256x128xbf16>, vector<128x128xbf16>, vector<256x128xf32> -> vector<256x128xf32>
    %cst_102 = arith.constant dense<0.000000e+00> : vector<256x128xf32>
    %156 = tpu.matmul %3, %154, %cst_102 {dimension_numbers = #tpu.dot_dimension_numbers<[1], [0], [0], [1], [0, 0, 1, 1], [], []>} : vector<256x128xbf16>, vector<128x128xbf16>, vector<256x128xf32> -> vector<256x128xf32>
    %c2_103 = arith.constant 2 : index
    %c0_104 = arith.constant 0 : index
    %c0_105 = arith.constant 0 : index
    %157 = vector.load %arg9[%c2_103, %c0_104, %c0_105] : memref<3x128x128xbf16, #tpu.memory_space<vmem>>, vector<1x128x128xbf16>
    %158 = vector.shape_cast %157 : vector<1x128x128xbf16> to vector<128x128xbf16>
    %cst_106 = arith.constant dense<0.000000e+00> : vector<256x128xf32>
    %159 = tpu.matmul %147, %158, %cst_106 {dimension_numbers = #tpu.dot_dimension_numbers<[1], [0], [0], [1], [0, 0, 1, 1], [], []>} : vector<256x128xbf16>, vector<128x128xbf16>, vector<256x128xf32> -> vector<256x128xf32>
    %160 = arith.addf %155, %159 : vector<256x128xf32>
    %161 = arith.addf %160, %156 : vector<256x128xf32>
    %c2_107 = arith.constant 2 : index
    %c0_108 = arith.constant 0 : index
    %c0_109 = arith.constant 0 : index
    %162 = vector.load %arg10[%c2_107, %c0_108, %c0_109] : memref<3x1x128xf32, #tpu.memory_space<vmem>>, vector<1x1x128xf32>
    %163 = vector.shape_cast %162 : vector<1x1x128xf32> to vector<1x128xf32>
    %164 = vector.broadcast %163 : vector<1x128xf32> to vector<256x128xf32>
    %165 = arith.addf %161, %164 : vector<256x128xf32>
    %cst_110 = arith.constant 0.00999999977 : f32
    %166 = vector.broadcast %cst_110 : f32 to vector<256x128xf32>
    %167 = arith.mulf %166, %165 : vector<256x128xf32>
    %168 = arith.maximumf %165, %167 : vector<256x128xf32>
    %169 = arith.truncf %168 : vector<256x128xf32> to vector<256x128xbf16>
    %c2_111 = arith.constant 2 : index
    %c0_112 = arith.constant 0 : index
    %c0_113 = arith.constant 0 : index
    %170 = vector.load %arg11[%c2_111, %c0_112, %c0_113] : memref<3x128x384xbf16, #tpu.memory_space<vmem>>, vector<1x128x384xbf16>
    %171 = vector.shape_cast %170 : vector<1x128x384xbf16> to vector<128x384xbf16>
    %cst_114 = arith.constant dense<0.000000e+00> : vector<256x384xf32>
    %172 = tpu.matmul %169, %171, %cst_114 {dimension_numbers = #tpu.dot_dimension_numbers<[1], [0], [0], [1], [0, 0, 1, 1], [], []>} : vector<256x128xbf16>, vector<128x384xbf16>, vector<256x384xf32> -> vector<256x384xf32>
    %c2_115 = arith.constant 2 : index
    %c0_116 = arith.constant 0 : index
    %c0_117 = arith.constant 0 : index
    %173 = vector.load %arg12[%c2_115, %c0_116, %c0_117] : memref<3x1x384xf32, #tpu.memory_space<vmem>>, vector<1x1x384xf32>
    %174 = vector.shape_cast %173 : vector<1x1x384xf32> to vector<1x384xf32>
    %175 = vector.broadcast %174 : vector<1x384xf32> to vector<256x384xf32>
    %176 = arith.addf %172, %175 : vector<256x384xf32>
    %177 = vector.extract_strided_slice %176 {offsets = [0, 0], sizes = [256, 128], strides = [1, 1]} : vector<256x384xf32> to vector<256x128xf32>
    %178 = vector.extract_strided_slice %176 {offsets = [0, 128], sizes = [256, 128], strides = [1, 1]} : vector<256x384xf32> to vector<256x128xf32>
    %cst_118 = arith.constant 0.00999999977 : f32
    %179 = vector.broadcast %cst_118 : f32 to vector<256x128xf32>
    %180 = arith.mulf %179, %178 : vector<256x128xf32>
    %181 = arith.maximumf %178, %180 : vector<256x128xf32>
    %182 = vector.extract_strided_slice %176 {offsets = [0, 256], sizes = [256, 128], strides = [1, 1]} : vector<256x384xf32> to vector<256x128xf32>
    %183 = arith.truncf %177 : vector<256x128xf32> to vector<256x128xbf16>
    %cst_119 = arith.constant dense<0.000000e+00> : vector<128x128xf32>
    %184 = tpu.matmul %5, %183, %cst_119 {dimension_numbers = #tpu.dot_dimension_numbers<[1], [0], [0], [1], [0, 0, 1, 1], [], []>} : vector<128x256xbf16>, vector<256x128xbf16>, vector<128x128xf32> -> vector<128x128xf32>
    %185 = arith.truncf %182 : vector<256x128xf32> to vector<256x128xbf16>
    %cst_120 = arith.constant dense<0.000000e+00> : vector<128x128xf32>
    %186 = tpu.matmul %7, %185, %cst_120 {dimension_numbers = #tpu.dot_dimension_numbers<[1], [0], [0], [1], [0, 0, 1, 1], [], []>} : vector<128x256xbf16>, vector<256x128xbf16>, vector<128x128xf32> -> vector<128x128xf32>
    %187 = arith.addf %184, %186 : vector<128x128xf32>
    %188 = vector.broadcast %9 : vector<128x1xf32> to vector<128x128xf32>
    %189 = arith.mulf %187, %188 : vector<128x128xf32>
    %cst_121 = arith.constant 0.00999999977 : f32
    %190 = vector.broadcast %cst_121 : f32 to vector<128x128xf32>
    %191 = arith.mulf %190, %189 : vector<128x128xf32>
    %192 = arith.maximumf %189, %191 : vector<128x128xf32>
    %193 = arith.truncf %192 : vector<128x128xf32> to vector<128x128xbf16>
    %c2_122 = arith.constant 2 : index
    %c0_123 = arith.constant 0 : index
    %c0_124 = arith.constant 0 : index
    %194 = vector.load %arg13[%c2_122, %c0_123, %c0_124] : memref<3x128x128xbf16, #tpu.memory_space<vmem>>, vector<1x128x128xbf16>
    %195 = vector.shape_cast %194 : vector<1x128x128xbf16> to vector<128x128xbf16>
    %cst_125 = arith.constant dense<0.000000e+00> : vector<128x128xf32>
    %196 = tpu.matmul %193, %195, %cst_125 {dimension_numbers = #tpu.dot_dimension_numbers<[1], [0], [0], [1], [0, 0, 1, 1], [], []>} : vector<128x128xbf16>, vector<128x128xbf16>, vector<128x128xf32> -> vector<128x128xf32>
    %c2_126 = arith.constant 2 : index
    %c0_127 = arith.constant 0 : index
    %c0_128 = arith.constant 0 : index
    %197 = vector.load %arg14[%c2_126, %c0_127, %c0_128] : memref<3x1x128xf32, #tpu.memory_space<vmem>>, vector<1x1x128xf32>
    %198 = vector.shape_cast %197 : vector<1x1x128xf32> to vector<1x128xf32>
    %199 = vector.broadcast %198 : vector<1x128xf32> to vector<128x128xf32>
    %200 = arith.addf %196, %199 : vector<128x128xf32>
    %cst_129 = arith.constant 0.00999999977 : f32
    %201 = vector.broadcast %cst_129 : f32 to vector<128x128xf32>
    %202 = arith.mulf %201, %200 : vector<128x128xf32>
    %203 = arith.maximumf %200, %202 : vector<128x128xf32>
    %204 = arith.truncf %203 : vector<128x128xf32> to vector<128x128xbf16>
    %c2_130 = arith.constant 2 : index
    %c0_131 = arith.constant 0 : index
    %c0_132 = arith.constant 0 : index
    %205 = vector.load %arg15[%c2_130, %c0_131, %c0_132] : memref<3x128x128xbf16, #tpu.memory_space<vmem>>, vector<1x128x128xbf16>
    %206 = vector.shape_cast %205 : vector<1x128x128xbf16> to vector<128x128xbf16>
    %cst_133 = arith.constant dense<0.000000e+00> : vector<128x128xf32>
    %207 = tpu.matmul %204, %206, %cst_133 {dimension_numbers = #tpu.dot_dimension_numbers<[1], [0], [0], [1], [0, 0, 1, 1], [], []>} : vector<128x128xbf16>, vector<128x128xbf16>, vector<128x128xf32> -> vector<128x128xf32>
    %c2_134 = arith.constant 2 : index
    %c0_135 = arith.constant 0 : index
    %c0_136 = arith.constant 0 : index
    %208 = vector.load %arg16[%c2_134, %c0_135, %c0_136] : memref<3x1x128xf32, #tpu.memory_space<vmem>>, vector<1x1x128xf32>
    %209 = vector.shape_cast %208 : vector<1x1x128xf32> to vector<1x128xf32>
    %210 = vector.broadcast %209 : vector<1x128xf32> to vector<128x128xf32>
    %211 = arith.addf %207, %210 : vector<128x128xf32>
    %c0_137 = arith.constant 0 : index
    %c0_138 = arith.constant 0 : index
    %c0_139 = arith.constant 0 : index
    %212 = vector.load %arg17[%c0_137, %c0_138, %c0_139] : memref<1x128x128xf32, #tpu.memory_space<vmem>>, vector<1x128x128xf32>
    %213 = vector.shape_cast %212 : vector<1x128x128xf32> to vector<128x128xf32>
    %214 = vector.shape_cast %211 : vector<128x128xf32> to vector<1x128x128xf32>
    tpu.vector_store %arg17[%c0_137, %c0_138, %c0_139], %214 {strides = array<i32>} : memref<1x128x128xf32, #tpu.memory_space<vmem>>, vector<1x128x128xf32>,
    %c0_140 = arith.constant 0 : index
    %c0_141 = arith.constant 0 : index
    %c0_142 = arith.constant 0 : index
    %215 = vector.load %arg18[%c0_140, %c0_141, %c0_142] : memref<1x256x128xf32, #tpu.memory_space<vmem>>, vector<1x256x128xf32>
    %216 = vector.shape_cast %215 : vector<1x256x128xf32> to vector<256x128xf32>
    %217 = vector.shape_cast %181 : vector<256x128xf32> to vector<1x256x128xf32>
    tpu.vector_store %arg18[%c0_140, %c0_141, %c0_142], %217 {strides = array<i32>} : memref<1x256x128xf32, #tpu.memory_space<vmem>>, vector<1x256x128xf32>,
    return
  }
  func.func @transform_0(%arg0: i32) -> (i32, i32, i32) {
    %c0_i32 = arith.constant 0 : i32
    %c0_i32_0 = arith.constant 0 : i32
    %c0_i32_1 = arith.constant 0 : i32
    return %arg0, %c0_i32, %c0_i32_0 : i32, i32, i32
  }
  func.func @transform_1(%arg0: i32) -> (i32, i32, i32) {
    %c0_i32 = arith.constant 0 : i32
    %c0_i32_0 = arith.constant 0 : i32
    %c0_i32_1 = arith.constant 0 : i32
    return %arg0, %c0_i32, %c0_i32_0 : i32, i32, i32
  }
  func.func @transform_2(%arg0: i32) -> (i32, i32, i32) {
    %c0_i32 = arith.constant 0 : i32
    %c0_i32_0 = arith.constant 0 : i32
    %c0_i32_1 = arith.constant 0 : i32
    return %arg0, %c0_i32, %c0_i32_0 : i32, i32, i32
  }
  func.func @transform_3(%arg0: i32) -> (i32, i32, i32) {
    %c0_i32 = arith.constant 0 : i32
    %c0_i32_0 = arith.constant 0 : i32
    %c0_i32_1 = arith.constant 0 : i32
    return %arg0, %c0_i32, %c0_i32_0 : i32, i32, i32
  }
  func.func @transform_4(%arg0: i32) -> (i32, i32, i32) {
    %c0_i32 = arith.constant 0 : i32
    %c0_i32_0 = arith.constant 0 : i32
    %c0_i32_1 = arith.constant 0 : i32
    return %arg0, %c0_i32, %c0_i32_0 : i32, i32, i32
  }
  func.func @transform_5(%arg0: i32) -> (i32, i32, i32) {
    %c0_i32 = arith.constant 0 : i32
    %c0_i32_0 = arith.constant 0 : i32
    %c0_i32_1 = arith.constant 0 : i32
    return %arg0, %c0_i32, %c0_i32_0 : i32, i32, i32
  }
  func.func @transform_6(%arg0: i32) -> (i32, i32, i32) {
    %c0_i32 = arith.constant 0 : i32
    %c0_i32_0 = arith.constant 0 : i32
    %c0_i32_1 = arith.constant 0 : i32
    return %arg0, %c0_i32, %c0_i32_0 : i32, i32, i32
  }
  func.func @transform_7(%arg0: i32) -> (i32, i32, i32) {
    %c0_i32 = arith.constant 0 : i32
    %c0_i32_0 = arith.constant 0 : i32
    %c0_i32_1 = arith.constant 0 : i32
    %c0_i32_2 = arith.constant 0 : i32
    return %c0_i32, %c0_i32_0, %c0_i32_1 : i32, i32, i32
  }
  func.func @transform_8(%arg0: i32) -> (i32, i32, i32) {
    %c0_i32 = arith.constant 0 : i32
    %c0_i32_0 = arith.constant 0 : i32
    %c0_i32_1 = arith.constant 0 : i32
    %c0_i32_2 = arith.constant 0 : i32
    return %c0_i32, %c0_i32_0, %c0_i32_1 : i32, i32, i32
  }
  func.func @transform_9(%arg0: i32) -> (i32, i32, i32) {
    %c0_i32 = arith.constant 0 : i32
    %c0_i32_0 = arith.constant 0 : i32
    %c0_i32_1 = arith.constant 0 : i32
    %c0_i32_2 = arith.constant 0 : i32
    return %c0_i32, %c0_i32_0, %c0_i32_1 : i32, i32, i32
  }
  func.func @transform_10(%arg0: i32) -> (i32, i32, i32) {
    %c0_i32 = arith.constant 0 : i32
    %c0_i32_0 = arith.constant 0 : i32
    %c0_i32_1 = arith.constant 0 : i32
    %c0_i32_2 = arith.constant 0 : i32
    return %c0_i32, %c0_i32_0, %c0_i32_1 : i32, i32, i32
  }
  func.func @transform_11(%arg0: i32) -> (i32, i32, i32) {
    %c0_i32 = arith.constant 0 : i32
    %c0_i32_0 = arith.constant 0 : i32
    %c0_i32_1 = arith.constant 0 : i32
    %c0_i32_2 = arith.constant 0 : i32
    return %c0_i32, %c0_i32_0, %c0_i32_1 : i32, i32, i32
  }
  func.func @transform_12(%arg0: i32) -> (i32, i32, i32) {
    %c0_i32 = arith.constant 0 : i32
    %c0_i32_0 = arith.constant 0 : i32
    %c0_i32_1 = arith.constant 0 : i32
    %c0_i32_2 = arith.constant 0 : i32
    return %c0_i32, %c0_i32_0, %c0_i32_1 : i32, i32, i32
  }
  func.func @transform_13(%arg0: i32) -> (i32, i32, i32) {
    %c0_i32 = arith.constant 0 : i32
    %c0_i32_0 = arith.constant 0 : i32
    %c0_i32_1 = arith.constant 0 : i32
    %c0_i32_2 = arith.constant 0 : i32
    return %c0_i32, %c0_i32_0, %c0_i32_1 : i32, i32, i32
  }
  func.func @transform_14(%arg0: i32) -> (i32, i32, i32) {
    %c0_i32 = arith.constant 0 : i32
    %c0_i32_0 = arith.constant 0 : i32
    %c0_i32_1 = arith.constant 0 : i32
    %c0_i32_2 = arith.constant 0 : i32
    return %c0_i32, %c0_i32_0, %c0_i32_1 : i32, i32, i32
  }
  func.func @transform_15(%arg0: i32) -> (i32, i32, i32) {
    %c0_i32 = arith.constant 0 : i32
    %c0_i32_0 = arith.constant 0 : i32
    %c0_i32_1 = arith.constant 0 : i32
    %c0_i32_2 = arith.constant 0 : i32
    return %c0_i32, %c0_i32_0, %c0_i32_1 : i32, i32, i32
  }
  func.func @transform_16(%arg0: i32) -> (i32, i32, i32) {
    %c0_i32 = arith.constant 0 : i32
    %c0_i32_0 = arith.constant 0 : i32
    %c0_i32_1 = arith.constant 0 : i32
    return %arg0, %c0_i32, %c0_i32_0 : i32, i32, i32
  }
  func.func @transform_17(%arg0: i32) -> (i32, i32, i32) {
    %c0_i32 = arith.constant 0 : i32
    %c0_i32_0 = arith.constant 0 : i32
    %c0_i32_1 = arith.constant 0 : i32
    return %arg0, %c0_i32, %c0_i32_0 : i32, i32, i32
  }
}

</mosaic_0001>

<llo_original>
// kernel: tpu_custom_call.1
$region0: #{tpu_custom_call.1}
  #allocation0 [shape = 'u32[]', space=smem, size = 0x4, offset = 0x4, fixed_abs, tag = 'smem constant byte address 0x4 - core index']
  #allocation1 [shape = 'u32[72,128]{1,0:T(1,128)}', space=vmem, size = 0x9000, scoped, tag = 'internal scratch']
  %s0 = inlined_call_operand.vmem [shape: bf16[2,256,128], index: 0, kind: input, shape index: {}]
  %s1 = inlined_call_operand.vmem [shape: bf16[2,256,128], index: 1, kind: input, shape index: {}]
  %s2 = inlined_call_operand.hbm [shape: bf16[2,128,256], index: 2, kind: input, shape index: {}]
  %s3 = inlined_call_operand.hbm [shape: bf16[2,128,256], index: 3, kind: input, shape index: {}]
  %s4 = inlined_call_operand.vmem [shape: f32[2,128,1], index: 4, kind: input, shape index: {}]
  %s5 = inlined_call_operand.hbm [shape: f32[2,128,128], index: 5, kind: input, shape index: {}, may-alias: {5,16}]
  %s6 = inlined_call_operand.hbm [shape: f32[2,256,128], index: 6, kind: input, shape index: {}, may-alias: {6,17}]
  %s7 = inlined_call_operand.vmem [shape: bf16[3,128,256], index: 7, kind: input, shape index: {}]
  %s8 = inlined_call_operand.hbm [shape: bf16[3,128,128], index: 8, kind: input, shape index: {}]
  %s9 = inlined_call_operand.vmem [shape: f32[3,1,128], index: 9, kind: input, shape index: {}]
  %s10 = inlined_call_operand.vmem [shape: bf16[3,128,384], index: 10, kind: input, shape index: {}]
  %s11 = inlined_call_operand.vmem [shape: f32[3,1,384], index: 11, kind: input, shape index: {}]
  %s12 = inlined_call_operand.hbm [shape: bf16[3,128,128], index: 12, kind: input, shape index: {}]
  %s13 = inlined_call_operand.vmem [shape: f32[3,1,128], index: 13, kind: input, shape index: {}]
  %s14 = inlined_call_operand.hbm [shape: bf16[3,128,128], index: 14, kind: input, shape index: {}]
  %s15 = inlined_call_operand.vmem [shape: f32[3,1,128], index: 15, kind: input, shape index: {}]
  %s16 = inlined_call_operand.hbm [shape: f32[2,128,128], index: 16, kind: output, shape index: {0}, may-alias: {5,16}]
  %s17 = inlined_call_operand.hbm [shape: f32[2,256,128], index: 17, kind: output, shape index: {1}, may-alias: {6,17}]
  %18 = xla_tuple %s16, %s17
  %s19 = sld [smem:[#allocation0]]
  $region133: #{tpu_custom_call.1} parent=0
    _
  %s21 = ssub.s32 1, %s19
  %s22 = scalar_select 0, %s21, %s19
  $region1: #{tpu_custom_call.1} parent=0
    #allocation2 [shape = 'u8[131072]{0}', space=vmem, size = 0x20000, scoped, tag = 'input window, operand 2']
    #allocation3 [shape = 's32[2]{0}', space=sflag, size = 0x8, scoped, tag = 'scoped memory for tpu_custom_call.1']
    #allocation4 [shape = 's32[2]{0}', space=sflag, size = 0x8, scoped, tag = 'scoped memory for tpu_custom_call.1']
    #allocation5 [shape = 'u8[131072]{0}', space=vmem, size = 0x20000, scoped, tag = 'input window, operand 3']
    #allocation6 [shape = 's32[2]{0}', space=sflag, size = 0x8, scoped, tag = 'scoped memory for tpu_custom_call.1']
    #allocation7 [shape = 'u8[131072]{0}', space=vmem, size = 0x20000, scoped, tag = 'input window, operand 5']
    #allocation8 [shape = 'u8[262144]{0}', space=vmem, size = 0x40000, scoped, tag = 'input window, operand 6']
    #allocation9 [shape = 's32[2]{0}', space=sflag, size = 0x8, scoped, tag = 'scoped memory for tpu_custom_call.1']
    #allocation10 [shape = 'u8[98304]{0}', space=vmem, size = 0x18000, scoped, tag = 'input window, operand 8, single buffered']
    #allocation11 [shape = 'u8[98304]{0}', space=vmem, size = 0x18000, scoped, tag = 'input window, operand 12, single buffered']
    #allocation12 [shape = 's32[1]{0}', space=sflag, size = 0x4, scoped, tag = 'scoped memory for tpu_custom_call.1']
    #allocation13 [shape = 'u8[98304]{0}', space=vmem, size = 0x18000, scoped, tag = 'input window, operand 14, single buffered']
    #allocation14 [shape = 'u8[131072]{0}', space=vmem, size = 0x20000, scoped, tag = 'output window, operand 0']
    #allocation15 [shape = 'u8[262144]{0}', space=vmem, size = 0x40000, scoped, tag = 'output window, operand 1']
    #allocation16 [shape = 's32[2]{0}', space=sflag, size = 0x8, scoped, tag = 'scoped memory for tpu_custom_call.1']
    %23 = vsyncpa [#allocation3], 0
    %s24 = scalar_lea.sflag [#allocation3], 1
    %25 = vsyncpa %s24, 0
    %26 = vsyncpa [#allocation6], 0
    %s27 = scalar_lea.sflag [#allocation6], 1
    %28 = vsyncpa %s27, 0
    %29 = vsyncpa [#allocation9], 0
    %s30 = scalar_lea.sflag [#allocation9], 1
    %31 = vsyncpa %s30, 0
    %32 = vsyncpa [#allocation12], 0
    %33 = vsyncpa [#allocation4], 0
    %s34 = scalar_lea.sflag [#allocation4], 1
    %35 = vsyncpa %s34, 0
    %36 = vsyncpa [#allocation16], 0
    %s37 = scalar_lea.sflag [#allocation16], 1
    %38 = vsyncpa %s37, 0
    loop: start=0, step=1, limit=4
    $region2: #{tpu_custom_call.1} parent=1 // loop_pre_header
      _
    $region3: #{tpu_custom_call.1} parent=1 // loop_header
      %s40 = sphi 0, %s44
      %p41 = scmp.ge.s32.totalorder %s40, 4
      %s50 = sphi 0, %s52
      %s53 = sphi 0, %s50
      %s54 = sphi 0, %s53
      %s70 = sphi 0, %s54
      %s76 = sphi 0, %s78
      %s79 = sphi 0, %s76
      %s80 = sphi 0, %s79
      %s96 = sphi 0, %s80
      %s102 = sphi 0, %s104
      %s105 = sphi 0, %s102
      %s106 = sphi 0, %s105
      %s122 = sphi 0, %s106
      %s128 = sphi 0, %s130
      %s131 = sphi 0, %s128
      %s132 = sphi 0, %s131
      %s148 = sphi 0, %s132
      %s154 = sphi 0, %s156
      %s157 = sphi 0, %s154
      %s158 = sphi 0, %s157
      %s174 = sphi 0, %s158
      %s180 = sphi 0, %s182
      %s183 = sphi 0, %s180
      %s184 = sphi 0, %s183
      %s200 = sphi 0, %s184
      %s206 = sphi 0, %s208
      %s209 = sphi 0, %s206
      %s210 = sphi 0, %s209
      %s226 = sphi 0, %s210
      %s230 = sphi 0, %s230
      %s232 = sphi 0, %s230
      %s233 = sphi 0, %s232
      %s247 = sphi 0, %s233
      %s251 = sphi 0, %s251
      %s253 = sphi 0, %s251
      %s254 = sphi 0, %s253
      %s268 = sphi 0, %s254
      %s272 = sphi 0, %s272
      %s274 = sphi 0, %s272
      %s275 = sphi 0, %s274
      %s289 = sphi 0, %s275
      %s293 = sphi 0, %s293
      %s295 = sphi 0, %s293
      %s296 = sphi 0, %s295
      %s310 = sphi 0, %s296
      %s314 = sphi 0, %s314
      %s316 = sphi 0, %s314
      %s317 = sphi 0, %s316
      %s331 = sphi 0, %s317
      %s335 = sphi 0, %s335
      %s337 = sphi 0, %s335
      %s338 = sphi 0, %s337
      %s352 = sphi 0, %s338
      %s356 = sphi 0, %s356
      %s358 = sphi 0, %s356
      %s359 = sphi 0, %s358
      %s373 = sphi 0, %s359
      %s377 = sphi 0, %s377
      %s379 = sphi 0, %s377
      %s380 = sphi 0, %s379
      %s394 = sphi 0, %s380
      %s398 = sphi 0, %s398
      %s400 = sphi 0, %s398
      %s401 = sphi 0, %s400
      %s415 = sphi 0, %s401
      %s421 = sphi 0, %s423
      %s424 = sphi 0, %s421
      %s425 = sphi 0, %s424
      %s441 = sphi 0, %s425
      %s447 = sphi 0, %s449
      %s450 = sphi 0, %s447
      %s451 = sphi 0, %s450
      %s467 = sphi 0, %s451
    $region4: #{tpu_custom_call.1} parent=1 // loop_header_branch
      %43 = sbr.rel (%p41) target = $region8
    $region5: #{tpu_custom_call.1} parent=1 // loop_body
      %s45 = ssub.s32 %s40, 1
      %s46 = ssub.s32 %s40, 2
      %s47 = sadd.s32 %s40, 1
      %s48 = ssub.s32 %s40, %s47
      %p49 = scmp.eq.s32.totalorder %s48, 0
      %s51 = sadd.s32 %s50, 1
      %s52 = scalar_select %p49, %s50, %s51
      %p55 = pneg %p49
      %p56 = scmp.eq.s32.totalorder %s40, 1
      %p57 = por %p55, %p56
      %p58 = scmp.ne.s32.totalorder %s50, %s53
      %p59 = scmp.eq.s32.totalorder %s40, 0
      %p60 = por %p58, %p59
      %p61 = scmp.ne.s32.totalorder %s50, %s53
      %p62 = scmp.eq.s32.totalorder %s45, 1
      %p63 = por %p61, %p62
      %p64 = scmp.ne.s32.totalorder %s53, %s54
      %p65 = scmp.eq.s32.totalorder %s45, 0
      %p66 = por %p64, %p65
      %p67 = scmp.ne.s32.totalorder %s53, %s54
      %p68 = scmp.eq.s32.totalorder %s46, 1
      %p69 = por %p67, %p68
      %p71 = scmp.ne.s32.totalorder %s54, %s70
      %p72 = scmp.eq.s32.totalorder %s46, 0
      %p73 = por %p71, %p72
      %s74 = ssub.s32 %s40, %s47
      %p75 = scmp.eq.s32.totalorder %s74, 0
      %s77 = sadd.s32 %s76, 1
      %s78 = scalar_select %p75, %s76, %s77
      %p81 = pneg %p75
      %p82 = scmp.eq.s32.totalorder %s40, 1
      %p83 = por %p81, %p82
      %p84 = scmp.ne.s32.totalorder %s76, %s79
      %p85 = scmp.eq.s32.totalorder %s40, 0
      %p86 = por %p84, %p85
      %p87 = scmp.ne.s32.totalorder %s76, %s79
      %p88 = scmp.eq.s32.totalorder %s45, 1
      %p89 = por %p87, %p88
      %p90 = scmp.ne.s32.totalorder %s79, %s80
      %p91 = scmp.eq.s32.totalorder %s45, 0
      %p92 = por %p90, %p91
      %p93 = scmp.ne.s32.totalorder %s79, %s80
      %p94 = scmp.eq.s32.totalorder %s46, 1
      %p95 = por %p93, %p94
      %p97 = scmp.ne.s32.totalorder %s80, %s96
      %p98 = scmp.eq.s32.totalorder %s46, 0
      %p99 = por %p97, %p98
      %s100 = ssub.s32 %s40, %s47
      %p101 = scmp.eq.s32.totalorder %s100, 0
      %s103 = sadd.s32 %s102, 1
      %s104 = scalar_select %p101, %s102, %s103
      %p107 = pneg %p101
      %p108 = scmp.eq.s32.totalorder %s40, 1
      %p109 = por %p107, %p108
      %p110 = scmp.ne.s32.totalorder %s102, %s105
      %p111 = scmp.eq.s32.totalorder %s40, 0
      %p112 = por %p110, %p111
      %p113 = scmp.ne.s32.totalorder %s102, %s105
      %p114 = scmp.eq.s32.totalorder %s45, 1
      %p115 = por %p113, %p114
      %p116 = scmp.ne.s32.totalorder %s105, %s106
      %p117 = scmp.eq.s32.totalorder %s45, 0
      %p118 = por %p116, %p117
      %p119 = scmp.ne.s32.totalorder %s105, %s106
      %p120 = scmp.eq.s32.totalorder %s46, 1
      %p121 = por %p119, %p120
      %p123 = scmp.ne.s32.totalorder %s106, %s122
      %p124 = scmp.eq.s32.totalorder %s46, 0
      %p125 = por %p123, %p124
      %s126 = ssub.s32 %s40, %s47
      %p127 = scmp.eq.s32.totalorder %s126, 0
      %s129 = sadd.s32 %s128, 1
      %s130 = scalar_select %p127, %s128, %s129
      %p133 = pneg %p127
      %p134 = scmp.eq.s32.totalorder %s40, 1
      %p135 = por %p133, %p134
      %p136 = scmp.ne.s32.totalorder %s128, %s131
      %p137 = scmp.eq.s32.totalorder %s40, 0
      %p138 = por %p136, %p137
      %p139 = scmp.ne.s32.totalorder %s128, %s131
      %p140 = scmp.eq.s32.totalorder %s45, 1
      %p141 = por %p139, %p140
      %p142 = scmp.ne.s32.totalorder %s131, %s132
      %p143 = scmp.eq.s32.totalorder %s45, 0
      %p144 = por %p142, %p143
      %p145 = scmp.ne.s32.totalorder %s131, %s132
      %p146 = scmp.eq.s32.totalorder %s46, 1
      %p147 = por %p145, %p146
      %p149 = scmp.ne.s32.totalorder %s132, %s148
      %p150 = scmp.eq.s32.totalorder %s46, 0
      %p151 = por %p149, %p150
      %s152 = ssub.s32 %s40, %s47
      %p153 = scmp.eq.s32.totalorder %s152, 0
      %s155 = sadd.s32 %s154, 1
      %s156 = scalar_select %p153, %s154, %s155
      %p159 = pneg %p153
      %p160 = scmp.eq.s32.totalorder %s40, 1
      %p161 = por %p159, %p160
      %p162 = scmp.ne.s32.totalorder %s154, %s157
      %p163 = scmp.eq.s32.totalorder %s40, 0
      %p164 = por %p162, %p163
      %p165 = scmp.ne.s32.totalorder %s154, %s157
      %p166 = scmp.eq.s32.totalorder %s45, 1
      %p167 = por %p165, %p166
      %p168 = scmp.ne.s32.totalorder %s157, %s158
      %p169 = scmp.eq.s32.totalorder %s45, 0
      %p170 = por %p168, %p169
      %p171 = scmp.ne.s32.totalorder %s157, %s158
      %p172 = scmp.eq.s32.totalorder %s46, 1
      %p173 = por %p171, %p172
      %p175 = scmp.ne.s32.totalorder %s158, %s174
      %p176 = scmp.eq.s32.totalorder %s46, 0
      %p177 = por %p175, %p176
      %s178 = ssub.s32 %s40, %s47
      %p179 = scmp.eq.s32.totalorder %s178, 0
      %s181 = sadd.s32 %s180, 1
      %s182 = scalar_select %p179, %s180, %s181
      %p185 = pneg %p179
      %p186 = scmp.eq.s32.totalorder %s40, 1
      %p187 = por %p185, %p186
      %p188 = scmp.ne.s32.totalorder %s180, %s183
      %p189 = scmp.eq.s32.totalorder %s40, 0
      %p190 = por %p188, %p189
      %p191 = scmp.ne.s32.totalorder %s180, %s183
      %p192 = scmp.eq.s32.totalorder %s45, 1
      %p193 = por %p191, %p192
      %p194 = scmp.ne.s32.totalorder %s183, %s184
      %p195 = scmp.eq.s32.totalorder %s45, 0
      %p196 = por %p194, %p195
      %p197 = scmp.ne.s32.totalorder %s183, %s184
      %p198 = scmp.eq.s32.totalorder %s46, 1
      %p199 = por %p197, %p198
      %p201 = scmp.ne.s32.totalorder %s184, %s200
      %p202 = scmp.eq.s32.totalorder %s46, 0
      %p203 = por %p201, %p202
      %s204 = ssub.s32 %s40, %s47
      %p205 = scmp.eq.s32.totalorder %s204, 0
      %s207 = sadd.s32 %s206, 1
      %s208 = scalar_select %p205, %s206, %s207
      %p211 = pneg %p205
      %p212 = scmp.eq.s32.totalorder %s40, 1
      %p213 = por %p211, %p212
      %p214 = scmp.ne.s32.totalorder %s206, %s209
      %p215 = scmp.eq.s32.totalorder %s40, 0
      %p216 = por %p214, %p215
      %p217 = scmp.ne.s32.totalorder %s206, %s209
      %p218 = scmp.eq.s32.totalorder %s45, 1
      %p219 = por %p217, %p218
      %p220 = scmp.ne.s32.totalorder %s209, %s210
      %p221 = scmp.eq.s32.totalorder %s45, 0
      %p222 = por %p220, %p221
      %p223 = scmp.ne.s32.totalorder %s209, %s210
      %p224 = scmp.eq.s32.totalorder %s46, 1
      %p225 = por %p223, %p224
      %p227 = scmp.ne.s32.totalorder %s210, %s226
      %p228 = scmp.eq.s32.totalorder %s46, 0
      %p229 = por %p227, %p228
      %s231 = sadd.s32 %s230, 1
      %p234 = scmp.eq.s32.totalorder %s40, 1
      %p235 = scmp.ne.s32.totalorder %s230, %s232
      %p236 = scmp.eq.s32.totalorder %s40, 0
      %p237 = por %p235, %p236
      %p238 = scmp.ne.s32.totalorder %s230, %s232
      %p239 = scmp.eq.s32.totalorder %s45, 1
      %p240 = por %p238, %p239
      %p241 = scmp.ne.s32.totalorder %s232, %s233
      %p242 = scmp.eq.s32.totalorder %s45, 0
      %p243 = por %p241, %p242
      %p244 = scmp.ne.s32.totalorder %s232, %s233
      %p245 = scmp.eq.s32.totalorder %s46, 1
      %p246 = por %p244, %p245
      %p248 = scmp.ne.s32.totalorder %s233, %s247
      %p249 = scmp.eq.s32.totalorder %s46, 0
      %p250 = por %p248, %p249
      %s252 = sadd.s32 %s251, 1
      %p255 = scmp.eq.s32.totalorder %s40, 1
      %p256 = scmp.ne.s32.totalorder %s251, %s253
      %p257 = scmp.eq.s32.totalorder %s40, 0
      %p258 = por %p256, %p257
      %p259 = scmp.ne.s32.totalorder %s251, %s253
      %p260 = scmp.eq.s32.totalorder %s45, 1
      %p261 = por %p259, %p260
      %p262 = scmp.ne.s32.totalorder %s253, %s254
      %p263 = scmp.eq.s32.totalorder %s45, 0
      %p264 = por %p262, %p263
      %p265 = scmp.ne.s32.totalorder %s253, %s254
      %p266 = scmp.eq.s32.totalorder %s46, 1
      %p267 = por %p265, %p266
      %p269 = scmp.ne.s32.totalorder %s254, %s268
      %p270 = scmp.eq.s32.totalorder %s46, 0
      %p271 = por %p269, %p270
      %s273 = sadd.s32 %s272, 1
      %p276 = scmp.eq.s32.totalorder %s40, 1
      %p277 = scmp.ne.s32.totalorder %s272, %s274
      %p278 = scmp.eq.s32.totalorder %s40, 0
      %p279 = por %p277, %p278
      %p280 = scmp.ne.s32.totalorder %s272, %s274
      %p281 = scmp.eq.s32.totalorder %s45, 1
      %p282 = por %p280, %p281
      %p283 = scmp.ne.s32.totalorder %s274, %s275
      %p284 = scmp.eq.s32.totalorder %s45, 0
      %p285 = por %p283, %p284
      %p286 = scmp.ne.s32.totalorder %s274, %s275
      %p287 = scmp.eq.s32.totalorder %s46, 1
      %p288 = por %p286, %p287
      %p290 = scmp.ne.s32.totalorder %s275, %s289
      %p291 = scmp.eq.s32.totalorder %s46, 0
      %p292 = por %p290, %p291
      %s294 = sadd.s32 %s293, 1
      %p297 = scmp.eq.s32.totalorder %s40, 1
      %p298 = scmp.ne.s32.totalorder %s293, %s295
      %p299 = scmp.eq.s32.totalorder %s40, 0
      %p300 = por %p298, %p299
      %p301 = scmp.ne.s32.totalorder %s293, %s295
      %p302 = scmp.eq.s32.totalorder %s45, 1
      %p303 = por %p301, %p302
      %p304 = scmp.ne.s32.totalorder %s295, %s296
      %p305 = scmp.eq.s32.totalorder %s45, 0
      %p306 = por %p304, %p305
      %p307 = scmp.ne.s32.totalorder %s295, %s296
      %p308 = scmp.eq.s32.totalorder %s46, 1
      %p309 = por %p307, %p308
      %p311 = scmp.ne.s32.totalorder %s296, %s310
      %p312 = scmp.eq.s32.totalorder %s46, 0
      %p313 = por %p311, %p312
      %s315 = sadd.s32 %s314, 1
      %p318 = scmp.eq.s32.totalorder %s40, 1
      %p319 = scmp.ne.s32.totalorder %s314, %s316
      %p320 = scmp.eq.s32.totalorder %s40, 0
      %p321 = por %p319, %p320
      %p322 = scmp.ne.s32.totalorder %s314, %s316
      %p323 = scmp.eq.s32.totalorder %s45, 1
      %p324 = por %p322, %p323
      %p325 = scmp.ne.s32.totalorder %s316, %s317
      %p326 = scmp.eq.s32.totalorder %s45, 0
      %p327 = por %p325, %p326
      %p328 = scmp.ne.s32.totalorder %s316, %s317
      %p329 = scmp.eq.s32.totalorder %s46, 1
      %p330 = por %p328, %p329
      %p332 = scmp.ne.s32.totalorder %s317, %s331
      %p333 = scmp.eq.s32.totalorder %s46, 0
      %p334 = por %p332, %p333
      %s336 = sadd.s32 %s335, 1
      %p339 = scmp.eq.s32.totalorder %s40, 1
      %p340 = scmp.ne.s32.totalorder %s335, %s337
      %p341 = scmp.eq.s32.totalorder %s40, 0
      %p342 = por %p340, %p341
      %p343 = scmp.ne.s32.totalorder %s335, %s337
      %p344 = scmp.eq.s32.totalorder %s45, 1
      %p345 = por %p343, %p344
      %p346 = scmp.ne.s32.totalorder %s337, %s338
      %p347 = scmp.eq.s32.totalorder %s45, 0
      %p348 = por %p346, %p347
      %p349 = scmp.ne.s32.totalorder %s337, %s338
      %p350 = scmp.eq.s32.totalorder %s46, 1
      %p351 = por %p349, %p350
      %p353 = scmp.ne.s32.totalorder %s338, %s352
      %p354 = scmp.eq.s32.totalorder %s46, 0
      %p355 = por %p353, %p354
      %s357 = sadd.s32 %s356, 1
      %p360 = scmp.eq.s32.totalorder %s40, 1
      %p361 = scmp.ne.s32.totalorder %s356, %s358
      %p362 = scmp.eq.s32.totalorder %s40, 0
      %p363 = por %p361, %p362
      %p364 = scmp.ne.s32.totalorder %s356, %s358
      %p365 = scmp.eq.s32.totalorder %s45, 1
      %p366 = por %p364, %p365
      %p367 = scmp.ne.s32.totalorder %s358, %s359
      %p368 = scmp.eq.s32.totalorder %s45, 0
      %p369 = por %p367, %p368
      %p370 = scmp.ne.s32.totalorder %s358, %s359
      %p371 = scmp.eq.s32.totalorder %s46, 1
      %p372 = por %p370, %p371
      %p374 = scmp.ne.s32.totalorder %s359, %s373
      %p375 = scmp.eq.s32.totalorder %s46, 0
      %p376 = por %p374, %p375
      %s378 = sadd.s32 %s377, 1
      %p381 = scmp.eq.s32.totalorder %s40, 1
      %p382 = scmp.ne.s32.totalorder %s377, %s379
      %p383 = scmp.eq.s32.totalorder %s40, 0
      %p384 = por %p382, %p383
      %p385 = scmp.ne.s32.totalorder %s377, %s379
      %p386 = scmp.eq.s32.totalorder %s45, 1
      %p387 = por %p385, %p386
      %p388 = scmp.ne.s32.totalorder %s379, %s380
      %p389 = scmp.eq.s32.totalorder %s45, 0
      %p390 = por %p388, %p389
      %p391 = scmp.ne.s32.totalorder %s379, %s380
      %p392 = scmp.eq.s32.totalorder %s46, 1
      %p393 = por %p391, %p392
      %p395 = scmp.ne.s32.totalorder %s380, %s394
      %p396 = scmp.eq.s32.totalorder %s46, 0
      %p397 = por %p395, %p396
      %s399 = sadd.s32 %s398, 1
      %p402 = scmp.eq.s32.totalorder %s40, 1
      %p403 = scmp.ne.s32.totalorder %s398, %s400
      %p404 = scmp.eq.s32.totalorder %s40, 0
      %p405 = por %p403, %p404
      %p406 = scmp.ne.s32.totalorder %s398, %s400
      %p407 = scmp.eq.s32.totalorder %s45, 1
      %p408 = por %p406, %p407
      %p409 = scmp.ne.s32.totalorder %s400, %s401
      %p410 = scmp.eq.s32.totalorder %s45, 0
      %p411 = por %p409, %p410
      %p412 = scmp.ne.s32.totalorder %s400, %s401
      %p413 = scmp.eq.s32.totalorder %s46, 1
      %p414 = por %p412, %p413
      %p416 = scmp.ne.s32.totalorder %s401, %s415
      %p417 = scmp.eq.s32.totalorder %s46, 0
      %p418 = por %p416, %p417
      %s419 = ssub.s32 %s40, %s47
      %p420 = scmp.eq.s32.totalorder %s419, 0
      %s422 = sadd.s32 %s421, 1
      %s423 = scalar_select %p420, %s421, %s422
      %p426 = pneg %p420
      %p427 = scmp.eq.s32.totalorder %s40, 1
      %p428 = por %p426, %p427
      %p429 = scmp.ne.s32.totalorder %s421, %s424
      %p430 = scmp.eq.s32.totalorder %s40, 0
      %p431 = por %p429, %p430
      %p432 = scmp.ne.s32.totalorder %s421, %s424
      %p433 = scmp.eq.s32.totalorder %s45, 1
      %p434 = por %p432, %p433
      %p435 = scmp.ne.s32.totalorder %s424, %s425
      %p436 = scmp.eq.s32.totalorder %s45, 0
      %p437 = por %p435, %p436
      %p438 = scmp.ne.s32.totalorder %s424, %s425
      %p439 = scmp.eq.s32.totalorder %s46, 1
      %p440 = por %p438, %p439
      %p442 = scmp.ne.s32.totalorder %s425, %s441
      %p443 = scmp.eq.s32.totalorder %s46, 0
      %p444 = por %p442, %p443
      %s445 = ssub.s32 %s40, %s47
      %p446 = scmp.eq.s32.totalorder %s445, 0
      %s448 = sadd.s32 %s447, 1
      %s449 = scalar_select %p446, %s447, %s448
      %p452 = pneg %p446
      %p453 = scmp.eq.s32.totalorder %s40, 1
      %p454 = por %p452, %p453
      %p455 = scmp.ne.s32.totalorder %s447, %s450
      %p456 = scmp.eq.s32.totalorder %s40, 0
      %p457 = por %p455, %p456
      %p458 = scmp.ne.s32.totalorder %s447, %s450
      %p459 = scmp.eq.s32.totalorder %s45, 1
      %p460 = por %p458, %p459
      %p461 = scmp.ne.s32.totalorder %s450, %s451
      %p462 = scmp.eq.s32.totalorder %s45, 0
      %p463 = por %p461, %p462
      %p464 = scmp.ne.s32.totalorder %s450, %s451
      %p465 = scmp.eq.s32.totalorder %s46, 1
      %p466 = por %p464, %p465
      %p468 = scmp.ne.s32.totalorder %s451, %s467
      %p469 = scmp.eq.s32.totalorder %s46, 0
      %p470 = por %p468, %p469
      %p471 = scmp.le.s32.totalorder 1, %s40
      %p472 = scmp.lt.s32.totalorder %s40, 3
      %p473 = pnand %p471, %p472
      %p474 = pneg %p473
      // Predicated region
      $region9: #{tpu_custom_call.1} parent=5 // pred_check
        _
      $region10: #{tpu_custom_call.1} parent=5 // pred_check_branch
        %476 = sbr.rel (%p473) target = $region12
      $region11: #{tpu_custom_call.1} parent=5 // pred_region
        %s477 = ssub.s32 %s40, 1
        // Predicated region
        $region13: #{tpu_custom_call.1} parent=11 // pred_check
          %p478 = pneg %p243
        $region14: #{tpu_custom_call.1} parent=11 // pred_check_branch
          %480 = sbr.rel (%p478) target = $region16
        $region15: #{tpu_custom_call.1} parent=11 // pred_region
          _
        $region16: #{tpu_custom_call.1} parent=11 // pred_fallthru
          _
        // Predicated region
        $region17: #{tpu_custom_call.1} parent=11 // pred_check
          %p481 = pneg %p264
        $region18: #{tpu_custom_call.1} parent=11 // pred_check_branch
          %483 = sbr.rel (%p481) target = $region20
        $region19: #{tpu_custom_call.1} parent=11 // pred_region
          %485 = vsyncadd [#allocation9], 0
          %s486 = sshll.u32 %s8, 4
          %s487 = int_to_ptr.hbm [resolvable:$true] %s486
          %s488 = sshll.u32 [#allocation10], 4
          %s489 = int_to_ptr.vmem [resolvable:$true] %s488
          %494 = dma.hbm_to_vmem [thread:$0]  %s487, 3072, %s489, [#allocation9], 64, 64, 4
        $region20: #{tpu_custom_call.1} parent=11 // pred_fallthru
          _
        // Predicated region
        $region21: #{tpu_custom_call.1} parent=11 // pred_check
          %p495 = pneg %p285
        $region22: #{tpu_custom_call.1} parent=11 // pred_check_branch
          %497 = sbr.rel (%p495) target = $region24
        $region23: #{tpu_custom_call.1} parent=11 // pred_region
          _
        $region24: #{tpu_custom_call.1} parent=11 // pred_fallthru
          _
        // Predicated region
        $region25: #{tpu_custom_call.1} parent=11 // pred_check
          %p498 = pneg %p306
        $region26: #{tpu_custom_call.1} parent=11 // pred_check_branch
          %500 = sbr.rel (%p498) target = $region28
        $region27: #{tpu_custom_call.1} parent=11 // pred_region
          _
        $region28: #{tpu_custom_call.1} parent=11 // pred_fallthru
          _
        // Predicated region
        $region29: #{tpu_custom_call.1} parent=11 // pred_check
          %p501 = pneg %p327
        $region30: #{tpu_custom_call.1} parent=11 // pred_check_branch
          %503 = sbr.rel (%p501) target = $region32
        $region31: #{tpu_custom_call.1} parent=11 // pred_region
          _
        $region32: #{tpu_custom_call.1} parent=11 // pred_fallthru
          _
        // Predicated region
        $region33: #{tpu_custom_call.1} parent=11 // pred_check
          %p504 = pneg %p348
        $region34: #{tpu_custom_call.1} parent=11 // pred_check_branch
          %506 = sbr.rel (%p504) target = $region36
        $region35: #{tpu_custom_call.1} parent=11 // pred_region
          %508 = vsyncadd [#allocation12], 0
          %s509 = sshll.u32 %s12, 4
          %s510 = int_to_ptr.hbm [resolvable:$true] %s509
          %s511 = sshll.u32 [#allocation11], 4
          %s512 = int_to_ptr.vmem [resolvable:$true] %s511
          %517 = dma.hbm_to_vmem [thread:$0]  %s510, 3072, %s512, [#allocation12], 64, 64, 4
        $region36: #{tpu_custom_call.1} parent=11 // pred_fallthru
          _
        // Predicated region
        $region37: #{tpu_custom_call.1} parent=11 // pred_check
          %p518 = pneg %p369
        $region38: #{tpu_custom_call.1} parent=11 // pred_check_branch
          %520 = sbr.rel (%p518) target = $region40
        $region39: #{tpu_custom_call.1} parent=11 // pred_region
          _
        $region40: #{tpu_custom_call.1} parent=11 // pred_fallthru
          _
        // Predicated region
        $region41: #{tpu_custom_call.1} parent=11 // pred_check
          %p521 = pneg %p390
        $region42: #{tpu_custom_call.1} parent=11 // pred_check_branch
          %523 = sbr.rel (%p521) target = $region44
        $region43: #{tpu_custom_call.1} parent=11 // pred_region
          %525 = vsyncadd [#allocation12], 0
          %s526 = sshll.u32 %s14, 4
          %s527 = int_to_ptr.hbm [resolvable:$true] %s526
          %s528 = sshll.u32 [#allocation13], 4
          %s529 = int_to_ptr.vmem [resolvable:$true] %s528
          %534 = dma.hbm_to_vmem [thread:$0]  %s527, 3072, %s529, [#allocation12], 64, 64, 4
        $region44: #{tpu_custom_call.1} parent=11 // pred_fallthru
          _
        // Predicated region
        $region45: #{tpu_custom_call.1} parent=11 // pred_check
          %p535 = pneg %p411
        $region46: #{tpu_custom_call.1} parent=11 // pred_check_branch
          %537 = sbr.rel (%p535) target = $region48
        $region47: #{tpu_custom_call.1} parent=11 // pred_region
          _
        $region48: #{tpu_custom_call.1} parent=11 // pred_fallthru
          _
      $region12: #{tpu_custom_call.1} parent=5 // pred_fallthru
        _
      %p538 = scmp.lt.s32.totalorder %s40, 2
      // Predicated region
      $region49: #{tpu_custom_call.1} parent=5 // pred_check
        %p539 = pneg %p538
      $region50: #{tpu_custom_call.1} parent=5 // pred_check_branch
        %541 = sbr.rel (%p539) target = $region52
      $region51: #{tpu_custom_call.1} parent=5 // pred_region
        // Predicated region
        $region53: #{tpu_custom_call.1} parent=51 // pred_check
          %p542 = pneg %p60
        $region54: #{tpu_custom_call.1} parent=51 // pred_check_branch
          %544 = sbr.rel (%p542) target = $region56
        $region55: #{tpu_custom_call.1} parent=51 // pred_region
          %p545 = scmp.lt.s32.totalorder %s40, 1
          %s546 = scalar_select %p545, %s40, 1
          %s547 = smul.addr %s546, 32
          %s548 = smul.addr %s547, 4
          %s549 = scalar_lea.vmem %s0, %s548
        $region56: #{tpu_custom_call.1} parent=51 // pred_fallthru
          _
        // Predicated region
        $region57: #{tpu_custom_call.1} parent=51 // pred_check
          %p550 = pneg %p86
        $region58: #{tpu_custom_call.1} parent=51 // pred_check_branch
          %552 = sbr.rel (%p550) target = $region60
        $region59: #{tpu_custom_call.1} parent=51 // pred_region
          %p553 = scmp.lt.s32.totalorder %s40, 1
          %s554 = scalar_select %p553, %s40, 1
          %s555 = smul.addr %s554, 32
          %s556 = smul.addr %s555, 4
          %s557 = scalar_lea.vmem %s1, %s556
        $region60: #{tpu_custom_call.1} parent=51 // pred_fallthru
          _
        // Predicated region
        $region61: #{tpu_custom_call.1} parent=51 // pred_check
          %p558 = pneg %p112
        $region62: #{tpu_custom_call.1} parent=51 // pred_check_branch
          %560 = sbr.rel (%p558) target = $region64
        $region63: #{tpu_custom_call.1} parent=51 // pred_region
          %s561 = sand.u32 %s102, 1
          %s562 = scalar_lea.sflag [#allocation3], %s561
          %s563 = sand.u32 %s102, 1
          %s564 = smul.addr %s563, 128
          %s565 = scalar_lea.vmem [#allocation2], %s564
          %567 = vsyncadd %s562, 0
          %s568 = smul.addr %s40, 32
          %s569 = smul.addr %s568, 4
          %s570 = scalar_lea.hbm %s2, %s569
          %s571 = sshll.u32 %s570, 4
          %s572 = int_to_ptr.hbm [resolvable:$true] %s571
          %s573 = sshll.u32 %s565, 4
          %s574 = int_to_ptr.vmem [resolvable:$true] %s573
          %579 = dma.hbm_to_vmem [thread:$0]  %s572, 2048, %s574, %s562, 128, 128, 8
        $region64: #{tpu_custom_call.1} parent=51 // pred_fallthru
          _
        // Predicated region
        $region65: #{tpu_custom_call.1} parent=51 // pred_check
          %p580 = pneg %p138
        $region66: #{tpu_custom_call.1} parent=51 // pred_check_branch
          %582 = sbr.rel (%p580) target = $region68
        $region67: #{tpu_custom_call.1} parent=51 // pred_region
          %s583 = sand.u32 %s40, 1
          %s584 = scalar_lea.sflag [#allocation6], %s583
          %s585 = sand.u32 %s128, 1
          %s586 = smul.addr %s585, 128
          %s587 = scalar_lea.vmem [#allocation5], %s586
          %589 = vsyncadd %s584, 0
          %s590 = smul.addr %s40, 32
          %s591 = smul.addr %s590, 4
          %s592 = scalar_lea.hbm %s3, %s591
          %s593 = sshll.u32 %s592, 4
          %s594 = int_to_ptr.hbm [resolvable:$true] %s593
          %s595 = sshll.u32 %s587, 4
          %s596 = int_to_ptr.vmem [resolvable:$true] %s595
          %601 = dma.hbm_to_vmem [thread:$0]  %s594, 2048, %s596, %s584, 128, 128, 8
        $region68: #{tpu_custom_call.1} parent=51 // pred_fallthru
          _
        // Predicated region
        $region69: #{tpu_custom_call.1} parent=51 // pred_check
          %p602 = pneg %p164
        $region70: #{tpu_custom_call.1} parent=51 // pred_check_branch
          %604 = sbr.rel (%p602) target = $region72
        $region71: #{tpu_custom_call.1} parent=51 // pred_region
          %p605 = scmp.lt.s32.totalorder %s40, 1
          %s606 = scalar_select %p605, %s40, 1
          %s607 = smul.addr %s606, 16
          %s608 = smul.addr %s607, 8
          %s609 = scalar_lea.vmem %s4, %s608
        $region72: #{tpu_custom_call.1} parent=51 // pred_fallthru
          _
        // Predicated region
        $region73: #{tpu_custom_call.1} parent=51 // pred_check
          %p610 = pneg %p190
        $region74: #{tpu_custom_call.1} parent=51 // pred_check_branch
          %612 = sbr.rel (%p610) target = $region76
        $region75: #{tpu_custom_call.1} parent=51 // pred_region
          %s613 = sand.u32 %s40, 1
          %s614 = scalar_lea.sflag [#allocation6], %s613
          %s615 = sand.u32 %s180, 1
          %s616 = smul.addr %s615, 128
          %s617 = scalar_lea.vmem [#allocation7], %s616
          %619 = vsyncadd %s614, 0
          %s620 = smul.addr %s40, 16
          %s621 = smul.addr %s620, 8
          %s622 = scalar_lea.hbm %s5, %s621
          %s623 = sshll.u32 %s622, 4
          %s624 = int_to_ptr.hbm [resolvable:$true] %s623
          %s625 = sshll.u32 %s617, 4
          %s626 = int_to_ptr.vmem [resolvable:$true] %s625
          %631 = dma.hbm_to_vmem [thread:$0]  %s624, 2048, %s626, %s614, 128, 128, 8
        $region76: #{tpu_custom_call.1} parent=51 // pred_fallthru
          _
        // Predicated region
        $region77: #{tpu_custom_call.1} parent=51 // pred_check
          %p632 = pneg %p216
        $region78: #{tpu_custom_call.1} parent=51 // pred_check_branch
          %634 = sbr.rel (%p632) target = $region80
        $region79: #{tpu_custom_call.1} parent=51 // pred_region
          %s635 = sand.u32 %s40, 1
          %s636 = scalar_lea.sflag [#allocation9], %s635
          %s637 = sand.u32 %s206, 1
          %s638 = smul.addr %s637, 256
          %s639 = scalar_lea.vmem [#allocation8], %s638
          %641 = vsyncadd %s636, 0
          %s642 = smul.addr %s40, 32
          %s643 = smul.addr %s642, 8
          %s644 = scalar_lea.hbm %s6, %s643
          %s645 = sshll.u32 %s644, 4
          %s646 = int_to_ptr.hbm [resolvable:$true] %s645
          %s647 = sshll.u32 %s639, 4
          %s648 = int_to_ptr.vmem [resolvable:$true] %s647
          %653 = dma.hbm_to_vmem [thread:$0]  %s646, 4096, %s648, %s636, 128, 128, 8
        $region80: #{tpu_custom_call.1} parent=51 // pred_fallthru
          _
      $region52: #{tpu_custom_call.1} parent=5 // pred_fallthru
        _
      %p654 = scmp.le.s32.totalorder 1, %s40
      %p655 = scmp.lt.s32.totalorder %s40, 3
      %p656 = pnand %p654, %p655
      %p657 = pneg %p656
      // Predicated region
      $region81: #{tpu_custom_call.1} parent=5 // pred_check
        _
      $region82: #{tpu_custom_call.1} parent=5 // pred_check_branch
        %659 = sbr.rel (%p656) target = $region84
      $region83: #{tpu_custom_call.1} parent=5 // pred_region
        %s660 = ssub.s32 %s40, 1
        %s661 = sand.u32 %s105, 1
        %s662 = scalar_lea.sflag [#allocation3], %s661
        %s663 = sand.u32 %s105, 1
        %s664 = smul.addr %s663, 128
        %s665 = scalar_lea.vmem [#allocation2], %s664
        // Predicated region
        $region85: #{tpu_custom_call.1} parent=83 // pred_check
          %p666 = pneg %p118
        $region86: #{tpu_custom_call.1} parent=83 // pred_check_branch
          %668 = sbr.rel (%p666) target = $region88
        $region87: #{tpu_custom_call.1} parent=83 // pred_region
          %670 = dma.done %s662, 2048
        $region88: #{tpu_custom_call.1} parent=83 // pred_fallthru
          _
        %s671 = sand.u32 %s45, 1
        %s672 = scalar_lea.sflag [#allocation6], %s671
        %s673 = sand.u32 %s131, 1
        %s674 = smul.addr %s673, 128
        %s675 = scalar_lea.vmem [#allocation5], %s674
        // Predicated region
        $region89: #{tpu_custom_call.1} parent=83 // pred_check
          %p676 = pneg %p144
        $region90: #{tpu_custom_call.1} parent=83 // pred_check_branch
          %678 = sbr.rel (%p676) target = $region92
        $region91: #{tpu_custom_call.1} parent=83 // pred_region
          %680 = dma.done %s672, 2048
        $region92: #{tpu_custom_call.1} parent=83 // pred_fallthru
          _
        %s681 = sand.u32 %s45, 1
        %s682 = scalar_lea.sflag [#allocation6], %s681
        %s683 = sand.u32 %s183, 1
        %s684 = smul.addr %s683, 128
        %s685 = scalar_lea.vmem [#allocation7], %s684
        // Predicated region
        $region93: #{tpu_custom_call.1} parent=83 // pred_check
          %p686 = pneg %p196
        $region94: #{tpu_custom_call.1} parent=83 // pred_check_branch
          %688 = sbr.rel (%p686) target = $region96
        $region95: #{tpu_custom_call.1} parent=83 // pred_region
          %690 = dma.done %s682, 2048
        $region96: #{tpu_custom_call.1} parent=83 // pred_fallthru
          _
        %s691 = sand.u32 %s45, 1
        %s692 = scalar_lea.sflag [#allocation9], %s691
        %s693 = sand.u32 %s209, 1
        %s694 = smul.addr %s693, 256
        %s695 = scalar_lea.vmem [#allocation8], %s694
        // Predicated region
        $region97: #{tpu_custom_call.1} parent=83 // pred_check
          %p696 = pneg %p222
        $region98: #{tpu_custom_call.1} parent=83 // pred_check_branch
          %698 = sbr.rel (%p696) target = $region100
        $region99: #{tpu_custom_call.1} parent=83 // pred_region
          %700 = dma.done %s692, 4096
        $region100: #{tpu_custom_call.1} parent=83 // pred_fallthru
          _
        // Predicated region
        $region101: #{tpu_custom_call.1} parent=83 // pred_check
          %p701 = pneg %p264
        $region102: #{tpu_custom_call.1} parent=83 // pred_check_branch
          %703 = sbr.rel (%p701) target = $region104
        $region103: #{tpu_custom_call.1} parent=83 // pred_region
          %705 = dma.done [#allocation9], 3072
        $region104: #{tpu_custom_call.1} parent=83 // pred_fallthru
          _
        // Predicated region
        $region105: #{tpu_custom_call.1} parent=83 // pred_check
          %p706 = pneg %p348
        $region106: #{tpu_custom_call.1} parent=83 // pred_check_branch
          %708 = sbr.rel (%p706) target = $region108
        $region107: #{tpu_custom_call.1} parent=83 // pred_region
          %710 = dma.done [#allocation12], 3072
        $region108: #{tpu_custom_call.1} parent=83 // pred_fallthru
          _
        // Predicated region
        $region109: #{tpu_custom_call.1} parent=83 // pred_check
          %p711 = pneg %p390
        $region110: #{tpu_custom_call.1} parent=83 // pred_check_branch
          %713 = sbr.rel (%p711) target = $region112
        $region111: #{tpu_custom_call.1} parent=83 // pred_region
          %715 = dma.done [#allocation12], 3072
        $region112: #{tpu_custom_call.1} parent=83 // pred_fallthru
          _
        %p716 = scmp.lt.s32.totalorder %s45, 1
        %s717 = scalar_select %p716, %s45, 1
        %s718 = smul.addr %s717, 32
        %s719 = smul.addr %s718, 4
        %s720 = scalar_lea.vmem %s0, %s719
        %p721 = pneg %p66
        %p722 = pneg %p63
        %p723 = scmp.lt.s32.totalorder %s45, 1
        %s724 = scalar_select %p723, %s45, 1
        %s725 = smul.addr %s724, 32
        %s726 = smul.addr %s725, 4
        %s727 = scalar_lea.vmem %s1, %s726
        %p728 = pneg %p92
        %p729 = pneg %p89
        %s730 = sand.u32 %s105, 1
        %s731 = scalar_lea.sflag [#allocation3], %s730
        %s732 = sand.u32 %s105, 1
        %s733 = smul.addr %s732, 128
        %s734 = scalar_lea.vmem [#allocation2], %s733
        %p735 = pneg %p118
        %p736 = pneg %p115
        %s737 = sand.u32 %s45, 1
        %s738 = scalar_lea.sflag [#allocation6], %s737
        %s739 = sand.u32 %s131, 1
        %s740 = smul.addr %s739, 128
        %s741 = scalar_lea.vmem [#allocation5], %s740
        %p742 = pneg %p144
        %p743 = pneg %p141
        %p744 = scmp.lt.s32.totalorder %s45, 1
        %s745 = scalar_select %p744, %s45, 1
        %s746 = smul.addr %s745, 16
        %s747 = smul.addr %s746, 8
        %s748 = scalar_lea.vmem %s4, %s747
        %p749 = pneg %p170
        %p750 = pneg %p167
        %s751 = sand.u32 %s45, 1
        %s752 = scalar_lea.sflag [#allocation6], %s751
        %s753 = sand.u32 %s183, 1
        %s754 = smul.addr %s753, 128
        %s755 = scalar_lea.vmem [#allocation7], %s754
        %p756 = pneg %p196
        %p757 = pneg %p193
        %s758 = sand.u32 %s45, 1
        %s759 = scalar_lea.sflag [#allocation9], %s758
        %s760 = sand.u32 %s209, 1
        %s761 = smul.addr %s760, 256
        %s762 = scalar_lea.vmem [#allocation8], %s761
        %p763 = pneg %p222
        %p764 = pneg %p219
        %p765 = pneg %p243
        %p766 = pneg %p240
        %p767 = pneg %p264
        %p768 = pneg %p261
        %p769 = pneg %p285
        %p770 = pneg %p282
        %p771 = pneg %p306
        %p772 = pneg %p303
        %p773 = pneg %p327
        %p774 = pneg %p324
        %p775 = pneg %p348
        %p776 = pneg %p345
        %p777 = pneg %p369
        %p778 = pneg %p366
        %p779 = pneg %p390
        %p780 = pneg %p387
        %p781 = pneg %p411
        %p782 = pneg %p408
        %p783 = pneg %p437
        %p784 = pneg %p434
        %s785 = sand.u32 %s424, 1
        %s786 = scalar_lea.sflag [#allocation4], %s785
        %s787 = sand.u32 %s424, 1
        %s788 = smul.addr %s787, 128
        %s789 = scalar_lea.vmem [#allocation14], %s788
        %p790 = pneg %p463
        %p791 = pneg %p460
        %s792 = sand.u32 %s450, 1
        %s793 = scalar_lea.sflag [#allocation16], %s792
        %s794 = sand.u32 %s450, 1
        %s795 = smul.addr %s794, 256
        %s796 = scalar_lea.vmem [#allocation15], %s795
        %p797 = scmp.lt.s32.totalorder %s45, 1
        %s798 = scalar_select %p797, %s45, 1
        %s799 = smul.addr %s798, 32
        %s800 = smul.addr %s799, 4
        %s801 = scalar_lea.vmem %s0, %s800
        %p802 = scmp.lt.s32.totalorder %s45, 1
        %s803 = scalar_select %p802, %s45, 1
        %s804 = smul.addr %s803, 32
        %s805 = smul.addr %s804, 4
        %s806 = scalar_lea.vmem %s1, %s805
        %p807 = scmp.lt.s32.totalorder %s45, 1
        %s808 = scalar_select %p807, %s45, 1
        %s809 = smul.addr %s808, 16
        %s810 = smul.addr %s809, 8
        %s811 = scalar_lea.vmem %s4, %s810
        %v812 = vld [vmem:[%s801] sm:$0xf]
        %v813 = vld [vmem:[%s801 + $0x4] sm:$0xf]
        %v814 = vld [vmem:[%s801 + $0x8] sm:$0xf]
        %v815 = vld [vmem:[%s801 + $0xc] sm:$0xf]
        %v816 = vld [vmem:[%s801 + $0x10] sm:$0xf]
        %v817 = vld [vmem:[%s801 + $0x14] sm:$0xf]
        %v818 = vld [vmem:[%s801 + $0x18] sm:$0xf]
        %v819 = vld [vmem:[%s801 + $0x1c] sm:$0xf]
        %v820 = vld [vmem:[%s801 + $0x20] sm:$0xf]
        %v821 = vld [vmem:[%s801 + $0x24] sm:$0xf]
        %v822 = vld [vmem:[%s801 + $0x28] sm:$0xf]
        %v823 = vld [vmem:[%s801 + $0x2c] sm:$0xf]
        %v824 = vld [vmem:[%s801 + $0x30] sm:$0xf]
        %v825 = vld [vmem:[%s801 + $0x34] sm:$0xf]
        %v826 = vld [vmem:[%s801 + $0x38] sm:$0xf]
        %v827 = vld [vmem:[%s801 + $0x3c] sm:$0xf]
        %v828 = vld [vmem:[%s801 + $0x40] sm:$0xf]
        %v829 = vld [vmem:[%s801 + $0x44] sm:$0xf]
        %v830 = vld [vmem:[%s801 + $0x48] sm:$0xf]
        %v831 = vld [vmem:[%s801 + $0x4c] sm:$0xf]
        %v832 = vld [vmem:[%s801 + $0x50] sm:$0xf]
        %v833 = vld [vmem:[%s801 + $0x54] sm:$0xf]
        %v834 = vld [vmem:[%s801 + $0x58] sm:$0xf]
        %v835 = vld [vmem:[%s801 + $0x5c] sm:$0xf]
        %v836 = vld [vmem:[%s801 + $0x60] sm:$0xf]
        %v837 = vld [vmem:[%s801 + $0x64] sm:$0xf]
        %v838 = vld [vmem:[%s801 + $0x68] sm:$0xf]
        %v839 = vld [vmem:[%s801 + $0x6c] sm:$0xf]
        %v840 = vld [vmem:[%s801 + $0x70] sm:$0xf]
        %v841 = vld [vmem:[%s801 + $0x74] sm:$0xf]
        %v842 = vld [vmem:[%s801 + $0x78] sm:$0xf]
        %v843 = vld [vmem:[%s801 + $0x7c] sm:$0xf]
        %v844 = vld [vmem:[%s806] sm:$0xf]
        %v845 = vld [vmem:[%s806 + $0x4] sm:$0xf]
        %v846 = vld [vmem:[%s806 + $0x8] sm:$0xf]
        %v847 = vld [vmem:[%s806 + $0xc] sm:$0xf]
        %v848 = vld [vmem:[%s806 + $0x10] sm:$0xf]
        %v849 = vld [vmem:[%s806 + $0x14] sm:$0xf]
        %v850 = vld [vmem:[%s806 + $0x18] sm:$0xf]
        %v851 = vld [vmem:[%s806 + $0x1c] sm:$0xf]
        %v852 = vld [vmem:[%s806 + $0x20] sm:$0xf]
        %v853 = vld [vmem:[%s806 + $0x24] sm:$0xf]
        %v854 = vld [vmem:[%s806 + $0x28] sm:$0xf]
        %v855 = vld [vmem:[%s806 + $0x2c] sm:$0xf]
        %v856 = vld [vmem:[%s806 + $0x30] sm:$0xf]
        %v857 = vld [vmem:[%s806 + $0x34] sm:$0xf]
        %v858 = vld [vmem:[%s806 + $0x38] sm:$0xf]
        %v859 = vld [vmem:[%s806 + $0x3c] sm:$0xf]
        %v860 = vld [vmem:[%s806 + $0x40] sm:$0xf]
        %v861 = vld [vmem:[%s806 + $0x44] sm:$0xf]
        %v862 = vld [vmem:[%s806 + $0x48] sm:$0xf]
        %v863 = vld [vmem:[%s806 + $0x4c] sm:$0xf]
        %v864 = vld [vmem:[%s806 + $0x50] sm:$0xf]
        %v865 = vld [vmem:[%s806 + $0x54] sm:$0xf]
        %v866 = vld [vmem:[%s806 + $0x58] sm:$0xf]
        %v867 = vld [vmem:[%s806 + $0x5c] sm:$0xf]
        %v868 = vld [vmem:[%s806 + $0x60] sm:$0xf]
        %v869 = vld [vmem:[%s806 + $0x64] sm:$0xf]
        %v870 = vld [vmem:[%s806 + $0x68] sm:$0xf]
        %v871 = vld [vmem:[%s806 + $0x6c] sm:$0xf]
        %v872 = vld [vmem:[%s806 + $0x70] sm:$0xf]
        %v873 = vld [vmem:[%s806 + $0x74] sm:$0xf]
        %v874 = vld [vmem:[%s806 + $0x78] sm:$0xf]
        %v875 = vld [vmem:[%s806 + $0x7c] sm:$0xf]
        %v876 = vld [vmem:[%s665] sm:$0xff]
        %v877 = vld [vmem:[%s665 + $0x8] sm:$0xff]
        %v878 = vld [vmem:[%s665 + $0x10] sm:$0xff]
        %v879 = vld [vmem:[%s665 + $0x18] sm:$0xff]
        %v880 = vld [vmem:[%s665 + $0x20] sm:$0xff]
        %v881 = vld [vmem:[%s665 + $0x28] sm:$0xff]
        %v882 = vld [vmem:[%s665 + $0x30] sm:$0xff]
        %v883 = vld [vmem:[%s665 + $0x38] sm:$0xff]
        %v884 = vld [vmem:[%s665 + $0x40] sm:$0xff]
        %v885 = vld [vmem:[%s665 + $0x48] sm:$0xff]
        %v886 = vld [vmem:[%s665 + $0x50] sm:$0xff]
        %v887 = vld [vmem:[%s665 + $0x58] sm:$0xff]
        %v888 = vld [vmem:[%s665 + $0x60] sm:$0xff]
        %v889 = vld [vmem:[%s665 + $0x68] sm:$0xff]
        %v890 = vld [vmem:[%s665 + $0x70] sm:$0xff]
        %v891 = vld [vmem:[%s665 + $0x78] sm:$0xff]
        %v892 = vld [vmem:[%s675] sm:$0xff]
        %v893 = vld [vmem:[%s675 + $0x8] sm:$0xff]
        %v894 = vld [vmem:[%s675 + $0x10] sm:$0xff]
        %v895 = vld [vmem:[%s675 + $0x18] sm:$0xff]
        %v896 = vld [vmem:[%s675 + $0x20] sm:$0xff]
        %v897 = vld [vmem:[%s675 + $0x28] sm:$0xff]
        %v898 = vld [vmem:[%s675 + $0x30] sm:$0xff]
        %v899 = vld [vmem:[%s675 + $0x38] sm:$0xff]
        %v900 = vld [vmem:[%s675 + $0x40] sm:$0xff]
        %v901 = vld [vmem:[%s675 + $0x48] sm:$0xff]
        %v902 = vld [vmem:[%s675 + $0x50] sm:$0xff]
        %v903 = vld [vmem:[%s675 + $0x58] sm:$0xff]
        %v904 = vld [vmem:[%s675 + $0x60] sm:$0xff]
        %v905 = vld [vmem:[%s675 + $0x68] sm:$0xff]
        %v906 = vld [vmem:[%s675 + $0x70] sm:$0xff]
        %v907 = vld [vmem:[%s675 + $0x78] sm:$0xff]
        %v908 = vld [vmem:[%s811] sm:$0xff]
        %v909 = vld [vmem:[%s811 + $0x8] sm:$0xff]
        %v910 = vld [vmem:[%s811 + $0x10] sm:$0xff]
        %v911 = vld [vmem:[%s811 + $0x18] sm:$0xff]
        %v912 = vld [vmem:[%s811 + $0x20] sm:$0xff]
        %v913 = vld [vmem:[%s811 + $0x28] sm:$0xff]
        %v914 = vld [vmem:[%s811 + $0x30] sm:$0xff]
        %v915 = vld [vmem:[%s811 + $0x38] sm:$0xff]
        %v916 = vld [vmem:[%s811 + $0x40] sm:$0xff]
        %v917 = vld [vmem:[%s811 + $0x48] sm:$0xff]
        %v918 = vld [vmem:[%s811 + $0x50] sm:$0xff]
        %v919 = vld [vmem:[%s811 + $0x58] sm:$0xff]
        %v920 = vld [vmem:[%s811 + $0x60] sm:$0xff]
        %v921 = vld [vmem:[%s811 + $0x68] sm:$0xff]
        %v922 = vld [vmem:[%s811 + $0x70] sm:$0xff]
        %v923 = vld [vmem:[%s811 + $0x78] sm:$0xff]
        %v924 = vld [vmem:[%s685] sm:$0xff]
        %v925 = vld [vmem:[%s685 + $0x8] sm:$0xff]
        %v926 = vld [vmem:[%s685 + $0x10] sm:$0xff]
        %v927 = vld [vmem:[%s685 + $0x18] sm:$0xff]
        %v928 = vld [vmem:[%s685 + $0x20] sm:$0xff]
        %v929 = vld [vmem:[%s685 + $0x28] sm:$0xff]
        %v930 = vld [vmem:[%s685 + $0x30] sm:$0xff]
        %v931 = vld [vmem:[%s685 + $0x38] sm:$0xff]
        %v932 = vld [vmem:[%s685 + $0x40] sm:$0xff]
        %v933 = vld [vmem:[%s685 + $0x48] sm:$0xff]
        %v934 = vld [vmem:[%s685 + $0x50] sm:$0xff]
        %v935 = vld [vmem:[%s685 + $0x58] sm:$0xff]
        %v936 = vld [vmem:[%s685 + $0x60] sm:$0xff]
        %v937 = vld [vmem:[%s685 + $0x68] sm:$0xff]
        %v938 = vld [vmem:[%s685 + $0x70] sm:$0xff]
        %v939 = vld [vmem:[%s685 + $0x78] sm:$0xff]
        %v940 = vld [vmem:[%s695] sm:$0xff]
        %v941 = vld [vmem:[%s695 + $0x8] sm:$0xff]
        %v942 = vld [vmem:[%s695 + $0x10] sm:$0xff]
        %v943 = vld [vmem:[%s695 + $0x18] sm:$0xff]
        %v944 = vld [vmem:[%s695 + $0x20] sm:$0xff]
        %v945 = vld [vmem:[%s695 + $0x28] sm:$0xff]
        %v946 = vld [vmem:[%s695 + $0x30] sm:$0xff]
        %v947 = vld [vmem:[%s695 + $0x38] sm:$0xff]
        %v948 = vld [vmem:[%s695 + $0x40] sm:$0xff]
        %v949 = vld [vmem:[%s695 + $0x48] sm:$0xff]
        %v950 = vld [vmem:[%s695 + $0x50] sm:$0xff]
        %v951 = vld [vmem:[%s695 + $0x58] sm:$0xff]
        %v952 = vld [vmem:[%s695 + $0x60] sm:$0xff]
        %v953 = vld [vmem:[%s695 + $0x68] sm:$0xff]
        %v954 = vld [vmem:[%s695 + $0x70] sm:$0xff]
        %v955 = vld [vmem:[%s695 + $0x78] sm:$0xff]
        %v956 = vld [vmem:[%s695 + $0x80] sm:$0xff]
        %v957 = vld [vmem:[%s695 + $0x88] sm:$0xff]
        %v958 = vld [vmem:[%s695 + $0x90] sm:$0xff]
        %v959 = vld [vmem:[%s695 + $0x98] sm:$0xff]
        %v960 = vld [vmem:[%s695 + $0xa0] sm:$0xff]
        %v961 = vld [vmem:[%s695 + $0xa8] sm:$0xff]
        %v962 = vld [vmem:[%s695 + $0xb0] sm:$0xff]
        %v963 = vld [vmem:[%s695 + $0xb8] sm:$0xff]
        %v964 = vld [vmem:[%s695 + $0xc0] sm:$0xff]
        %v965 = vld [vmem:[%s695 + $0xc8] sm:$0xff]
        %v966 = vld [vmem:[%s695 + $0xd0] sm:$0xff]
        %v967 = vld [vmem:[%s695 + $0xd8] sm:$0xff]
        %v968 = vld [vmem:[%s695 + $0xe0] sm:$0xff]
        %v969 = vld [vmem:[%s695 + $0xe8] sm:$0xff]
        %v970 = vld [vmem:[%s695 + $0xf0] sm:$0xff]
        %v971 = vld [vmem:[%s695 + $0xf8] sm:$0xff]
        %v972 = vpack.c.bf16 %v925, %v924
        %v973 = vpack.c.bf16 %v927, %v926
        %v974 = vpack.c.bf16 %v929, %v928
        %v975 = vpack.c.bf16 %v931, %v930
        %v976 = vpack.c.bf16 %v933, %v932
        %v977 = vpack.c.bf16 %v935, %v934
        %v978 = vpack.c.bf16 %v937, %v936
        %v979 = vpack.c.bf16 %v939, %v938
        %v980 = vpack.c.bf16 %v941, %v940
        %v981 = vpack.c.bf16 %v943, %v942
        %v982 = vpack.c.bf16 %v945, %v944
        %v983 = vpack.c.bf16 %v947, %v946
        %v984 = vpack.c.bf16 %v949, %v948
        %v985 = vpack.c.bf16 %v951, %v950
        %v986 = vpack.c.bf16 %v953, %v952
        %v987 = vpack.c.bf16 %v955, %v954
        %v988 = vpack.c.bf16 %v957, %v956
        %v989 = vpack.c.bf16 %v959, %v958
        %v990 = vpack.c.bf16 %v961, %v960
        %v991 = vpack.c.bf16 %v963, %v962
        %v992 = vpack.c.bf16 %v965, %v964
        %v993 = vpack.c.bf16 %v967, %v966
        %v994 = vpack.c.bf16 %v969, %v968
        %v995 = vpack.c.bf16 %v971, %v970
        %v996 = vld [vmem:[%s7] sm:$0xff]
        %v997 = vld [vmem:[%s7 + $0x8] sm:$0xff]
        %v998 = vld [vmem:[%s7 + $0x10] sm:$0xff]
        %v999 = vld [vmem:[%s7 + $0x18] sm:$0xff]
        %v1000 = vld [vmem:[%s7 + $0x20] sm:$0xff]
        %v1001 = vld [vmem:[%s7 + $0x28] sm:$0xff]
        %v1002 = vld [vmem:[%s7 + $0x30] sm:$0xff]
        %v1003 = vld [vmem:[%s7 + $0x38] sm:$0xff]
        %v1004 = vld [vmem:[%s7 + $0x40] sm:$0xff]
        %v1005 = vld [vmem:[%s7 + $0x48] sm:$0xff]
        %v1006 = vld [vmem:[%s7 + $0x50] sm:$0xff]
        %v1007 = vld [vmem:[%s7 + $0x58] sm:$0xff]
        %v1008 = vld [vmem:[%s7 + $0x60] sm:$0xff]
        %v1009 = vld [vmem:[%s7 + $0x68] sm:$0xff]
        %v1010 = vld [vmem:[%s7 + $0x70] sm:$0xff]
        %v1011 = vld [vmem:[%s7 + $0x78] sm:$0xff]
        %v1028 = vunpack.c.l.b16 %v996
        %v1029 = vunpack.c.h.b16 %v996
        %v1030 = vunpack.c.l.b16 %v997
        %v1031 = vunpack.c.h.b16 %v997
        %v1032 = vunpack.c.l.b16 %v998
        %v1033 = vunpack.c.h.b16 %v998
        %v1034 = vunpack.c.l.b16 %v999
        %v1035 = vunpack.c.h.b16 %v999
        %v1036 = vunpack.c.l.b16 %v1000
        %v1037 = vunpack.c.h.b16 %v1000
        %v1038 = vunpack.c.l.b16 %v1001
        %v1039 = vunpack.c.h.b16 %v1001
        %v1040 = vunpack.c.l.b16 %v1002
        %v1041 = vunpack.c.h.b16 %v1002
        %v1042 = vunpack.c.l.b16 %v1003
        %v1043 = vunpack.c.h.b16 %v1003
        %v1044 = vunpack.c.l.b16 %v1004
        %v1045 = vunpack.c.h.b16 %v1004
        %v1046 = vunpack.c.l.b16 %v1005
        %v1047 = vunpack.c.h.b16 %v1005
        %v1048 = vunpack.c.l.b16 %v1006
        %v1049 = vunpack.c.h.b16 %v1006
        %v1050 = vunpack.c.l.b16 %v1007
        %v1051 = vunpack.c.h.b16 %v1007
        %v1052 = vunpack.c.l.b16 %v1008
        %v1053 = vunpack.c.h.b16 %v1008
        %v1054 = vunpack.c.l.b16 %v1009
        %v1055 = vunpack.c.h.b16 %v1009
        %v1056 = vunpack.c.l.b16 %v1010
        %v1057 = vunpack.c.h.b16 %v1010
        %v1058 = vunpack.c.l.b16 %v1011
        %v1059 = vunpack.c.h.b16 %v1011
        %v1060 = vpack.c.b16 %v1030, %v1028
        %v1061 = vpack.c.b16 %v1031, %v1029
        %v1062 = vpack.c.b16 %v1034, %v1032
        %v1063 = vpack.c.b16 %v1035, %v1033
        %v1064 = vpack.c.b16 %v1038, %v1036
        %v1065 = vpack.c.b16 %v1039, %v1037
        %v1066 = vpack.c.b16 %v1042, %v1040
        %v1067 = vpack.c.b16 %v1043, %v1041
        %v1068 = vpack.c.b16 %v1046, %v1044
        %v1069 = vpack.c.b16 %v1047, %v1045
        %v1070 = vpack.c.b16 %v1050, %v1048
        %v1071 = vpack.c.b16 %v1051, %v1049
        %v1072 = vpack.c.b16 %v1054, %v1052
        %v1073 = vpack.c.b16 %v1055, %v1053
        %v1074 = vpack.c.b16 %v1058, %v1056
        %v1075 = vpack.c.b16 %v1059, %v1057
        %1092 = vmatpush.bf16.msra.mxu0 %v1074
        %1093 = vmatpush.bf16.msra.mxu0 %v1072
        %1094 = vmatpush.bf16.msra.mxu0 %v1070
        %1095 = vmatpush.bf16.msra.mxu0 %v1068
        %1096 = vmatpush.bf16.msra.mxu0 %v1066
        %1097 = vmatpush.bf16.msra.mxu0 %v1064
        %1098 = vmatpush.bf16.msra.mxu0 %v1062
        %1099 = vmatpush.bf16.msra.mxu0 %v1060
        %1100 = vmatmul.bf16.gmra.mxu0 %v972
        %v1101 = vpop.f32.mrf.mxu0
        %v1102 = vadd.f32 0.0, %v1101
        %v1103 = vpop.f32.mrf.mxu0
        %v1104 = vadd.f32 0.0, %v1103
        %1105 = vmatmul.bf16.gmra.mxu0 %v973
        %v1106 = vpop.f32.mrf.mxu0
        %v1107 = vadd.f32 0.0, %v1106
        %v1108 = vpop.f32.mrf.mxu0
        %v1109 = vadd.f32 0.0, %v1108
        %1110 = vmatmul.bf16.gmra.mxu0 %v974
        %v1111 = vpop.f32.mrf.mxu0
        %v1112 = vadd.f32 0.0, %v1111
        %v1113 = vpop.f32.mrf.mxu0
        %v1114 = vadd.f32 0.0, %v1113
        %1115 = vmatmul.bf16.gmra.mxu0 %v975
        %v1116 = vpop.f32.mrf.mxu0
        %v1117 = vadd.f32 0.0, %v1116
        %v1118 = vpop.f32.mrf.mxu0
        %v1119 = vadd.f32 0.0, %v1118
        %1120 = vmatmul.bf16.gmra.mxu0 %v976
        %v1121 = vpop.f32.mrf.mxu0
        %v1122 = vadd.f32 0.0, %v1121
        %v1123 = vpop.f32.mrf.mxu0
        %v1124 = vadd.f32 0.0, %v1123
        %1125 = vmatmul.bf16.gmra.mxu0 %v977
        %v1126 = vpop.f32.mrf.mxu0
        %v1127 = vadd.f32 0.0, %v1126
        %v1128 = vpop.f32.mrf.mxu0
        %v1129 = vadd.f32 0.0, %v1128
        %1130 = vmatmul.bf16.gmra.mxu0 %v978
        %v1131 = vpop.f32.mrf.mxu0
        %v1132 = vadd.f32 0.0, %v1131
        %v1133 = vpop.f32.mrf.mxu0
        %v1134 = vadd.f32 0.0, %v1133
        %1135 = vmatmul.bf16.gmra.mxu0 %v979
        %v1136 = vpop.f32.mrf.mxu0
        %v1137 = vadd.f32 0.0, %v1136
        %v1138 = vpop.f32.mrf.mxu0
        %v1139 = vadd.f32 0.0, %v1138
        %1140 = vdwg.mxu0
        %1141 = vmatpush.bf16.msra.mxu0 %v1075
        %1142 = vmatpush.bf16.msra.mxu0 %v1073
        %1143 = vmatpush.bf16.msra.mxu0 %v1071
        %1144 = vmatpush.bf16.msra.mxu0 %v1069
        %1145 = vmatpush.bf16.msra.mxu0 %v1067
        %1146 = vmatpush.bf16.msra.mxu0 %v1065
        %1147 = vmatpush.bf16.msra.mxu0 %v1063
        %1148 = vmatpush.bf16.msra.mxu0 %v1061
        %1149 = vmatmul.bf16.gmra.mxu0 %v972
        %v1150 = vpop.f32.mrf.mxu0
        %v1151 = vadd.f32 0.0, %v1150
        %v1152 = vpop.f32.mrf.mxu0
        %v1153 = vadd.f32 0.0, %v1152
        %1154 = vmatmul.bf16.gmra.mxu0 %v973
        %v1155 = vpop.f32.mrf.mxu0
        %v1156 = vadd.f32 0.0, %v1155
        %v1157 = vpop.f32.mrf.mxu0
        %v1158 = vadd.f32 0.0, %v1157
        %1159 = vmatmul.bf16.gmra.mxu0 %v974
        %v1160 = vpop.f32.mrf.mxu0
        %v1161 = vadd.f32 0.0, %v1160
        %v1162 = vpop.f32.mrf.mxu0
        %v1163 = vadd.f32 0.0, %v1162
        %1164 = vmatmul.bf16.gmra.mxu0 %v975
        %v1165 = vpop.f32.mrf.mxu0
        %v1166 = vadd.f32 0.0, %v1165
        %v1167 = vpop.f32.mrf.mxu0
        %v1168 = vadd.f32 0.0, %v1167
        %1169 = vmatmul.bf16.gmra.mxu0 %v976
        %v1170 = vpop.f32.mrf.mxu0
        %v1171 = vadd.f32 0.0, %v1170
        %v1172 = vpop.f32.mrf.mxu0
        %v1173 = vadd.f32 0.0, %v1172
        %1174 = vmatmul.bf16.gmra.mxu0 %v977
        %v1175 = vpop.f32.mrf.mxu0
        %v1176 = vadd.f32 0.0, %v1175
        %v1177 = vpop.f32.mrf.mxu0
        %v1178 = vadd.f32 0.0, %v1177
        %1179 = vmatmul.bf16.gmra.mxu0 %v978
        %v1180 = vpop.f32.mrf.mxu0
        %v1181 = vadd.f32 0.0, %v1180
        %v1182 = vpop.f32.mrf.mxu0
        %v1183 = vadd.f32 0.0, %v1182
        %1184 = vmatmul.bf16.gmra.mxu0 %v979
        %v1185 = vpop.f32.mrf.mxu0
        %v1186 = vadd.f32 0.0, %v1185
        %v1187 = vpop.f32.mrf.mxu0
        %v1188 = vadd.f32 0.0, %v1187
        %1189 = vdwg.mxu0
        %v1190 = vpack.c.bf16 %v1104, %v1102
        %v1191 = vpack.c.bf16 %v1109, %v1107
        %v1192 = vpack.c.bf16 %v1114, %v1112
        %v1193 = vpack.c.bf16 %v1119, %v1117
        %v1194 = vpack.c.bf16 %v1124, %v1122
        %v1195 = vpack.c.bf16 %v1129, %v1127
        %v1196 = vpack.c.bf16 %v1134, %v1132
        %v1197 = vpack.c.bf16 %v1139, %v1137
        %v1198 = vpack.c.bf16 %v1153, %v1151
        %v1199 = vpack.c.bf16 %v1158, %v1156
        %v1200 = vpack.c.bf16 %v1163, %v1161
        %v1201 = vpack.c.bf16 %v1168, %v1166
        %v1202 = vpack.c.bf16 %v1173, %v1171
        %v1203 = vpack.c.bf16 %v1178, %v1176
        %v1204 = vpack.c.bf16 %v1183, %v1181
        %v1205 = vpack.c.bf16 %v1188, %v1186
        %v1238 = vunpack.c.l.b16 %v844
        %v1239 = vunpack.c.l.b16 %v845
        %v1240 = vunpack.c.l.b16 %v846
        %v1241 = vunpack.c.l.b16 %v847
        %v1242 = vunpack.c.l.b16 %v848
        %v1243 = vunpack.c.l.b16 %v849
        %v1244 = vunpack.c.l.b16 %v850
        %v1245 = vunpack.c.l.b16 %v851
        %v1246 = vunpack.c.l.b16 %v852
        %v1247 = vunpack.c.l.b16 %v853
        %v1248 = vunpack.c.l.b16 %v854
        %v1249 = vunpack.c.l.b16 %v855
        %v1250 = vunpack.c.l.b16 %v856
        %v1251 = vunpack.c.l.b16 %v857
        %v1252 = vunpack.c.l.b16 %v858
        %v1253 = vunpack.c.l.b16 %v859
        %v1254 = vunpack.c.l.b16 %v860
        %v1255 = vunpack.c.l.b16 %v861
        %v1256 = vunpack.c.l.b16 %v862
        %v1257 = vunpack.c.l.b16 %v863
        %v1258 = vunpack.c.l.b16 %v864
        %v1259 = vunpack.c.l.b16 %v865
        %v1260 = vunpack.c.l.b16 %v866
        %v1261 = vunpack.c.l.b16 %v867
        %v1262 = vunpack.c.l.b16 %v868
        %v1263 = vunpack.c.l.b16 %v869
        %v1264 = vunpack.c.l.b16 %v870
        %v1265 = vunpack.c.l.b16 %v871
        %v1266 = vunpack.c.l.b16 %v872
        %v1267 = vunpack.c.l.b16 %v873
        %v1268 = vunpack.c.l.b16 %v874
        %v1269 = vunpack.c.l.b16 %v875
        %v1270 = vpack.c.b16 %v1239, %v1238
        %v1271 = vpack.c.b16 %v1241, %v1240
        %v1272 = vpack.c.b16 %v1243, %v1242
        %v1273 = vpack.c.b16 %v1245, %v1244
        %v1274 = vpack.c.b16 %v1247, %v1246
        %v1275 = vpack.c.b16 %v1249, %v1248
        %v1276 = vpack.c.b16 %v1251, %v1250
        %v1277 = vpack.c.b16 %v1253, %v1252
        %v1278 = vpack.c.b16 %v1255, %v1254
        %v1279 = vpack.c.b16 %v1257, %v1256
        %v1280 = vpack.c.b16 %v1259, %v1258
        %v1281 = vpack.c.b16 %v1261, %v1260
        %v1282 = vpack.c.b16 %v1263, %v1262
        %v1283 = vpack.c.b16 %v1265, %v1264
        %v1284 = vpack.c.b16 %v1267, %v1266
        %v1285 = vpack.c.b16 %v1269, %v1268
        %1302 = vmatpush.bf16.msra.mxu0 %v1205
        %1303 = vmatpush.bf16.msra.mxu0 %v1204
        %1304 = vmatpush.bf16.msra.mxu0 %v1203
        %1305 = vmatpush.bf16.msra.mxu0 %v1202
        %1306 = vmatpush.bf16.msra.mxu0 %v1201
        %1307 = vmatpush.bf16.msra.mxu0 %v1200
        %1308 = vmatpush.bf16.msra.mxu0 %v1199
        %1309 = vmatpush.bf16.msra.mxu0 %v1198
        %1310 = vmatmul.bf16.gmra.mxu0 %v1270
        %v1311 = vpop.f32.mrf.mxu0
        %v1312 = vadd.f32 0.0, %v1311
        %v1313 = vpop.f32.mrf.mxu0
        %v1314 = vadd.f32 0.0, %v1313
        %1315 = vmatmul.bf16.gmra.mxu0 %v1271
        %v1316 = vpop.f32.mrf.mxu0
        %v1317 = vadd.f32 0.0, %v1316
        %v1318 = vpop.f32.mrf.mxu0
        %v1319 = vadd.f32 0.0, %v1318
        %1320 = vmatmul.bf16.gmra.mxu0 %v1272
        %v1321 = vpop.f32.mrf.mxu0
        %v1322 = vadd.f32 0.0, %v1321
        %v1323 = vpop.f32.mrf.mxu0
        %v1324 = vadd.f32 0.0, %v1323
        %1325 = vmatmul.bf16.gmra.mxu0 %v1273
        %v1326 = vpop.f32.mrf.mxu0
        %v1327 = vadd.f32 0.0, %v1326
        %v1328 = vpop.f32.mrf.mxu0
        %v1329 = vadd.f32 0.0, %v1328
        %1330 = vmatmul.bf16.gmra.mxu0 %v1274
        %v1331 = vpop.f32.mrf.mxu0
        %v1332 = vadd.f32 0.0, %v1331
        %v1333 = vpop.f32.mrf.mxu0
        %v1334 = vadd.f32 0.0, %v1333
        %1335 = vmatmul.bf16.gmra.mxu0 %v1275
        %v1336 = vpop.f32.mrf.mxu0
        %v1337 = vadd.f32 0.0, %v1336
        %v1338 = vpop.f32.mrf.mxu0
        %v1339 = vadd.f32 0.0, %v1338
        %1340 = vmatmul.bf16.gmra.mxu0 %v1276
        %v1341 = vpop.f32.mrf.mxu0
        %v1342 = vadd.f32 0.0, %v1341
        %v1343 = vpop.f32.mrf.mxu0
        %v1344 = vadd.f32 0.0, %v1343
        %1345 = vmatmul.bf16.gmra.mxu0 %v1277
        %v1346 = vpop.f32.mrf.mxu0
        %v1347 = vadd.f32 0.0, %v1346
        %v1348 = vpop.f32.mrf.mxu0
        %v1349 = vadd.f32 0.0, %v1348
        %1350 = vmatmul.bf16.gmra.mxu0 %v1278
        %v1351 = vpop.f32.mrf.mxu0
        %v1352 = vadd.f32 0.0, %v1351
        %v1353 = vpop.f32.mrf.mxu0
        %v1354 = vadd.f32 0.0, %v1353
        %1355 = vmatmul.bf16.gmra.mxu0 %v1279
        %v1356 = vpop.f32.mrf.mxu0
        %v1357 = vadd.f32 0.0, %v1356
        %v1358 = vpop.f32.mrf.mxu0
        %v1359 = vadd.f32 0.0, %v1358
        %1360 = vmatmul.bf16.gmra.mxu0 %v1280
        %v1361 = vpop.f32.mrf.mxu0
        %v1362 = vadd.f32 0.0, %v1361
        %v1363 = vpop.f32.mrf.mxu0
        %v1364 = vadd.f32 0.0, %v1363
        %1365 = vmatmul.bf16.gmra.mxu0 %v1281
        %v1366 = vpop.f32.mrf.mxu0
        %v1367 = vadd.f32 0.0, %v1366
        %v1368 = vpop.f32.mrf.mxu0
        %v1369 = vadd.f32 0.0, %v1368
        %1370 = vmatmul.bf16.gmra.mxu0 %v1282
        %v1371 = vpop.f32.mrf.mxu0
        %v1372 = vadd.f32 0.0, %v1371
        %v1373 = vpop.f32.mrf.mxu0
        %v1374 = vadd.f32 0.0, %v1373
        %1375 = vmatmul.bf16.gmra.mxu0 %v1283
        %v1376 = vpop.f32.mrf.mxu0
        %v1377 = vadd.f32 0.0, %v1376
        %v1378 = vpop.f32.mrf.mxu0
        %v1379 = vadd.f32 0.0, %v1378
        %1380 = vmatmul.bf16.gmra.mxu0 %v1284
        %v1381 = vpop.f32.mrf.mxu0
        %v1382 = vadd.f32 0.0, %v1381
        %v1383 = vpop.f32.mrf.mxu0
        %v1384 = vadd.f32 0.0, %v1383
        %1385 = vmatmul.bf16.gmra.mxu0 %v1285
        %v1386 = vpop.f32.mrf.mxu0
        %v1387 = vadd.f32 0.0, %v1386
        %v1388 = vpop.f32.mrf.mxu0
        %v1389 = vadd.f32 0.0, %v1388
        %1390 = vdwg.mxu0
        %v1391 = vld [vmem:[#allocation10] sm:$0xf]
        %v1392 = vld [vmem:[#allocation10 + $0x4] sm:$0xf]
        %v1393 = vld [vmem:[#allocation10 + $0x8] sm:$0xf]
        %v1394 = vld [vmem:[#allocation10 + $0xc] sm:$0xf]
        %v1395 = vld [vmem:[#allocation10 + $0x10] sm:$0xf]
        %v1396 = vld [vmem:[#allocation10 + $0x14] sm:$0xf]
        %v1397 = vld [vmem:[#allocation10 + $0x18] sm:$0xf]
        %v1398 = vld [vmem:[#allocation10 + $0x1c] sm:$0xf]
        %v1399 = vld [vmem:[#allocation10 + $0x20] sm:$0xf]
        %v1400 = vld [vmem:[#allocation10 + $0x24] sm:$0xf]
        %v1401 = vld [vmem:[#allocation10 + $0x28] sm:$0xf]
        %v1402 = vld [vmem:[#allocation10 + $0x2c] sm:$0xf]
        %v1403 = vld [vmem:[#allocation10 + $0x30] sm:$0xf]
        %v1404 = vld [vmem:[#allocation10 + $0x34] sm:$0xf]
        %v1405 = vld [vmem:[#allocation10 + $0x38] sm:$0xf]
        %v1406 = vld [vmem:[#allocation10 + $0x3c] sm:$0xf]
        %v1423 = vunpack.c.l.b16 %v1391
        %v1424 = vunpack.c.l.b16 %v1392
        %v1425 = vunpack.c.l.b16 %v1393
        %v1426 = vunpack.c.l.b16 %v1394
        %v1427 = vunpack.c.l.b16 %v1395
        %v1428 = vunpack.c.l.b16 %v1396
        %v1429 = vunpack.c.l.b16 %v1397
        %v1430 = vunpack.c.l.b16 %v1398
        %v1431 = vunpack.c.l.b16 %v1399
        %v1432 = vunpack.c.l.b16 %v1400
        %v1433 = vunpack.c.l.b16 %v1401
        %v1434 = vunpack.c.l.b16 %v1402
        %v1435 = vunpack.c.l.b16 %v1403
        %v1436 = vunpack.c.l.b16 %v1404
        %v1437 = vunpack.c.l.b16 %v1405
        %v1438 = vunpack.c.l.b16 %v1406
        %v1439 = vpack.c.b16 %v1424, %v1423
        %v1440 = vpack.c.b16 %v1426, %v1425
        %v1441 = vpack.c.b16 %v1428, %v1427
        %v1442 = vpack.c.b16 %v1430, %v1429
        %v1443 = vpack.c.b16 %v1432, %v1431
        %v1444 = vpack.c.b16 %v1434, %v1433
        %v1445 = vpack.c.b16 %v1436, %v1435
        %v1446 = vpack.c.b16 %v1438, %v1437
        %1455 = vmatpush.bf16.msra.mxu0 %v1446
        %1456 = vmatpush.bf16.msra.mxu0 %v1445
        %1457 = vmatpush.bf16.msra.mxu0 %v1444
        %1458 = vmatpush.bf16.msra.mxu0 %v1443
        %1459 = vmatpush.bf16.msra.mxu0 %v1442
        %1460 = vmatpush.bf16.msra.mxu0 %v1441
        %1461 = vmatpush.bf16.msra.mxu0 %v1440
        %1462 = vmatpush.bf16.msra.mxu0 %v1439
        %1463 = vmatmul.bf16.gmra.mxu0 %v980
        %v1464 = vpop.f32.mrf.mxu0
        %v1465 = vadd.f32 0.0, %v1464
        %v1466 = vpop.f32.mrf.mxu0
        %v1467 = vadd.f32 0.0, %v1466
        %1468 = vmatmul.bf16.gmra.mxu0 %v981
        %v1469 = vpop.f32.mrf.mxu0
        %v1470 = vadd.f32 0.0, %v1469
        %v1471 = vpop.f32.mrf.mxu0
        %v1472 = vadd.f32 0.0, %v1471
        %1473 = vmatmul.bf16.gmra.mxu0 %v982
        %v1474 = vpop.f32.mrf.mxu0
        %v1475 = vadd.f32 0.0, %v1474
        %v1476 = vpop.f32.mrf.mxu0
        %v1477 = vadd.f32 0.0, %v1476
        %1478 = vmatmul.bf16.gmra.mxu0 %v983
        %v1479 = vpop.f32.mrf.mxu0
        %v1480 = vadd.f32 0.0, %v1479
        %v1481 = vpop.f32.mrf.mxu0
        %v1482 = vadd.f32 0.0, %v1481
        %1483 = vmatmul.bf16.gmra.mxu0 %v984
        %v1484 = vpop.f32.mrf.mxu0
        %v1485 = vadd.f32 0.0, %v1484
        %v1486 = vpop.f32.mrf.mxu0
        %v1487 = vadd.f32 0.0, %v1486
        %1488 = vmatmul.bf16.gmra.mxu0 %v985
        %v1489 = vpop.f32.mrf.mxu0
        %v1490 = vadd.f32 0.0, %v1489
        %v1491 = vpop.f32.mrf.mxu0
        %v1492 = vadd.f32 0.0, %v1491
        %1493 = vmatmul.bf16.gmra.mxu0 %v986
        %v1494 = vpop.f32.mrf.mxu0
        %v1495 = vadd.f32 0.0, %v1494
        %v1496 = vpop.f32.mrf.mxu0
        %v1497 = vadd.f32 0.0, %v1496
        %1498 = vmatmul.bf16.gmra.mxu0 %v987
        %v1499 = vpop.f32.mrf.mxu0
        %v1500 = vadd.f32 0.0, %v1499
        %v1501 = vpop.f32.mrf.mxu0
        %v1502 = vadd.f32 0.0, %v1501
        %1503 = vmatmul.bf16.gmra.mxu0 %v988
        %v1504 = vpop.f32.mrf.mxu0
        %v1505 = vadd.f32 0.0, %v1504
        %v1506 = vpop.f32.mrf.mxu0
        %v1507 = vadd.f32 0.0, %v1506
        %1508 = vmatmul.bf16.gmra.mxu0 %v989
        %v1509 = vpop.f32.mrf.mxu0
        %v1510 = vadd.f32 0.0, %v1509
        %v1511 = vpop.f32.mrf.mxu0
        %v1512 = vadd.f32 0.0, %v1511
        %1513 = vmatmul.bf16.gmra.mxu0 %v990
        %v1514 = vpop.f32.mrf.mxu0
        %v1515 = vadd.f32 0.0, %v1514
        %v1516 = vpop.f32.mrf.mxu0
        %v1517 = vadd.f32 0.0, %v1516
        %1518 = vmatmul.bf16.gmra.mxu0 %v991
        %v1519 = vpop.f32.mrf.mxu0
        %v1520 = vadd.f32 0.0, %v1519
        %v1521 = vpop.f32.mrf.mxu0
        %v1522 = vadd.f32 0.0, %v1521
        %1523 = vmatmul.bf16.gmra.mxu0 %v992
        %v1524 = vpop.f32.mrf.mxu0
        %v1525 = vadd.f32 0.0, %v1524
        %v1526 = vpop.f32.mrf.mxu0
        %v1527 = vadd.f32 0.0, %v1526
        %1528 = vmatmul.bf16.gmra.mxu0 %v993
        %v1529 = vpop.f32.mrf.mxu0
        %v1530 = vadd.f32 0.0, %v1529
        %v1531 = vpop.f32.mrf.mxu0
        %v1532 = vadd.f32 0.0, %v1531
        %1533 = vmatmul.bf16.gmra.mxu0 %v994
        %v1534 = vpop.f32.mrf.mxu0
        %v1535 = vadd.f32 0.0, %v1534
        %v1536 = vpop.f32.mrf.mxu0
        %v1537 = vadd.f32 0.0, %v1536
        %1538 = vmatmul.bf16.gmra.mxu0 %v995
        %v1539 = vpop.f32.mrf.mxu0
        %v1540 = vadd.f32 0.0, %v1539
        %v1541 = vpop.f32.mrf.mxu0
        %v1542 = vadd.f32 0.0, %v1541
        %1543 = vdwg.mxu0
        %v1576 = vunpack.c.l.b16 %v812
        %v1577 = vunpack.c.l.b16 %v813
        %v1578 = vunpack.c.l.b16 %v814
        %v1579 = vunpack.c.l.b16 %v815
        %v1580 = vunpack.c.l.b16 %v816
        %v1581 = vunpack.c.l.b16 %v817
        %v1582 = vunpack.c.l.b16 %v818
        %v1583 = vunpack.c.l.b16 %v819
        %v1584 = vunpack.c.l.b16 %v820
        %v1585 = vunpack.c.l.b16 %v821
        %v1586 = vunpack.c.l.b16 %v822
        %v1587 = vunpack.c.l.b16 %v823
        %v1588 = vunpack.c.l.b16 %v824
        %v1589 = vunpack.c.l.b16 %v825
        %v1590 = vunpack.c.l.b16 %v826
        %v1591 = vunpack.c.l.b16 %v827
        %v1592 = vunpack.c.l.b16 %v828
        %v1593 = vunpack.c.l.b16 %v829
        %v1594 = vunpack.c.l.b16 %v830
        %v1595 = vunpack.c.l.b16 %v831
        %v1596 = vunpack.c.l.b16 %v832
        %v1597 = vunpack.c.l.b16 %v833
        %v1598 = vunpack.c.l.b16 %v834
        %v1599 = vunpack.c.l.b16 %v835
        %v1600 = vunpack.c.l.b16 %v836
        %v1601 = vunpack.c.l.b16 %v837
        %v1602 = vunpack.c.l.b16 %v838
        %v1603 = vunpack.c.l.b16 %v839
        %v1604 = vunpack.c.l.b16 %v840
        %v1605 = vunpack.c.l.b16 %v841
        %v1606 = vunpack.c.l.b16 %v842
        %v1607 = vunpack.c.l.b16 %v843
        %v1608 = vpack.c.b16 %v1577, %v1576
        %v1609 = vpack.c.b16 %v1579, %v1578
        %v1610 = vpack.c.b16 %v1581, %v1580
        %v1611 = vpack.c.b16 %v1583, %v1582
        %v1612 = vpack.c.b16 %v1585, %v1584
        %v1613 = vpack.c.b16 %v1587, %v1586
        %v1614 = vpack.c.b16 %v1589, %v1588
        %v1615 = vpack.c.b16 %v1591, %v1590
        %v1616 = vpack.c.b16 %v1593, %v1592
        %v1617 = vpack.c.b16 %v1595, %v1594
        %v1618 = vpack.c.b16 %v1597, %v1596
        %v1619 = vpack.c.b16 %v1599, %v1598
        %v1620 = vpack.c.b16 %v1601, %v1600
        %v1621 = vpack.c.b16 %v1603, %v1602
        %v1622 = vpack.c.b16 %v1605, %v1604
        %v1623 = vpack.c.b16 %v1607, %v1606
        %1640 = vmatpush.bf16.msra.mxu0 %v1197
        %1641 = vmatpush.bf16.msra.mxu0 %v1196
        %1642 = vmatpush.bf16.msra.mxu0 %v1195
        %1643 = vmatpush.bf16.msra.mxu0 %v1194
        %1644 = vmatpush.bf16.msra.mxu0 %v1193
        %1645 = vmatpush.bf16.msra.mxu0 %v1192
        %1646 = vmatpush.bf16.msra.mxu0 %v1191
        %1647 = vmatpush.bf16.msra.mxu0 %v1190
        %1648 = vmatmul.bf16.gmra.mxu0 %v1608
        %v1649 = vpop.f32.mrf.mxu0
        %v1650 = vadd.f32 %v1465, %v1649
        %v1651 = vpop.f32.mrf.mxu0
        %v1652 = vadd.f32 %v1467, %v1651
        %1653 = vmatmul.bf16.gmra.mxu0 %v1609
        %v1654 = vpop.f32.mrf.mxu0
        %v1655 = vadd.f32 %v1470, %v1654
        %v1656 = vpop.f32.mrf.mxu0
        %v1657 = vadd.f32 %v1472, %v1656
        %1658 = vmatmul.bf16.gmra.mxu0 %v1610
        %v1659 = vpop.f32.mrf.mxu0
        %v1660 = vadd.f32 %v1475, %v1659
        %v1661 = vpop.f32.mrf.mxu0
        %v1662 = vadd.f32 %v1477, %v1661
        %1663 = vmatmul.bf16.gmra.mxu0 %v1611
        %v1664 = vpop.f32.mrf.mxu0
        %v1665 = vadd.f32 %v1480, %v1664
        %v1666 = vpop.f32.mrf.mxu0
        %v1667 = vadd.f32 %v1482, %v1666
        %1668 = vmatmul.bf16.gmra.mxu0 %v1612
        %v1669 = vpop.f32.mrf.mxu0
        %v1670 = vadd.f32 %v1485, %v1669
        %v1671 = vpop.f32.mrf.mxu0
        %v1672 = vadd.f32 %v1487, %v1671
        %1673 = vmatmul.bf16.gmra.mxu0 %v1613
        %v1674 = vpop.f32.mrf.mxu0
        %v1675 = vadd.f32 %v1490, %v1674
        %v1676 = vpop.f32.mrf.mxu0
        %v1677 = vadd.f32 %v1492, %v1676
        %1678 = vmatmul.bf16.gmra.mxu0 %v1614
        %v1679 = vpop.f32.mrf.mxu0
        %v1680 = vadd.f32 %v1495, %v1679
        %v1681 = vpop.f32.mrf.mxu0
        %v1682 = vadd.f32 %v1497, %v1681
        %1683 = vmatmul.bf16.gmra.mxu0 %v1615
        %v1684 = vpop.f32.mrf.mxu0
        %v1685 = vadd.f32 %v1500, %v1684
        %v1686 = vpop.f32.mrf.mxu0
        %v1687 = vadd.f32 %v1502, %v1686
        %1688 = vmatmul.bf16.gmra.mxu0 %v1616
        %v1689 = vpop.f32.mrf.mxu0
        %v1690 = vadd.f32 %v1505, %v1689
        %v1691 = vpop.f32.mrf.mxu0
        %v1692 = vadd.f32 %v1507, %v1691
        %1693 = vmatmul.bf16.gmra.mxu0 %v1617
        %v1694 = vpop.f32.mrf.mxu0
        %v1695 = vadd.f32 %v1510, %v1694
        %v1696 = vpop.f32.mrf.mxu0
        %v1697 = vadd.f32 %v1512, %v1696
        %1698 = vmatmul.bf16.gmra.mxu0 %v1618
        %v1699 = vpop.f32.mrf.mxu0
        %v1700 = vadd.f32 %v1515, %v1699
        %v1701 = vpop.f32.mrf.mxu0
        %v1702 = vadd.f32 %v1517, %v1701
        %1703 = vmatmul.bf16.gmra.mxu0 %v1619
        %v1704 = vpop.f32.mrf.mxu0
        %v1705 = vadd.f32 %v1520, %v1704
        %v1706 = vpop.f32.mrf.mxu0
        %v1707 = vadd.f32 %v1522, %v1706
        %1708 = vmatmul.bf16.gmra.mxu0 %v1620
        %v1709 = vpop.f32.mrf.mxu0
        %v1710 = vadd.f32 %v1525, %v1709
        %v1711 = vpop.f32.mrf.mxu0
        %v1712 = vadd.f32 %v1527, %v1711
        %1713 = vmatmul.bf16.gmra.mxu0 %v1621
        %v1714 = vpop.f32.mrf.mxu0
        %v1715 = vadd.f32 %v1530, %v1714
        %v1716 = vpop.f32.mrf.mxu0
        %v1717 = vadd.f32 %v1532, %v1716
        %1718 = vmatmul.bf16.gmra.mxu0 %v1622
        %v1719 = vpop.f32.mrf.mxu0
        %v1720 = vadd.f32 %v1535, %v1719
        %v1721 = vpop.f32.mrf.mxu0
        %v1722 = vadd.f32 %v1537, %v1721
        %1723 = vmatmul.bf16.gmra.mxu0 %v1623
        %v1724 = vpop.f32.mrf.mxu0
        %v1725 = vadd.f32 %v1540, %v1724
        %v1726 = vpop.f32.mrf.mxu0
        %v1727 = vadd.f32 %v1542, %v1726
        %1728 = vdwg.mxu0
        %v1729 = vadd.f32 %v1650, %v1312
        %v1730 = vadd.f32 %v1652, %v1314
        %v1731 = vadd.f32 %v1655, %v1317
        %v1732 = vadd.f32 %v1657, %v1319
        %v1733 = vadd.f32 %v1660, %v1322
        %v1734 = vadd.f32 %v1662, %v1324
        %v1735 = vadd.f32 %v1665, %v1327
        %v1736 = vadd.f32 %v1667, %v1329
        %v1737 = vadd.f32 %v1670, %v1332
        %v1738 = vadd.f32 %v1672, %v1334
        %v1739 = vadd.f32 %v1675, %v1337
        %v1740 = vadd.f32 %v1677, %v1339
        %v1741 = vadd.f32 %v1680, %v1342
        %v1742 = vadd.f32 %v1682, %v1344
        %v1743 = vadd.f32 %v1685, %v1347
        %v1744 = vadd.f32 %v1687, %v1349
        %v1745 = vadd.f32 %v1690, %v1352
        %v1746 = vadd.f32 %v1692, %v1354
        %v1747 = vadd.f32 %v1695, %v1357
        %v1748 = vadd.f32 %v1697, %v1359
        %v1749 = vadd.f32 %v1700, %v1362
        %v1750 = vadd.f32 %v1702, %v1364
        %v1751 = vadd.f32 %v1705, %v1367
        %v1752 = vadd.f32 %v1707, %v1369
        %v1753 = vadd.f32 %v1710, %v1372
        %v1754 = vadd.f32 %v1712, %v1374
        %v1755 = vadd.f32 %v1715, %v1377
        %v1756 = vadd.f32 %v1717, %v1379
        %v1757 = vadd.f32 %v1720, %v1382
        %v1758 = vadd.f32 %v1722, %v1384
        %v1759 = vadd.f32 %v1725, %v1387
        %v1760 = vadd.f32 %v1727, %v1389
        %v1761 = vld [vmem:[%s9] sm:$0x1]
        %v1763 = vperm.slane %v1761, 0
        %v1765 = vadd.f32 %v1729, %v1763
        %v1766 = vadd.f32 %v1730, %v1763
        %v1767 = vadd.f32 %v1731, %v1763
        %v1768 = vadd.f32 %v1732, %v1763
        %v1769 = vadd.f32 %v1733, %v1763
        %v1770 = vadd.f32 %v1734, %v1763
        %v1771 = vadd.f32 %v1735, %v1763
        %v1772 = vadd.f32 %v1736, %v1763
        %v1773 = vadd.f32 %v1737, %v1763
        %v1774 = vadd.f32 %v1738, %v1763
        %v1775 = vadd.f32 %v1739, %v1763
        %v1776 = vadd.f32 %v1740, %v1763
        %v1777 = vadd.f32 %v1741, %v1763
        %v1778 = vadd.f32 %v1742, %v1763
        %v1779 = vadd.f32 %v1743, %v1763
        %v1780 = vadd.f32 %v1744, %v1763
        %v1781 = vadd.f32 %v1745, %v1763
        %v1782 = vadd.f32 %v1746, %v1763
        %v1783 = vadd.f32 %v1747, %v1763
        %v1784 = vadd.f32 %v1748, %v1763
        %v1785 = vadd.f32 %v1749, %v1763
        %v1786 = vadd.f32 %v1750, %v1763
        %v1787 = vadd.f32 %v1751, %v1763
        %v1788 = vadd.f32 %v1752, %v1763
        %v1789 = vadd.f32 %v1753, %v1763
        %v1790 = vadd.f32 %v1754, %v1763
        %v1791 = vadd.f32 %v1755, %v1763
        %v1792 = vadd.f32 %v1756, %v1763
        %v1793 = vadd.f32 %v1757, %v1763
        %v1794 = vadd.f32 %v1758, %v1763
        %v1795 = vadd.f32 %v1759, %v1763
        %v1796 = vadd.f32 %v1760, %v1763
        %v1797 = vmul.f32 %v1765, 0.01
        %v1798 = vmul.f32 %v1766, 0.01
        %v1799 = vmul.f32 %v1767, 0.01
        %v1800 = vmul.f32 %v1768, 0.01
        %v1801 = vmul.f32 %v1769, 0.01
        %v1802 = vmul.f32 %v1770, 0.01
        %v1803 = vmul.f32 %v1771, 0.01
        %v1804 = vmul.f32 %v1772, 0.01
        %v1805 = vmul.f32 %v1773, 0.01
        %v1806 = vmul.f32 %v1774, 0.01
        %v1807 = vmul.f32 %v1775, 0.01
        %v1808 = vmul.f32 %v1776, 0.01
        %v1809 = vmul.f32 %v1777, 0.01
        %v1810 = vmul.f32 %v1778, 0.01
        %v1811 = vmul.f32 %v1779, 0.01
        %v1812 = vmul.f32 %v1780, 0.01
        %v1813 = vmul.f32 %v1781, 0.01
        %v1814 = vmul.f32 %v1782, 0.01
        %v1815 = vmul.f32 %v1783, 0.01
        %v1816 = vmul.f32 %v1784, 0.01
        %v1817 = vmul.f32 %v1785, 0.01
        %v1818 = vmul.f32 %v1786, 0.01
        %v1819 = vmul.f32 %v1787, 0.01
        %v1820 = vmul.f32 %v1788, 0.01
        %v1821 = vmul.f32 %v1789, 0.01
        %v1822 = vmul.f32 %v1790, 0.01
        %v1823 = vmul.f32 %v1791, 0.01
        %v1824 = vmul.f32 %v1792, 0.01
        %v1825 = vmul.f32 %v1793, 0.01
        %v1826 = vmul.f32 %v1794, 0.01
        %v1827 = vmul.f32 %v1795, 0.01
        %v1828 = vmul.f32 %v1796, 0.01
        %v1829 = vmax.f32 %v1765, %v1797
        %v1830 = vmax.f32 %v1766, %v1798
        %v1831 = vmax.f32 %v1767, %v1799
        %v1832 = vmax.f32 %v1768, %v1800
        %v1833 = vmax.f32 %v1769, %v1801
        %v1834 = vmax.f32 %v1770, %v1802
        %v1835 = vmax.f32 %v1771, %v1803
        %v1836 = vmax.f32 %v1772, %v1804
        %v1837 = vmax.f32 %v1773, %v1805
        %v1838 = vmax.f32 %v1774, %v1806
        %v1839 = vmax.f32 %v1775, %v1807
        %v1840 = vmax.f32 %v1776, %v1808
        %v1841 = vmax.f32 %v1777, %v1809
        %v1842 = vmax.f32 %v1778, %v1810
        %v1843 = vmax.f32 %v1779, %v1811
        %v1844 = vmax.f32 %v1780, %v1812
        %v1845 = vmax.f32 %v1781, %v1813
        %v1846 = vmax.f32 %v1782, %v1814
        %v1847 = vmax.f32 %v1783, %v1815
        %v1848 = vmax.f32 %v1784, %v1816
        %v1849 = vmax.f32 %v1785, %v1817
        %v1850 = vmax.f32 %v1786, %v1818
        %v1851 = vmax.f32 %v1787, %v1819
        %v1852 = vmax.f32 %v1788, %v1820
        %v1853 = vmax.f32 %v1789, %v1821
        %v1854 = vmax.f32 %v1790, %v1822
        %v1855 = vmax.f32 %v1791, %v1823
        %v1856 = vmax.f32 %v1792, %v1824
        %v1857 = vmax.f32 %v1793, %v1825
        %v1858 = vmax.f32 %v1794, %v1826
        %v1859 = vmax.f32 %v1795, %v1827
        %v1860 = vmax.f32 %v1796, %v1828
        %v1861 = vpack.c.bf16 %v1830, %v1829
        %v1862 = vpack.c.bf16 %v1832, %v1831
        %v1863 = vpack.c.bf16 %v1834, %v1833
        %v1864 = vpack.c.bf16 %v1836, %v1835
        %v1865 = vpack.c.bf16 %v1838, %v1837
        %v1866 = vpack.c.bf16 %v1840, %v1839
        %v1867 = vpack.c.bf16 %v1842, %v1841
        %v1868 = vpack.c.bf16 %v1844, %v1843
        %v1869 = vpack.c.bf16 %v1846, %v1845
        %v1870 = vpack.c.bf16 %v1848, %v1847
        %v1871 = vpack.c.bf16 %v1850, %v1849
        %v1872 = vpack.c.bf16 %v1852, %v1851
        %v1873 = vpack.c.bf16 %v1854, %v1853
        %v1874 = vpack.c.bf16 %v1856, %v1855
        %v1875 = vpack.c.bf16 %v1858, %v1857
        %v1876 = vpack.c.bf16 %v1860, %v1859
        %v1877 = vld [vmem:[%s10] sm:$0xff]
        %v1878 = vld [vmem:[%s10 + $0x8] sm:$0xf]
        %v1879 = vld [vmem:[%s10 + $0xc] sm:$0xff]
        %v1880 = vld [vmem:[%s10 + $0x14] sm:$0xf]
        %v1881 = vld [vmem:[%s10 + $0x18] sm:$0xff]
        %v1882 = vld [vmem:[%s10 + $0x20] sm:$0xf]
        %v1883 = vld [vmem:[%s10 + $0x24] sm:$0xff]
        %v1884 = vld [vmem:[%s10 + $0x2c] sm:$0xf]
        %v1885 = vld [vmem:[%s10 + $0x30] sm:$0xff]
        %v1886 = vld [vmem:[%s10 + $0x38] sm:$0xf]
        %v1887 = vld [vmem:[%s10 + $0x3c] sm:$0xff]
        %v1888 = vld [vmem:[%s10 + $0x44] sm:$0xf]
        %v1889 = vld [vmem:[%s10 + $0x48] sm:$0xff]
        %v1890 = vld [vmem:[%s10 + $0x50] sm:$0xf]
        %v1891 = vld [vmem:[%s10 + $0x54] sm:$0xff]
        %v1892 = vld [vmem:[%s10 + $0x5c] sm:$0xf]
        %v1893 = vld [vmem:[%s10 + $0x60] sm:$0xff]
        %v1894 = vld [vmem:[%s10 + $0x68] sm:$0xf]
        %v1895 = vld [vmem:[%s10 + $0x6c] sm:$0xff]
        %v1896 = vld [vmem:[%s10 + $0x74] sm:$0xf]
        %v1897 = vld [vmem:[%s10 + $0x78] sm:$0xff]
        %v1898 = vld [vmem:[%s10 + $0x80] sm:$0xf]
        %v1899 = vld [vmem:[%s10 + $0x84] sm:$0xff]
        %v1900 = vld [vmem:[%s10 + $0x8c] sm:$0xf]
        %v1901 = vld [vmem:[%s10 + $0x90] sm:$0xff]
        %v1902 = vld [vmem:[%s10 + $0x98] sm:$0xf]
        %v1903 = vld [vmem:[%s10 + $0x9c] sm:$0xff]
        %v1904 = vld [vmem:[%s10 + $0xa4] sm:$0xf]
        %v1905 = vld [vmem:[%s10 + $0xa8] sm:$0xff]
        %v1906 = vld [vmem:[%s10 + $0xb0] sm:$0xf]
        %v1907 = vld [vmem:[%s10 + $0xb4] sm:$0xff]
        %v1908 = vld [vmem:[%s10 + $0xbc] sm:$0xf]
        %v1909 = vld [vmem:[%s11] sm:$0x7]
        %v1911 = vperm.slane %v1909, 0
        %v1912 = vperm.slane %v1909, 1
        %v1913 = vperm.slane %v1909, 2
        %v1949 = vunpack.c.l.b16 %v1877
        %v1950 = vunpack.c.h.b16 %v1877
        %v1951 = vunpack.c.l.b16 %v1878
        %v1952 = vunpack.c.l.b16 %v1879
        %v1953 = vunpack.c.h.b16 %v1879
        %v1954 = vunpack.c.l.b16 %v1880
        %v1955 = vunpack.c.l.b16 %v1881
        %v1956 = vunpack.c.h.b16 %v1881
        %v1957 = vunpack.c.l.b16 %v1882
        %v1958 = vunpack.c.l.b16 %v1883
        %v1959 = vunpack.c.h.b16 %v1883
        %v1960 = vunpack.c.l.b16 %v1884
        %v1961 = vunpack.c.l.b16 %v1885
        %v1962 = vunpack.c.h.b16 %v1885
        %v1963 = vunpack.c.l.b16 %v1886
        %v1964 = vunpack.c.l.b16 %v1887
        %v1965 = vunpack.c.h.b16 %v1887
        %v1966 = vunpack.c.l.b16 %v1888
        %v1967 = vunpack.c.l.b16 %v1889
        %v1968 = vunpack.c.h.b16 %v1889
        %v1969 = vunpack.c.l.b16 %v1890
        %v1970 = vunpack.c.l.b16 %v1891
        %v1971 = vunpack.c.h.b16 %v1891
        %v1972 = vunpack.c.l.b16 %v1892
        %v1973 = vunpack.c.l.b16 %v1893
        %v1974 = vunpack.c.h.b16 %v1893
        %v1975 = vunpack.c.l.b16 %v1894
        %v1976 = vunpack.c.l.b16 %v1895
        %v1977 = vunpack.c.h.b16 %v1895
        %v1978 = vunpack.c.l.b16 %v1896
        %v1979 = vunpack.c.l.b16 %v1897
        %v1980 = vunpack.c.h.b16 %v1897
        %v1981 = vunpack.c.l.b16 %v1898
        %v1982 = vunpack.c.l.b16 %v1899
        %v1983 = vunpack.c.h.b16 %v1899
        %v1984 = vunpack.c.l.b16 %v1900
        %v1985 = vunpack.c.l.b16 %v1901
        %v1986 = vunpack.c.h.b16 %v1901
        %v1987 = vunpack.c.l.b16 %v1902
        %v1988 = vunpack.c.l.b16 %v1903
        %v1989 = vunpack.c.h.b16 %v1903
        %v1990 = vunpack.c.l.b16 %v1904
        %v1991 = vunpack.c.l.b16 %v1905
        %v1992 = vunpack.c.h.b16 %v1905
        %v1993 = vunpack.c.l.b16 %v1906
        %v1994 = vunpack.c.l.b16 %v1907
        %v1995 = vunpack.c.h.b16 %v1907
        %v1996 = vunpack.c.l.b16 %v1908
        %v1997 = vpack.c.b16 %v1952, %v1949
        %v1998 = vpack.c.b16 %v1953, %v1950
        %v1999 = vpack.c.b16 %v1954, %v1951
        %v2000 = vpack.c.b16 %v1958, %v1955
        %v2001 = vpack.c.b16 %v1959, %v1956
        %v2002 = vpack.c.b16 %v1960, %v1957
        %v2003 = vpack.c.b16 %v1964, %v1961
        %v2004 = vpack.c.b16 %v1965, %v1962
        %v2005 = vpack.c.b16 %v1966, %v1963
        %v2006 = vpack.c.b16 %v1970, %v1967
        %v2007 = vpack.c.b16 %v1971, %v1968
        %v2008 = vpack.c.b16 %v1972, %v1969
        %v2009 = vpack.c.b16 %v1976, %v1973
        %v2010 = vpack.c.b16 %v1977, %v1974
        %v2011 = vpack.c.b16 %v1978, %v1975
        %v2012 = vpack.c.b16 %v1982, %v1979
        %v2013 = vpack.c.b16 %v1983, %v1980
        %v2014 = vpack.c.b16 %v1984, %v1981
        %v2015 = vpack.c.b16 %v1988, %v1985
        %v2016 = vpack.c.b16 %v1989, %v1986
        %v2017 = vpack.c.b16 %v1990, %v1987
        %v2018 = vpack.c.b16 %v1994, %v1991
        %v2019 = vpack.c.b16 %v1995, %v1992
        %v2020 = vpack.c.b16 %v1996, %v1993
        %2045 = vmatpush.bf16.msra.mxu0 %v2018
        %2046 = vmatpush.bf16.msra.mxu0 %v2015
        %2047 = vmatpush.bf16.msra.mxu0 %v2012
        %2048 = vmatpush.bf16.msra.mxu0 %v2009
        %2049 = vmatpush.bf16.msra.mxu0 %v2006
        %2050 = vmatpush.bf16.msra.mxu0 %v2003
        %2051 = vmatpush.bf16.msra.mxu0 %v2000
        %2052 = vmatpush.bf16.msra.mxu0 %v1997
        %2053 = vmatmul.bf16.gmra.mxu0 %v1861
        %v2054 = vpop.f32.mrf.mxu0
        %v2055 = vadd.f32 %v1911, %v2054
        %v2056 = vpop.f32.mrf.mxu0
        %v2057 = vadd.f32 %v1911, %v2056
        %2058 = vmatmul.bf16.gmra.mxu0 %v1862
        %v2059 = vpop.f32.mrf.mxu0
        %v2060 = vadd.f32 %v1911, %v2059
        %v2061 = vpop.f32.mrf.mxu0
        %v2062 = vadd.f32 %v1911, %v2061
        %2063 = vmatmul.bf16.gmra.mxu0 %v1863
        %v2064 = vpop.f32.mrf.mxu0
        %v2065 = vadd.f32 %v1911, %v2064
        %v2066 = vpop.f32.mrf.mxu0
        %v2067 = vadd.f32 %v1911, %v2066
        %2068 = vmatmul.bf16.gmra.mxu0 %v1864
        %v2069 = vpop.f32.mrf.mxu0
        %v2070 = vadd.f32 %v1911, %v2069
        %v2071 = vpop.f32.mrf.mxu0
        %v2072 = vadd.f32 %v1911, %v2071
        %2073 = vmatmul.bf16.gmra.mxu0 %v1865
        %v2074 = vpop.f32.mrf.mxu0
        %v2075 = vadd.f32 %v1911, %v2074
        %v2076 = vpop.f32.mrf.mxu0
        %v2077 = vadd.f32 %v1911, %v2076
        %2078 = vmatmul.bf16.gmra.mxu0 %v1866
        %v2079 = vpop.f32.mrf.mxu0
        %v2080 = vadd.f32 %v1911, %v2079
        %v2081 = vpop.f32.mrf.mxu0
        %v2082 = vadd.f32 %v1911, %v2081
        %2083 = vmatmul.bf16.gmra.mxu0 %v1867
        %v2084 = vpop.f32.mrf.mxu0
        %v2085 = vadd.f32 %v1911, %v2084
        %v2086 = vpop.f32.mrf.mxu0
        %v2087 = vadd.f32 %v1911, %v2086
        %2088 = vmatmul.bf16.gmra.mxu0 %v1868
        %v2089 = vpop.f32.mrf.mxu0
        %v2090 = vadd.f32 %v1911, %v2089
        %v2091 = vpop.f32.mrf.mxu0
        %v2092 = vadd.f32 %v1911, %v2091
        %2093 = vmatmul.bf16.gmra.mxu0 %v1869
        %v2094 = vpop.f32.mrf.mxu0
        %v2095 = vadd.f32 %v1911, %v2094
        %v2096 = vpop.f32.mrf.mxu0
        %v2097 = vadd.f32 %v1911, %v2096
        %2098 = vmatmul.bf16.gmra.mxu0 %v1870
        %v2099 = vpop.f32.mrf.mxu0
        %v2100 = vadd.f32 %v1911, %v2099
        %v2101 = vpop.f32.mrf.mxu0
        %v2102 = vadd.f32 %v1911, %v2101
        %2103 = vmatmul.bf16.gmra.mxu0 %v1871
        %v2104 = vpop.f32.mrf.mxu0
        %v2105 = vadd.f32 %v1911, %v2104
        %v2106 = vpop.f32.mrf.mxu0
        %v2107 = vadd.f32 %v1911, %v2106
        %2108 = vmatmul.bf16.gmra.mxu0 %v1872
        %v2109 = vpop.f32.mrf.mxu0
        %v2110 = vadd.f32 %v1911, %v2109
        %v2111 = vpop.f32.mrf.mxu0
        %v2112 = vadd.f32 %v1911, %v2111
        %2113 = vmatmul.bf16.gmra.mxu0 %v1873
        %v2114 = vpop.f32.mrf.mxu0
        %v2115 = vadd.f32 %v1911, %v2114
        %v2116 = vpop.f32.mrf.mxu0
        %v2117 = vadd.f32 %v1911, %v2116
        %2118 = vmatmul.bf16.gmra.mxu0 %v1874
        %v2119 = vpop.f32.mrf.mxu0
        %v2120 = vadd.f32 %v1911, %v2119
        %v2121 = vpop.f32.mrf.mxu0
        %v2122 = vadd.f32 %v1911, %v2121
        %2123 = vmatmul.bf16.gmra.mxu0 %v1875
        %v2124 = vpop.f32.mrf.mxu0
        %v2125 = vadd.f32 %v1911, %v2124
        %v2126 = vpop.f32.mrf.mxu0
        %v2127 = vadd.f32 %v1911, %v2126
        %2128 = vmatmul.bf16.gmra.mxu0 %v1876
        %v2129 = vpop.f32.mrf.mxu0
        %v2130 = vadd.f32 %v1911, %v2129
        %v2131 = vpop.f32.mrf.mxu0
        %v2132 = vadd.f32 %v1911, %v2131
        %2133 = vdwg.mxu0
        %2134 = vmatpush.bf16.msra.mxu0 %v2019
        %2135 = vmatpush.bf16.msra.mxu0 %v2016
        %2136 = vmatpush.bf16.msra.mxu0 %v2013
        %2137 = vmatpush.bf16.msra.mxu0 %v2010
        %2138 = vmatpush.bf16.msra.mxu0 %v2007
        %2139 = vmatpush.bf16.msra.mxu0 %v2004
        %2140 = vmatpush.bf16.msra.mxu0 %v2001
        %2141 = vmatpush.bf16.msra.mxu0 %v1998
        %2142 = vmatmul.bf16.gmra.mxu0 %v1861
        %v2143 = vpop.f32.mrf.mxu0
        %v2144 = vadd.f32 %v1912, %v2143
        %v2145 = vpop.f32.mrf.mxu0
        %v2146 = vadd.f32 %v1912, %v2145
        %2147 = vmatmul.bf16.gmra.mxu0 %v1862
        %v2148 = vpop.f32.mrf.mxu0
        %v2149 = vadd.f32 %v1912, %v2148
        %v2150 = vpop.f32.mrf.mxu0
        %v2151 = vadd.f32 %v1912, %v2150
        %2152 = vmatmul.bf16.gmra.mxu0 %v1863
        %v2153 = vpop.f32.mrf.mxu0
        %v2154 = vadd.f32 %v1912, %v2153
        %v2155 = vpop.f32.mrf.mxu0
        %v2156 = vadd.f32 %v1912, %v2155
        %2157 = vmatmul.bf16.gmra.mxu0 %v1864
        %v2158 = vpop.f32.mrf.mxu0
        %v2159 = vadd.f32 %v1912, %v2158
        %v2160 = vpop.f32.mrf.mxu0
        %v2161 = vadd.f32 %v1912, %v2160
        %2162 = vmatmul.bf16.gmra.mxu0 %v1865
        %v2163 = vpop.f32.mrf.mxu0
        %v2164 = vadd.f32 %v1912, %v2163
        %v2165 = vpop.f32.mrf.mxu0
        %v2166 = vadd.f32 %v1912, %v2165
        %2167 = vmatmul.bf16.gmra.mxu0 %v1866
        %v2168 = vpop.f32.mrf.mxu0
        %v2169 = vadd.f32 %v1912, %v2168
        %v2170 = vpop.f32.mrf.mxu0
        %v2171 = vadd.f32 %v1912, %v2170
        %2172 = vmatmul.bf16.gmra.mxu0 %v1867
        %v2173 = vpop.f32.mrf.mxu0
        %v2174 = vadd.f32 %v1912, %v2173
        %v2175 = vpop.f32.mrf.mxu0
        %v2176 = vadd.f32 %v1912, %v2175
        %2177 = vmatmul.bf16.gmra.mxu0 %v1868
        %v2178 = vpop.f32.mrf.mxu0
        %v2179 = vadd.f32 %v1912, %v2178
        %v2180 = vpop.f32.mrf.mxu0
        %v2181 = vadd.f32 %v1912, %v2180
        %2182 = vmatmul.bf16.gmra.mxu0 %v1869
        %v2183 = vpop.f32.mrf.mxu0
        %v2184 = vadd.f32 %v1912, %v2183
        %v2185 = vpop.f32.mrf.mxu0
        %v2186 = vadd.f32 %v1912, %v2185
        %2187 = vmatmul.bf16.gmra.mxu0 %v1870
        %v2188 = vpop.f32.mrf.mxu0
        %v2189 = vadd.f32 %v1912, %v2188
        %v2190 = vpop.f32.mrf.mxu0
        %v2191 = vadd.f32 %v1912, %v2190
        %2192 = vmatmul.bf16.gmra.mxu0 %v1871
        %v2193 = vpop.f32.mrf.mxu0
        %v2194 = vadd.f32 %v1912, %v2193
        %v2195 = vpop.f32.mrf.mxu0
        %v2196 = vadd.f32 %v1912, %v2195
        %2197 = vmatmul.bf16.gmra.mxu0 %v1872
        %v2198 = vpop.f32.mrf.mxu0
        %v2199 = vadd.f32 %v1912, %v2198
        %v2200 = vpop.f32.mrf.mxu0
        %v2201 = vadd.f32 %v1912, %v2200
        %2202 = vmatmul.bf16.gmra.mxu0 %v1873
        %v2203 = vpop.f32.mrf.mxu0
        %v2204 = vadd.f32 %v1912, %v2203
        %v2205 = vpop.f32.mrf.mxu0
        %v2206 = vadd.f32 %v1912, %v2205
        %2207 = vmatmul.bf16.gmra.mxu0 %v1874
        %v2208 = vpop.f32.mrf.mxu0
        %v2209 = vadd.f32 %v1912, %v2208
        %v2210 = vpop.f32.mrf.mxu0
        %v2211 = vadd.f32 %v1912, %v2210
        %2212 = vmatmul.bf16.gmra.mxu0 %v1875
        %v2213 = vpop.f32.mrf.mxu0
        %v2214 = vadd.f32 %v1912, %v2213
        %v2215 = vpop.f32.mrf.mxu0
        %v2216 = vadd.f32 %v1912, %v2215
        %2217 = vmatmul.bf16.gmra.mxu0 %v1876
        %v2218 = vpop.f32.mrf.mxu0
        %v2219 = vadd.f32 %v1912, %v2218
        %v2220 = vpop.f32.mrf.mxu0
        %v2221 = vadd.f32 %v1912, %v2220
        %2222 = vdwg.mxu0
        %2223 = vmatpush.bf16.msra.mxu0 %v2020
        %2224 = vmatpush.bf16.msra.mxu0 %v2017
        %2225 = vmatpush.bf16.msra.mxu0 %v2014
        %2226 = vmatpush.bf16.msra.mxu0 %v2011
        %2227 = vmatpush.bf16.msra.mxu0 %v2008
        %2228 = vmatpush.bf16.msra.mxu0 %v2005
        %2229 = vmatpush.bf16.msra.mxu0 %v2002
        %2230 = vmatpush.bf16.msra.mxu0 %v1999
        %2231 = vmatmul.bf16.gmra.mxu0 %v1861
        %v2232 = vpop.f32.mrf.mxu0
        %v2233 = vadd.f32 %v1913, %v2232
        %v2234 = vpop.f32.mrf.mxu0
        %v2235 = vadd.f32 %v1913, %v2234
        %2236 = vmatmul.bf16.gmra.mxu0 %v1862
        %v2237 = vpop.f32.mrf.mxu0
        %v2238 = vadd.f32 %v1913, %v2237
        %v2239 = vpop.f32.mrf.mxu0
        %v2240 = vadd.f32 %v1913, %v2239
        %2241 = vmatmul.bf16.gmra.mxu0 %v1863
        %v2242 = vpop.f32.mrf.mxu0
        %v2243 = vadd.f32 %v1913, %v2242
        %v2244 = vpop.f32.mrf.mxu0
        %v2245 = vadd.f32 %v1913, %v2244
        %2246 = vmatmul.bf16.gmra.mxu0 %v1864
        %v2247 = vpop.f32.mrf.mxu0
        %v2248 = vadd.f32 %v1913, %v2247
        %v2249 = vpop.f32.mrf.mxu0
        %v2250 = vadd.f32 %v1913, %v2249
        %2251 = vmatmul.bf16.gmra.mxu0 %v1865
        %v2252 = vpop.f32.mrf.mxu0
        %v2253 = vadd.f32 %v1913, %v2252
        %v2254 = vpop.f32.mrf.mxu0
        %v2255 = vadd.f32 %v1913, %v2254
        %2256 = vmatmul.bf16.gmra.mxu0 %v1866
        %v2257 = vpop.f32.mrf.mxu0
        %v2258 = vadd.f32 %v1913, %v2257
        %v2259 = vpop.f32.mrf.mxu0
        %v2260 = vadd.f32 %v1913, %v2259
        %2261 = vmatmul.bf16.gmra.mxu0 %v1867
        %v2262 = vpop.f32.mrf.mxu0
        %v2263 = vadd.f32 %v1913, %v2262
        %v2264 = vpop.f32.mrf.mxu0
        %v2265 = vadd.f32 %v1913, %v2264
        %2266 = vmatmul.bf16.gmra.mxu0 %v1868
        %v2267 = vpop.f32.mrf.mxu0
        %v2268 = vadd.f32 %v1913, %v2267
        %v2269 = vpop.f32.mrf.mxu0
        %v2270 = vadd.f32 %v1913, %v2269
        %2271 = vmatmul.bf16.gmra.mxu0 %v1869
        %v2272 = vpop.f32.mrf.mxu0
        %v2273 = vadd.f32 %v1913, %v2272
        %v2274 = vpop.f32.mrf.mxu0
        %v2275 = vadd.f32 %v1913, %v2274
        %2276 = vmatmul.bf16.gmra.mxu0 %v1870
        %v2277 = vpop.f32.mrf.mxu0
        %v2278 = vadd.f32 %v1913, %v2277
        %v2279 = vpop.f32.mrf.mxu0
        %v2280 = vadd.f32 %v1913, %v2279
        %2281 = vmatmul.bf16.gmra.mxu0 %v1871
        %v2282 = vpop.f32.mrf.mxu0
        %v2283 = vadd.f32 %v1913, %v2282
        %v2284 = vpop.f32.mrf.mxu0
        %v2285 = vadd.f32 %v1913, %v2284
        %2286 = vmatmul.bf16.gmra.mxu0 %v1872
        %v2287 = vpop.f32.mrf.mxu0
        %v2288 = vadd.f32 %v1913, %v2287
        %v2289 = vpop.f32.mrf.mxu0
        %v2290 = vadd.f32 %v1913, %v2289
        %2291 = vmatmul.bf16.gmra.mxu0 %v1873
        %v2292 = vpop.f32.mrf.mxu0
        %v2293 = vadd.f32 %v1913, %v2292
        %v2294 = vpop.f32.mrf.mxu0
        %v2295 = vadd.f32 %v1913, %v2294
        %2296 = vmatmul.bf16.gmra.mxu0 %v1874
        %v2297 = vpop.f32.mrf.mxu0
        %v2298 = vadd.f32 %v1913, %v2297
        %v2299 = vpop.f32.mrf.mxu0
        %v2300 = vadd.f32 %v1913, %v2299
        %2301 = vmatmul.bf16.gmra.mxu0 %v1875
        %v2302 = vpop.f32.mrf.mxu0
        %v2303 = vadd.f32 %v1913, %v2302
        %v2304 = vpop.f32.mrf.mxu0
        %v2305 = vadd.f32 %v1913, %v2304
        %2306 = vmatmul.bf16.gmra.mxu0 %v1876
        %v2307 = vpop.f32.mrf.mxu0
        %v2308 = vadd.f32 %v1913, %v2307
        %v2309 = vpop.f32.mrf.mxu0
        %v2310 = vadd.f32 %v1913, %v2309
        %2311 = vdwg.mxu0
        %v2312 = vmul.f32 %v2144, 0.01
        %v2313 = vmul.f32 %v2146, 0.01
        %v2314 = vmul.f32 %v2149, 0.01
        %v2315 = vmul.f32 %v2151, 0.01
        %v2316 = vmul.f32 %v2154, 0.01
        %v2317 = vmul.f32 %v2156, 0.01
        %v2318 = vmul.f32 %v2159, 0.01
        %v2319 = vmul.f32 %v2161, 0.01
        %v2320 = vmul.f32 %v2164, 0.01
        %v2321 = vmul.f32 %v2166, 0.01
        %v2322 = vmul.f32 %v2169, 0.01
        %v2323 = vmul.f32 %v2171, 0.01
        %v2324 = vmul.f32 %v2174, 0.01
        %v2325 = vmul.f32 %v2176, 0.01
        %v2326 = vmul.f32 %v2179, 0.01
        %v2327 = vmul.f32 %v2181, 0.01
        %v2328 = vmul.f32 %v2184, 0.01
        %v2329 = vmul.f32 %v2186, 0.01
        %v2330 = vmul.f32 %v2189, 0.01
        %v2331 = vmul.f32 %v2191, 0.01
        %v2332 = vmul.f32 %v2194, 0.01
        %v2333 = vmul.f32 %v2196, 0.01
        %v2334 = vmul.f32 %v2199, 0.01
        %v2335 = vmul.f32 %v2201, 0.01
        %v2336 = vmul.f32 %v2204, 0.01
        %v2337 = vmul.f32 %v2206, 0.01
        %v2338 = vmul.f32 %v2209, 0.01
        %v2339 = vmul.f32 %v2211, 0.01
        %v2340 = vmul.f32 %v2214, 0.01
        %v2341 = vmul.f32 %v2216, 0.01
        %v2342 = vmul.f32 %v2219, 0.01
        %v2343 = vmul.f32 %v2221, 0.01
        %v2344 = vmax.f32 %v2144, %v2312
        %v2345 = vmax.f32 %v2146, %v2313
        %v2346 = vmax.f32 %v2149, %v2314
        %v2347 = vmax.f32 %v2151, %v2315
        %v2348 = vmax.f32 %v2154, %v2316
        %v2349 = vmax.f32 %v2156, %v2317
        %v2350 = vmax.f32 %v2159, %v2318
        %v2351 = vmax.f32 %v2161, %v2319
        %v2352 = vmax.f32 %v2164, %v2320
        %v2353 = vmax.f32 %v2166, %v2321
        %v2354 = vmax.f32 %v2169, %v2322
        %v2355 = vmax.f32 %v2171, %v2323
        %v2356 = vmax.f32 %v2174, %v2324
        %v2357 = vmax.f32 %v2176, %v2325
        %v2358 = vmax.f32 %v2179, %v2326
        %v2359 = vmax.f32 %v2181, %v2327
        %v2360 = vmax.f32 %v2184, %v2328
        %v2361 = vmax.f32 %v2186, %v2329
        %v2362 = vmax.f32 %v2189, %v2330
        %v2363 = vmax.f32 %v2191, %v2331
        %v2364 = vmax.f32 %v2194, %v2332
        %v2365 = vmax.f32 %v2196, %v2333
        %v2366 = vmax.f32 %v2199, %v2334
        %v2367 = vmax.f32 %v2201, %v2335
        %v2368 = vmax.f32 %v2204, %v2336
        %v2369 = vmax.f32 %v2206, %v2337
        %v2370 = vmax.f32 %v2209, %v2338
        %v2371 = vmax.f32 %v2211, %v2339
        %v2372 = vmax.f32 %v2214, %v2340
        %v2373 = vmax.f32 %v2216, %v2341
        %v2374 = vmax.f32 %v2219, %v2342
        %v2375 = vmax.f32 %v2221, %v2343
        %v2376 = vpack.c.bf16 %v2057, %v2055
        %v2377 = vpack.c.bf16 %v2062, %v2060
        %v2378 = vpack.c.bf16 %v2067, %v2065
        %v2379 = vpack.c.bf16 %v2072, %v2070
        %v2380 = vpack.c.bf16 %v2077, %v2075
        %v2381 = vpack.c.bf16 %v2082, %v2080
        %v2382 = vpack.c.bf16 %v2087, %v2085
        %v2383 = vpack.c.bf16 %v2092, %v2090
        %v2384 = vpack.c.bf16 %v2097, %v2095
        %v2385 = vpack.c.bf16 %v2102, %v2100
        %v2386 = vpack.c.bf16 %v2107, %v2105
        %v2387 = vpack.c.bf16 %v2112, %v2110
        %v2388 = vpack.c.bf16 %v2117, %v2115
        %v2389 = vpack.c.bf16 %v2122, %v2120
        %v2390 = vpack.c.bf16 %v2127, %v2125
        %v2391 = vpack.c.bf16 %v2132, %v2130
        %v2392 = vpack.c.bf16 %v2235, %v2233
        %v2393 = vpack.c.bf16 %v2240, %v2238
        %v2394 = vpack.c.bf16 %v2245, %v2243
        %v2395 = vpack.c.bf16 %v2250, %v2248
        %v2396 = vpack.c.bf16 %v2255, %v2253
        %v2397 = vpack.c.bf16 %v2260, %v2258
        %v2398 = vpack.c.bf16 %v2265, %v2263
        %v2399 = vpack.c.bf16 %v2270, %v2268
        %v2400 = vpack.c.bf16 %v2275, %v2273
        %v2401 = vpack.c.bf16 %v2280, %v2278
        %v2402 = vpack.c.bf16 %v2285, %v2283
        %v2403 = vpack.c.bf16 %v2290, %v2288
        %v2404 = vpack.c.bf16 %v2295, %v2293
        %v2405 = vpack.c.bf16 %v2300, %v2298
        %v2406 = vpack.c.bf16 %v2305, %v2303
        %v2407 = vpack.c.bf16 %v2310, %v2308
        %v2424 = vunpack.c.l.b16 %v892
        %v2425 = vunpack.c.h.b16 %v892
        %v2426 = vunpack.c.l.b16 %v893
        %v2427 = vunpack.c.h.b16 %v893
        %v2428 = vunpack.c.l.b16 %v894
        %v2429 = vunpack.c.h.b16 %v894
        %v2430 = vunpack.c.l.b16 %v895
        %v2431 = vunpack.c.h.b16 %v895
        %v2432 = vunpack.c.l.b16 %v896
        %v2433 = vunpack.c.h.b16 %v896
        %v2434 = vunpack.c.l.b16 %v897
        %v2435 = vunpack.c.h.b16 %v897
        %v2436 = vunpack.c.l.b16 %v898
        %v2437 = vunpack.c.h.b16 %v898
        %v2438 = vunpack.c.l.b16 %v899
        %v2439 = vunpack.c.h.b16 %v899
        %v2440 = vunpack.c.l.b16 %v900
        %v2441 = vunpack.c.h.b16 %v900
        %v2442 = vunpack.c.l.b16 %v901
        %v2443 = vunpack.c.h.b16 %v901
        %v2444 = vunpack.c.l.b16 %v902
        %v2445 = vunpack.c.h.b16 %v902
        %v2446 = vunpack.c.l.b16 %v903
        %v2447 = vunpack.c.h.b16 %v903
        %v2448 = vunpack.c.l.b16 %v904
        %v2449 = vunpack.c.h.b16 %v904
        %v2450 = vunpack.c.l.b16 %v905
        %v2451 = vunpack.c.h.b16 %v905
        %v2452 = vunpack.c.l.b16 %v906
        %v2453 = vunpack.c.h.b16 %v906
        %v2454 = vunpack.c.l.b16 %v907
        %v2455 = vunpack.c.h.b16 %v907
        %v2456 = vpack.c.b16 %v2426, %v2424
        %v2457 = vpack.c.b16 %v2427, %v2425
        %v2458 = vpack.c.b16 %v2430, %v2428
        %v2459 = vpack.c.b16 %v2431, %v2429
        %v2460 = vpack.c.b16 %v2434, %v2432
        %v2461 = vpack.c.b16 %v2435, %v2433
        %v2462 = vpack.c.b16 %v2438, %v2436
        %v2463 = vpack.c.b16 %v2439, %v2437
        %v2464 = vpack.c.b16 %v2442, %v2440
        %v2465 = vpack.c.b16 %v2443, %v2441
        %v2466 = vpack.c.b16 %v2446, %v2444
        %v2467 = vpack.c.b16 %v2447, %v2445
        %v2468 = vpack.c.b16 %v2450, %v2448
        %v2469 = vpack.c.b16 %v2451, %v2449
        %v2470 = vpack.c.b16 %v2454, %v2452
        %v2471 = vpack.c.b16 %v2455, %v2453
        %2488 = vmatpush.bf16.msra.mxu0 %v2399
        %2489 = vmatpush.bf16.msra.mxu0 %v2398
        %2490 = vmatpush.bf16.msra.mxu0 %v2397
        %2491 = vmatpush.bf16.msra.mxu0 %v2396
        %2492 = vmatpush.bf16.msra.mxu0 %v2395
        %2493 = vmatpush.bf16.msra.mxu0 %v2394
        %2494 = vmatpush.bf16.msra.mxu0 %v2393
        %2495 = vmatpush.bf16.msra.mxu0 %v2392
        %2496 = vmatmul.bf16.gmra.mxu0 %v2456
        %v2497 = vpop.f32.mrf.mxu0
        %v2498 = vadd.f32 0.0, %v2497
        %v2499 = vpop.f32.mrf.mxu0
        %v2500 = vadd.f32 0.0, %v2499
        %2501 = vmatmul.bf16.gmra.mxu0 %v2458
        %v2502 = vpop.f32.mrf.mxu0
        %v2503 = vadd.f32 0.0, %v2502
        %v2504 = vpop.f32.mrf.mxu0
        %v2505 = vadd.f32 0.0, %v2504
        %2506 = vmatmul.bf16.gmra.mxu0 %v2460
        %v2507 = vpop.f32.mrf.mxu0
        %v2508 = vadd.f32 0.0, %v2507
        %v2509 = vpop.f32.mrf.mxu0
        %v2510 = vadd.f32 0.0, %v2509
        %2511 = vmatmul.bf16.gmra.mxu0 %v2462
        %v2512 = vpop.f32.mrf.mxu0
        %v2513 = vadd.f32 0.0, %v2512
        %v2514 = vpop.f32.mrf.mxu0
        %v2515 = vadd.f32 0.0, %v2514
        %2516 = vmatmul.bf16.gmra.mxu0 %v2464
        %v2517 = vpop.f32.mrf.mxu0
        %v2518 = vadd.f32 0.0, %v2517
        %v2519 = vpop.f32.mrf.mxu0
        %v2520 = vadd.f32 0.0, %v2519
        %2521 = vmatmul.bf16.gmra.mxu0 %v2466
        %v2522 = vpop.f32.mrf.mxu0
        %v2523 = vadd.f32 0.0, %v2522
        %v2524 = vpop.f32.mrf.mxu0
        %v2525 = vadd.f32 0.0, %v2524
        %2526 = vmatmul.bf16.gmra.mxu0 %v2468
        %v2527 = vpop.f32.mrf.mxu0
        %v2528 = vadd.f32 0.0, %v2527
        %v2529 = vpop.f32.mrf.mxu0
        %v2530 = vadd.f32 0.0, %v2529
        %2531 = vmatmul.bf16.gmra.mxu0 %v2470
        %v2532 = vpop.f32.mrf.mxu0
        %v2533 = vadd.f32 0.0, %v2532
        %v2534 = vpop.f32.mrf.mxu0
        %v2535 = vadd.f32 0.0, %v2534
        %2536 = vdwg.mxu0
        %2537 = vmatpush.bf16.msra.mxu0 %v2407
        %2538 = vmatpush.bf16.msra.mxu0 %v2406
        %2539 = vmatpush.bf16.msra.mxu0 %v2405
        %2540 = vmatpush.bf16.msra.mxu0 %v2404
        %2541 = vmatpush.bf16.msra.mxu0 %v2403
        %2542 = vmatpush.bf16.msra.mxu0 %v2402
        %2543 = vmatpush.bf16.msra.mxu0 %v2401
        %2544 = vmatpush.bf16.msra.mxu0 %v2400
        %2545 = vmatmul.bf16.gmra.mxu0 %v2457
        %v2546 = vpop.f32.mrf.mxu0
        %v2547 = vadd.f32 %v2498, %v2546
        %v2548 = vpop.f32.mrf.mxu0
        %v2549 = vadd.f32 %v2500, %v2548
        %2550 = vmatmul.bf16.gmra.mxu0 %v2459
        %v2551 = vpop.f32.mrf.mxu0
        %v2552 = vadd.f32 %v2503, %v2551
        %v2553 = vpop.f32.mrf.mxu0
        %v2554 = vadd.f32 %v2505, %v2553
        %2555 = vmatmul.bf16.gmra.mxu0 %v2461
        %v2556 = vpop.f32.mrf.mxu0
        %v2557 = vadd.f32 %v2508, %v2556
        %v2558 = vpop.f32.mrf.mxu0
        %v2559 = vadd.f32 %v2510, %v2558
        %2560 = vmatmul.bf16.gmra.mxu0 %v2463
        %v2561 = vpop.f32.mrf.mxu0
        %v2562 = vadd.f32 %v2513, %v2561
        %v2563 = vpop.f32.mrf.mxu0
        %v2564 = vadd.f32 %v2515, %v2563
        %2565 = vmatmul.bf16.gmra.mxu0 %v2465
        %v2566 = vpop.f32.mrf.mxu0
        %v2567 = vadd.f32 %v2518, %v2566
        %v2568 = vpop.f32.mrf.mxu0
        %v2569 = vadd.f32 %v2520, %v2568
        %2570 = vmatmul.bf16.gmra.mxu0 %v2467
        %v2571 = vpop.f32.mrf.mxu0
        %v2572 = vadd.f32 %v2523, %v2571
        %v2573 = vpop.f32.mrf.mxu0
        %v2574 = vadd.f32 %v2525, %v2573
        %2575 = vmatmul.bf16.gmra.mxu0 %v2469
        %v2576 = vpop.f32.mrf.mxu0
        %v2577 = vadd.f32 %v2528, %v2576
        %v2578 = vpop.f32.mrf.mxu0
        %v2579 = vadd.f32 %v2530, %v2578
        %2580 = vmatmul.bf16.gmra.mxu0 %v2471
        %v2581 = vpop.f32.mrf.mxu0
        %v2582 = vadd.f32 %v2533, %v2581
        %v2583 = vpop.f32.mrf.mxu0
        %v2584 = vadd.f32 %v2535, %v2583
        %2585 = vdwg.mxu0
        %v2602 = vunpack.c.l.b16 %v876
        %v2603 = vunpack.c.h.b16 %v876
        %v2604 = vunpack.c.l.b16 %v877
        %v2605 = vunpack.c.h.b16 %v877
        %v2606 = vunpack.c.l.b16 %v878
        %v2607 = vunpack.c.h.b16 %v878
        %v2608 = vunpack.c.l.b16 %v879
        %v2609 = vunpack.c.h.b16 %v879
        %v2610 = vunpack.c.l.b16 %v880
        %v2611 = vunpack.c.h.b16 %v880
        %v2612 = vunpack.c.l.b16 %v881
        %v2613 = vunpack.c.h.b16 %v881
        %v2614 = vunpack.c.l.b16 %v882
        %v2615 = vunpack.c.h.b16 %v882
        %v2616 = vunpack.c.l.b16 %v883
        %v2617 = vunpack.c.h.b16 %v883
        %v2618 = vunpack.c.l.b16 %v884
        %v2619 = vunpack.c.h.b16 %v884
        %v2620 = vunpack.c.l.b16 %v885
        %v2621 = vunpack.c.h.b16 %v885
        %v2622 = vunpack.c.l.b16 %v886
        %v2623 = vunpack.c.h.b16 %v886
        %v2624 = vunpack.c.l.b16 %v887
        %v2625 = vunpack.c.h.b16 %v887
        %v2626 = vunpack.c.l.b16 %v888
        %v2627 = vunpack.c.h.b16 %v888
        %v2628 = vunpack.c.l.b16 %v889
        %v2629 = vunpack.c.h.b16 %v889
        %v2630 = vunpack.c.l.b16 %v890
        %v2631 = vunpack.c.h.b16 %v890
        %v2632 = vunpack.c.l.b16 %v891
        %v2633 = vunpack.c.h.b16 %v891
        %v2634 = vpack.c.b16 %v2604, %v2602
        %v2635 = vpack.c.b16 %v2605, %v2603
        %v2636 = vpack.c.b16 %v2608, %v2606
        %v2637 = vpack.c.b16 %v2609, %v2607
        %v2638 = vpack.c.b16 %v2612, %v2610
        %v2639 = vpack.c.b16 %v2613, %v2611
        %v2640 = vpack.c.b16 %v2616, %v2614
        %v2641 = vpack.c.b16 %v2617, %v2615
        %v2642 = vpack.c.b16 %v2620, %v2618
        %v2643 = vpack.c.b16 %v2621, %v2619
        %v2644 = vpack.c.b16 %v2624, %v2622
        %v2645 = vpack.c.b16 %v2625, %v2623
        %v2646 = vpack.c.b16 %v2628, %v2626
        %v2647 = vpack.c.b16 %v2629, %v2627
        %v2648 = vpack.c.b16 %v2632, %v2630
        %v2649 = vpack.c.b16 %v2633, %v2631
        %2666 = vmatpush.bf16.msra.mxu0 %v2383
        %2667 = vmatpush.bf16.msra.mxu0 %v2382
        %2668 = vmatpush.bf16.msra.mxu0 %v2381
        %2669 = vmatpush.bf16.msra.mxu0 %v2380
        %2670 = vmatpush.bf16.msra.mxu0 %v2379
        %2671 = vmatpush.bf16.msra.mxu0 %v2378
        %2672 = vmatpush.bf16.msra.mxu0 %v2377
        %2673 = vmatpush.bf16.msra.mxu0 %v2376
        %2674 = vmatmul.bf16.gmra.mxu0 %v2634
        %v2675 = vpop.f32.mrf.mxu0
        %v2676 = vadd.f32 %v2547, %v2675
        %v2677 = vpop.f32.mrf.mxu0
        %v2678 = vadd.f32 %v2549, %v2677
        %2679 = vmatmul.bf16.gmra.mxu0 %v2636
        %v2680 = vpop.f32.mrf.mxu0
        %v2681 = vadd.f32 %v2552, %v2680
        %v2682 = vpop.f32.mrf.mxu0
        %v2683 = vadd.f32 %v2554, %v2682
        %2684 = vmatmul.bf16.gmra.mxu0 %v2638
        %v2685 = vpop.f32.mrf.mxu0
        %v2686 = vadd.f32 %v2557, %v2685
        %v2687 = vpop.f32.mrf.mxu0
        %v2688 = vadd.f32 %v2559, %v2687
        %2689 = vmatmul.bf16.gmra.mxu0 %v2640
        %v2690 = vpop.f32.mrf.mxu0
        %v2691 = vadd.f32 %v2562, %v2690
        %v2692 = vpop.f32.mrf.mxu0
        %v2693 = vadd.f32 %v2564, %v2692
        %2694 = vmatmul.bf16.gmra.mxu0 %v2642
        %v2695 = vpop.f32.mrf.mxu0
        %v2696 = vadd.f32 %v2567, %v2695
        %v2697 = vpop.f32.mrf.mxu0
        %v2698 = vadd.f32 %v2569, %v2697
        %2699 = vmatmul.bf16.gmra.mxu0 %v2644
        %v2700 = vpop.f32.mrf.mxu0
        %v2701 = vadd.f32 %v2572, %v2700
        %v2702 = vpop.f32.mrf.mxu0
        %v2703 = vadd.f32 %v2574, %v2702
        %2704 = vmatmul.bf16.gmra.mxu0 %v2646
        %v2705 = vpop.f32.mrf.mxu0
        %v2706 = vadd.f32 %v2577, %v2705
        %v2707 = vpop.f32.mrf.mxu0
        %v2708 = vadd.f32 %v2579, %v2707
        %2709 = vmatmul.bf16.gmra.mxu0 %v2648
        %v2710 = vpop.f32.mrf.mxu0
        %v2711 = vadd.f32 %v2582, %v2710
        %v2712 = vpop.f32.mrf.mxu0
        %v2713 = vadd.f32 %v2584, %v2712
        %2714 = vdwg.mxu0
        %2715 = vmatpush.bf16.msra.mxu0 %v2391
        %2716 = vmatpush.bf16.msra.mxu0 %v2390
        %2717 = vmatpush.bf16.msra.mxu0 %v2389
        %2718 = vmatpush.bf16.msra.mxu0 %v2388
        %2719 = vmatpush.bf16.msra.mxu0 %v2387
        %2720 = vmatpush.bf16.msra.mxu0 %v2386
        %2721 = vmatpush.bf16.msra.mxu0 %v2385
        %2722 = vmatpush.bf16.msra.mxu0 %v2384
        %2723 = vmatmul.bf16.gmra.mxu0 %v2635
        %v2724 = vpop.f32.mrf.mxu0
        %v2725 = vadd.f32 %v2676, %v2724
        %v2726 = vpop.f32.mrf.mxu0
        %v2727 = vadd.f32 %v2678, %v2726
        %2728 = vmatmul.bf16.gmra.mxu0 %v2637
        %v2729 = vpop.f32.mrf.mxu0
        %v2730 = vadd.f32 %v2681, %v2729
        %v2731 = vpop.f32.mrf.mxu0
        %v2732 = vadd.f32 %v2683, %v2731
        %2733 = vmatmul.bf16.gmra.mxu0 %v2639
        %v2734 = vpop.f32.mrf.mxu0
        %v2735 = vadd.f32 %v2686, %v2734
        %v2736 = vpop.f32.mrf.mxu0
        %v2737 = vadd.f32 %v2688, %v2736
        %2738 = vmatmul.bf16.gmra.mxu0 %v2641
        %v2739 = vpop.f32.mrf.mxu0
        %v2740 = vadd.f32 %v2691, %v2739
        %v2741 = vpop.f32.mrf.mxu0
        %v2742 = vadd.f32 %v2693, %v2741
        %2743 = vmatmul.bf16.gmra.mxu0 %v2643
        %v2744 = vpop.f32.mrf.mxu0
        %v2745 = vadd.f32 %v2696, %v2744
        %v2746 = vpop.f32.mrf.mxu0
        %v2747 = vadd.f32 %v2698, %v2746
        %2748 = vmatmul.bf16.gmra.mxu0 %v2645
        %v2749 = vpop.f32.mrf.mxu0
        %v2750 = vadd.f32 %v2701, %v2749
        %v2751 = vpop.f32.mrf.mxu0
        %v2752 = vadd.f32 %v2703, %v2751
        %2753 = vmatmul.bf16.gmra.mxu0 %v2647
        %v2754 = vpop.f32.mrf.mxu0
        %v2755 = vadd.f32 %v2706, %v2754
        %v2756 = vpop.f32.mrf.mxu0
        %v2757 = vadd.f32 %v2708, %v2756
        %2758 = vmatmul.bf16.gmra.mxu0 %v2649
        %v2759 = vpop.f32.mrf.mxu0
        %v2760 = vadd.f32 %v2711, %v2759
        %v2761 = vpop.f32.mrf.mxu0
        %v2762 = vadd.f32 %v2713, %v2761
        %2763 = vdwg.mxu0
        %2765 = vset.pattern.permute.xlu0 0
        %2766 = vperm.xlu0 %2765, %v908
        %v2767 = vpop.permute.xlu0 %2766
        %2770 = vset.pattern.permute.xlu0 0
        %2771 = vperm.xlu0 %2770, %v909
        %v2772 = vpop.permute.xlu0 %2771
        %2775 = vset.pattern.permute.xlu0 0
        %2776 = vperm.xlu0 %2775, %v910
        %v2777 = vpop.permute.xlu0 %2776
        %2780 = vset.pattern.permute.xlu0 0
        %2781 = vperm.xlu0 %2780, %v911
        %v2782 = vpop.permute.xlu0 %2781
        %2785 = vset.pattern.permute.xlu0 0
        %2786 = vperm.xlu0 %2785, %v912
        %v2787 = vpop.permute.xlu0 %2786
        %2790 = vset.pattern.permute.xlu0 0
        %2791 = vperm.xlu0 %2790, %v913
        %v2792 = vpop.permute.xlu0 %2791
        %2795 = vset.pattern.permute.xlu0 0
        %2796 = vperm.xlu0 %2795, %v914
        %v2797 = vpop.permute.xlu0 %2796
        %2800 = vset.pattern.permute.xlu0 0
        %2801 = vperm.xlu0 %2800, %v915
        %v2802 = vpop.permute.xlu0 %2801
        %2805 = vset.pattern.permute.xlu0 0
        %2806 = vperm.xlu0 %2805, %v916
        %v2807 = vpop.permute.xlu0 %2806
        %2810 = vset.pattern.permute.xlu0 0
        %2811 = vperm.xlu0 %2810, %v917
        %v2812 = vpop.permute.xlu0 %2811
        %2815 = vset.pattern.permute.xlu0 0
        %2816 = vperm.xlu0 %2815, %v918
        %v2817 = vpop.permute.xlu0 %2816
        %2820 = vset.pattern.permute.xlu0 0
        %2821 = vperm.xlu0 %2820, %v919
        %v2822 = vpop.permute.xlu0 %2821
        %2825 = vset.pattern.permute.xlu0 0
        %2826 = vperm.xlu0 %2825, %v920
        %v2827 = vpop.permute.xlu0 %2826
        %2830 = vset.pattern.permute.xlu0 0
        %2831 = vperm.xlu0 %2830, %v921
        %v2832 = vpop.permute.xlu0 %2831
        %2835 = vset.pattern.permute.xlu0 0
        %2836 = vperm.xlu0 %2835, %v922
        %v2837 = vpop.permute.xlu0 %2836
        %2840 = vset.pattern.permute.xlu0 0
        %2841 = vperm.xlu0 %2840, %v923
        %v2842 = vpop.permute.xlu0 %2841
        %v2844 = vmul.f32 %v2725, %v2767
        %v2845 = vmul.f32 %v2727, %v2772
        %v2846 = vmul.f32 %v2730, %v2777
        %v2847 = vmul.f32 %v2732, %v2782
        %v2848 = vmul.f32 %v2735, %v2787
        %v2849 = vmul.f32 %v2737, %v2792
        %v2850 = vmul.f32 %v2740, %v2797
        %v2851 = vmul.f32 %v2742, %v2802
        %v2852 = vmul.f32 %v2745, %v2807
        %v2853 = vmul.f32 %v2747, %v2812
        %v2854 = vmul.f32 %v2750, %v2817
        %v2855 = vmul.f32 %v2752, %v2822
        %v2856 = vmul.f32 %v2755, %v2827
        %v2857 = vmul.f32 %v2757, %v2832
        %v2858 = vmul.f32 %v2760, %v2837
        %v2859 = vmul.f32 %v2762, %v2842
        %v2860 = vmul.f32 %v2844, 0.01
        %v2861 = vmul.f32 %v2845, 0.01
        %v2862 = vmul.f32 %v2846, 0.01
        %v2863 = vmul.f32 %v2847, 0.01
        %v2864 = vmul.f32 %v2848, 0.01
        %v2865 = vmul.f32 %v2849, 0.01
        %v2866 = vmul.f32 %v2850, 0.01
        %v2867 = vmul.f32 %v2851, 0.01
        %v2868 = vmul.f32 %v2852, 0.01
        %v2869 = vmul.f32 %v2853, 0.01
        %v2870 = vmul.f32 %v2854, 0.01
        %v2871 = vmul.f32 %v2855, 0.01
        %v2872 = vmul.f32 %v2856, 0.01
        %v2873 = vmul.f32 %v2857, 0.01
        %v2874 = vmul.f32 %v2858, 0.01
        %v2875 = vmul.f32 %v2859, 0.01
        %v2876 = vmax.f32 %v2844, %v2860
        %v2877 = vmax.f32 %v2845, %v2861
        %v2878 = vmax.f32 %v2846, %v2862
        %v2879 = vmax.f32 %v2847, %v2863
        %v2880 = vmax.f32 %v2848, %v2864
        %v2881 = vmax.f32 %v2849, %v2865
        %v2882 = vmax.f32 %v2850, %v2866
        %v2883 = vmax.f32 %v2851, %v2867
        %v2884 = vmax.f32 %v2852, %v2868
        %v2885 = vmax.f32 %v2853, %v2869
        %v2886 = vmax.f32 %v2854, %v2870
        %v2887 = vmax.f32 %v2855, %v2871
        %v2888 = vmax.f32 %v2856, %v2872
        %v2889 = vmax.f32 %v2857, %v2873
        %v2890 = vmax.f32 %v2858, %v2874
        %v2891 = vmax.f32 %v2859, %v2875
        %v2892 = vpack.c.bf16 %v2877, %v2876
        %v2893 = vpack.c.bf16 %v2879, %v2878
        %v2894 = vpack.c.bf16 %v2881, %v2880
        %v2895 = vpack.c.bf16 %v2883, %v2882
        %v2896 = vpack.c.bf16 %v2885, %v2884
        %v2897 = vpack.c.bf16 %v2887, %v2886
        %v2898 = vpack.c.bf16 %v2889, %v2888
        %v2899 = vpack.c.bf16 %v2891, %v2890
        %v2900 = vld [vmem:[#allocation11] sm:$0xf]
        %v2901 = vld [vmem:[#allocation11 + $0x4] sm:$0xf]
        %v2902 = vld [vmem:[#allocation11 + $0x8] sm:$0xf]
        %v2903 = vld [vmem:[#allocation11 + $0xc] sm:$0xf]
        %v2904 = vld [vmem:[#allocation11 + $0x10] sm:$0xf]
        %v2905 = vld [vmem:[#allocation11 + $0x14] sm:$0xf]
        %v2906 = vld [vmem:[#allocation11 + $0x18] sm:$0xf]
        %v2907 = vld [vmem:[#allocation11 + $0x1c] sm:$0xf]
        %v2908 = vld [vmem:[#allocation11 + $0x20] sm:$0xf]
        %v2909 = vld [vmem:[#allocation11 + $0x24] sm:$0xf]
        %v2910 = vld [vmem:[#allocation11 + $0x28] sm:$0xf]
        %v2911 = vld [vmem:[#allocation11 + $0x2c] sm:$0xf]
        %v2912 = vld [vmem:[#allocation11 + $0x30] sm:$0xf]
        %v2913 = vld [vmem:[#allocation11 + $0x34] sm:$0xf]
        %v2914 = vld [vmem:[#allocation11 + $0x38] sm:$0xf]
        %v2915 = vld [vmem:[#allocation11 + $0x3c] sm:$0xf]
        %v2916 = vld [vmem:[%s13] sm:$0x1]
        %v2918 = vperm.slane %v2916, 0
        %v2936 = vunpack.c.l.b16 %v2900
        %v2937 = vunpack.c.l.b16 %v2901
        %v2938 = vunpack.c.l.b16 %v2902
        %v2939 = vunpack.c.l.b16 %v2903
        %v2940 = vunpack.c.l.b16 %v2904
        %v2941 = vunpack.c.l.b16 %v2905
        %v2942 = vunpack.c.l.b16 %v2906
        %v2943 = vunpack.c.l.b16 %v2907
        %v2944 = vunpack.c.l.b16 %v2908
        %v2945 = vunpack.c.l.b16 %v2909
        %v2946 = vunpack.c.l.b16 %v2910
        %v2947 = vunpack.c.l.b16 %v2911
        %v2948 = vunpack.c.l.b16 %v2912
        %v2949 = vunpack.c.l.b16 %v2913
        %v2950 = vunpack.c.l.b16 %v2914
        %v2951 = vunpack.c.l.b16 %v2915
        %v2952 = vpack.c.b16 %v2937, %v2936
        %v2953 = vpack.c.b16 %v2939, %v2938
        %v2954 = vpack.c.b16 %v2941, %v2940
        %v2955 = vpack.c.b16 %v2943, %v2942
        %v2956 = vpack.c.b16 %v2945, %v2944
        %v2957 = vpack.c.b16 %v2947, %v2946
        %v2958 = vpack.c.b16 %v2949, %v2948
        %v2959 = vpack.c.b16 %v2951, %v2950
        %2968 = vmatpush.bf16.msra.mxu0 %v2959
        %2969 = vmatpush.bf16.msra.mxu0 %v2958
        %2970 = vmatpush.bf16.msra.mxu0 %v2957
        %2971 = vmatpush.bf16.msra.mxu0 %v2956
        %2972 = vmatpush.bf16.msra.mxu0 %v2955
        %2973 = vmatpush.bf16.msra.mxu0 %v2954
        %2974 = vmatpush.bf16.msra.mxu0 %v2953
        %2975 = vmatpush.bf16.msra.mxu0 %v2952
        %2976 = vmatmul.bf16.gmra.mxu0 %v2892
        %v2977 = vpop.f32.mrf.mxu0
        %v2978 = vadd.f32 %v2918, %v2977
        %v2979 = vpop.f32.mrf.mxu0
        %v2980 = vadd.f32 %v2918, %v2979
        %2981 = vmatmul.bf16.gmra.mxu0 %v2893
        %v2982 = vpop.f32.mrf.mxu0
        %v2983 = vadd.f32 %v2918, %v2982
        %v2984 = vpop.f32.mrf.mxu0
        %v2985 = vadd.f32 %v2918, %v2984
        %2986 = vmatmul.bf16.gmra.mxu0 %v2894
        %v2987 = vpop.f32.mrf.mxu0
        %v2988 = vadd.f32 %v2918, %v2987
        %v2989 = vpop.f32.mrf.mxu0
        %v2990 = vadd.f32 %v2918, %v2989
        %2991 = vmatmul.bf16.gmra.mxu0 %v2895
        %v2992 = vpop.f32.mrf.mxu0
        %v2993 = vadd.f32 %v2918, %v2992
        %v2994 = vpop.f32.mrf.mxu0
        %v2995 = vadd.f32 %v2918, %v2994
        %2996 = vmatmul.bf16.gmra.mxu0 %v2896
        %v2997 = vpop.f32.mrf.mxu0
        %v2998 = vadd.f32 %v2918, %v2997
        %v2999 = vpop.f32.mrf.mxu0
        %v3000 = vadd.f32 %v2918, %v2999
        %3001 = vmatmul.bf16.gmra.mxu0 %v2897
        %v3002 = vpop.f32.mrf.mxu0
        %v3003 = vadd.f32 %v2918, %v3002
        %v3004 = vpop.f32.mrf.mxu0
        %v3005 = vadd.f32 %v2918, %v3004
        %3006 = vmatmul.bf16.gmra.mxu0 %v2898
        %v3007 = vpop.f32.mrf.mxu0
        %v3008 = vadd.f32 %v2918, %v3007
        %v3009 = vpop.f32.mrf.mxu0
        %v3010 = vadd.f32 %v2918, %v3009
        %3011 = vmatmul.bf16.gmra.mxu0 %v2899
        %v3012 = vpop.f32.mrf.mxu0
        %v3013 = vadd.f32 %v2918, %v3012
        %v3014 = vpop.f32.mrf.mxu0
        %v3015 = vadd.f32 %v2918, %v3014
        %3016 = vdwg.mxu0
        %v3017 = vmul.f32 %v2978, 0.01
        %v3018 = vmul.f32 %v2980, 0.01
        %v3019 = vmul.f32 %v2983, 0.01
        %v3020 = vmul.f32 %v2985, 0.01
        %v3021 = vmul.f32 %v2988, 0.01
        %v3022 = vmul.f32 %v2990, 0.01
        %v3023 = vmul.f32 %v2993, 0.01
        %v3024 = vmul.f32 %v2995, 0.01
        %v3025 = vmul.f32 %v2998, 0.01
        %v3026 = vmul.f32 %v3000, 0.01
        %v3027 = vmul.f32 %v3003, 0.01
        %v3028 = vmul.f32 %v3005, 0.01
        %v3029 = vmul.f32 %v3008, 0.01
        %v3030 = vmul.f32 %v3010, 0.01
        %v3031 = vmul.f32 %v3013, 0.01
        %v3032 = vmul.f32 %v3015, 0.01
        %v3033 = vmax.f32 %v2978, %v3017
        %v3034 = vmax.f32 %v2980, %v3018
        %v3035 = vmax.f32 %v2983, %v3019
        %v3036 = vmax.f32 %v2985, %v3020
        %v3037 = vmax.f32 %v2988, %v3021
        %v3038 = vmax.f32 %v2990, %v3022
        %v3039 = vmax.f32 %v2993, %v3023
        %v3040 = vmax.f32 %v2995, %v3024
        %v3041 = vmax.f32 %v2998, %v3025
        %v3042 = vmax.f32 %v3000, %v3026
        %v3043 = vmax.f32 %v3003, %v3027
        %v3044 = vmax.f32 %v3005, %v3028
        %v3045 = vmax.f32 %v3008, %v3029
        %v3046 = vmax.f32 %v3010, %v3030
        %v3047 = vmax.f32 %v3013, %v3031
        %v3048 = vmax.f32 %v3015, %v3032
        %v3049 = vpack.c.bf16 %v3034, %v3033
        %v3050 = vpack.c.bf16 %v3036, %v3035
        %v3051 = vpack.c.bf16 %v3038, %v3037
        %v3052 = vpack.c.bf16 %v3040, %v3039
        %v3053 = vpack.c.bf16 %v3042, %v3041
        %v3054 = vpack.c.bf16 %v3044, %v3043
        %v3055 = vpack.c.bf16 %v3046, %v3045
        %v3056 = vpack.c.bf16 %v3048, %v3047
        %v3057 = vld [vmem:[#allocation13] sm:$0xf]
        %v3058 = vld [vmem:[#allocation13 + $0x4] sm:$0xf]
        %v3059 = vld [vmem:[#allocation13 + $0x8] sm:$0xf]
        %v3060 = vld [vmem:[#allocation13 + $0xc] sm:$0xf]
        %v3061 = vld [vmem:[#allocation13 + $0x10] sm:$0xf]
        %v3062 = vld [vmem:[#allocation13 + $0x14] sm:$0xf]
        %v3063 = vld [vmem:[#allocation13 + $0x18] sm:$0xf]
        %v3064 = vld [vmem:[#allocation13 + $0x1c] sm:$0xf]
        %v3065 = vld [vmem:[#allocation13 + $0x20] sm:$0xf]
        %v3066 = vld [vmem:[#allocation13 + $0x24] sm:$0xf]
        %v3067 = vld [vmem:[#allocation13 + $0x28] sm:$0xf]
        %v3068 = vld [vmem:[#allocation13 + $0x2c] sm:$0xf]
        %v3069 = vld [vmem:[#allocation13 + $0x30] sm:$0xf]
        %v3070 = vld [vmem:[#allocation13 + $0x34] sm:$0xf]
        %v3071 = vld [vmem:[#allocation13 + $0x38] sm:$0xf]
        %v3072 = vld [vmem:[#allocation13 + $0x3c] sm:$0xf]
        %v3073 = vld [vmem:[%s15] sm:$0x1]
        %v3075 = vperm.slane %v3073, 0
        %v3093 = vunpack.c.l.b16 %v3057
        %v3094 = vunpack.c.l.b16 %v3058
        %v3095 = vunpack.c.l.b16 %v3059
        %v3096 = vunpack.c.l.b16 %v3060
        %v3097 = vunpack.c.l.b16 %v3061
        %v3098 = vunpack.c.l.b16 %v3062
        %v3099 = vunpack.c.l.b16 %v3063
        %v3100 = vunpack.c.l.b16 %v3064
        %v3101 = vunpack.c.l.b16 %v3065
        %v3102 = vunpack.c.l.b16 %v3066
        %v3103 = vunpack.c.l.b16 %v3067
        %v3104 = vunpack.c.l.b16 %v3068
        %v3105 = vunpack.c.l.b16 %v3069
        %v3106 = vunpack.c.l.b16 %v3070
        %v3107 = vunpack.c.l.b16 %v3071
        %v3108 = vunpack.c.l.b16 %v3072
        %v3109 = vpack.c.b16 %v3094, %v3093
        %v3110 = vpack.c.b16 %v3096, %v3095
        %v3111 = vpack.c.b16 %v3098, %v3097
        %v3112 = vpack.c.b16 %v3100, %v3099
        %v3113 = vpack.c.b16 %v3102, %v3101
        %v3114 = vpack.c.b16 %v3104, %v3103
        %v3115 = vpack.c.b16 %v3106, %v3105
        %v3116 = vpack.c.b16 %v3108, %v3107
        %3125 = vmatpush.bf16.msra.mxu0 %v3116
        %3126 = vmatpush.bf16.msra.mxu0 %v3115
        %3127 = vmatpush.bf16.msra.mxu0 %v3114
        %3128 = vmatpush.bf16.msra.mxu0 %v3113
        %3129 = vmatpush.bf16.msra.mxu0 %v3112
        %3130 = vmatpush.bf16.msra.mxu0 %v3111
        %3131 = vmatpush.bf16.msra.mxu0 %v3110
        %3132 = vmatpush.bf16.msra.mxu0 %v3109
        %3133 = vmatmul.bf16.gmra.mxu0 %v3049
        %v3134 = vpop.f32.mrf.mxu0
        %v3135 = vadd.f32 %v3075, %v3134
        %v3136 = vpop.f32.mrf.mxu0
        %v3137 = vadd.f32 %v3075, %v3136
        %3138 = vmatmul.bf16.gmra.mxu0 %v3050
        %v3139 = vpop.f32.mrf.mxu0
        %v3140 = vadd.f32 %v3075, %v3139
        %v3141 = vpop.f32.mrf.mxu0
        %v3142 = vadd.f32 %v3075, %v3141
        %3143 = vmatmul.bf16.gmra.mxu0 %v3051
        %v3144 = vpop.f32.mrf.mxu0
        %v3145 = vadd.f32 %v3075, %v3144
        %v3146 = vpop.f32.mrf.mxu0
        %v3147 = vadd.f32 %v3075, %v3146
        %3148 = vmatmul.bf16.gmra.mxu0 %v3052
        %v3149 = vpop.f32.mrf.mxu0
        %v3150 = vadd.f32 %v3075, %v3149
        %v3151 = vpop.f32.mrf.mxu0
        %v3152 = vadd.f32 %v3075, %v3151
        %3153 = vmatmul.bf16.gmra.mxu0 %v3053
        %v3154 = vpop.f32.mrf.mxu0
        %v3155 = vadd.f32 %v3075, %v3154
        %v3156 = vpop.f32.mrf.mxu0
        %v3157 = vadd.f32 %v3075, %v3156
        %3158 = vmatmul.bf16.gmra.mxu0 %v3054
        %v3159 = vpop.f32.mrf.mxu0
        %v3160 = vadd.f32 %v3075, %v3159
        %v3161 = vpop.f32.mrf.mxu0
        %v3162 = vadd.f32 %v3075, %v3161
        %3163 = vmatmul.bf16.gmra.mxu0 %v3055
        %v3164 = vpop.f32.mrf.mxu0
        %v3165 = vadd.f32 %v3075, %v3164
        %v3166 = vpop.f32.mrf.mxu0
        %v3167 = vadd.f32 %v3075, %v3166
        %3168 = vmatmul.bf16.gmra.mxu0 %v3056
        %v3169 = vpop.f32.mrf.mxu0
        %v3170 = vadd.f32 %v3075, %v3169
        %v3171 = vpop.f32.mrf.mxu0
        %v3172 = vadd.f32 %v3075, %v3171
        %3173 = vdwg.mxu0
        %v3174 = vpack.c.bf16 %v3137, %v3135
        %v3175 = vpack.c.bf16 %v3142, %v3140
        %v3176 = vpack.c.bf16 %v3147, %v3145
        %v3177 = vpack.c.bf16 %v3152, %v3150
        %v3178 = vpack.c.bf16 %v3157, %v3155
        %v3179 = vpack.c.bf16 %v3162, %v3160
        %v3180 = vpack.c.bf16 %v3167, %v3165
        %v3181 = vpack.c.bf16 %v3172, %v3170
        %v3182 = vpack.c.bf16 %v2345, %v2344
        %v3183 = vpack.c.bf16 %v2347, %v2346
        %v3184 = vpack.c.bf16 %v2349, %v2348
        %v3185 = vpack.c.bf16 %v2351, %v2350
        %v3186 = vpack.c.bf16 %v2353, %v2352
        %v3187 = vpack.c.bf16 %v2355, %v2354
        %v3188 = vpack.c.bf16 %v2357, %v2356
        %v3189 = vpack.c.bf16 %v2359, %v2358
        %v3190 = vpack.c.bf16 %v2361, %v2360
        %v3191 = vpack.c.bf16 %v2363, %v2362
        %v3192 = vpack.c.bf16 %v2365, %v2364
        %v3193 = vpack.c.bf16 %v2367, %v2366
        %v3194 = vpack.c.bf16 %v2369, %v2368
        %v3195 = vpack.c.bf16 %v2371, %v2370
        %v3196 = vpack.c.bf16 %v2373, %v2372
        %v3197 = vpack.c.bf16 %v2375, %v2374
        %s3198 = scalar_lea.vmem %s7, 128
        %v3199 = vld [vmem:[%s3198] sm:$0xff]
        %v3200 = vld [vmem:[%s3198 + $0x8] sm:$0xff]
        %v3201 = vld [vmem:[%s3198 + $0x10] sm:$0xff]
        %v3202 = vld [vmem:[%s3198 + $0x18] sm:$0xff]
        %v3203 = vld [vmem:[%s3198 + $0x20] sm:$0xff]
        %v3204 = vld [vmem:[%s3198 + $0x28] sm:$0xff]
        %v3205 = vld [vmem:[%s3198 + $0x30] sm:$0xff]
        %v3206 = vld [vmem:[%s3198 + $0x38] sm:$0xff]
        %v3207 = vld [vmem:[%s3198 + $0x40] sm:$0xff]
        %v3208 = vld [vmem:[%s3198 + $0x48] sm:$0xff]
        %v3209 = vld [vmem:[%s3198 + $0x50] sm:$0xff]
        %v3210 = vld [vmem:[%s3198 + $0x58] sm:$0xff]
        %v3211 = vld [vmem:[%s3198 + $0x60] sm:$0xff]
        %v3212 = vld [vmem:[%s3198 + $0x68] sm:$0xff]
        %v3213 = vld [vmem:[%s3198 + $0x70] sm:$0xff]
        %v3214 = vld [vmem:[%s3198 + $0x78] sm:$0xff]
        %v3231 = vunpack.c.l.b16 %v3199
        %v3232 = vunpack.c.h.b16 %v3199
        %v3233 = vunpack.c.l.b16 %v3200
        %v3234 = vunpack.c.h.b16 %v3200
        %v3235 = vunpack.c.l.b16 %v3201
        %v3236 = vunpack.c.h.b16 %v3201
        %v3237 = vunpack.c.l.b16 %v3202
        %v3238 = vunpack.c.h.b16 %v3202
        %v3239 = vunpack.c.l.b16 %v3203
        %v3240 = vunpack.c.h.b16 %v3203
        %v3241 = vunpack.c.l.b16 %v3204
        %v3242 = vunpack.c.h.b16 %v3204
        %v3243 = vunpack.c.l.b16 %v3205
        %v3244 = vunpack.c.h.b16 %v3205
        %v3245 = vunpack.c.l.b16 %v3206
        %v3246 = vunpack.c.h.b16 %v3206
        %v3247 = vunpack.c.l.b16 %v3207
        %v3248 = vunpack.c.h.b16 %v3207
        %v3249 = vunpack.c.l.b16 %v3208
        %v3250 = vunpack.c.h.b16 %v3208
        %v3251 = vunpack.c.l.b16 %v3209
        %v3252 = vunpack.c.h.b16 %v3209
        %v3253 = vunpack.c.l.b16 %v3210
        %v3254 = vunpack.c.h.b16 %v3210
        %v3255 = vunpack.c.l.b16 %v3211
        %v3256 = vunpack.c.h.b16 %v3211
        %v3257 = vunpack.c.l.b16 %v3212
        %v3258 = vunpack.c.h.b16 %v3212
        %v3259 = vunpack.c.l.b16 %v3213
        %v3260 = vunpack.c.h.b16 %v3213
        %v3261 = vunpack.c.l.b16 %v3214
        %v3262 = vunpack.c.h.b16 %v3214
        %v3263 = vpack.c.b16 %v3233, %v3231
        %v3264 = vpack.c.b16 %v3234, %v3232
        %v3265 = vpack.c.b16 %v3237, %v3235
        %v3266 = vpack.c.b16 %v3238, %v3236
        %v3267 = vpack.c.b16 %v3241, %v3239
        %v3268 = vpack.c.b16 %v3242, %v3240
        %v3269 = vpack.c.b16 %v3245, %v3243
        %v3270 = vpack.c.b16 %v3246, %v3244
        %v3271 = vpack.c.b16 %v3249, %v3247
        %v3272 = vpack.c.b16 %v3250, %v3248
        %v3273 = vpack.c.b16 %v3253, %v3251
        %v3274 = vpack.c.b16 %v3254, %v3252
        %v3275 = vpack.c.b16 %v3257, %v3255
        %v3276 = vpack.c.b16 %v3258, %v3256
        %v3277 = vpack.c.b16 %v3261, %v3259
        %v3278 = vpack.c.b16 %v3262, %v3260
        %3295 = vmatpush.bf16.msra.mxu0 %v3277
        %3296 = vmatpush.bf16.msra.mxu0 %v3275
        %3297 = vmatpush.bf16.msra.mxu0 %v3273
        %3298 = vmatpush.bf16.msra.mxu0 %v3271
        %3299 = vmatpush.bf16.msra.mxu0 %v3269
        %3300 = vmatpush.bf16.msra.mxu0 %v3267
        %3301 = vmatpush.bf16.msra.mxu0 %v3265
        %3302 = vmatpush.bf16.msra.mxu0 %v3263
        %3303 = vmatmul.bf16.gmra.mxu0 %v3174
        %v3304 = vpop.f32.mrf.mxu0
        %v3305 = vadd.f32 0.0, %v3304
        %v3306 = vpop.f32.mrf.mxu0
        %v3307 = vadd.f32 0.0, %v3306
        %3308 = vmatmul.bf16.gmra.mxu0 %v3175
        %v3309 = vpop.f32.mrf.mxu0
        %v3310 = vadd.f32 0.0, %v3309
        %v3311 = vpop.f32.mrf.mxu0
        %v3312 = vadd.f32 0.0, %v3311
        %3313 = vmatmul.bf16.gmra.mxu0 %v3176
        %v3314 = vpop.f32.mrf.mxu0
        %v3315 = vadd.f32 0.0, %v3314
        %v3316 = vpop.f32.mrf.mxu0
        %v3317 = vadd.f32 0.0, %v3316
        %3318 = vmatmul.bf16.gmra.mxu0 %v3177
        %v3319 = vpop.f32.mrf.mxu0
        %v3320 = vadd.f32 0.0, %v3319
        %v3321 = vpop.f32.mrf.mxu0
        %v3322 = vadd.f32 0.0, %v3321
        %3323 = vmatmul.bf16.gmra.mxu0 %v3178
        %v3324 = vpop.f32.mrf.mxu0
        %v3325 = vadd.f32 0.0, %v3324
        %v3326 = vpop.f32.mrf.mxu0
        %v3327 = vadd.f32 0.0, %v3326
        %3328 = vmatmul.bf16.gmra.mxu0 %v3179
        %v3329 = vpop.f32.mrf.mxu0
        %v3330 = vadd.f32 0.0, %v3329
        %v3331 = vpop.f32.mrf.mxu0
        %v3332 = vadd.f32 0.0, %v3331
        %3333 = vmatmul.bf16.gmra.mxu0 %v3180
        %v3334 = vpop.f32.mrf.mxu0
        %v3335 = vadd.f32 0.0, %v3334
        %v3336 = vpop.f32.mrf.mxu0
        %v3337 = vadd.f32 0.0, %v3336
        %3338 = vmatmul.bf16.gmra.mxu0 %v3181
        %v3339 = vpop.f32.mrf.mxu0
        %v3340 = vadd.f32 0.0, %v3339
        %v3341 = vpop.f32.mrf.mxu0
        %v3342 = vadd.f32 0.0, %v3341
        %3343 = vdwg.mxu0
        %3344 = vmatpush.bf16.msra.mxu0 %v3278
        %3345 = vmatpush.bf16.msra.mxu0 %v3276
        %3346 = vmatpush.bf16.msra.mxu0 %v3274
        %3347 = vmatpush.bf16.msra.mxu0 %v3272
        %3348 = vmatpush.bf16.msra.mxu0 %v3270
        %3349 = vmatpush.bf16.msra.mxu0 %v3268
        %3350 = vmatpush.bf16.msra.mxu0 %v3266
        %3351 = vmatpush.bf16.msra.mxu0 %v3264
        %3352 = vmatmul.bf16.gmra.mxu0 %v3174
        %v3353 = vpop.f32.mrf.mxu0
        %v3354 = vadd.f32 0.0, %v3353
        %v3355 = vpop.f32.mrf.mxu0
        %v3356 = vadd.f32 0.0, %v3355
        %3357 = vmatmul.bf16.gmra.mxu0 %v3175
        %v3358 = vpop.f32.mrf.mxu0
        %v3359 = vadd.f32 0.0, %v3358
        %v3360 = vpop.f32.mrf.mxu0
        %v3361 = vadd.f32 0.0, %v3360
        %3362 = vmatmul.bf16.gmra.mxu0 %v3176
        %v3363 = vpop.f32.mrf.mxu0
        %v3364 = vadd.f32 0.0, %v3363
        %v3365 = vpop.f32.mrf.mxu0
        %v3366 = vadd.f32 0.0, %v3365
        %3367 = vmatmul.bf16.gmra.mxu0 %v3177
        %v3368 = vpop.f32.mrf.mxu0
        %v3369 = vadd.f32 0.0, %v3368
        %v3370 = vpop.f32.mrf.mxu0
        %v3371 = vadd.f32 0.0, %v3370
        %3372 = vmatmul.bf16.gmra.mxu0 %v3178
        %v3373 = vpop.f32.mrf.mxu0
        %v3374 = vadd.f32 0.0, %v3373
        %v3375 = vpop.f32.mrf.mxu0
        %v3376 = vadd.f32 0.0, %v3375
        %3377 = vmatmul.bf16.gmra.mxu0 %v3179
        %v3378 = vpop.f32.mrf.mxu0
        %v3379 = vadd.f32 0.0, %v3378
        %v3380 = vpop.f32.mrf.mxu0
        %v3381 = vadd.f32 0.0, %v3380
        %3382 = vmatmul.bf16.gmra.mxu0 %v3180
        %v3383 = vpop.f32.mrf.mxu0
        %v3384 = vadd.f32 0.0, %v3383
        %v3385 = vpop.f32.mrf.mxu0
        %v3386 = vadd.f32 0.0, %v3385
        %3387 = vmatmul.bf16.gmra.mxu0 %v3181
        %v3388 = vpop.f32.mrf.mxu0
        %v3389 = vadd.f32 0.0, %v3388
        %v3390 = vpop.f32.mrf.mxu0
        %v3391 = vadd.f32 0.0, %v3390
        %3392 = vdwg.mxu0
        %v3393 = vpack.c.bf16 %v3307, %v3305
        %v3394 = vpack.c.bf16 %v3312, %v3310
        %v3395 = vpack.c.bf16 %v3317, %v3315
        %v3396 = vpack.c.bf16 %v3322, %v3320
        %v3397 = vpack.c.bf16 %v3327, %v3325
        %v3398 = vpack.c.bf16 %v3332, %v3330
        %v3399 = vpack.c.bf16 %v3337, %v3335
        %v3400 = vpack.c.bf16 %v3342, %v3340
        %v3401 = vpack.c.bf16 %v3356, %v3354
        %v3402 = vpack.c.bf16 %v3361, %v3359
        %v3403 = vpack.c.bf16 %v3366, %v3364
        %v3404 = vpack.c.bf16 %v3371, %v3369
        %v3405 = vpack.c.bf16 %v3376, %v3374
        %v3406 = vpack.c.bf16 %v3381, %v3379
        %v3407 = vpack.c.bf16 %v3386, %v3384
        %v3408 = vpack.c.bf16 %v3391, %v3389
        %3409 = vmatpush.bf16.msra.mxu0 %v3408
        %3410 = vmatpush.bf16.msra.mxu0 %v3407
        %3411 = vmatpush.bf16.msra.mxu0 %v3406
        %3412 = vmatpush.bf16.msra.mxu0 %v3405
        %3413 = vmatpush.bf16.msra.mxu0 %v3404
        %3414 = vmatpush.bf16.msra.mxu0 %v3403
        %3415 = vmatpush.bf16.msra.mxu0 %v3402
        %3416 = vmatpush.bf16.msra.mxu0 %v3401
        %3417 = vmatmul.bf16.gmra.mxu0 %v1270
        %v3418 = vpop.f32.mrf.mxu0
        %v3419 = vadd.f32 0.0, %v3418
        %v3420 = vpop.f32.mrf.mxu0
        %v3421 = vadd.f32 0.0, %v3420
        %3422 = vmatmul.bf16.gmra.mxu0 %v1271
        %v3423 = vpop.f32.mrf.mxu0
        %v3424 = vadd.f32 0.0, %v3423
        %v3425 = vpop.f32.mrf.mxu0
        %v3426 = vadd.f32 0.0, %v3425
        %3427 = vmatmul.bf16.gmra.mxu0 %v1272
        %v3428 = vpop.f32.mrf.mxu0
        %v3429 = vadd.f32 0.0, %v3428
        %v3430 = vpop.f32.mrf.mxu0
        %v3431 = vadd.f32 0.0, %v3430
        %3432 = vmatmul.bf16.gmra.mxu0 %v1273
        %v3433 = vpop.f32.mrf.mxu0
        %v3434 = vadd.f32 0.0, %v3433
        %v3435 = vpop.f32.mrf.mxu0
        %v3436 = vadd.f32 0.0, %v3435
        %3437 = vmatmul.bf16.gmra.mxu0 %v1274
        %v3438 = vpop.f32.mrf.mxu0
        %v3439 = vadd.f32 0.0, %v3438
        %v3440 = vpop.f32.mrf.mxu0
        %v3441 = vadd.f32 0.0, %v3440
        %3442 = vmatmul.bf16.gmra.mxu0 %v1275
        %v3443 = vpop.f32.mrf.mxu0
        %v3444 = vadd.f32 0.0, %v3443
        %v3445 = vpop.f32.mrf.mxu0
        %v3446 = vadd.f32 0.0, %v3445
        %3447 = vmatmul.bf16.gmra.mxu0 %v1276
        %v3448 = vpop.f32.mrf.mxu0
        %v3449 = vadd.f32 0.0, %v3448
        %v3450 = vpop.f32.mrf.mxu0
        %v3451 = vadd.f32 0.0, %v3450
        %3452 = vmatmul.bf16.gmra.mxu0 %v1277
        %v3453 = vpop.f32.mrf.mxu0
        %v3454 = vadd.f32 0.0, %v3453
        %v3455 = vpop.f32.mrf.mxu0
        %v3456 = vadd.f32 0.0, %v3455
        %3457 = vmatmul.bf16.gmra.mxu0 %v1278
        %v3458 = vpop.f32.mrf.mxu0
        %v3459 = vadd.f32 0.0, %v3458
        %v3460 = vpop.f32.mrf.mxu0
        %v3461 = vadd.f32 0.0, %v3460
        %3462 = vmatmul.bf16.gmra.mxu0 %v1279
        %v3463 = vpop.f32.mrf.mxu0
        %v3464 = vadd.f32 0.0, %v3463
        %v3465 = vpop.f32.mrf.mxu0
        %v3466 = vadd.f32 0.0, %v3465
        %3467 = vmatmul.bf16.gmra.mxu0 %v1280
        %v3468 = vpop.f32.mrf.mxu0
        %v3469 = vadd.f32 0.0, %v3468
        %v3470 = vpop.f32.mrf.mxu0
        %v3471 = vadd.f32 0.0, %v3470
        %3472 = vmatmul.bf16.gmra.mxu0 %v1281
        %v3473 = vpop.f32.mrf.mxu0
        %v3474 = vadd.f32 0.0, %v3473
        %v3475 = vpop.f32.mrf.mxu0
        %v3476 = vadd.f32 0.0, %v3475
        %3477 = vmatmul.bf16.gmra.mxu0 %v1282
        %v3478 = vpop.f32.mrf.mxu0
        %v3479 = vadd.f32 0.0, %v3478
        %v3480 = vpop.f32.mrf.mxu0
        %v3481 = vadd.f32 0.0, %v3480
        %3482 = vmatmul.bf16.gmra.mxu0 %v1283
        %v3483 = vpop.f32.mrf.mxu0
        %v3484 = vadd.f32 0.0, %v3483
        %v3485 = vpop.f32.mrf.mxu0
        %v3486 = vadd.f32 0.0, %v3485
        %3487 = vmatmul.bf16.gmra.mxu0 %v1284
        %v3488 = vpop.f32.mrf.mxu0
        %v3489 = vadd.f32 0.0, %v3488
        %v3490 = vpop.f32.mrf.mxu0
        %v3491 = vadd.f32 0.0, %v3490
        %3492 = vmatmul.bf16.gmra.mxu0 %v1285
        %v3493 = vpop.f32.mrf.mxu0
        %v3494 = vadd.f32 0.0, %v3493
        %v3495 = vpop.f32.mrf.mxu0
        %v3496 = vadd.f32 0.0, %v3495
        %3497 = vdwg.mxu0
        %s3498 = scalar_lea.vmem [#allocation10], 64
        %v3499 = vld [vmem:[%s3498] sm:$0xf]
        %v3500 = vld [vmem:[%s3498 + $0x4] sm:$0xf]
        %v3501 = vld [vmem:[%s3498 + $0x8] sm:$0xf]
        %v3502 = vld [vmem:[%s3498 + $0xc] sm:$0xf]
        %v3503 = vld [vmem:[%s3498 + $0x10] sm:$0xf]
        %v3504 = vld [vmem:[%s3498 + $0x14] sm:$0xf]
        %v3505 = vld [vmem:[%s3498 + $0x18] sm:$0xf]
        %v3506 = vld [vmem:[%s3498 + $0x1c] sm:$0xf]
        %v3507 = vld [vmem:[%s3498 + $0x20] sm:$0xf]
        %v3508 = vld [vmem:[%s3498 + $0x24] sm:$0xf]
        %v3509 = vld [vmem:[%s3498 + $0x28] sm:$0xf]
        %v3510 = vld [vmem:[%s3498 + $0x2c] sm:$0xf]
        %v3511 = vld [vmem:[%s3498 + $0x30] sm:$0xf]
        %v3512 = vld [vmem:[%s3498 + $0x34] sm:$0xf]
        %v3513 = vld [vmem:[%s3498 + $0x38] sm:$0xf]
        %v3514 = vld [vmem:[%s3498 + $0x3c] sm:$0xf]
        %v3531 = vunpack.c.l.b16 %v3499
        %v3532 = vunpack.c.l.b16 %v3500
        %v3533 = vunpack.c.l.b16 %v3501
        %v3534 = vunpack.c.l.b16 %v3502
        %v3535 = vunpack.c.l.b16 %v3503
        %v3536 = vunpack.c.l.b16 %v3504
        %v3537 = vunpack.c.l.b16 %v3505
        %v3538 = vunpack.c.l.b16 %v3506
        %v3539 = vunpack.c.l.b16 %v3507
        %v3540 = vunpack.c.l.b16 %v3508
        %v3541 = vunpack.c.l.b16 %v3509
        %v3542 = vunpack.c.l.b16 %v3510
        %v3543 = vunpack.c.l.b16 %v3511
        %v3544 = vunpack.c.l.b16 %v3512
        %v3545 = vunpack.c.l.b16 %v3513
        %v3546 = vunpack.c.l.b16 %v3514
        %v3547 = vpack.c.b16 %v3532, %v3531
        %v3548 = vpack.c.b16 %v3534, %v3533
        %v3549 = vpack.c.b16 %v3536, %v3535
        %v3550 = vpack.c.b16 %v3538, %v3537
        %v3551 = vpack.c.b16 %v3540, %v3539
        %v3552 = vpack.c.b16 %v3542, %v3541
        %v3553 = vpack.c.b16 %v3544, %v3543
        %v3554 = vpack.c.b16 %v3546, %v3545
        %3563 = vmatpush.bf16.msra.mxu0 %v3554
        %3564 = vmatpush.bf16.msra.mxu0 %v3553
        %3565 = vmatpush.bf16.msra.mxu0 %v3552
        %3566 = vmatpush.bf16.msra.mxu0 %v3551
        %3567 = vmatpush.bf16.msra.mxu0 %v3550
        %3568 = vmatpush.bf16.msra.mxu0 %v3549
        %3569 = vmatpush.bf16.msra.mxu0 %v3548
        %3570 = vmatpush.bf16.msra.mxu0 %v3547
        %3571 = vmatmul.bf16.gmra.mxu0 %v3182
        %v3572 = vpop.f32.mrf.mxu0
        %v3573 = vadd.f32 0.0, %v3572
        %v3574 = vpop.f32.mrf.mxu0
        %v3575 = vadd.f32 0.0, %v3574
        %3576 = vmatmul.bf16.gmra.mxu0 %v3183
        %v3577 = vpop.f32.mrf.mxu0
        %v3578 = vadd.f32 0.0, %v3577
        %v3579 = vpop.f32.mrf.mxu0
        %v3580 = vadd.f32 0.0, %v3579
        %3581 = vmatmul.bf16.gmra.mxu0 %v3184
        %v3582 = vpop.f32.mrf.mxu0
        %v3583 = vadd.f32 0.0, %v3582
        %v3584 = vpop.f32.mrf.mxu0
        %v3585 = vadd.f32 0.0, %v3584
        %3586 = vmatmul.bf16.gmra.mxu0 %v3185
        %v3587 = vpop.f32.mrf.mxu0
        %v3588 = vadd.f32 0.0, %v3587
        %v3589 = vpop.f32.mrf.mxu0
        %v3590 = vadd.f32 0.0, %v3589
        %3591 = vmatmul.bf16.gmra.mxu0 %v3186
        %v3592 = vpop.f32.mrf.mxu0
        %v3593 = vadd.f32 0.0, %v3592
        %v3594 = vpop.f32.mrf.mxu0
        %v3595 = vadd.f32 0.0, %v3594
        %3596 = vmatmul.bf16.gmra.mxu0 %v3187
        %v3597 = vpop.f32.mrf.mxu0
        %v3598 = vadd.f32 0.0, %v3597
        %v3599 = vpop.f32.mrf.mxu0
        %v3600 = vadd.f32 0.0, %v3599
        %3601 = vmatmul.bf16.gmra.mxu0 %v3188
        %v3602 = vpop.f32.mrf.mxu0
        %v3603 = vadd.f32 0.0, %v3602
        %v3604 = vpop.f32.mrf.mxu0
        %v3605 = vadd.f32 0.0, %v3604
        %3606 = vmatmul.bf16.gmra.mxu0 %v3189
        %v3607 = vpop.f32.mrf.mxu0
        %v3608 = vadd.f32 0.0, %v3607
        %v3609 = vpop.f32.mrf.mxu0
        %v3610 = vadd.f32 0.0, %v3609
        %3611 = vmatmul.bf16.gmra.mxu0 %v3190
        %v3612 = vpop.f32.mrf.mxu0
        %v3613 = vadd.f32 0.0, %v3612
        %v3614 = vpop.f32.mrf.mxu0
        %v3615 = vadd.f32 0.0, %v3614
        %3616 = vmatmul.bf16.gmra.mxu0 %v3191
        %v3617 = vpop.f32.mrf.mxu0
        %v3618 = vadd.f32 0.0, %v3617
        %v3619 = vpop.f32.mrf.mxu0
        %v3620 = vadd.f32 0.0, %v3619
        %3621 = vmatmul.bf16.gmra.mxu0 %v3192
        %v3622 = vpop.f32.mrf.mxu0
        %v3623 = vadd.f32 0.0, %v3622
        %v3624 = vpop.f32.mrf.mxu0
        %v3625 = vadd.f32 0.0, %v3624
        %3626 = vmatmul.bf16.gmra.mxu0 %v3193
        %v3627 = vpop.f32.mrf.mxu0
        %v3628 = vadd.f32 0.0, %v3627
        %v3629 = vpop.f32.mrf.mxu0
        %v3630 = vadd.f32 0.0, %v3629
        %3631 = vmatmul.bf16.gmra.mxu0 %v3194
        %v3632 = vpop.f32.mrf.mxu0
        %v3633 = vadd.f32 0.0, %v3632
        %v3634 = vpop.f32.mrf.mxu0
        %v3635 = vadd.f32 0.0, %v3634
        %3636 = vmatmul.bf16.gmra.mxu0 %v3195
        %v3637 = vpop.f32.mrf.mxu0
        %v3638 = vadd.f32 0.0, %v3637
        %v3639 = vpop.f32.mrf.mxu0
        %v3640 = vadd.f32 0.0, %v3639
        %3641 = vmatmul.bf16.gmra.mxu0 %v3196
        %v3642 = vpop.f32.mrf.mxu0
        %v3643 = vadd.f32 0.0, %v3642
        %v3644 = vpop.f32.mrf.mxu0
        %v3645 = vadd.f32 0.0, %v3644
        %3646 = vmatmul.bf16.gmra.mxu0 %v3197
        %v3647 = vpop.f32.mrf.mxu0
        %v3648 = vadd.f32 0.0, %v3647
        %v3649 = vpop.f32.mrf.mxu0
        %v3650 = vadd.f32 0.0, %v3649
        %3651 = vdwg.mxu0
        %3652 = vmatpush.bf16.msra.mxu0 %v3400
        %3653 = vmatpush.bf16.msra.mxu0 %v3399
        %3654 = vmatpush.bf16.msra.mxu0 %v3398
        %3655 = vmatpush.bf16.msra.mxu0 %v3397
        %3656 = vmatpush.bf16.msra.mxu0 %v3396
        %3657 = vmatpush.bf16.msra.mxu0 %v3395
        %3658 = vmatpush.bf16.msra.mxu0 %v3394
        %3659 = vmatpush.bf16.msra.mxu0 %v3393
        %3660 = vmatmul.bf16.gmra.mxu0 %v1608
        %v3661 = vpop.f32.mrf.mxu0
        %v3662 = vadd.f32 %v3573, %v3661
        %v3663 = vpop.f32.mrf.mxu0
        %v3664 = vadd.f32 %v3575, %v3663
        %3665 = vmatmul.bf16.gmra.mxu0 %v1609
        %v3666 = vpop.f32.mrf.mxu0
        %v3667 = vadd.f32 %v3578, %v3666
        %v3668 = vpop.f32.mrf.mxu0
        %v3669 = vadd.f32 %v3580, %v3668
        %3670 = vmatmul.bf16.gmra.mxu0 %v1610
        %v3671 = vpop.f32.mrf.mxu0
        %v3672 = vadd.f32 %v3583, %v3671
        %v3673 = vpop.f32.mrf.mxu0
        %v3674 = vadd.f32 %v3585, %v3673
        %3675 = vmatmul.bf16.gmra.mxu0 %v1611
        %v3676 = vpop.f32.mrf.mxu0
        %v3677 = vadd.f32 %v3588, %v3676
        %v3678 = vpop.f32.mrf.mxu0
        %v3679 = vadd.f32 %v3590, %v3678
        %3680 = vmatmul.bf16.gmra.mxu0 %v1612
        %v3681 = vpop.f32.mrf.mxu0
        %v3682 = vadd.f32 %v3593, %v3681
        %v3683 = vpop.f32.mrf.mxu0
        %v3684 = vadd.f32 %v3595, %v3683
        %3685 = vmatmul.bf16.gmra.mxu0 %v1613
        %v3686 = vpop.f32.mrf.mxu0
        %v3687 = vadd.f32 %v3598, %v3686
        %v3688 = vpop.f32.mrf.mxu0
        %v3689 = vadd.f32 %v3600, %v3688
        %3690 = vmatmul.bf16.gmra.mxu0 %v1614
        %v3691 = vpop.f32.mrf.mxu0
        %v3692 = vadd.f32 %v3603, %v3691
        %v3693 = vpop.f32.mrf.mxu0
        %v3694 = vadd.f32 %v3605, %v3693
        %3695 = vmatmul.bf16.gmra.mxu0 %v1615
        %v3696 = vpop.f32.mrf.mxu0
        %v3697 = vadd.f32 %v3608, %v3696
        %v3698 = vpop.f32.mrf.mxu0
        %v3699 = vadd.f32 %v3610, %v3698
        %3700 = vmatmul.bf16.gmra.mxu0 %v1616
        %v3701 = vpop.f32.mrf.mxu0
        %v3702 = vadd.f32 %v3613, %v3701
        %v3703 = vpop.f32.mrf.mxu0
        %v3704 = vadd.f32 %v3615, %v3703
        %3705 = vmatmul.bf16.gmra.mxu0 %v1617
        %v3706 = vpop.f32.mrf.mxu0
        %v3707 = vadd.f32 %v3618, %v3706
        %v3708 = vpop.f32.mrf.mxu0
        %v3709 = vadd.f32 %v3620, %v3708
        %3710 = vmatmul.bf16.gmra.mxu0 %v1618
        %v3711 = vpop.f32.mrf.mxu0
        %v3712 = vadd.f32 %v3623, %v3711
        %v3713 = vpop.f32.mrf.mxu0
        %v3714 = vadd.f32 %v3625, %v3713
        %3715 = vmatmul.bf16.gmra.mxu0 %v1619
        %v3716 = vpop.f32.mrf.mxu0
        %v3717 = vadd.f32 %v3628, %v3716
        %v3718 = vpop.f32.mrf.mxu0
        %v3719 = vadd.f32 %v3630, %v3718
        %3720 = vmatmul.bf16.gmra.mxu0 %v1620
        %v3721 = vpop.f32.mrf.mxu0
        %v3722 = vadd.f32 %v3633, %v3721
        %v3723 = vpop.f32.mrf.mxu0
        %v3724 = vadd.f32 %v3635, %v3723
        %3725 = vmatmul.bf16.gmra.mxu0 %v1621
        %v3726 = vpop.f32.mrf.mxu0
        %v3727 = vadd.f32 %v3638, %v3726
        %v3728 = vpop.f32.mrf.mxu0
        %v3729 = vadd.f32 %v3640, %v3728
        %3730 = vmatmul.bf16.gmra.mxu0 %v1622
        %v3731 = vpop.f32.mrf.mxu0
        %v3732 = vadd.f32 %v3643, %v3731
        %v3733 = vpop.f32.mrf.mxu0
        %v3734 = vadd.f32 %v3645, %v3733
        %3735 = vmatmul.bf16.gmra.mxu0 %v1623
        %v3736 = vpop.f32.mrf.mxu0
        %v3737 = vadd.f32 %v3648, %v3736
        %v3738 = vpop.f32.mrf.mxu0
        %v3739 = vadd.f32 %v3650, %v3738
        %3740 = vdwg.mxu0
        %v3741 = vadd.f32 %v3662, %v3419
        %v3742 = vadd.f32 %v3664, %v3421
        %v3743 = vadd.f32 %v3667, %v3424
        %v3744 = vadd.f32 %v3669, %v3426
        %v3745 = vadd.f32 %v3672, %v3429
        %v3746 = vadd.f32 %v3674, %v3431
        %v3747 = vadd.f32 %v3677, %v3434
        %v3748 = vadd.f32 %v3679, %v3436
        %v3749 = vadd.f32 %v3682, %v3439
        %v3750 = vadd.f32 %v3684, %v3441
        %v3751 = vadd.f32 %v3687, %v3444
        %v3752 = vadd.f32 %v3689, %v3446
        %v3753 = vadd.f32 %v3692, %v3449
        %v3754 = vadd.f32 %v3694, %v3451
        %v3755 = vadd.f32 %v3697, %v3454
        %v3756 = vadd.f32 %v3699, %v3456
        %v3757 = vadd.f32 %v3702, %v3459
        %v3758 = vadd.f32 %v3704, %v3461
        %v3759 = vadd.f32 %v3707, %v3464
        %v3760 = vadd.f32 %v3709, %v3466
        %v3761 = vadd.f32 %v3712, %v3469
        %v3762 = vadd.f32 %v3714, %v3471
        %v3763 = vadd.f32 %v3717, %v3474
        %v3764 = vadd.f32 %v3719, %v3476
        %v3765 = vadd.f32 %v3722, %v3479
        %v3766 = vadd.f32 %v3724, %v3481
        %v3767 = vadd.f32 %v3727, %v3484
        %v3768 = vadd.f32 %v3729, %v3486
        %v3769 = vadd.f32 %v3732, %v3489
        %v3770 = vadd.f32 %v3734, %v3491
        %v3771 = vadd.f32 %v3737, %v3494
        %v3772 = vadd.f32 %v3739, %v3496
        %s3773 = scalar_lea.vmem %s9, 1
        %v3774 = vld [vmem:[%s3773] sm:$0x1]
        %v3776 = vperm.slane %v3774, 0
        %v3778 = vadd.f32 %v3741, %v3776
        %v3779 = vadd.f32 %v3742, %v3776
        %v3780 = vadd.f32 %v3743, %v3776
        %v3781 = vadd.f32 %v3744, %v3776
        %v3782 = vadd.f32 %v3745, %v3776
        %v3783 = vadd.f32 %v3746, %v3776
        %v3784 = vadd.f32 %v3747, %v3776
        %v3785 = vadd.f32 %v3748, %v3776
        %v3786 = vadd.f32 %v3749, %v3776
        %v3787 = vadd.f32 %v3750, %v3776
        %v3788 = vadd.f32 %v3751, %v3776
        %v3789 = vadd.f32 %v3752, %v3776
        %v3790 = vadd.f32 %v3753, %v3776
        %v3791 = vadd.f32 %v3754, %v3776
        %v3792 = vadd.f32 %v3755, %v3776
        %v3793 = vadd.f32 %v3756, %v3776
        %v3794 = vadd.f32 %v3757, %v3776
        %v3795 = vadd.f32 %v3758, %v3776
        %v3796 = vadd.f32 %v3759, %v3776
        %v3797 = vadd.f32 %v3760, %v3776
        %v3798 = vadd.f32 %v3761, %v3776
        %v3799 = vadd.f32 %v3762, %v3776
        %v3800 = vadd.f32 %v3763, %v3776
        %v3801 = vadd.f32 %v3764, %v3776
        %v3802 = vadd.f32 %v3765, %v3776
        %v3803 = vadd.f32 %v3766, %v3776
        %v3804 = vadd.f32 %v3767, %v3776
        %v3805 = vadd.f32 %v3768, %v3776
        %v3806 = vadd.f32 %v3769, %v3776
        %v3807 = vadd.f32 %v3770, %v3776
        %v3808 = vadd.f32 %v3771, %v3776
        %v3809 = vadd.f32 %v3772, %v3776
        %v3810 = vmul.f32 %v3778, 0.01
        %v3811 = vmul.f32 %v3779, 0.01
        %v3812 = vmul.f32 %v3780, 0.01
        %v3813 = vmul.f32 %v3781, 0.01
        %v3814 = vmul.f32 %v3782, 0.01
        %v3815 = vmul.f32 %v3783, 0.01
        %v3816 = vmul.f32 %v3784, 0.01
        %v3817 = vmul.f32 %v3785, 0.01
        %v3818 = vmul.f32 %v3786, 0.01
        %v3819 = vmul.f32 %v3787, 0.01
        %v3820 = vmul.f32 %v3788, 0.01
        %v3821 = vmul.f32 %v3789, 0.01
        %v3822 = vmul.f32 %v3790, 0.01
        %v3823 = vmul.f32 %v3791, 0.01
        %v3824 = vmul.f32 %v3792, 0.01
        %v3825 = vmul.f32 %v3793, 0.01
        %v3826 = vmul.f32 %v3794, 0.01
        %v3827 = vmul.f32 %v3795, 0.01
        %v3828 = vmul.f32 %v3796, 0.01
        %v3829 = vmul.f32 %v3797, 0.01
        %v3830 = vmul.f32 %v3798, 0.01
        %v3831 = vmul.f32 %v3799, 0.01
        %v3832 = vmul.f32 %v3800, 0.01
        %v3833 = vmul.f32 %v3801, 0.01
        %v3834 = vmul.f32 %v3802, 0.01
        %v3835 = vmul.f32 %v3803, 0.01
        %v3836 = vmul.f32 %v3804, 0.01
        %v3837 = vmul.f32 %v3805, 0.01
        %v3838 = vmul.f32 %v3806, 0.01
        %v3839 = vmul.f32 %v3807, 0.01
        %v3840 = vmul.f32 %v3808, 0.01
        %v3841 = vmul.f32 %v3809, 0.01
        %v3842 = vmax.f32 %v3778, %v3810
        %v3843 = vmax.f32 %v3779, %v3811
        %v3844 = vmax.f32 %v3780, %v3812
        %v3845 = vmax.f32 %v3781, %v3813
        %v3846 = vmax.f32 %v3782, %v3814
        %v3847 = vmax.f32 %v3783, %v3815
        %v3848 = vmax.f32 %v3784, %v3816
        %v3849 = vmax.f32 %v3785, %v3817
        %v3850 = vmax.f32 %v3786, %v3818
        %v3851 = vmax.f32 %v3787, %v3819
        %v3852 = vmax.f32 %v3788, %v3820
        %v3853 = vmax.f32 %v3789, %v3821
        %v3854 = vmax.f32 %v3790, %v3822
        %v3855 = vmax.f32 %v3791, %v3823
        %v3856 = vmax.f32 %v3792, %v3824
        %v3857 = vmax.f32 %v3793, %v3825
        %v3858 = vmax.f32 %v3794, %v3826
        %v3859 = vmax.f32 %v3795, %v3827
        %v3860 = vmax.f32 %v3796, %v3828
        %v3861 = vmax.f32 %v3797, %v3829
        %v3862 = vmax.f32 %v3798, %v3830
        %v3863 = vmax.f32 %v3799, %v3831
        %v3864 = vmax.f32 %v3800, %v3832
        %v3865 = vmax.f32 %v3801, %v3833
        %v3866 = vmax.f32 %v3802, %v3834
        %v3867 = vmax.f32 %v3803, %v3835
        %v3868 = vmax.f32 %v3804, %v3836
        %v3869 = vmax.f32 %v3805, %v3837
        %v3870 = vmax.f32 %v3806, %v3838
        %v3871 = vmax.f32 %v3807, %v3839
        %v3872 = vmax.f32 %v3808, %v3840
        %v3873 = vmax.f32 %v3809, %v3841
        %v3874 = vpack.c.bf16 %v3843, %v3842
        %v3875 = vpack.c.bf16 %v3845, %v3844
        %v3876 = vpack.c.bf16 %v3847, %v3846
        %v3877 = vpack.c.bf16 %v3849, %v3848
        %v3878 = vpack.c.bf16 %v3851, %v3850
        %v3879 = vpack.c.bf16 %v3853, %v3852
        %v3880 = vpack.c.bf16 %v3855, %v3854
        %v3881 = vpack.c.bf16 %v3857, %v3856
        %v3882 = vpack.c.bf16 %v3859, %v3858
        %v3883 = vpack.c.bf16 %v3861, %v3860
        %v3884 = vpack.c.bf16 %v3863, %v3862
        %v3885 = vpack.c.bf16 %v3865, %v3864
        %v3886 = vpack.c.bf16 %v3867, %v3866
        %v3887 = vpack.c.bf16 %v3869, %v3868
        %v3888 = vpack.c.bf16 %v3871, %v3870
        %v3889 = vpack.c.bf16 %v3873, %v3872
        %s3890 = scalar_lea.vmem %s10, 192
        %v3891 = vld [vmem:[%s3890] sm:$0xff]
        %v3892 = vld [vmem:[%s3890 + $0x8] sm:$0xf]
        %v3893 = vld [vmem:[%s3890 + $0xc] sm:$0xff]
        %v3894 = vld [vmem:[%s3890 + $0x14] sm:$0xf]
        %v3895 = vld [vmem:[%s3890 + $0x18] sm:$0xff]
        %v3896 = vld [vmem:[%s3890 + $0x20] sm:$0xf]
        %v3897 = vld [vmem:[%s3890 + $0x24] sm:$0xff]
        %v3898 = vld [vmem:[%s3890 + $0x2c] sm:$0xf]
        %v3899 = vld [vmem:[%s3890 + $0x30] sm:$0xff]
        %v3900 = vld [vmem:[%s3890 + $0x38] sm:$0xf]
        %v3901 = vld [vmem:[%s3890 + $0x3c] sm:$0xff]
        %v3902 = vld [vmem:[%s3890 + $0x44] sm:$0xf]
        %v3903 = vld [vmem:[%s3890 + $0x48] sm:$0xff]
        %v3904 = vld [vmem:[%s3890 + $0x50] sm:$0xf]
        %v3905 = vld [vmem:[%s3890 + $0x54] sm:$0xff]
        %v3906 = vld [vmem:[%s3890 + $0x5c] sm:$0xf]
        %v3907 = vld [vmem:[%s3890 + $0x60] sm:$0xff]
        %v3908 = vld [vmem:[%s3890 + $0x68] sm:$0xf]
        %v3909 = vld [vmem:[%s3890 + $0x6c] sm:$0xff]
        %v3910 = vld [vmem:[%s3890 + $0x74] sm:$0xf]
        %v3911 = vld [vmem:[%s3890 + $0x78] sm:$0xff]
        %v3912 = vld [vmem:[%s3890 + $0x80] sm:$0xf]
        %v3913 = vld [vmem:[%s3890 + $0x84] sm:$0xff]
        %v3914 = vld [vmem:[%s3890 + $0x8c] sm:$0xf]
        %v3915 = vld [vmem:[%s3890 + $0x90] sm:$0xff]
        %v3916 = vld [vmem:[%s3890 + $0x98] sm:$0xf]
        %v3917 = vld [vmem:[%s3890 + $0x9c] sm:$0xff]
        %v3918 = vld [vmem:[%s3890 + $0xa4] sm:$0xf]
        %v3919 = vld [vmem:[%s3890 + $0xa8] sm:$0xff]
        %v3920 = vld [vmem:[%s3890 + $0xb0] sm:$0xf]
        %v3921 = vld [vmem:[%s3890 + $0xb4] sm:$0xff]
        %v3922 = vld [vmem:[%s3890 + $0xbc] sm:$0xf]
        %s3923 = scalar_lea.vmem %s11, 3
        %v3924 = vld [vmem:[%s3923] sm:$0x7]
        %v3926 = vperm.slane %v3924, 0
        %v3927 = vperm.slane %v3924, 1
        %v3928 = vperm.slane %v3924, 2
        %v3964 = vunpack.c.l.b16 %v3891
        %v3965 = vunpack.c.h.b16 %v3891
        %v3966 = vunpack.c.l.b16 %v3892
        %v3967 = vunpack.c.l.b16 %v3893
        %v3968 = vunpack.c.h.b16 %v3893
        %v3969 = vunpack.c.l.b16 %v3894
        %v3970 = vunpack.c.l.b16 %v3895
        %v3971 = vunpack.c.h.b16 %v3895
        %v3972 = vunpack.c.l.b16 %v3896
        %v3973 = vunpack.c.l.b16 %v3897
        %v3974 = vunpack.c.h.b16 %v3897
        %v3975 = vunpack.c.l.b16 %v3898
        %v3976 = vunpack.c.l.b16 %v3899
        %v3977 = vunpack.c.h.b16 %v3899
        %v3978 = vunpack.c.l.b16 %v3900
        %v3979 = vunpack.c.l.b16 %v3901
        %v3980 = vunpack.c.h.b16 %v3901
        %v3981 = vunpack.c.l.b16 %v3902
        %v3982 = vunpack.c.l.b16 %v3903
        %v3983 = vunpack.c.h.b16 %v3903
        %v3984 = vunpack.c.l.b16 %v3904
        %v3985 = vunpack.c.l.b16 %v3905
        %v3986 = vunpack.c.h.b16 %v3905
        %v3987 = vunpack.c.l.b16 %v3906
        %v3988 = vunpack.c.l.b16 %v3907
        %v3989 = vunpack.c.h.b16 %v3907
        %v3990 = vunpack.c.l.b16 %v3908
        %v3991 = vunpack.c.l.b16 %v3909
        %v3992 = vunpack.c.h.b16 %v3909
        %v3993 = vunpack.c.l.b16 %v3910
        %v3994 = vunpack.c.l.b16 %v3911
        %v3995 = vunpack.c.h.b16 %v3911
        %v3996 = vunpack.c.l.b16 %v3912
        %v3997 = vunpack.c.l.b16 %v3913
        %v3998 = vunpack.c.h.b16 %v3913
        %v3999 = vunpack.c.l.b16 %v3914
        %v4000 = vunpack.c.l.b16 %v3915
        %v4001 = vunpack.c.h.b16 %v3915
        %v4002 = vunpack.c.l.b16 %v3916
        %v4003 = vunpack.c.l.b16 %v3917
        %v4004 = vunpack.c.h.b16 %v3917
        %v4005 = vunpack.c.l.b16 %v3918
        %v4006 = vunpack.c.l.b16 %v3919
        %v4007 = vunpack.c.h.b16 %v3919
        %v4008 = vunpack.c.l.b16 %v3920
        %v4009 = vunpack.c.l.b16 %v3921
        %v4010 = vunpack.c.h.b16 %v3921
        %v4011 = vunpack.c.l.b16 %v3922
        %v4012 = vpack.c.b16 %v3967, %v3964
        %v4013 = vpack.c.b16 %v3968, %v3965
        %v4014 = vpack.c.b16 %v3969, %v3966
        %v4015 = vpack.c.b16 %v3973, %v3970
        %v4016 = vpack.c.b16 %v3974, %v3971
        %v4017 = vpack.c.b16 %v3975, %v3972
        %v4018 = vpack.c.b16 %v3979, %v3976
        %v4019 = vpack.c.b16 %v3980, %v3977
        %v4020 = vpack.c.b16 %v3981, %v3978
        %v4021 = vpack.c.b16 %v3985, %v3982
        %v4022 = vpack.c.b16 %v3986, %v3983
        %v4023 = vpack.c.b16 %v3987, %v3984
        %v4024 = vpack.c.b16 %v3991, %v3988
        %v4025 = vpack.c.b16 %v3992, %v3989
        %v4026 = vpack.c.b16 %v3993, %v3990
        %v4027 = vpack.c.b16 %v3997, %v3994
        %v4028 = vpack.c.b16 %v3998, %v3995
        %v4029 = vpack.c.b16 %v3999, %v3996
        %v4030 = vpack.c.b16 %v4003, %v4000
        %v4031 = vpack.c.b16 %v4004, %v4001
        %v4032 = vpack.c.b16 %v4005, %v4002
        %v4033 = vpack.c.b16 %v4009, %v4006
        %v4034 = vpack.c.b16 %v4010, %v4007
        %v4035 = vpack.c.b16 %v4011, %v4008
        %4060 = vmatpush.bf16.msra.mxu0 %v4033
        %4061 = vmatpush.bf16.msra.mxu0 %v4030
        %4062 = vmatpush.bf16.msra.mxu0 %v4027
        %4063 = vmatpush.bf16.msra.mxu0 %v4024
        %4064 = vmatpush.bf16.msra.mxu0 %v4021
        %4065 = vmatpush.bf16.msra.mxu0 %v4018
        %4066 = vmatpush.bf16.msra.mxu0 %v4015
        %4067 = vmatpush.bf16.msra.mxu0 %v4012
        %4068 = vmatmul.bf16.gmra.mxu0 %v3874
        %v4069 = vpop.f32.mrf.mxu0
        %v4070 = vadd.f32 %v3926, %v4069
        %v4071 = vpop.f32.mrf.mxu0
        %v4072 = vadd.f32 %v3926, %v4071
        %4073 = vmatmul.bf16.gmra.mxu0 %v3875
        %v4074 = vpop.f32.mrf.mxu0
        %v4075 = vadd.f32 %v3926, %v4074
        %v4076 = vpop.f32.mrf.mxu0
        %v4077 = vadd.f32 %v3926, %v4076
        %4078 = vmatmul.bf16.gmra.mxu0 %v3876
        %v4079 = vpop.f32.mrf.mxu0
        %v4080 = vadd.f32 %v3926, %v4079
        %v4081 = vpop.f32.mrf.mxu0
        %v4082 = vadd.f32 %v3926, %v4081
        %4083 = vmatmul.bf16.gmra.mxu0 %v3877
        %v4084 = vpop.f32.mrf.mxu0
        %v4085 = vadd.f32 %v3926, %v4084
        %v4086 = vpop.f32.mrf.mxu0
        %v4087 = vadd.f32 %v3926, %v4086
        %4088 = vmatmul.bf16.gmra.mxu0 %v3878
        %v4089 = vpop.f32.mrf.mxu0
        %v4090 = vadd.f32 %v3926, %v4089
        %v4091 = vpop.f32.mrf.mxu0
        %v4092 = vadd.f32 %v3926, %v4091
        %4093 = vmatmul.bf16.gmra.mxu0 %v3879
        %v4094 = vpop.f32.mrf.mxu0
        %v4095 = vadd.f32 %v3926, %v4094
        %v4096 = vpop.f32.mrf.mxu0
        %v4097 = vadd.f32 %v3926, %v4096
        %4098 = vmatmul.bf16.gmra.mxu0 %v3880
        %v4099 = vpop.f32.mrf.mxu0
        %v4100 = vadd.f32 %v3926, %v4099
        %v4101 = vpop.f32.mrf.mxu0
        %v4102 = vadd.f32 %v3926, %v4101
        %4103 = vmatmul.bf16.gmra.mxu0 %v3881
        %v4104 = vpop.f32.mrf.mxu0
        %v4105 = vadd.f32 %v3926, %v4104
        %v4106 = vpop.f32.mrf.mxu0
        %v4107 = vadd.f32 %v3926, %v4106
        %4108 = vmatmul.bf16.gmra.mxu0 %v3882
        %v4109 = vpop.f32.mrf.mxu0
        %v4110 = vadd.f32 %v3926, %v4109
        %v4111 = vpop.f32.mrf.mxu0
        %v4112 = vadd.f32 %v3926, %v4111
        %4113 = vmatmul.bf16.gmra.mxu0 %v3883
        %v4114 = vpop.f32.mrf.mxu0
        %v4115 = vadd.f32 %v3926, %v4114
        %v4116 = vpop.f32.mrf.mxu0
        %v4117 = vadd.f32 %v3926, %v4116
        %4118 = vmatmul.bf16.gmra.mxu0 %v3884
        %v4119 = vpop.f32.mrf.mxu0
        %v4120 = vadd.f32 %v3926, %v4119
        %v4121 = vpop.f32.mrf.mxu0
        %v4122 = vadd.f32 %v3926, %v4121
        %4123 = vmatmul.bf16.gmra.mxu0 %v3885
        %v4124 = vpop.f32.mrf.mxu0
        %v4125 = vadd.f32 %v3926, %v4124
        %v4126 = vpop.f32.mrf.mxu0
        %v4127 = vadd.f32 %v3926, %v4126
        %4128 = vmatmul.bf16.gmra.mxu0 %v3886
        %v4129 = vpop.f32.mrf.mxu0
        %v4130 = vadd.f32 %v3926, %v4129
        %v4131 = vpop.f32.mrf.mxu0
        %v4132 = vadd.f32 %v3926, %v4131
        %4133 = vmatmul.bf16.gmra.mxu0 %v3887
        %v4134 = vpop.f32.mrf.mxu0
        %v4135 = vadd.f32 %v3926, %v4134
        %v4136 = vpop.f32.mrf.mxu0
        %v4137 = vadd.f32 %v3926, %v4136
        %4138 = vmatmul.bf16.gmra.mxu0 %v3888
        %v4139 = vpop.f32.mrf.mxu0
        %v4140 = vadd.f32 %v3926, %v4139
        %v4141 = vpop.f32.mrf.mxu0
        %v4142 = vadd.f32 %v3926, %v4141
        %4143 = vmatmul.bf16.gmra.mxu0 %v3889
        %v4144 = vpop.f32.mrf.mxu0
        %v4145 = vadd.f32 %v3926, %v4144
        %v4146 = vpop.f32.mrf.mxu0
        %v4147 = vadd.f32 %v3926, %v4146
        %4148 = vdwg.mxu0
        %4149 = vmatpush.bf16.msra.mxu0 %v4034
        %4150 = vmatpush.bf16.msra.mxu0 %v4031
        %4151 = vmatpush.bf16.msra.mxu0 %v4028
        %4152 = vmatpush.bf16.msra.mxu0 %v4025
        %4153 = vmatpush.bf16.msra.mxu0 %v4022
        %4154 = vmatpush.bf16.msra.mxu0 %v4019
        %4155 = vmatpush.bf16.msra.mxu0 %v4016
        %4156 = vmatpush.bf16.msra.mxu0 %v4013
        %4157 = vmatmul.bf16.gmra.mxu0 %v3874
        %v4158 = vpop.f32.mrf.mxu0
        %v4159 = vadd.f32 %v3927, %v4158
        %v4160 = vpop.f32.mrf.mxu0
        %v4161 = vadd.f32 %v3927, %v4160
        %4162 = vmatmul.bf16.gmra.mxu0 %v3875
        %v4163 = vpop.f32.mrf.mxu0
        %v4164 = vadd.f32 %v3927, %v4163
        %v4165 = vpop.f32.mrf.mxu0
        %v4166 = vadd.f32 %v3927, %v4165
        %4167 = vmatmul.bf16.gmra.mxu0 %v3876
        %v4168 = vpop.f32.mrf.mxu0
        %v4169 = vadd.f32 %v3927, %v4168
        %v4170 = vpop.f32.mrf.mxu0
        %v4171 = vadd.f32 %v3927, %v4170
        %4172 = vmatmul.bf16.gmra.mxu0 %v3877
        %v4173 = vpop.f32.mrf.mxu0
        %v4174 = vadd.f32 %v3927, %v4173
        %v4175 = vpop.f32.mrf.mxu0
        %v4176 = vadd.f32 %v3927, %v4175
        %4177 = vmatmul.bf16.gmra.mxu0 %v3878
        %v4178 = vpop.f32.mrf.mxu0
        %v4179 = vadd.f32 %v3927, %v4178
        %v4180 = vpop.f32.mrf.mxu0
        %v4181 = vadd.f32 %v3927, %v4180
        %4182 = vmatmul.bf16.gmra.mxu0 %v3879
        %v4183 = vpop.f32.mrf.mxu0
        %v4184 = vadd.f32 %v3927, %v4183
        %v4185 = vpop.f32.mrf.mxu0
        %v4186 = vadd.f32 %v3927, %v4185
        %4187 = vmatmul.bf16.gmra.mxu0 %v3880
        %v4188 = vpop.f32.mrf.mxu0
        %v4189 = vadd.f32 %v3927, %v4188
        %v4190 = vpop.f32.mrf.mxu0
        %v4191 = vadd.f32 %v3927, %v4190
        %4192 = vmatmul.bf16.gmra.mxu0 %v3881
        %v4193 = vpop.f32.mrf.mxu0
        %v4194 = vadd.f32 %v3927, %v4193
        %v4195 = vpop.f32.mrf.mxu0
        %v4196 = vadd.f32 %v3927, %v4195
        %4197 = vmatmul.bf16.gmra.mxu0 %v3882
        %v4198 = vpop.f32.mrf.mxu0
        %v4199 = vadd.f32 %v3927, %v4198
        %v4200 = vpop.f32.mrf.mxu0
        %v4201 = vadd.f32 %v3927, %v4200
        %4202 = vmatmul.bf16.gmra.mxu0 %v3883
        %v4203 = vpop.f32.mrf.mxu0
        %v4204 = vadd.f32 %v3927, %v4203
        %v4205 = vpop.f32.mrf.mxu0
        %v4206 = vadd.f32 %v3927, %v4205
        %4207 = vmatmul.bf16.gmra.mxu0 %v3884
        %v4208 = vpop.f32.mrf.mxu0
        %v4209 = vadd.f32 %v3927, %v4208
        %v4210 = vpop.f32.mrf.mxu0
        %v4211 = vadd.f32 %v3927, %v4210
        %4212 = vmatmul.bf16.gmra.mxu0 %v3885
        %v4213 = vpop.f32.mrf.mxu0
        %v4214 = vadd.f32 %v3927, %v4213
        %v4215 = vpop.f32.mrf.mxu0
        %v4216 = vadd.f32 %v3927, %v4215
        %4217 = vmatmul.bf16.gmra.mxu0 %v3886
        %v4218 = vpop.f32.mrf.mxu0
        %v4219 = vadd.f32 %v3927, %v4218
        %v4220 = vpop.f32.mrf.mxu0
        %v4221 = vadd.f32 %v3927, %v4220
        %4222 = vmatmul.bf16.gmra.mxu0 %v3887
        %v4223 = vpop.f32.mrf.mxu0
        %v4224 = vadd.f32 %v3927, %v4223
        %v4225 = vpop.f32.mrf.mxu0
        %v4226 = vadd.f32 %v3927, %v4225
        %4227 = vmatmul.bf16.gmra.mxu0 %v3888
        %v4228 = vpop.f32.mrf.mxu0
        %v4229 = vadd.f32 %v3927, %v4228
        %v4230 = vpop.f32.mrf.mxu0
        %v4231 = vadd.f32 %v3927, %v4230
        %4232 = vmatmul.bf16.gmra.mxu0 %v3889
        %v4233 = vpop.f32.mrf.mxu0
        %v4234 = vadd.f32 %v3927, %v4233
        %v4235 = vpop.f32.mrf.mxu0
        %v4236 = vadd.f32 %v3927, %v4235
        %4237 = vdwg.mxu0
        %4238 = vmatpush.bf16.msra.mxu0 %v4035
        %4239 = vmatpush.bf16.msra.mxu0 %v4032
        %4240 = vmatpush.bf16.msra.mxu0 %v4029
        %4241 = vmatpush.bf16.msra.mxu0 %v4026
        %4242 = vmatpush.bf16.msra.mxu0 %v4023
        %4243 = vmatpush.bf16.msra.mxu0 %v4020
        %4244 = vmatpush.bf16.msra.mxu0 %v4017
        %4245 = vmatpush.bf16.msra.mxu0 %v4014
        %4246 = vmatmul.bf16.gmra.mxu0 %v3874
        %v4247 = vpop.f32.mrf.mxu0
        %v4248 = vadd.f32 %v3928, %v4247
        %v4249 = vpop.f32.mrf.mxu0
        %v4250 = vadd.f32 %v3928, %v4249
        %4251 = vmatmul.bf16.gmra.mxu0 %v3875
        %v4252 = vpop.f32.mrf.mxu0
        %v4253 = vadd.f32 %v3928, %v4252
        %v4254 = vpop.f32.mrf.mxu0
        %v4255 = vadd.f32 %v3928, %v4254
        %4256 = vmatmul.bf16.gmra.mxu0 %v3876
        %v4257 = vpop.f32.mrf.mxu0
        %v4258 = vadd.f32 %v3928, %v4257
        %v4259 = vpop.f32.mrf.mxu0
        %v4260 = vadd.f32 %v3928, %v4259
        %4261 = vmatmul.bf16.gmra.mxu0 %v3877
        %v4262 = vpop.f32.mrf.mxu0
        %v4263 = vadd.f32 %v3928, %v4262
        %v4264 = vpop.f32.mrf.mxu0
        %v4265 = vadd.f32 %v3928, %v4264
        %4266 = vmatmul.bf16.gmra.mxu0 %v3878
        %v4267 = vpop.f32.mrf.mxu0
        %v4268 = vadd.f32 %v3928, %v4267
        %v4269 = vpop.f32.mrf.mxu0
        %v4270 = vadd.f32 %v3928, %v4269
        %4271 = vmatmul.bf16.gmra.mxu0 %v3879
        %v4272 = vpop.f32.mrf.mxu0
        %v4273 = vadd.f32 %v3928, %v4272
        %v4274 = vpop.f32.mrf.mxu0
        %v4275 = vadd.f32 %v3928, %v4274
        %4276 = vmatmul.bf16.gmra.mxu0 %v3880
        %v4277 = vpop.f32.mrf.mxu0
        %v4278 = vadd.f32 %v3928, %v4277
        %v4279 = vpop.f32.mrf.mxu0
        %v4280 = vadd.f32 %v3928, %v4279
        %4281 = vmatmul.bf16.gmra.mxu0 %v3881
        %v4282 = vpop.f32.mrf.mxu0
        %v4283 = vadd.f32 %v3928, %v4282
        %v4284 = vpop.f32.mrf.mxu0
        %v4285 = vadd.f32 %v3928, %v4284
        %4286 = vmatmul.bf16.gmra.mxu0 %v3882
        %v4287 = vpop.f32.mrf.mxu0
        %v4288 = vadd.f32 %v3928, %v4287
        %v4289 = vpop.f32.mrf.mxu0
        %v4290 = vadd.f32 %v3928, %v4289
        %4291 = vmatmul.bf16.gmra.mxu0 %v3883
        %v4292 = vpop.f32.mrf.mxu0
        %v4293 = vadd.f32 %v3928, %v4292
        %v4294 = vpop.f32.mrf.mxu0
        %v4295 = vadd.f32 %v3928, %v4294
        %4296 = vmatmul.bf16.gmra.mxu0 %v3884
        %v4297 = vpop.f32.mrf.mxu0
        %v4298 = vadd.f32 %v3928, %v4297
        %v4299 = vpop.f32.mrf.mxu0
        %v4300 = vadd.f32 %v3928, %v4299
        %4301 = vmatmul.bf16.gmra.mxu0 %v3885
        %v4302 = vpop.f32.mrf.mxu0
        %v4303 = vadd.f32 %v3928, %v4302
        %v4304 = vpop.f32.mrf.mxu0
        %v4305 = vadd.f32 %v3928, %v4304
        %4306 = vmatmul.bf16.gmra.mxu0 %v3886
        %v4307 = vpop.f32.mrf.mxu0
        %v4308 = vadd.f32 %v3928, %v4307
        %v4309 = vpop.f32.mrf.mxu0
        %v4310 = vadd.f32 %v3928, %v4309
        %4311 = vmatmul.bf16.gmra.mxu0 %v3887
        %v4312 = vpop.f32.mrf.mxu0
        %v4313 = vadd.f32 %v3928, %v4312
        %v4314 = vpop.f32.mrf.mxu0
        %v4315 = vadd.f32 %v3928, %v4314
        %4316 = vmatmul.bf16.gmra.mxu0 %v3888
        %v4317 = vpop.f32.mrf.mxu0
        %v4318 = vadd.f32 %v3928, %v4317
        %v4319 = vpop.f32.mrf.mxu0
        %v4320 = vadd.f32 %v3928, %v4319
        %4321 = vmatmul.bf16.gmra.mxu0 %v3889
        %v4322 = vpop.f32.mrf.mxu0
        %v4323 = vadd.f32 %v3928, %v4322
        %v4324 = vpop.f32.mrf.mxu0
        %v4325 = vadd.f32 %v3928, %v4324
        %4326 = vdwg.mxu0
        %v4327 = vmul.f32 %v4159, 0.01
        %v4328 = vmul.f32 %v4161, 0.01
        %v4329 = vmul.f32 %v4164, 0.01
        %v4330 = vmul.f32 %v4166, 0.01
        %v4331 = vmul.f32 %v4169, 0.01
        %v4332 = vmul.f32 %v4171, 0.01
        %v4333 = vmul.f32 %v4174, 0.01
        %v4334 = vmul.f32 %v4176, 0.01
        %v4335 = vmul.f32 %v4179, 0.01
        %v4336 = vmul.f32 %v4181, 0.01
        %v4337 = vmul.f32 %v4184, 0.01
        %v4338 = vmul.f32 %v4186, 0.01
        %v4339 = vmul.f32 %v4189, 0.01
        %v4340 = vmul.f32 %v4191, 0.01
        %v4341 = vmul.f32 %v4194, 0.01
        %v4342 = vmul.f32 %v4196, 0.01
        %v4343 = vmul.f32 %v4199, 0.01
        %v4344 = vmul.f32 %v4201, 0.01
        %v4345 = vmul.f32 %v4204, 0.01
        %v4346 = vmul.f32 %v4206, 0.01
        %v4347 = vmul.f32 %v4209, 0.01
        %v4348 = vmul.f32 %v4211, 0.01
        %v4349 = vmul.f32 %v4214, 0.01
        %v4350 = vmul.f32 %v4216, 0.01
        %v4351 = vmul.f32 %v4219, 0.01
        %v4352 = vmul.f32 %v4221, 0.01
        %v4353 = vmul.f32 %v4224, 0.01
        %v4354 = vmul.f32 %v4226, 0.01
        %v4355 = vmul.f32 %v4229, 0.01
        %v4356 = vmul.f32 %v4231, 0.01
        %v4357 = vmul.f32 %v4234, 0.01
        %v4358 = vmul.f32 %v4236, 0.01
        %v4359 = vmax.f32 %v4159, %v4327
        %v4360 = vmax.f32 %v4161, %v4328
        %v4361 = vmax.f32 %v4164, %v4329
        %v4362 = vmax.f32 %v4166, %v4330
        %v4363 = vmax.f32 %v4169, %v4331
        %v4364 = vmax.f32 %v4171, %v4332
        %v4365 = vmax.f32 %v4174, %v4333
        %v4366 = vmax.f32 %v4176, %v4334
        %v4367 = vmax.f32 %v4179, %v4335
        %v4368 = vmax.f32 %v4181, %v4336
        %v4369 = vmax.f32 %v4184, %v4337
        %v4370 = vmax.f32 %v4186, %v4338
        %v4371 = vmax.f32 %v4189, %v4339
        %v4372 = vmax.f32 %v4191, %v4340
        %v4373 = vmax.f32 %v4194, %v4341
        %v4374 = vmax.f32 %v4196, %v4342
        %v4375 = vmax.f32 %v4199, %v4343
        %v4376 = vmax.f32 %v4201, %v4344
        %v4377 = vmax.f32 %v4204, %v4345
        %v4378 = vmax.f32 %v4206, %v4346
        %v4379 = vmax.f32 %v4209, %v4347
        %v4380 = vmax.f32 %v4211, %v4348
        %v4381 = vmax.f32 %v4214, %v4349
        %v4382 = vmax.f32 %v4216, %v4350
        %v4383 = vmax.f32 %v4219, %v4351
        %v4384 = vmax.f32 %v4221, %v4352
        %v4385 = vmax.f32 %v4224, %v4353
        %v4386 = vmax.f32 %v4226, %v4354
        %v4387 = vmax.f32 %v4229, %v4355
        %v4388 = vmax.f32 %v4231, %v4356
        %v4389 = vmax.f32 %v4234, %v4357
        %v4390 = vmax.f32 %v4236, %v4358
        %v4391 = vpack.c.bf16 %v4072, %v4070
        %v4392 = vpack.c.bf16 %v4077, %v4075
        %v4393 = vpack.c.bf16 %v4082, %v4080
        %v4394 = vpack.c.bf16 %v4087, %v4085
        %v4395 = vpack.c.bf16 %v4092, %v4090
        %v4396 = vpack.c.bf16 %v4097, %v4095
        %v4397 = vpack.c.bf16 %v4102, %v4100
        %v4398 = vpack.c.bf16 %v4107, %v4105
        %v4399 = vpack.c.bf16 %v4112, %v4110
        %v4400 = vpack.c.bf16 %v4117, %v4115
        %v4401 = vpack.c.bf16 %v4122, %v4120
        %v4402 = vpack.c.bf16 %v4127, %v4125
        %v4403 = vpack.c.bf16 %v4132, %v4130
        %v4404 = vpack.c.bf16 %v4137, %v4135
        %v4405 = vpack.c.bf16 %v4142, %v4140
        %v4406 = vpack.c.bf16 %v4147, %v4145
        %v4407 = vpack.c.bf16 %v4250, %v4248
        %v4408 = vpack.c.bf16 %v4255, %v4253
        %v4409 = vpack.c.bf16 %v4260, %v4258
        %v4410 = vpack.c.bf16 %v4265, %v4263
        %v4411 = vpack.c.bf16 %v4270, %v4268
        %v4412 = vpack.c.bf16 %v4275, %v4273
        %v4413 = vpack.c.bf16 %v4280, %v4278
        %v4414 = vpack.c.bf16 %v4285, %v4283
        %v4415 = vpack.c.bf16 %v4290, %v4288
        %v4416 = vpack.c.bf16 %v4295, %v4293
        %v4417 = vpack.c.bf16 %v4300, %v4298
        %v4418 = vpack.c.bf16 %v4305, %v4303
        %v4419 = vpack.c.bf16 %v4310, %v4308
        %v4420 = vpack.c.bf16 %v4315, %v4313
        %v4421 = vpack.c.bf16 %v4320, %v4318
        %v4422 = vpack.c.bf16 %v4325, %v4323
        %4423 = vmatpush.bf16.msra.mxu0 %v4414
        %4424 = vmatpush.bf16.msra.mxu0 %v4413
        %4425 = vmatpush.bf16.msra.mxu0 %v4412
        %4426 = vmatpush.bf16.msra.mxu0 %v4411
        %4427 = vmatpush.bf16.msra.mxu0 %v4410
        %4428 = vmatpush.bf16.msra.mxu0 %v4409
        %4429 = vmatpush.bf16.msra.mxu0 %v4408
        %4430 = vmatpush.bf16.msra.mxu0 %v4407
        %4431 = vmatmul.bf16.gmra.mxu0 %v2456
        %v4432 = vpop.f32.mrf.mxu0
        %v4433 = vadd.f32 0.0, %v4432
        %v4434 = vpop.f32.mrf.mxu0
        %v4435 = vadd.f32 0.0, %v4434
        %4436 = vmatmul.bf16.gmra.mxu0 %v2458
        %v4437 = vpop.f32.mrf.mxu0
        %v4438 = vadd.f32 0.0, %v4437
        %v4439 = vpop.f32.mrf.mxu0
        %v4440 = vadd.f32 0.0, %v4439
        %4441 = vmatmul.bf16.gmra.mxu0 %v2460
        %v4442 = vpop.f32.mrf.mxu0
        %v4443 = vadd.f32 0.0, %v4442
        %v4444 = vpop.f32.mrf.mxu0
        %v4445 = vadd.f32 0.0, %v4444
        %4446 = vmatmul.bf16.gmra.mxu0 %v2462
        %v4447 = vpop.f32.mrf.mxu0
        %v4448 = vadd.f32 0.0, %v4447
        %v4449 = vpop.f32.mrf.mxu0
        %v4450 = vadd.f32 0.0, %v4449
        %4451 = vmatmul.bf16.gmra.mxu0 %v2464
        %v4452 = vpop.f32.mrf.mxu0
        %v4453 = vadd.f32 0.0, %v4452
        %v4454 = vpop.f32.mrf.mxu0
        %v4455 = vadd.f32 0.0, %v4454
        %4456 = vmatmul.bf16.gmra.mxu0 %v2466
        %v4457 = vpop.f32.mrf.mxu0
        %v4458 = vadd.f32 0.0, %v4457
        %v4459 = vpop.f32.mrf.mxu0
        %v4460 = vadd.f32 0.0, %v4459
        %4461 = vmatmul.bf16.gmra.mxu0 %v2468
        %v4462 = vpop.f32.mrf.mxu0
        %v4463 = vadd.f32 0.0, %v4462
        %v4464 = vpop.f32.mrf.mxu0
        %v4465 = vadd.f32 0.0, %v4464
        %4466 = vmatmul.bf16.gmra.mxu0 %v2470
        %v4467 = vpop.f32.mrf.mxu0
        %v4468 = vadd.f32 0.0, %v4467
        %v4469 = vpop.f32.mrf.mxu0
        %v4470 = vadd.f32 0.0, %v4469
        %4471 = vdwg.mxu0
        %4472 = vmatpush.bf16.msra.mxu0 %v4422
        %4473 = vmatpush.bf16.msra.mxu0 %v4421
        %4474 = vmatpush.bf16.msra.mxu0 %v4420
        %4475 = vmatpush.bf16.msra.mxu0 %v4419
        %4476 = vmatpush.bf16.msra.mxu0 %v4418
        %4477 = vmatpush.bf16.msra.mxu0 %v4417
        %4478 = vmatpush.bf16.msra.mxu0 %v4416
        %4479 = vmatpush.bf16.msra.mxu0 %v4415
        %4480 = vmatmul.bf16.gmra.mxu0 %v2457
        %v4481 = vpop.f32.mrf.mxu0
        %v4482 = vadd.f32 %v4433, %v4481
        %v4483 = vpop.f32.mrf.mxu0
        %v4484 = vadd.f32 %v4435, %v4483
        %4485 = vmatmul.bf16.gmra.mxu0 %v2459
        %v4486 = vpop.f32.mrf.mxu0
        %v4487 = vadd.f32 %v4438, %v4486
        %v4488 = vpop.f32.mrf.mxu0
        %v4489 = vadd.f32 %v4440, %v4488
        %4490 = vmatmul.bf16.gmra.mxu0 %v2461
        %v4491 = vpop.f32.mrf.mxu0
        %v4492 = vadd.f32 %v4443, %v4491
        %v4493 = vpop.f32.mrf.mxu0
        %v4494 = vadd.f32 %v4445, %v4493
        %4495 = vmatmul.bf16.gmra.mxu0 %v2463
        %v4496 = vpop.f32.mrf.mxu0
        %v4497 = vadd.f32 %v4448, %v4496
        %v4498 = vpop.f32.mrf.mxu0
        %v4499 = vadd.f32 %v4450, %v4498
        %4500 = vmatmul.bf16.gmra.mxu0 %v2465
        %v4501 = vpop.f32.mrf.mxu0
        %v4502 = vadd.f32 %v4453, %v4501
        %v4503 = vpop.f32.mrf.mxu0
        %v4504 = vadd.f32 %v4455, %v4503
        %4505 = vmatmul.bf16.gmra.mxu0 %v2467
        %v4506 = vpop.f32.mrf.mxu0
        %v4507 = vadd.f32 %v4458, %v4506
        %v4508 = vpop.f32.mrf.mxu0
        %v4509 = vadd.f32 %v4460, %v4508
        %4510 = vmatmul.bf16.gmra.mxu0 %v2469
        %v4511 = vpop.f32.mrf.mxu0
        %v4512 = vadd.f32 %v4463, %v4511
        %v4513 = vpop.f32.mrf.mxu0
        %v4514 = vadd.f32 %v4465, %v4513
        %4515 = vmatmul.bf16.gmra.mxu0 %v2471
        %v4516 = vpop.f32.mrf.mxu0
        %v4517 = vadd.f32 %v4468, %v4516
        %v4518 = vpop.f32.mrf.mxu0
        %v4519 = vadd.f32 %v4470, %v4518
        %4520 = vdwg.mxu0
        %4521 = vmatpush.bf16.msra.mxu0 %v4398
        %4522 = vmatpush.bf16.msra.mxu0 %v4397
        %4523 = vmatpush.bf16.msra.mxu0 %v4396
        %4524 = vmatpush.bf16.msra.mxu0 %v4395
        %4525 = vmatpush.bf16.msra.mxu0 %v4394
        %4526 = vmatpush.bf16.msra.mxu0 %v4393
        %4527 = vmatpush.bf16.msra.mxu0 %v4392
        %4528 = vmatpush.bf16.msra.mxu0 %v4391
        %4529 = vmatmul.bf16.gmra.mxu0 %v2634
        %v4530 = vpop.f32.mrf.mxu0
        %v4531 = vadd.f32 %v4482, %v4530
        %v4532 = vpop.f32.mrf.mxu0
        %v4533 = vadd.f32 %v4484, %v4532
        %4534 = vmatmul.bf16.gmra.mxu0 %v2636
        %v4535 = vpop.f32.mrf.mxu0
        %v4536 = vadd.f32 %v4487, %v4535
        %v4537 = vpop.f32.mrf.mxu0
        %v4538 = vadd.f32 %v4489, %v4537
        %4539 = vmatmul.bf16.gmra.mxu0 %v2638
        %v4540 = vpop.f32.mrf.mxu0
        %v4541 = vadd.f32 %v4492, %v4540
        %v4542 = vpop.f32.mrf.mxu0
        %v4543 = vadd.f32 %v4494, %v4542
        %4544 = vmatmul.bf16.gmra.mxu0 %v2640
        %v4545 = vpop.f32.mrf.mxu0
        %v4546 = vadd.f32 %v4497, %v4545
        %v4547 = vpop.f32.mrf.mxu0
        %v4548 = vadd.f32 %v4499, %v4547
        %4549 = vmatmul.bf16.gmra.mxu0 %v2642
        %v4550 = vpop.f32.mrf.mxu0
        %v4551 = vadd.f32 %v4502, %v4550
        %v4552 = vpop.f32.mrf.mxu0
        %v4553 = vadd.f32 %v4504, %v4552
        %4554 = vmatmul.bf16.gmra.mxu0 %v2644
        %v4555 = vpop.f32.mrf.mxu0
        %v4556 = vadd.f32 %v4507, %v4555
        %v4557 = vpop.f32.mrf.mxu0
        %v4558 = vadd.f32 %v4509, %v4557
        %4559 = vmatmul.bf16.gmra.mxu0 %v2646
        %v4560 = vpop.f32.mrf.mxu0
        %v4561 = vadd.f32 %v4512, %v4560
        %v4562 = vpop.f32.mrf.mxu0
        %v4563 = vadd.f32 %v4514, %v4562
        %4564 = vmatmul.bf16.gmra.mxu0 %v2648
        %v4565 = vpop.f32.mrf.mxu0
        %v4566 = vadd.f32 %v4517, %v4565
        %v4567 = vpop.f32.mrf.mxu0
        %v4568 = vadd.f32 %v4519, %v4567
        %4569 = vdwg.mxu0
        %4570 = vmatpush.bf16.msra.mxu0 %v4406
        %4571 = vmatpush.bf16.msra.mxu0 %v4405
        %4572 = vmatpush.bf16.msra.mxu0 %v4404
        %4573 = vmatpush.bf16.msra.mxu0 %v4403
        %4574 = vmatpush.bf16.msra.mxu0 %v4402
        %4575 = vmatpush.bf16.msra.mxu0 %v4401
        %4576 = vmatpush.bf16.msra.mxu0 %v4400
        %4577 = vmatpush.bf16.msra.mxu0 %v4399
        %4578 = vmatmul.bf16.gmra.mxu0 %v2635
        %v4579 = vpop.f32.mrf.mxu0
        %v4580 = vadd.f32 %v4531, %v4579
        %v4581 = vpop.f32.mrf.mxu0
        %v4582 = vadd.f32 %v4533, %v4581
        %4583 = vmatmul.bf16.gmra.mxu0 %v2637
        %v4584 = vpop.f32.mrf.mxu0
        %v4585 = vadd.f32 %v4536, %v4584
        %v4586 = vpop.f32.mrf.mxu0
        %v4587 = vadd.f32 %v4538, %v4586
        %4588 = vmatmul.bf16.gmra.mxu0 %v2639
        %v4589 = vpop.f32.mrf.mxu0
        %v4590 = vadd.f32 %v4541, %v4589
        %v4591 = vpop.f32.mrf.mxu0
        %v4592 = vadd.f32 %v4543, %v4591
        %4593 = vmatmul.bf16.gmra.mxu0 %v2641
        %v4594 = vpop.f32.mrf.mxu0
        %v4595 = vadd.f32 %v4546, %v4594
        %v4596 = vpop.f32.mrf.mxu0
        %v4597 = vadd.f32 %v4548, %v4596
        %4598 = vmatmul.bf16.gmra.mxu0 %v2643
        %v4599 = vpop.f32.mrf.mxu0
        %v4600 = vadd.f32 %v4551, %v4599
        %v4601 = vpop.f32.mrf.mxu0
        %v4602 = vadd.f32 %v4553, %v4601
        %4603 = vmatmul.bf16.gmra.mxu0 %v2645
        %v4604 = vpop.f32.mrf.mxu0
        %v4605 = vadd.f32 %v4556, %v4604
        %v4606 = vpop.f32.mrf.mxu0
        %v4607 = vadd.f32 %v4558, %v4606
        %4608 = vmatmul.bf16.gmra.mxu0 %v2647
        %v4609 = vpop.f32.mrf.mxu0
        %v4610 = vadd.f32 %v4561, %v4609
        %v4611 = vpop.f32.mrf.mxu0
        %v4612 = vadd.f32 %v4563, %v4611
        %4613 = vmatmul.bf16.gmra.mxu0 %v2649
        %v4614 = vpop.f32.mrf.mxu0
        %v4615 = vadd.f32 %v4566, %v4614
        %v4616 = vpop.f32.mrf.mxu0
        %v4617 = vadd.f32 %v4568, %v4616
        %4618 = vdwg.mxu0
        %v4619 = vmul.f32 %v4580, %v2767
        %v4620 = vmul.f32 %v4582, %v2772
        %v4621 = vmul.f32 %v4585, %v2777
        %v4622 = vmul.f32 %v4587, %v2782
        %v4623 = vmul.f32 %v4590, %v2787
        %v4624 = vmul.f32 %v4592, %v2792
        %v4625 = vmul.f32 %v4595, %v2797
        %v4626 = vmul.f32 %v4597, %v2802
        %v4627 = vmul.f32 %v4600, %v2807
        %v4628 = vmul.f32 %v4602, %v2812
        %v4629 = vmul.f32 %v4605, %v2817
        %v4630 = vmul.f32 %v4607, %v2822
        %v4631 = vmul.f32 %v4610, %v2827
        %v4632 = vmul.f32 %v4612, %v2832
        %v4633 = vmul.f32 %v4615, %v2837
        %v4634 = vmul.f32 %v4617, %v2842
        %v4635 = vmul.f32 %v4619, 0.01
        %v4636 = vmul.f32 %v4620, 0.01
        %v4637 = vmul.f32 %v4621, 0.01
        %v4638 = vmul.f32 %v4622, 0.01
        %v4639 = vmul.f32 %v4623, 0.01
        %v4640 = vmul.f32 %v4624, 0.01
        %v4641 = vmul.f32 %v4625, 0.01
        %v4642 = vmul.f32 %v4626, 0.01
        %v4643 = vmul.f32 %v4627, 0.01
        %v4644 = vmul.f32 %v4628, 0.01
        %v4645 = vmul.f32 %v4629, 0.01
        %v4646 = vmul.f32 %v4630, 0.01
        %v4647 = vmul.f32 %v4631, 0.01
        %v4648 = vmul.f32 %v4632, 0.01
        %v4649 = vmul.f32 %v4633, 0.01
        %v4650 = vmul.f32 %v4634, 0.01
        %v4651 = vmax.f32 %v4619, %v4635
        %v4652 = vmax.f32 %v4620, %v4636
        %v4653 = vmax.f32 %v4621, %v4637
        %v4654 = vmax.f32 %v4622, %v4638
        %v4655 = vmax.f32 %v4623, %v4639
        %v4656 = vmax.f32 %v4624, %v4640
        %v4657 = vmax.f32 %v4625, %v4641
        %v4658 = vmax.f32 %v4626, %v4642
        %v4659 = vmax.f32 %v4627, %v4643
        %v4660 = vmax.f32 %v4628, %v4644
        %v4661 = vmax.f32 %v4629, %v4645
        %v4662 = vmax.f32 %v4630, %v4646
        %v4663 = vmax.f32 %v4631, %v4647
        %v4664 = vmax.f32 %v4632, %v4648
        %v4665 = vmax.f32 %v4633, %v4649
        %v4666 = vmax.f32 %v4634, %v4650
        %v4667 = vpack.c.bf16 %v4652, %v4651
        %v4668 = vpack.c.bf16 %v4654, %v4653
        %v4669 = vpack.c.bf16 %v4656, %v4655
        %v4670 = vpack.c.bf16 %v4658, %v4657
        %v4671 = vpack.c.bf16 %v4660, %v4659
        %v4672 = vpack.c.bf16 %v4662, %v4661
        %v4673 = vpack.c.bf16 %v4664, %v4663
        %v4674 = vpack.c.bf16 %v4666, %v4665
        %s4675 = scalar_lea.vmem [#allocation11], 64
        %v4676 = vld [vmem:[%s4675] sm:$0xf]
        %v4677 = vld [vmem:[%s4675 + $0x4] sm:$0xf]
        %v4678 = vld [vmem:[%s4675 + $0x8] sm:$0xf]
        %v4679 = vld [vmem:[%s4675 + $0xc] sm:$0xf]
        %v4680 = vld [vmem:[%s4675 + $0x10] sm:$0xf]
        %v4681 = vld [vmem:[%s4675 + $0x14] sm:$0xf]
        %v4682 = vld [vmem:[%s4675 + $0x18] sm:$0xf]
        %v4683 = vld [vmem:[%s4675 + $0x1c] sm:$0xf]
        %v4684 = vld [vmem:[%s4675 + $0x20] sm:$0xf]
        %v4685 = vld [vmem:[%s4675 + $0x24] sm:$0xf]
        %v4686 = vld [vmem:[%s4675 + $0x28] sm:$0xf]
        %v4687 = vld [vmem:[%s4675 + $0x2c] sm:$0xf]
        %v4688 = vld [vmem:[%s4675 + $0x30] sm:$0xf]
        %v4689 = vld [vmem:[%s4675 + $0x34] sm:$0xf]
        %v4690 = vld [vmem:[%s4675 + $0x38] sm:$0xf]
        %v4691 = vld [vmem:[%s4675 + $0x3c] sm:$0xf]
        %s4692 = scalar_lea.vmem %s13, 1
        %v4693 = vld [vmem:[%s4692] sm:$0x1]
        %v4695 = vperm.slane %v4693, 0
        %v4713 = vunpack.c.l.b16 %v4676
        %v4714 = vunpack.c.l.b16 %v4677
        %v4715 = vunpack.c.l.b16 %v4678
        %v4716 = vunpack.c.l.b16 %v4679
        %v4717 = vunpack.c.l.b16 %v4680
        %v4718 = vunpack.c.l.b16 %v4681
        %v4719 = vunpack.c.l.b16 %v4682
        %v4720 = vunpack.c.l.b16 %v4683
        %v4721 = vunpack.c.l.b16 %v4684
        %v4722 = vunpack.c.l.b16 %v4685
        %v4723 = vunpack.c.l.b16 %v4686
        %v4724 = vunpack.c.l.b16 %v4687
        %v4725 = vunpack.c.l.b16 %v4688
        %v4726 = vunpack.c.l.b16 %v4689
        %v4727 = vunpack.c.l.b16 %v4690
        %v4728 = vunpack.c.l.b16 %v4691
        %v4729 = vpack.c.b16 %v4714, %v4713
        %v4730 = vpack.c.b16 %v4716, %v4715
        %v4731 = vpack.c.b16 %v4718, %v4717
        %v4732 = vpack.c.b16 %v4720, %v4719
        %v4733 = vpack.c.b16 %v4722, %v4721
        %v4734 = vpack.c.b16 %v4724, %v4723
        %v4735 = vpack.c.b16 %v4726, %v4725
        %v4736 = vpack.c.b16 %v4728, %v4727
        %4745 = vmatpush.bf16.msra.mxu0 %v4736
        %4746 = vmatpush.bf16.msra.mxu0 %v4735
        %4747 = vmatpush.bf16.msra.mxu0 %v4734
        %4748 = vmatpush.bf16.msra.mxu0 %v4733
        %4749 = vmatpush.bf16.msra.mxu0 %v4732
        %4750 = vmatpush.bf16.msra.mxu0 %v4731
        %4751 = vmatpush.bf16.msra.mxu0 %v4730
        %4752 = vmatpush.bf16.msra.mxu0 %v4729
        %4753 = vmatmul.bf16.gmra.mxu0 %v4667
        %v4754 = vpop.f32.mrf.mxu0
        %v4755 = vadd.f32 %v4695, %v4754
        %v4756 = vpop.f32.mrf.mxu0
        %v4757 = vadd.f32 %v4695, %v4756
        %4758 = vmatmul.bf16.gmra.mxu0 %v4668
        %v4759 = vpop.f32.mrf.mxu0
        %v4760 = vadd.f32 %v4695, %v4759
        %v4761 = vpop.f32.mrf.mxu0
        %v4762 = vadd.f32 %v4695, %v4761
        %4763 = vmatmul.bf16.gmra.mxu0 %v4669
        %v4764 = vpop.f32.mrf.mxu0
        %v4765 = vadd.f32 %v4695, %v4764
        %v4766 = vpop.f32.mrf.mxu0
        %v4767 = vadd.f32 %v4695, %v4766
        %4768 = vmatmul.bf16.gmra.mxu0 %v4670
        %v4769 = vpop.f32.mrf.mxu0
        %v4770 = vadd.f32 %v4695, %v4769
        %v4771 = vpop.f32.mrf.mxu0
        %v4772 = vadd.f32 %v4695, %v4771
        %4773 = vmatmul.bf16.gmra.mxu0 %v4671
        %v4774 = vpop.f32.mrf.mxu0
        %v4775 = vadd.f32 %v4695, %v4774
        %v4776 = vpop.f32.mrf.mxu0
        %v4777 = vadd.f32 %v4695, %v4776
        %4778 = vmatmul.bf16.gmra.mxu0 %v4672
        %v4779 = vpop.f32.mrf.mxu0
        %v4780 = vadd.f32 %v4695, %v4779
        %v4781 = vpop.f32.mrf.mxu0
        %v4782 = vadd.f32 %v4695, %v4781
        %4783 = vmatmul.bf16.gmra.mxu0 %v4673
        %v4784 = vpop.f32.mrf.mxu0
        %v4785 = vadd.f32 %v4695, %v4784
        %v4786 = vpop.f32.mrf.mxu0
        %v4787 = vadd.f32 %v4695, %v4786
        %4788 = vmatmul.bf16.gmra.mxu0 %v4674
        %v4789 = vpop.f32.mrf.mxu0
        %v4790 = vadd.f32 %v4695, %v4789
        %v4791 = vpop.f32.mrf.mxu0
        %v4792 = vadd.f32 %v4695, %v4791
        %4793 = vdwg.mxu0
        %v4794 = vmul.f32 %v4755, 0.01
        %v4795 = vmul.f32 %v4757, 0.01
        %v4796 = vmul.f32 %v4760, 0.01
        %v4797 = vmul.f32 %v4762, 0.01
        %v4798 = vmul.f32 %v4765, 0.01
        %v4799 = vmul.f32 %v4767, 0.01
        %v4800 = vmul.f32 %v4770, 0.01
        %v4801 = vmul.f32 %v4772, 0.01
        %v4802 = vmul.f32 %v4775, 0.01
        %v4803 = vmul.f32 %v4777, 0.01
        %v4804 = vmul.f32 %v4780, 0.01
        %v4805 = vmul.f32 %v4782, 0.01
        %v4806 = vmul.f32 %v4785, 0.01
        %v4807 = vmul.f32 %v4787, 0.01
        %v4808 = vmul.f32 %v4790, 0.01
        %v4809 = vmul.f32 %v4792, 0.01
        %v4810 = vmax.f32 %v4755, %v4794
        %v4811 = vmax.f32 %v4757, %v4795
        %v4812 = vmax.f32 %v4760, %v4796
        %v4813 = vmax.f32 %v4762, %v4797
        %v4814 = vmax.f32 %v4765, %v4798
        %v4815 = vmax.f32 %v4767, %v4799
        %v4816 = vmax.f32 %v4770, %v4800
        %v4817 = vmax.f32 %v4772, %v4801
        %v4818 = vmax.f32 %v4775, %v4802
        %v4819 = vmax.f32 %v4777, %v4803
        %v4820 = vmax.f32 %v4780, %v4804
        %v4821 = vmax.f32 %v4782, %v4805
        %v4822 = vmax.f32 %v4785, %v4806
        %v4823 = vmax.f32 %v4787, %v4807
        %v4824 = vmax.f32 %v4790, %v4808
        %v4825 = vmax.f32 %v4792, %v4809
        %v4826 = vpack.c.bf16 %v4811, %v4810
        %v4827 = vpack.c.bf16 %v4813, %v4812
        %v4828 = vpack.c.bf16 %v4815, %v4814
        %v4829 = vpack.c.bf16 %v4817, %v4816
        %v4830 = vpack.c.bf16 %v4819, %v4818
        %v4831 = vpack.c.bf16 %v4821, %v4820
        %v4832 = vpack.c.bf16 %v4823, %v4822
        %v4833 = vpack.c.bf16 %v4825, %v4824
        %s4834 = scalar_lea.vmem [#allocation13], 64
        %v4835 = vld [vmem:[%s4834] sm:$0xf]
        %v4836 = vld [vmem:[%s4834 + $0x4] sm:$0xf]
        %v4837 = vld [vmem:[%s4834 + $0x8] sm:$0xf]
        %v4838 = vld [vmem:[%s4834 + $0xc] sm:$0xf]
        %v4839 = vld [vmem:[%s4834 + $0x10] sm:$0xf]
        %v4840 = vld [vmem:[%s4834 + $0x14] sm:$0xf]
        %v4841 = vld [vmem:[%s4834 + $0x18] sm:$0xf]
        %v4842 = vld [vmem:[%s4834 + $0x1c] sm:$0xf]
        %v4843 = vld [vmem:[%s4834 + $0x20] sm:$0xf]
        %v4844 = vld [vmem:[%s4834 + $0x24] sm:$0xf]
        %v4845 = vld [vmem:[%s4834 + $0x28] sm:$0xf]
        %v4846 = vld [vmem:[%s4834 + $0x2c] sm:$0xf]
        %v4847 = vld [vmem:[%s4834 + $0x30] sm:$0xf]
        %v4848 = vld [vmem:[%s4834 + $0x34] sm:$0xf]
        %v4849 = vld [vmem:[%s4834 + $0x38] sm:$0xf]
        %v4850 = vld [vmem:[%s4834 + $0x3c] sm:$0xf]
        %s4851 = scalar_lea.vmem %s15, 1
        %v4852 = vld [vmem:[%s4851] sm:$0x1]
        %v4854 = vperm.slane %v4852, 0
        %v4872 = vunpack.c.l.b16 %v4835
        %v4873 = vunpack.c.l.b16 %v4836
        %v4874 = vunpack.c.l.b16 %v4837
        %v4875 = vunpack.c.l.b16 %v4838
        %v4876 = vunpack.c.l.b16 %v4839
        %v4877 = vunpack.c.l.b16 %v4840
        %v4878 = vunpack.c.l.b16 %v4841
        %v4879 = vunpack.c.l.b16 %v4842
        %v4880 = vunpack.c.l.b16 %v4843
        %v4881 = vunpack.c.l.b16 %v4844
        %v4882 = vunpack.c.l.b16 %v4845
        %v4883 = vunpack.c.l.b16 %v4846
        %v4884 = vunpack.c.l.b16 %v4847
        %v4885 = vunpack.c.l.b16 %v4848
        %v4886 = vunpack.c.l.b16 %v4849
        %v4887 = vunpack.c.l.b16 %v4850
        %v4888 = vpack.c.b16 %v4873, %v4872
        %v4889 = vpack.c.b16 %v4875, %v4874
        %v4890 = vpack.c.b16 %v4877, %v4876
        %v4891 = vpack.c.b16 %v4879, %v4878
        %v4892 = vpack.c.b16 %v4881, %v4880
        %v4893 = vpack.c.b16 %v4883, %v4882
        %v4894 = vpack.c.b16 %v4885, %v4884
        %v4895 = vpack.c.b16 %v4887, %v4886
        %4904 = vmatpush.bf16.msra.mxu0 %v4895
        %4905 = vmatpush.bf16.msra.mxu0 %v4894
        %4906 = vmatpush.bf16.msra.mxu0 %v4893
        %4907 = vmatpush.bf16.msra.mxu0 %v4892
        %4908 = vmatpush.bf16.msra.mxu0 %v4891
        %4909 = vmatpush.bf16.msra.mxu0 %v4890
        %4910 = vmatpush.bf16.msra.mxu0 %v4889
        %4911 = vmatpush.bf16.msra.mxu0 %v4888
        %4912 = vmatmul.bf16.gmra.mxu0 %v4826
        %v4913 = vpop.f32.mrf.mxu0
        %v4914 = vadd.f32 %v4854, %v4913
        %v4915 = vpop.f32.mrf.mxu0
        %v4916 = vadd.f32 %v4854, %v4915
        %4917 = vmatmul.bf16.gmra.mxu0 %v4827
        %v4918 = vpop.f32.mrf.mxu0
        %v4919 = vadd.f32 %v4854, %v4918
        %v4920 = vpop.f32.mrf.mxu0
        %v4921 = vadd.f32 %v4854, %v4920
        %4922 = vmatmul.bf16.gmra.mxu0 %v4828
        %v4923 = vpop.f32.mrf.mxu0
        %v4924 = vadd.f32 %v4854, %v4923
        %v4925 = vpop.f32.mrf.mxu0
        %v4926 = vadd.f32 %v4854, %v4925
        %4927 = vmatmul.bf16.gmra.mxu0 %v4829
        %v4928 = vpop.f32.mrf.mxu0
        %v4929 = vadd.f32 %v4854, %v4928
        %v4930 = vpop.f32.mrf.mxu0
        %v4931 = vadd.f32 %v4854, %v4930
        %4932 = vmatmul.bf16.gmra.mxu0 %v4830
        %v4933 = vpop.f32.mrf.mxu0
        %v4934 = vadd.f32 %v4854, %v4933
        %v4935 = vpop.f32.mrf.mxu0
        %v4936 = vadd.f32 %v4854, %v4935
        %4937 = vmatmul.bf16.gmra.mxu0 %v4831
        %v4938 = vpop.f32.mrf.mxu0
        %v4939 = vadd.f32 %v4854, %v4938
        %v4940 = vpop.f32.mrf.mxu0
        %v4941 = vadd.f32 %v4854, %v4940
        %4942 = vmatmul.bf16.gmra.mxu0 %v4832
        %v4943 = vpop.f32.mrf.mxu0
        %v4944 = vadd.f32 %v4854, %v4943
        %v4945 = vpop.f32.mrf.mxu0
        %v4946 = vadd.f32 %v4854, %v4945
        %4947 = vmatmul.bf16.gmra.mxu0 %v4833
        %v4948 = vpop.f32.mrf.mxu0
        %v4949 = vadd.f32 %v4854, %v4948
        %v4950 = vpop.f32.mrf.mxu0
        %v4951 = vadd.f32 %v4854, %v4950
        %4952 = vdwg.mxu0
        %v4953 = vpack.c.bf16 %v4916, %v4914
        %v4954 = vpack.c.bf16 %v4921, %v4919
        %v4955 = vpack.c.bf16 %v4926, %v4924
        %v4956 = vpack.c.bf16 %v4931, %v4929
        %v4957 = vpack.c.bf16 %v4936, %v4934
        %v4958 = vpack.c.bf16 %v4941, %v4939
        %v4959 = vpack.c.bf16 %v4946, %v4944
        %v4960 = vpack.c.bf16 %v4951, %v4949
        %v4961 = vpack.c.bf16 %v4360, %v4359
        %v4962 = vpack.c.bf16 %v4362, %v4361
        %v4963 = vpack.c.bf16 %v4364, %v4363
        %v4964 = vpack.c.bf16 %v4366, %v4365
        %v4965 = vpack.c.bf16 %v4368, %v4367
        %v4966 = vpack.c.bf16 %v4370, %v4369
        %v4967 = vpack.c.bf16 %v4372, %v4371
        %v4968 = vpack.c.bf16 %v4374, %v4373
        %v4969 = vpack.c.bf16 %v4376, %v4375
        %v4970 = vpack.c.bf16 %v4378, %v4377
        %v4971 = vpack.c.bf16 %v4380, %v4379
        %v4972 = vpack.c.bf16 %v4382, %v4381
        %v4973 = vpack.c.bf16 %v4384, %v4383
        %v4974 = vpack.c.bf16 %v4386, %v4385
        %v4975 = vpack.c.bf16 %v4388, %v4387
        %v4976 = vpack.c.bf16 %v4390, %v4389
        %s4977 = scalar_lea.vmem %s7, 256
        %v4978 = vld [vmem:[%s4977] sm:$0xff]
        %v4979 = vld [vmem:[%s4977 + $0x8] sm:$0xff]
        %v4980 = vld [vmem:[%s4977 + $0x10] sm:$0xff]
        %v4981 = vld [vmem:[%s4977 + $0x18] sm:$0xff]
        %v4982 = vld [vmem:[%s4977 + $0x20] sm:$0xff]
        %v4983 = vld [vmem:[%s4977 + $0x28] sm:$0xff]
        %v4984 = vld [vmem:[%s4977 + $0x30] sm:$0xff]
        %v4985 = vld [vmem:[%s4977 + $0x38] sm:$0xff]
        %v4986 = vld [vmem:[%s4977 + $0x40] sm:$0xff]
        %v4987 = vld [vmem:[%s4977 + $0x48] sm:$0xff]
        %v4988 = vld [vmem:[%s4977 + $0x50] sm:$0xff]
        %v4989 = vld [vmem:[%s4977 + $0x58] sm:$0xff]
        %v4990 = vld [vmem:[%s4977 + $0x60] sm:$0xff]
        %v4991 = vld [vmem:[%s4977 + $0x68] sm:$0xff]
        %v4992 = vld [vmem:[%s4977 + $0x70] sm:$0xff]
        %v4993 = vld [vmem:[%s4977 + $0x78] sm:$0xff]
        %v5010 = vunpack.c.l.b16 %v4978
        %v5011 = vunpack.c.h.b16 %v4978
        %v5012 = vunpack.c.l.b16 %v4979
        %v5013 = vunpack.c.h.b16 %v4979
        %v5014 = vunpack.c.l.b16 %v4980
        %v5015 = vunpack.c.h.b16 %v4980
        %v5016 = vunpack.c.l.b16 %v4981
        %v5017 = vunpack.c.h.b16 %v4981
        %v5018 = vunpack.c.l.b16 %v4982
        %v5019 = vunpack.c.h.b16 %v4982
        %v5020 = vunpack.c.l.b16 %v4983
        %v5021 = vunpack.c.h.b16 %v4983
        %v5022 = vunpack.c.l.b16 %v4984
        %v5023 = vunpack.c.h.b16 %v4984
        %v5024 = vunpack.c.l.b16 %v4985
        %v5025 = vunpack.c.h.b16 %v4985
        %v5026 = vunpack.c.l.b16 %v4986
        %v5027 = vunpack.c.h.b16 %v4986
        %v5028 = vunpack.c.l.b16 %v4987
        %v5029 = vunpack.c.h.b16 %v4987
        %v5030 = vunpack.c.l.b16 %v4988
        %v5031 = vunpack.c.h.b16 %v4988
        %v5032 = vunpack.c.l.b16 %v4989
        %v5033 = vunpack.c.h.b16 %v4989
        %v5034 = vunpack.c.l.b16 %v4990
        %v5035 = vunpack.c.h.b16 %v4990
        %v5036 = vunpack.c.l.b16 %v4991
        %v5037 = vunpack.c.h.b16 %v4991
        %v5038 = vunpack.c.l.b16 %v4992
        %v5039 = vunpack.c.h.b16 %v4992
        %v5040 = vunpack.c.l.b16 %v4993
        %v5041 = vunpack.c.h.b16 %v4993
        %v5042 = vpack.c.b16 %v5012, %v5010
        %v5043 = vpack.c.b16 %v5013, %v5011
        %v5044 = vpack.c.b16 %v5016, %v5014
        %v5045 = vpack.c.b16 %v5017, %v5015
        %v5046 = vpack.c.b16 %v5020, %v5018
        %v5047 = vpack.c.b16 %v5021, %v5019
        %v5048 = vpack.c.b16 %v5024, %v5022
        %v5049 = vpack.c.b16 %v5025, %v5023
        %v5050 = vpack.c.b16 %v5028, %v5026
        %v5051 = vpack.c.b16 %v5029, %v5027
        %v5052 = vpack.c.b16 %v5032, %v5030
        %v5053 = vpack.c.b16 %v5033, %v5031
        %v5054 = vpack.c.b16 %v5036, %v5034
        %v5055 = vpack.c.b16 %v5037, %v5035
        %v5056 = vpack.c.b16 %v5040, %v5038
        %v5057 = vpack.c.b16 %v5041, %v5039
        %5074 = vmatpush.bf16.msra.mxu0 %v5056
        %5075 = vmatpush.bf16.msra.mxu0 %v5054
        %5076 = vmatpush.bf16.msra.mxu0 %v5052
        %5077 = vmatpush.bf16.msra.mxu0 %v5050
        %5078 = vmatpush.bf16.msra.mxu0 %v5048
        %5079 = vmatpush.bf16.msra.mxu0 %v5046
        %5080 = vmatpush.bf16.msra.mxu0 %v5044
        %5081 = vmatpush.bf16.msra.mxu0 %v5042
        %5082 = vmatmul.bf16.gmra.mxu0 %v4953
        %v5083 = vpop.f32.mrf.mxu0
        %v5084 = vadd.f32 0.0, %v5083
        %v5085 = vpop.f32.mrf.mxu0
        %v5086 = vadd.f32 0.0, %v5085
        %5087 = vmatmul.bf16.gmra.mxu0 %v4954
        %v5088 = vpop.f32.mrf.mxu0
        %v5089 = vadd.f32 0.0, %v5088
        %v5090 = vpop.f32.mrf.mxu0
        %v5091 = vadd.f32 0.0, %v5090
        %5092 = vmatmul.bf16.gmra.mxu0 %v4955
        %v5093 = vpop.f32.mrf.mxu0
        %v5094 = vadd.f32 0.0, %v5093
        %v5095 = vpop.f32.mrf.mxu0
        %v5096 = vadd.f32 0.0, %v5095
        %5097 = vmatmul.bf16.gmra.mxu0 %v4956
        %v5098 = vpop.f32.mrf.mxu0
        %v5099 = vadd.f32 0.0, %v5098
        %v5100 = vpop.f32.mrf.mxu0
        %v5101 = vadd.f32 0.0, %v5100
        %5102 = vmatmul.bf16.gmra.mxu0 %v4957
        %v5103 = vpop.f32.mrf.mxu0
        %v5104 = vadd.f32 0.0, %v5103
        %v5105 = vpop.f32.mrf.mxu0
        %v5106 = vadd.f32 0.0, %v5105
        %5107 = vmatmul.bf16.gmra.mxu0 %v4958
        %v5108 = vpop.f32.mrf.mxu0
        %v5109 = vadd.f32 0.0, %v5108
        %v5110 = vpop.f32.mrf.mxu0
        %v5111 = vadd.f32 0.0, %v5110
        %5112 = vmatmul.bf16.gmra.mxu0 %v4959
        %v5113 = vpop.f32.mrf.mxu0
        %v5114 = vadd.f32 0.0, %v5113
        %v5115 = vpop.f32.mrf.mxu0
        %v5116 = vadd.f32 0.0, %v5115
        %5117 = vmatmul.bf16.gmra.mxu0 %v4960
        %v5118 = vpop.f32.mrf.mxu0
        %v5119 = vadd.f32 0.0, %v5118
        %v5120 = vpop.f32.mrf.mxu0
        %v5121 = vadd.f32 0.0, %v5120
        %5122 = vdwg.mxu0
        %5123 = vmatpush.bf16.msra.mxu0 %v5057
        %5124 = vmatpush.bf16.msra.mxu0 %v5055
        %5125 = vmatpush.bf16.msra.mxu0 %v5053
        %5126 = vmatpush.bf16.msra.mxu0 %v5051
        %5127 = vmatpush.bf16.msra.mxu0 %v5049
        %5128 = vmatpush.bf16.msra.mxu0 %v5047
        %5129 = vmatpush.bf16.msra.mxu0 %v5045
        %5130 = vmatpush.bf16.msra.mxu0 %v5043
        %5131 = vmatmul.bf16.gmra.mxu0 %v4953
        %v5132 = vpop.f32.mrf.mxu0
        %v5133 = vadd.f32 0.0, %v5132
        %v5134 = vpop.f32.mrf.mxu0
        %v5135 = vadd.f32 0.0, %v5134
        %5136 = vmatmul.bf16.gmra.mxu0 %v4954
        %v5137 = vpop.f32.mrf.mxu0
        %v5138 = vadd.f32 0.0, %v5137
        %v5139 = vpop.f32.mrf.mxu0
        %v5140 = vadd.f32 0.0, %v5139
        %5141 = vmatmul.bf16.gmra.mxu0 %v4955
        %v5142 = vpop.f32.mrf.mxu0
        %v5143 = vadd.f32 0.0, %v5142
        %v5144 = vpop.f32.mrf.mxu0
        %v5145 = vadd.f32 0.0, %v5144
        %5146 = vmatmul.bf16.gmra.mxu0 %v4956
        %v5147 = vpop.f32.mrf.mxu0
        %v5148 = vadd.f32 0.0, %v5147
        %v5149 = vpop.f32.mrf.mxu0
        %v5150 = vadd.f32 0.0, %v5149
        %5151 = vmatmul.bf16.gmra.mxu0 %v4957
        %v5152 = vpop.f32.mrf.mxu0
        %v5153 = vadd.f32 0.0, %v5152
        %v5154 = vpop.f32.mrf.mxu0
        %v5155 = vadd.f32 0.0, %v5154
        %5156 = vmatmul.bf16.gmra.mxu0 %v4958
        %v5157 = vpop.f32.mrf.mxu0
        %v5158 = vadd.f32 0.0, %v5157
        %v5159 = vpop.f32.mrf.mxu0
        %v5160 = vadd.f32 0.0, %v5159
        %5161 = vmatmul.bf16.gmra.mxu0 %v4959
        %v5162 = vpop.f32.mrf.mxu0
        %v5163 = vadd.f32 0.0, %v5162
        %v5164 = vpop.f32.mrf.mxu0
        %v5165 = vadd.f32 0.0, %v5164
        %5166 = vmatmul.bf16.gmra.mxu0 %v4960
        %v5167 = vpop.f32.mrf.mxu0
        %v5168 = vadd.f32 0.0, %v5167
        %v5169 = vpop.f32.mrf.mxu0
        %v5170 = vadd.f32 0.0, %v5169
        %5171 = vdwg.mxu0
        %v5172 = vpack.c.bf16 %v5086, %v5084
        %v5173 = vpack.c.bf16 %v5091, %v5089
        %v5174 = vpack.c.bf16 %v5096, %v5094
        %v5175 = vpack.c.bf16 %v5101, %v5099
        %v5176 = vpack.c.bf16 %v5106, %v5104
        %v5177 = vpack.c.bf16 %v5111, %v5109
        %v5178 = vpack.c.bf16 %v5116, %v5114
        %v5179 = vpack.c.bf16 %v5121, %v5119
        %v5180 = vpack.c.bf16 %v5135, %v5133
        %v5181 = vpack.c.bf16 %v5140, %v5138
        %v5182 = vpack.c.bf16 %v5145, %v5143
        %v5183 = vpack.c.bf16 %v5150, %v5148
        %v5184 = vpack.c.bf16 %v5155, %v5153
        %v5185 = vpack.c.bf16 %v5160, %v5158
        %v5186 = vpack.c.bf16 %v5165, %v5163
        %v5187 = vpack.c.bf16 %v5170, %v5168
        %5188 = vmatpush.bf16.msra.mxu0 %v5187
        %5189 = vmatpush.bf16.msra.mxu0 %v5186
        %5190 = vmatpush.bf16.msra.mxu0 %v5185
        %5191 = vmatpush.bf16.msra.mxu0 %v5184
        %5192 = vmatpush.bf16.msra.mxu0 %v5183
        %5193 = vmatpush.bf16.msra.mxu0 %v5182
        %5194 = vmatpush.bf16.msra.mxu0 %v5181
        %5195 = vmatpush.bf16.msra.mxu0 %v5180
        %5196 = vmatmul.bf16.gmra.mxu0 %v1270
        %v5197 = vpop.f32.mrf.mxu0
        %v5198 = vadd.f32 0.0, %v5197
        %v5199 = vpop.f32.mrf.mxu0
        %v5200 = vadd.f32 0.0, %v5199
        %5201 = vmatmul.bf16.gmra.mxu0 %v1271
        %v5202 = vpop.f32.mrf.mxu0
        %v5203 = vadd.f32 0.0, %v5202
        %v5204 = vpop.f32.mrf.mxu0
        %v5205 = vadd.f32 0.0, %v5204
        %5206 = vmatmul.bf16.gmra.mxu0 %v1272
        %v5207 = vpop.f32.mrf.mxu0
        %v5208 = vadd.f32 0.0, %v5207
        %v5209 = vpop.f32.mrf.mxu0
        %v5210 = vadd.f32 0.0, %v5209
        %5211 = vmatmul.bf16.gmra.mxu0 %v1273
        %v5212 = vpop.f32.mrf.mxu0
        %v5213 = vadd.f32 0.0, %v5212
        %v5214 = vpop.f32.mrf.mxu0
        %v5215 = vadd.f32 0.0, %v5214
        %5216 = vmatmul.bf16.gmra.mxu0 %v1274
        %v5217 = vpop.f32.mrf.mxu0
        %v5218 = vadd.f32 0.0, %v5217
        %v5219 = vpop.f32.mrf.mxu0
        %v5220 = vadd.f32 0.0, %v5219
        %5221 = vmatmul.bf16.gmra.mxu0 %v1275
        %v5222 = vpop.f32.mrf.mxu0
        %v5223 = vadd.f32 0.0, %v5222
        %v5224 = vpop.f32.mrf.mxu0
        %v5225 = vadd.f32 0.0, %v5224
        %5226 = vmatmul.bf16.gmra.mxu0 %v1276
        %v5227 = vpop.f32.mrf.mxu0
        %v5228 = vadd.f32 0.0, %v5227
        %v5229 = vpop.f32.mrf.mxu0
        %v5230 = vadd.f32 0.0, %v5229
        %5231 = vmatmul.bf16.gmra.mxu0 %v1277
        %v5232 = vpop.f32.mrf.mxu0
        %v5233 = vadd.f32 0.0, %v5232
        %v5234 = vpop.f32.mrf.mxu0
        %v5235 = vadd.f32 0.0, %v5234
        %5236 = vmatmul.bf16.gmra.mxu0 %v1278
        %v5237 = vpop.f32.mrf.mxu0
        %v5238 = vadd.f32 0.0, %v5237
        %v5239 = vpop.f32.mrf.mxu0
        %v5240 = vadd.f32 0.0, %v5239
        %5241 = vmatmul.bf16.gmra.mxu0 %v1279
        %v5242 = vpop.f32.mrf.mxu0
        %v5243 = vadd.f32 0.0, %v5242
        %v5244 = vpop.f32.mrf.mxu0
        %v5245 = vadd.f32 0.0, %v5244
        %5246 = vmatmul.bf16.gmra.mxu0 %v1280
        %v5247 = vpop.f32.mrf.mxu0
        %v5248 = vadd.f32 0.0, %v5247
        %v5249 = vpop.f32.mrf.mxu0
        %v5250 = vadd.f32 0.0, %v5249
        %5251 = vmatmul.bf16.gmra.mxu0 %v1281
        %v5252 = vpop.f32.mrf.mxu0
        %v5253 = vadd.f32 0.0, %v5252
        %v5254 = vpop.f32.mrf.mxu0
        %v5255 = vadd.f32 0.0, %v5254
        %5256 = vmatmul.bf16.gmra.mxu0 %v1282
        %v5257 = vpop.f32.mrf.mxu0
        %v5258 = vadd.f32 0.0, %v5257
        %v5259 = vpop.f32.mrf.mxu0
        %v5260 = vadd.f32 0.0, %v5259
        %5261 = vmatmul.bf16.gmra.mxu0 %v1283
        %v5262 = vpop.f32.mrf.mxu0
        %v5263 = vadd.f32 0.0, %v5262
        %v5264 = vpop.f32.mrf.mxu0
        %v5265 = vadd.f32 0.0, %v5264
        %5266 = vmatmul.bf16.gmra.mxu0 %v1284
        %v5267 = vpop.f32.mrf.mxu0
        %v5268 = vadd.f32 0.0, %v5267
        %v5269 = vpop.f32.mrf.mxu0
        %v5270 = vadd.f32 0.0, %v5269
        %5271 = vmatmul.bf16.gmra.mxu0 %v1285
        %v5272 = vpop.f32.mrf.mxu0
        %v5273 = vadd.f32 0.0, %v5272
        %v5274 = vpop.f32.mrf.mxu0
        %v5275 = vadd.f32 0.0, %v5274
        %5276 = vdwg.mxu0
        %s5277 = scalar_lea.vmem [#allocation10], 128
        %v5278 = vld [vmem:[%s5277] sm:$0xf]
        %v5279 = vld [vmem:[%s5277 + $0x4] sm:$0xf]
        %v5280 = vld [vmem:[%s5277 + $0x8] sm:$0xf]
        %v5281 = vld [vmem:[%s5277 + $0xc] sm:$0xf]
        %v5282 = vld [vmem:[%s5277 + $0x10] sm:$0xf]
        %v5283 = vld [vmem:[%s5277 + $0x14] sm:$0xf]
        %v5284 = vld [vmem:[%s5277 + $0x18] sm:$0xf]
        %v5285 = vld [vmem:[%s5277 + $0x1c] sm:$0xf]
        %v5286 = vld [vmem:[%s5277 + $0x20] sm:$0xf]
        %v5287 = vld [vmem:[%s5277 + $0x24] sm:$0xf]
        %v5288 = vld [vmem:[%s5277 + $0x28] sm:$0xf]
        %v5289 = vld [vmem:[%s5277 + $0x2c] sm:$0xf]
        %v5290 = vld [vmem:[%s5277 + $0x30] sm:$0xf]
        %v5291 = vld [vmem:[%s5277 + $0x34] sm:$0xf]
        %v5292 = vld [vmem:[%s5277 + $0x38] sm:$0xf]
        %v5293 = vld [vmem:[%s5277 + $0x3c] sm:$0xf]
        %v5310 = vunpack.c.l.b16 %v5278
        %v5311 = vunpack.c.l.b16 %v5279
        %v5312 = vunpack.c.l.b16 %v5280
        %v5313 = vunpack.c.l.b16 %v5281
        %v5314 = vunpack.c.l.b16 %v5282
        %v5315 = vunpack.c.l.b16 %v5283
        %v5316 = vunpack.c.l.b16 %v5284
        %v5317 = vunpack.c.l.b16 %v5285
        %v5318 = vunpack.c.l.b16 %v5286
        %v5319 = vunpack.c.l.b16 %v5287
        %v5320 = vunpack.c.l.b16 %v5288
        %v5321 = vunpack.c.l.b16 %v5289
        %v5322 = vunpack.c.l.b16 %v5290
        %v5323 = vunpack.c.l.b16 %v5291
        %v5324 = vunpack.c.l.b16 %v5292
        %v5325 = vunpack.c.l.b16 %v5293
        %v5326 = vpack.c.b16 %v5311, %v5310
        %v5327 = vpack.c.b16 %v5313, %v5312
        %v5328 = vpack.c.b16 %v5315, %v5314
        %v5329 = vpack.c.b16 %v5317, %v5316
        %v5330 = vpack.c.b16 %v5319, %v5318
        %v5331 = vpack.c.b16 %v5321, %v5320
        %v5332 = vpack.c.b16 %v5323, %v5322
        %v5333 = vpack.c.b16 %v5325, %v5324
        %5342 = vmatpush.bf16.msra.mxu0 %v5333
        %5343 = vmatpush.bf16.msra.mxu0 %v5332
        %5344 = vmatpush.bf16.msra.mxu0 %v5331
        %5345 = vmatpush.bf16.msra.mxu0 %v5330
        %5346 = vmatpush.bf16.msra.mxu0 %v5329
        %5347 = vmatpush.bf16.msra.mxu0 %v5328
        %5348 = vmatpush.bf16.msra.mxu0 %v5327
        %5349 = vmatpush.bf16.msra.mxu0 %v5326
        %5350 = vmatmul.bf16.gmra.mxu0 %v4961
        %v5351 = vpop.f32.mrf.mxu0
        %v5352 = vadd.f32 0.0, %v5351
        %v5353 = vpop.f32.mrf.mxu0
        %v5354 = vadd.f32 0.0, %v5353
        %5355 = vmatmul.bf16.gmra.mxu0 %v4962
        %v5356 = vpop.f32.mrf.mxu0
        %v5357 = vadd.f32 0.0, %v5356
        %v5358 = vpop.f32.mrf.mxu0
        %v5359 = vadd.f32 0.0, %v5358
        %5360 = vmatmul.bf16.gmra.mxu0 %v4963
        %v5361 = vpop.f32.mrf.mxu0
        %v5362 = vadd.f32 0.0, %v5361
        %v5363 = vpop.f32.mrf.mxu0
        %v5364 = vadd.f32 0.0, %v5363
        %5365 = vmatmul.bf16.gmra.mxu0 %v4964
        %v5366 = vpop.f32.mrf.mxu0
        %v5367 = vadd.f32 0.0, %v5366
        %v5368 = vpop.f32.mrf.mxu0
        %v5369 = vadd.f32 0.0, %v5368
        %5370 = vmatmul.bf16.gmra.mxu0 %v4965
        %v5371 = vpop.f32.mrf.mxu0
        %v5372 = vadd.f32 0.0, %v5371
        %v5373 = vpop.f32.mrf.mxu0
        %v5374 = vadd.f32 0.0, %v5373
        %5375 = vmatmul.bf16.gmra.mxu0 %v4966
        %v5376 = vpop.f32.mrf.mxu0
        %v5377 = vadd.f32 0.0, %v5376
        %v5378 = vpop.f32.mrf.mxu0
        %v5379 = vadd.f32 0.0, %v5378
        %5380 = vmatmul.bf16.gmra.mxu0 %v4967
        %v5381 = vpop.f32.mrf.mxu0
        %v5382 = vadd.f32 0.0, %v5381
        %v5383 = vpop.f32.mrf.mxu0
        %v5384 = vadd.f32 0.0, %v5383
        %5385 = vmatmul.bf16.gmra.mxu0 %v4968
        %v5386 = vpop.f32.mrf.mxu0
        %v5387 = vadd.f32 0.0, %v5386
        %v5388 = vpop.f32.mrf.mxu0
        %v5389 = vadd.f32 0.0, %v5388
        %5390 = vmatmul.bf16.gmra.mxu0 %v4969
        %v5391 = vpop.f32.mrf.mxu0
        %v5392 = vadd.f32 0.0, %v5391
        %v5393 = vpop.f32.mrf.mxu0
        %v5394 = vadd.f32 0.0, %v5393
        %5395 = vmatmul.bf16.gmra.mxu0 %v4970
        %v5396 = vpop.f32.mrf.mxu0
        %v5397 = vadd.f32 0.0, %v5396
        %v5398 = vpop.f32.mrf.mxu0
        %v5399 = vadd.f32 0.0, %v5398
        %5400 = vmatmul.bf16.gmra.mxu0 %v4971
        %v5401 = vpop.f32.mrf.mxu0
        %v5402 = vadd.f32 0.0, %v5401
        %v5403 = vpop.f32.mrf.mxu0
        %v5404 = vadd.f32 0.0, %v5403
        %5405 = vmatmul.bf16.gmra.mxu0 %v4972
        %v5406 = vpop.f32.mrf.mxu0
        %v5407 = vadd.f32 0.0, %v5406
        %v5408 = vpop.f32.mrf.mxu0
        %v5409 = vadd.f32 0.0, %v5408
        %5410 = vmatmul.bf16.gmra.mxu0 %v4973
        %v5411 = vpop.f32.mrf.mxu0
        %v5412 = vadd.f32 0.0, %v5411
        %v5413 = vpop.f32.mrf.mxu0
        %v5414 = vadd.f32 0.0, %v5413
        %5415 = vmatmul.bf16.gmra.mxu0 %v4974
        %v5416 = vpop.f32.mrf.mxu0
        %v5417 = vadd.f32 0.0, %v5416
        %v5418 = vpop.f32.mrf.mxu0
        %v5419 = vadd.f32 0.0, %v5418
        %5420 = vmatmul.bf16.gmra.mxu0 %v4975
        %v5421 = vpop.f32.mrf.mxu0
        %v5422 = vadd.f32 0.0, %v5421
        %v5423 = vpop.f32.mrf.mxu0
        %v5424 = vadd.f32 0.0, %v5423
        %5425 = vmatmul.bf16.gmra.mxu0 %v4976
        %v5426 = vpop.f32.mrf.mxu0
        %v5427 = vadd.f32 0.0, %v5426
        %v5428 = vpop.f32.mrf.mxu0
        %v5429 = vadd.f32 0.0, %v5428
        %5430 = vdwg.mxu0
        %5431 = vmatpush.bf16.msra.mxu0 %v5179
        %5432 = vmatpush.bf16.msra.mxu0 %v5178
        %5433 = vmatpush.bf16.msra.mxu0 %v5177
        %5434 = vmatpush.bf16.msra.mxu0 %v5176
        %5435 = vmatpush.bf16.msra.mxu0 %v5175
        %5436 = vmatpush.bf16.msra.mxu0 %v5174
        %5437 = vmatpush.bf16.msra.mxu0 %v5173
        %5438 = vmatpush.bf16.msra.mxu0 %v5172
        %5439 = vmatmul.bf16.gmra.mxu0 %v1608
        %v5440 = vpop.f32.mrf.mxu0
        %v5441 = vadd.f32 %v5352, %v5440
        %v5442 = vpop.f32.mrf.mxu0
        %v5443 = vadd.f32 %v5354, %v5442
        %5444 = vmatmul.bf16.gmra.mxu0 %v1609
        %v5445 = vpop.f32.mrf.mxu0
        %v5446 = vadd.f32 %v5357, %v5445
        %v5447 = vpop.f32.mrf.mxu0
        %v5448 = vadd.f32 %v5359, %v5447
        %5449 = vmatmul.bf16.gmra.mxu0 %v1610
        %v5450 = vpop.f32.mrf.mxu0
        %v5451 = vadd.f32 %v5362, %v5450
        %v5452 = vpop.f32.mrf.mxu0
        %v5453 = vadd.f32 %v5364, %v5452
        %5454 = vmatmul.bf16.gmra.mxu0 %v1611
        %v5455 = vpop.f32.mrf.mxu0
        %v5456 = vadd.f32 %v5367, %v5455
        %v5457 = vpop.f32.mrf.mxu0
        %v5458 = vadd.f32 %v5369, %v5457
        %5459 = vmatmul.bf16.gmra.mxu0 %v1612
        %v5460 = vpop.f32.mrf.mxu0
        %v5461 = vadd.f32 %v5372, %v5460
        %v5462 = vpop.f32.mrf.mxu0
        %v5463 = vadd.f32 %v5374, %v5462
        %5464 = vmatmul.bf16.gmra.mxu0 %v1613
        %v5465 = vpop.f32.mrf.mxu0
        %v5466 = vadd.f32 %v5377, %v5465
        %v5467 = vpop.f32.mrf.mxu0
        %v5468 = vadd.f32 %v5379, %v5467
        %5469 = vmatmul.bf16.gmra.mxu0 %v1614
        %v5470 = vpop.f32.mrf.mxu0
        %v5471 = vadd.f32 %v5382, %v5470
        %v5472 = vpop.f32.mrf.mxu0
        %v5473 = vadd.f32 %v5384, %v5472
        %5474 = vmatmul.bf16.gmra.mxu0 %v1615
        %v5475 = vpop.f32.mrf.mxu0
        %v5476 = vadd.f32 %v5387, %v5475
        %v5477 = vpop.f32.mrf.mxu0
        %v5478 = vadd.f32 %v5389, %v5477
        %5479 = vmatmul.bf16.gmra.mxu0 %v1616
        %v5480 = vpop.f32.mrf.mxu0
        %v5481 = vadd.f32 %v5392, %v5480
        %v5482 = vpop.f32.mrf.mxu0
        %v5483 = vadd.f32 %v5394, %v5482
        %5484 = vmatmul.bf16.gmra.mxu0 %v1617
        %v5485 = vpop.f32.mrf.mxu0
        %v5486 = vadd.f32 %v5397, %v5485
        %v5487 = vpop.f32.mrf.mxu0
        %v5488 = vadd.f32 %v5399, %v5487
        %5489 = vmatmul.bf16.gmra.mxu0 %v1618
        %v5490 = vpop.f32.mrf.mxu0
        %v5491 = vadd.f32 %v5402, %v5490
        %v5492 = vpop.f32.mrf.mxu0
        %v5493 = vadd.f32 %v5404, %v5492
        %5494 = vmatmul.bf16.gmra.mxu0 %v1619
        %v5495 = vpop.f32.mrf.mxu0
        %v5496 = vadd.f32 %v5407, %v5495
        %v5497 = vpop.f32.mrf.mxu0
        %v5498 = vadd.f32 %v5409, %v5497
        %5499 = vmatmul.bf16.gmra.mxu0 %v1620
        %v5500 = vpop.f32.mrf.mxu0
        %v5501 = vadd.f32 %v5412, %v5500
        %v5502 = vpop.f32.mrf.mxu0
        %v5503 = vadd.f32 %v5414, %v5502
        %5504 = vmatmul.bf16.gmra.mxu0 %v1621
        %v5505 = vpop.f32.mrf.mxu0
        %v5506 = vadd.f32 %v5417, %v5505
        %v5507 = vpop.f32.mrf.mxu0
        %v5508 = vadd.f32 %v5419, %v5507
        %5509 = vmatmul.bf16.gmra.mxu0 %v1622
        %v5510 = vpop.f32.mrf.mxu0
        %v5511 = vadd.f32 %v5422, %v5510
        %v5512 = vpop.f32.mrf.mxu0
        %v5513 = vadd.f32 %v5424, %v5512
        %5514 = vmatmul.bf16.gmra.mxu0 %v1623
        %v5515 = vpop.f32.mrf.mxu0
        %v5516 = vadd.f32 %v5427, %v5515
        %v5517 = vpop.f32.mrf.mxu0
        %v5518 = vadd.f32 %v5429, %v5517
        %5519 = vdwg.mxu0
        %v5520 = vadd.f32 %v5441, %v5198
        %v5521 = vadd.f32 %v5443, %v5200
        %v5522 = vadd.f32 %v5446, %v5203
        %v5523 = vadd.f32 %v5448, %v5205
        %v5524 = vadd.f32 %v5451, %v5208
        %v5525 = vadd.f32 %v5453, %v5210
        %v5526 = vadd.f32 %v5456, %v5213
        %v5527 = vadd.f32 %v5458, %v5215
        %v5528 = vadd.f32 %v5461, %v5218
        %v5529 = vadd.f32 %v5463, %v5220
        %v5530 = vadd.f32 %v5466, %v5223
        %v5531 = vadd.f32 %v5468, %v5225
        %v5532 = vadd.f32 %v5471, %v5228
        %v5533 = vadd.f32 %v5473, %v5230
        %v5534 = vadd.f32 %v5476, %v5233
        %v5535 = vadd.f32 %v5478, %v5235
        %v5536 = vadd.f32 %v5481, %v5238
        %v5537 = vadd.f32 %v5483, %v5240
        %v5538 = vadd.f32 %v5486, %v5243
        %v5539 = vadd.f32 %v5488, %v5245
        %v5540 = vadd.f32 %v5491, %v5248
        %v5541 = vadd.f32 %v5493, %v5250
        %v5542 = vadd.f32 %v5496, %v5253
        %v5543 = vadd.f32 %v5498, %v5255
        %v5544 = vadd.f32 %v5501, %v5258
        %v5545 = vadd.f32 %v5503, %v5260
        %v5546 = vadd.f32 %v5506, %v5263
        %v5547 = vadd.f32 %v5508, %v5265
        %v5548 = vadd.f32 %v5511, %v5268
        %v5549 = vadd.f32 %v5513, %v5270
        %v5550 = vadd.f32 %v5516, %v5273
        %v5551 = vadd.f32 %v5518, %v5275
        %s5552 = scalar_lea.vmem %s9, 2
        %v5553 = vld [vmem:[%s5552] sm:$0x1]
        %v5555 = vperm.slane %v5553, 0
        %v5557 = vadd.f32 %v5520, %v5555
        %v5558 = vadd.f32 %v5521, %v5555
        %v5559 = vadd.f32 %v5522, %v5555
        %v5560 = vadd.f32 %v5523, %v5555
        %v5561 = vadd.f32 %v5524, %v5555
        %v5562 = vadd.f32 %v5525, %v5555
        %v5563 = vadd.f32 %v5526, %v5555
        %v5564 = vadd.f32 %v5527, %v5555
        %v5565 = vadd.f32 %v5528, %v5555
        %v5566 = vadd.f32 %v5529, %v5555
        %v5567 = vadd.f32 %v5530, %v5555
        %v5568 = vadd.f32 %v5531, %v5555
        %v5569 = vadd.f32 %v5532, %v5555
        %v5570 = vadd.f32 %v5533, %v5555
        %v5571 = vadd.f32 %v5534, %v5555
        %v5572 = vadd.f32 %v5535, %v5555
        %v5573 = vadd.f32 %v5536, %v5555
        %v5574 = vadd.f32 %v5537, %v5555
        %v5575 = vadd.f32 %v5538, %v5555
        %v5576 = vadd.f32 %v5539, %v5555
        %v5577 = vadd.f32 %v5540, %v5555
        %v5578 = vadd.f32 %v5541, %v5555
        %v5579 = vadd.f32 %v5542, %v5555
        %v5580 = vadd.f32 %v5543, %v5555
        %v5581 = vadd.f32 %v5544, %v5555
        %v5582 = vadd.f32 %v5545, %v5555
        %v5583 = vadd.f32 %v5546, %v5555
        %v5584 = vadd.f32 %v5547, %v5555
        %v5585 = vadd.f32 %v5548, %v5555
        %v5586 = vadd.f32 %v5549, %v5555
        %v5587 = vadd.f32 %v5550, %v5555
        %v5588 = vadd.f32 %v5551, %v5555
        %v5589 = vmul.f32 %v5557, 0.01
        %v5590 = vmul.f32 %v5558, 0.01
        %v5591 = vmul.f32 %v5559, 0.01
        %v5592 = vmul.f32 %v5560, 0.01
        %v5593 = vmul.f32 %v5561, 0.01
        %v5594 = vmul.f32 %v5562, 0.01
        %v5595 = vmul.f32 %v5563, 0.01
        %v5596 = vmul.f32 %v5564, 0.01
        %v5597 = vmul.f32 %v5565, 0.01
        %v5598 = vmul.f32 %v5566, 0.01
        %v5599 = vmul.f32 %v5567, 0.01
        %v5600 = vmul.f32 %v5568, 0.01
        %v5601 = vmul.f32 %v5569, 0.01
        %v5602 = vmul.f32 %v5570, 0.01
        %v5603 = vmul.f32 %v5571, 0.01
        %v5604 = vmul.f32 %v5572, 0.01
        %v5605 = vmul.f32 %v5573, 0.01
        %v5606 = vmul.f32 %v5574, 0.01
        %v5607 = vmul.f32 %v5575, 0.01
        %v5608 = vmul.f32 %v5576, 0.01
        %v5609 = vmul.f32 %v5577, 0.01
        %v5610 = vmul.f32 %v5578, 0.01
        %v5611 = vmul.f32 %v5579, 0.01
        %v5612 = vmul.f32 %v5580, 0.01
        %v5613 = vmul.f32 %v5581, 0.01
        %v5614 = vmul.f32 %v5582, 0.01
        %v5615 = vmul.f32 %v5583, 0.01
        %v5616 = vmul.f32 %v5584, 0.01
        %v5617 = vmul.f32 %v5585, 0.01
        %v5618 = vmul.f32 %v5586, 0.01
        %v5619 = vmul.f32 %v5587, 0.01
        %v5620 = vmul.f32 %v5588, 0.01
        %v5621 = vmax.f32 %v5557, %v5589
        %v5622 = vmax.f32 %v5558, %v5590
        %v5623 = vmax.f32 %v5559, %v5591
        %v5624 = vmax.f32 %v5560, %v5592
        %v5625 = vmax.f32 %v5561, %v5593
        %v5626 = vmax.f32 %v5562, %v5594
        %v5627 = vmax.f32 %v5563, %v5595
        %v5628 = vmax.f32 %v5564, %v5596
        %v5629 = vmax.f32 %v5565, %v5597
        %v5630 = vmax.f32 %v5566, %v5598
        %v5631 = vmax.f32 %v5567, %v5599
        %v5632 = vmax.f32 %v5568, %v5600
        %v5633 = vmax.f32 %v5569, %v5601
        %v5634 = vmax.f32 %v5570, %v5602
        %v5635 = vmax.f32 %v5571, %v5603
        %v5636 = vmax.f32 %v5572, %v5604
        %v5637 = vmax.f32 %v5573, %v5605
        %v5638 = vmax.f32 %v5574, %v5606
        %v5639 = vmax.f32 %v5575, %v5607
        %v5640 = vmax.f32 %v5576, %v5608
        %v5641 = vmax.f32 %v5577, %v5609
        %v5642 = vmax.f32 %v5578, %v5610
        %v5643 = vmax.f32 %v5579, %v5611
        %v5644 = vmax.f32 %v5580, %v5612
        %v5645 = vmax.f32 %v5581, %v5613
        %v5646 = vmax.f32 %v5582, %v5614
        %v5647 = vmax.f32 %v5583, %v5615
        %v5648 = vmax.f32 %v5584, %v5616
        %v5649 = vmax.f32 %v5585, %v5617
        %v5650 = vmax.f32 %v5586, %v5618
        %v5651 = vmax.f32 %v5587, %v5619
        %v5652 = vmax.f32 %v5588, %v5620
        %v5653 = vpack.c.bf16 %v5622, %v5621
        %v5654 = vpack.c.bf16 %v5624, %v5623
        %v5655 = vpack.c.bf16 %v5626, %v5625
        %v5656 = vpack.c.bf16 %v5628, %v5627
        %v5657 = vpack.c.bf16 %v5630, %v5629
        %v5658 = vpack.c.bf16 %v5632, %v5631
        %v5659 = vpack.c.bf16 %v5634, %v5633
        %v5660 = vpack.c.bf16 %v5636, %v5635
        %v5661 = vpack.c.bf16 %v5638, %v5637
        %v5662 = vpack.c.bf16 %v5640, %v5639
        %v5663 = vpack.c.bf16 %v5642, %v5641
        %v5664 = vpack.c.bf16 %v5644, %v5643
        %v5665 = vpack.c.bf16 %v5646, %v5645
        %v5666 = vpack.c.bf16 %v5648, %v5647
        %v5667 = vpack.c.bf16 %v5650, %v5649
        %v5668 = vpack.c.bf16 %v5652, %v5651
        %s5669 = scalar_lea.vmem %s10, 384
        %v5670 = vld [vmem:[%s5669] sm:$0xff]
        %v5671 = vld [vmem:[%s5669 + $0x8] sm:$0xf]
        %v5672 = vld [vmem:[%s5669 + $0xc] sm:$0xff]
        %v5673 = vld [vmem:[%s5669 + $0x14] sm:$0xf]
        %v5674 = vld [vmem:[%s5669 + $0x18] sm:$0xff]
        %v5675 = vld [vmem:[%s5669 + $0x20] sm:$0xf]
        %v5676 = vld [vmem:[%s5669 + $0x24] sm:$0xff]
        %v5677 = vld [vmem:[%s5669 + $0x2c] sm:$0xf]
        %v5678 = vld [vmem:[%s5669 + $0x30] sm:$0xff]
        %v5679 = vld [vmem:[%s5669 + $0x38] sm:$0xf]
        %v5680 = vld [vmem:[%s5669 + $0x3c] sm:$0xff]
        %v5681 = vld [vmem:[%s5669 + $0x44] sm:$0xf]
        %v5682 = vld [vmem:[%s5669 + $0x48] sm:$0xff]
        %v5683 = vld [vmem:[%s5669 + $0x50] sm:$0xf]
        %v5684 = vld [vmem:[%s5669 + $0x54] sm:$0xff]
        %v5685 = vld [vmem:[%s5669 + $0x5c] sm:$0xf]
        %v5686 = vld [vmem:[%s5669 + $0x60] sm:$0xff]
        %v5687 = vld [vmem:[%s5669 + $0x68] sm:$0xf]
        %v5688 = vld [vmem:[%s5669 + $0x6c] sm:$0xff]
        %v5689 = vld [vmem:[%s5669 + $0x74] sm:$0xf]
        %v5690 = vld [vmem:[%s5669 + $0x78] sm:$0xff]
        %v5691 = vld [vmem:[%s5669 + $0x80] sm:$0xf]
        %v5692 = vld [vmem:[%s5669 + $0x84] sm:$0xff]
        %v5693 = vld [vmem:[%s5669 + $0x8c] sm:$0xf]
        %v5694 = vld [vmem:[%s5669 + $0x90] sm:$0xff]
        %v5695 = vld [vmem:[%s5669 + $0x98] sm:$0xf]
        %v5696 = vld [vmem:[%s5669 + $0x9c] sm:$0xff]
        %v5697 = vld [vmem:[%s5669 + $0xa4] sm:$0xf]
        %v5698 = vld [vmem:[%s5669 + $0xa8] sm:$0xff]
        %v5699 = vld [vmem:[%s5669 + $0xb0] sm:$0xf]
        %v5700 = vld [vmem:[%s5669 + $0xb4] sm:$0xff]
        %v5701 = vld [vmem:[%s5669 + $0xbc] sm:$0xf]
        %s5702 = scalar_lea.vmem %s11, 6
        %v5703 = vld [vmem:[%s5702] sm:$0x7]
        %v5705 = vperm.slane %v5703, 0
        %v5706 = vperm.slane %v5703, 1
        %v5707 = vperm.slane %v5703, 2
        %v5743 = vunpack.c.l.b16 %v5670
        %v5744 = vunpack.c.h.b16 %v5670
        %v5745 = vunpack.c.l.b16 %v5671
        %v5746 = vunpack.c.l.b16 %v5672
        %v5747 = vunpack.c.h.b16 %v5672
        %v5748 = vunpack.c.l.b16 %v5673
        %v5749 = vunpack.c.l.b16 %v5674
        %v5750 = vunpack.c.h.b16 %v5674
        %v5751 = vunpack.c.l.b16 %v5675
        %v5752 = vunpack.c.l.b16 %v5676
        %v5753 = vunpack.c.h.b16 %v5676
        %v5754 = vunpack.c.l.b16 %v5677
        %v5755 = vunpack.c.l.b16 %v5678
        %v5756 = vunpack.c.h.b16 %v5678
        %v5757 = vunpack.c.l.b16 %v5679
        %v5758 = vunpack.c.l.b16 %v5680
        %v5759 = vunpack.c.h.b16 %v5680
        %v5760 = vunpack.c.l.b16 %v5681
        %v5761 = vunpack.c.l.b16 %v5682
        %v5762 = vunpack.c.h.b16 %v5682
        %v5763 = vunpack.c.l.b16 %v5683
        %v5764 = vunpack.c.l.b16 %v5684
        %v5765 = vunpack.c.h.b16 %v5684
        %v5766 = vunpack.c.l.b16 %v5685
        %v5767 = vunpack.c.l.b16 %v5686
        %v5768 = vunpack.c.h.b16 %v5686
        %v5769 = vunpack.c.l.b16 %v5687
        %v5770 = vunpack.c.l.b16 %v5688
        %v5771 = vunpack.c.h.b16 %v5688
        %v5772 = vunpack.c.l.b16 %v5689
        %v5773 = vunpack.c.l.b16 %v5690
        %v5774 = vunpack.c.h.b16 %v5690
        %v5775 = vunpack.c.l.b16 %v5691
        %v5776 = vunpack.c.l.b16 %v5692
        %v5777 = vunpack.c.h.b16 %v5692
        %v5778 = vunpack.c.l.b16 %v5693
        %v5779 = vunpack.c.l.b16 %v5694
        %v5780 = vunpack.c.h.b16 %v5694
        %v5781 = vunpack.c.l.b16 %v5695
        %v5782 = vunpack.c.l.b16 %v5696
        %v5783 = vunpack.c.h.b16 %v5696
        %v5784 = vunpack.c.l.b16 %v5697
        %v5785 = vunpack.c.l.b16 %v5698
        %v5786 = vunpack.c.h.b16 %v5698
        %v5787 = vunpack.c.l.b16 %v5699
        %v5788 = vunpack.c.l.b16 %v5700
        %v5789 = vunpack.c.h.b16 %v5700
        %v5790 = vunpack.c.l.b16 %v5701
        %v5791 = vpack.c.b16 %v5746, %v5743
        %v5792 = vpack.c.b16 %v5747, %v5744
        %v5793 = vpack.c.b16 %v5748, %v5745
        %v5794 = vpack.c.b16 %v5752, %v5749
        %v5795 = vpack.c.b16 %v5753, %v5750
        %v5796 = vpack.c.b16 %v5754, %v5751
        %v5797 = vpack.c.b16 %v5758, %v5755
        %v5798 = vpack.c.b16 %v5759, %v5756
        %v5799 = vpack.c.b16 %v5760, %v5757
        %v5800 = vpack.c.b16 %v5764, %v5761
        %v5801 = vpack.c.b16 %v5765, %v5762
        %v5802 = vpack.c.b16 %v5766, %v5763
        %v5803 = vpack.c.b16 %v5770, %v5767
        %v5804 = vpack.c.b16 %v5771, %v5768
        %v5805 = vpack.c.b16 %v5772, %v5769
        %v5806 = vpack.c.b16 %v5776, %v5773
        %v5807 = vpack.c.b16 %v5777, %v5774
        %v5808 = vpack.c.b16 %v5778, %v5775
        %v5809 = vpack.c.b16 %v5782, %v5779
        %v5810 = vpack.c.b16 %v5783, %v5780
        %v5811 = vpack.c.b16 %v5784, %v5781
        %v5812 = vpack.c.b16 %v5788, %v5785
        %v5813 = vpack.c.b16 %v5789, %v5786
        %v5814 = vpack.c.b16 %v5790, %v5787
        %5839 = vmatpush.bf16.msra.mxu0 %v5812
        %5840 = vmatpush.bf16.msra.mxu0 %v5809
        %5841 = vmatpush.bf16.msra.mxu0 %v5806
        %5842 = vmatpush.bf16.msra.mxu0 %v5803
        %5843 = vmatpush.bf16.msra.mxu0 %v5800
        %5844 = vmatpush.bf16.msra.mxu0 %v5797
        %5845 = vmatpush.bf16.msra.mxu0 %v5794
        %5846 = vmatpush.bf16.msra.mxu0 %v5791
        %5847 = vmatmul.bf16.gmra.mxu0 %v5653
        %v5848 = vpop.f32.mrf.mxu0
        %v5849 = vadd.f32 %v5705, %v5848
        %v5850 = vpop.f32.mrf.mxu0
        %v5851 = vadd.f32 %v5705, %v5850
        %5852 = vmatmul.bf16.gmra.mxu0 %v5654
        %v5853 = vpop.f32.mrf.mxu0
        %v5854 = vadd.f32 %v5705, %v5853
        %v5855 = vpop.f32.mrf.mxu0
        %v5856 = vadd.f32 %v5705, %v5855
        %5857 = vmatmul.bf16.gmra.mxu0 %v5655
        %v5858 = vpop.f32.mrf.mxu0
        %v5859 = vadd.f32 %v5705, %v5858
        %v5860 = vpop.f32.mrf.mxu0
        %v5861 = vadd.f32 %v5705, %v5860
        %5862 = vmatmul.bf16.gmra.mxu0 %v5656
        %v5863 = vpop.f32.mrf.mxu0
        %v5864 = vadd.f32 %v5705, %v5863
        %v5865 = vpop.f32.mrf.mxu0
        %v5866 = vadd.f32 %v5705, %v5865
        %5867 = vmatmul.bf16.gmra.mxu0 %v5657
        %v5868 = vpop.f32.mrf.mxu0
        %v5869 = vadd.f32 %v5705, %v5868
        %v5870 = vpop.f32.mrf.mxu0
        %v5871 = vadd.f32 %v5705, %v5870
        %5872 = vmatmul.bf16.gmra.mxu0 %v5658
        %v5873 = vpop.f32.mrf.mxu0
        %v5874 = vadd.f32 %v5705, %v5873
        %v5875 = vpop.f32.mrf.mxu0
        %v5876 = vadd.f32 %v5705, %v5875
        %5877 = vmatmul.bf16.gmra.mxu0 %v5659
        %v5878 = vpop.f32.mrf.mxu0
        %v5879 = vadd.f32 %v5705, %v5878
        %v5880 = vpop.f32.mrf.mxu0
        %v5881 = vadd.f32 %v5705, %v5880
        %5882 = vmatmul.bf16.gmra.mxu0 %v5660
        %v5883 = vpop.f32.mrf.mxu0
        %v5884 = vadd.f32 %v5705, %v5883
        %v5885 = vpop.f32.mrf.mxu0
        %v5886 = vadd.f32 %v5705, %v5885
        %5887 = vmatmul.bf16.gmra.mxu0 %v5661
        %v5888 = vpop.f32.mrf.mxu0
        %v5889 = vadd.f32 %v5705, %v5888
        %v5890 = vpop.f32.mrf.mxu0
        %v5891 = vadd.f32 %v5705, %v5890
        %5892 = vmatmul.bf16.gmra.mxu0 %v5662
        %v5893 = vpop.f32.mrf.mxu0
        %v5894 = vadd.f32 %v5705, %v5893
        %v5895 = vpop.f32.mrf.mxu0
        %v5896 = vadd.f32 %v5705, %v5895
        %5897 = vmatmul.bf16.gmra.mxu0 %v5663
        %v5898 = vpop.f32.mrf.mxu0
        %v5899 = vadd.f32 %v5705, %v5898
        %v5900 = vpop.f32.mrf.mxu0
        %v5901 = vadd.f32 %v5705, %v5900
        %5902 = vmatmul.bf16.gmra.mxu0 %v5664
        %v5903 = vpop.f32.mrf.mxu0
        %v5904 = vadd.f32 %v5705, %v5903
        %v5905 = vpop.f32.mrf.mxu0
        %v5906 = vadd.f32 %v5705, %v5905
        %5907 = vmatmul.bf16.gmra.mxu0 %v5665
        %v5908 = vpop.f32.mrf.mxu0
        %v5909 = vadd.f32 %v5705, %v5908
        %v5910 = vpop.f32.mrf.mxu0
        %v5911 = vadd.f32 %v5705, %v5910
        %5912 = vmatmul.bf16.gmra.mxu0 %v5666
        %v5913 = vpop.f32.mrf.mxu0
        %v5914 = vadd.f32 %v5705, %v5913
        %v5915 = vpop.f32.mrf.mxu0
        %v5916 = vadd.f32 %v5705, %v5915
        %5917 = vmatmul.bf16.gmra.mxu0 %v5667
        %v5918 = vpop.f32.mrf.mxu0
        %v5919 = vadd.f32 %v5705, %v5918
        %v5920 = vpop.f32.mrf.mxu0
        %v5921 = vadd.f32 %v5705, %v5920
        %5922 = vmatmul.bf16.gmra.mxu0 %v5668
        %v5923 = vpop.f32.mrf.mxu0
        %v5924 = vadd.f32 %v5705, %v5923
        %v5925 = vpop.f32.mrf.mxu0
        %v5926 = vadd.f32 %v5705, %v5925
        %5927 = vdwg.mxu0
        %5928 = vmatpush.bf16.msra.mxu0 %v5813
        %5929 = vmatpush.bf16.msra.mxu0 %v5810
        %5930 = vmatpush.bf16.msra.mxu0 %v5807
        %5931 = vmatpush.bf16.msra.mxu0 %v5804
        %5932 = vmatpush.bf16.msra.mxu0 %v5801
        %5933 = vmatpush.bf16.msra.mxu0 %v5798
        %5934 = vmatpush.bf16.msra.mxu0 %v5795
        %5935 = vmatpush.bf16.msra.mxu0 %v5792
        %5936 = vmatmul.bf16.gmra.mxu0 %v5653
        %v5937 = vpop.f32.mrf.mxu0
        %v5938 = vadd.f32 %v5706, %v5937
        %v5939 = vpop.f32.mrf.mxu0
        %v5940 = vadd.f32 %v5706, %v5939
        %5941 = vmatmul.bf16.gmra.mxu0 %v5654
        %v5942 = vpop.f32.mrf.mxu0
        %v5943 = vadd.f32 %v5706, %v5942
        %v5944 = vpop.f32.mrf.mxu0
        %v5945 = vadd.f32 %v5706, %v5944
        %5946 = vmatmul.bf16.gmra.mxu0 %v5655
        %v5947 = vpop.f32.mrf.mxu0
        %v5948 = vadd.f32 %v5706, %v5947
        %v5949 = vpop.f32.mrf.mxu0
        %v5950 = vadd.f32 %v5706, %v5949
        %5951 = vmatmul.bf16.gmra.mxu0 %v5656
        %v5952 = vpop.f32.mrf.mxu0
        %v5953 = vadd.f32 %v5706, %v5952
        %v5954 = vpop.f32.mrf.mxu0
        %v5955 = vadd.f32 %v5706, %v5954
        %5956 = vmatmul.bf16.gmra.mxu0 %v5657
        %v5957 = vpop.f32.mrf.mxu0
        %v5958 = vadd.f32 %v5706, %v5957
        %v5959 = vpop.f32.mrf.mxu0
        %v5960 = vadd.f32 %v5706, %v5959
        %5961 = vmatmul.bf16.gmra.mxu0 %v5658
        %v5962 = vpop.f32.mrf.mxu0
        %v5963 = vadd.f32 %v5706, %v5962
        %v5964 = vpop.f32.mrf.mxu0
        %v5965 = vadd.f32 %v5706, %v5964
        %5966 = vmatmul.bf16.gmra.mxu0 %v5659
        %v5967 = vpop.f32.mrf.mxu0
        %v5968 = vadd.f32 %v5706, %v5967
        %v5969 = vpop.f32.mrf.mxu0
        %v5970 = vadd.f32 %v5706, %v5969
        %5971 = vmatmul.bf16.gmra.mxu0 %v5660
        %v5972 = vpop.f32.mrf.mxu0
        %v5973 = vadd.f32 %v5706, %v5972
        %v5974 = vpop.f32.mrf.mxu0
        %v5975 = vadd.f32 %v5706, %v5974
        %5976 = vmatmul.bf16.gmra.mxu0 %v5661
        %v5977 = vpop.f32.mrf.mxu0
        %v5978 = vadd.f32 %v5706, %v5977
        %v5979 = vpop.f32.mrf.mxu0
        %v5980 = vadd.f32 %v5706, %v5979
        %5981 = vmatmul.bf16.gmra.mxu0 %v5662
        %v5982 = vpop.f32.mrf.mxu0
        %v5983 = vadd.f32 %v5706, %v5982
        %v5984 = vpop.f32.mrf.mxu0
        %v5985 = vadd.f32 %v5706, %v5984
        %5986 = vmatmul.bf16.gmra.mxu0 %v5663
        %v5987 = vpop.f32.mrf.mxu0
        %v5988 = vadd.f32 %v5706, %v5987
        %v5989 = vpop.f32.mrf.mxu0
        %v5990 = vadd.f32 %v5706, %v5989
        %5991 = vmatmul.bf16.gmra.mxu0 %v5664
        %v5992 = vpop.f32.mrf.mxu0
        %v5993 = vadd.f32 %v5706, %v5992
        %v5994 = vpop.f32.mrf.mxu0
        %v5995 = vadd.f32 %v5706, %v5994
        %5996 = vmatmul.bf16.gmra.mxu0 %v5665
        %v5997 = vpop.f32.mrf.mxu0
        %v5998 = vadd.f32 %v5706, %v5997
        %v5999 = vpop.f32.mrf.mxu0
        %v6000 = vadd.f32 %v5706, %v5999
        %6001 = vmatmul.bf16.gmra.mxu0 %v5666
        %v6002 = vpop.f32.mrf.mxu0
        %v6003 = vadd.f32 %v5706, %v6002
        %v6004 = vpop.f32.mrf.mxu0
        %v6005 = vadd.f32 %v5706, %v6004
        %6006 = vmatmul.bf16.gmra.mxu0 %v5667
        %v6007 = vpop.f32.mrf.mxu0
        %v6008 = vadd.f32 %v5706, %v6007
        %v6009 = vpop.f32.mrf.mxu0
        %v6010 = vadd.f32 %v5706, %v6009
        %6011 = vmatmul.bf16.gmra.mxu0 %v5668
        %v6012 = vpop.f32.mrf.mxu0
        %v6013 = vadd.f32 %v5706, %v6012
        %v6014 = vpop.f32.mrf.mxu0
        %v6015 = vadd.f32 %v5706, %v6014
        %6016 = vdwg.mxu0
        %6017 = vmatpush.bf16.msra.mxu0 %v5814
        %6018 = vmatpush.bf16.msra.mxu0 %v5811
        %6019 = vmatpush.bf16.msra.mxu0 %v5808
        %6020 = vmatpush.bf16.msra.mxu0 %v5805
        %6021 = vmatpush.bf16.msra.mxu0 %v5802
        %6022 = vmatpush.bf16.msra.mxu0 %v5799
        %6023 = vmatpush.bf16.msra.mxu0 %v5796
        %6024 = vmatpush.bf16.msra.mxu0 %v5793
        %6025 = vmatmul.bf16.gmra.mxu0 %v5653
        %v6026 = vpop.f32.mrf.mxu0
        %v6027 = vadd.f32 %v5707, %v6026
        %v6028 = vpop.f32.mrf.mxu0
        %v6029 = vadd.f32 %v5707, %v6028
        %6030 = vmatmul.bf16.gmra.mxu0 %v5654
        %v6031 = vpop.f32.mrf.mxu0
        %v6032 = vadd.f32 %v5707, %v6031
        %v6033 = vpop.f32.mrf.mxu0
        %v6034 = vadd.f32 %v5707, %v6033
        %6035 = vmatmul.bf16.gmra.mxu0 %v5655
        %v6036 = vpop.f32.mrf.mxu0
        %v6037 = vadd.f32 %v5707, %v6036
        %v6038 = vpop.f32.mrf.mxu0
        %v6039 = vadd.f32 %v5707, %v6038
        %6040 = vmatmul.bf16.gmra.mxu0 %v5656
        %v6041 = vpop.f32.mrf.mxu0
        %v6042 = vadd.f32 %v5707, %v6041
        %v6043 = vpop.f32.mrf.mxu0
        %v6044 = vadd.f32 %v5707, %v6043
        %6045 = vmatmul.bf16.gmra.mxu0 %v5657
        %v6046 = vpop.f32.mrf.mxu0
        %v6047 = vadd.f32 %v5707, %v6046
        %v6048 = vpop.f32.mrf.mxu0
        %v6049 = vadd.f32 %v5707, %v6048
        %6050 = vmatmul.bf16.gmra.mxu0 %v5658
        %v6051 = vpop.f32.mrf.mxu0
        %v6052 = vadd.f32 %v5707, %v6051
        %v6053 = vpop.f32.mrf.mxu0
        %v6054 = vadd.f32 %v5707, %v6053
        %6055 = vmatmul.bf16.gmra.mxu0 %v5659
        %v6056 = vpop.f32.mrf.mxu0
        %v6057 = vadd.f32 %v5707, %v6056
        %v6058 = vpop.f32.mrf.mxu0
        %v6059 = vadd.f32 %v5707, %v6058
        %6060 = vmatmul.bf16.gmra.mxu0 %v5660
        %v6061 = vpop.f32.mrf.mxu0
        %v6062 = vadd.f32 %v5707, %v6061
        %v6063 = vpop.f32.mrf.mxu0
        %v6064 = vadd.f32 %v5707, %v6063
        %6065 = vmatmul.bf16.gmra.mxu0 %v5661
        %v6066 = vpop.f32.mrf.mxu0
        %v6067 = vadd.f32 %v5707, %v6066
        %v6068 = vpop.f32.mrf.mxu0
        %v6069 = vadd.f32 %v5707, %v6068
        %6070 = vmatmul.bf16.gmra.mxu0 %v5662
        %v6071 = vpop.f32.mrf.mxu0
        %v6072 = vadd.f32 %v5707, %v6071
        %v6073 = vpop.f32.mrf.mxu0
        %v6074 = vadd.f32 %v5707, %v6073
        %6075 = vmatmul.bf16.gmra.mxu0 %v5663
        %v6076 = vpop.f32.mrf.mxu0
        %v6077 = vadd.f32 %v5707, %v6076
        %v6078 = vpop.f32.mrf.mxu0
        %v6079 = vadd.f32 %v5707, %v6078
        %6080 = vmatmul.bf16.gmra.mxu0 %v5664
        %v6081 = vpop.f32.mrf.mxu0
        %v6082 = vadd.f32 %v5707, %v6081
        %v6083 = vpop.f32.mrf.mxu0
        %v6084 = vadd.f32 %v5707, %v6083
        %6085 = vmatmul.bf16.gmra.mxu0 %v5665
        %v6086 = vpop.f32.mrf.mxu0
        %v6087 = vadd.f32 %v5707, %v6086
        %v6088 = vpop.f32.mrf.mxu0
        %v6089 = vadd.f32 %v5707, %v6088
        %6090 = vmatmul.bf16.gmra.mxu0 %v5666
        %v6091 = vpop.f32.mrf.mxu0
        %v6092 = vadd.f32 %v5707, %v6091
        %v6093 = vpop.f32.mrf.mxu0
        %v6094 = vadd.f32 %v5707, %v6093
        %6095 = vmatmul.bf16.gmra.mxu0 %v5667
        %v6096 = vpop.f32.mrf.mxu0
        %v6097 = vadd.f32 %v5707, %v6096
        %v6098 = vpop.f32.mrf.mxu0
        %v6099 = vadd.f32 %v5707, %v6098
        %6100 = vmatmul.bf16.gmra.mxu0 %v5668
        %v6101 = vpop.f32.mrf.mxu0
        %v6102 = vadd.f32 %v5707, %v6101
        %v6103 = vpop.f32.mrf.mxu0
        %v6104 = vadd.f32 %v5707, %v6103
        %6105 = vdwg.mxu0
        %v6106 = vmul.f32 %v5938, 0.01
        %v6107 = vmul.f32 %v5940, 0.01
        %v6108 = vmul.f32 %v5943, 0.01
        %v6109 = vmul.f32 %v5945, 0.01
        %v6110 = vmul.f32 %v5948, 0.01
        %v6111 = vmul.f32 %v5950, 0.01
        %v6112 = vmul.f32 %v5953, 0.01
        %v6113 = vmul.f32 %v5955, 0.01
        %v6114 = vmul.f32 %v5958, 0.01
        %v6115 = vmul.f32 %v5960, 0.01
        %v6116 = vmul.f32 %v5963, 0.01
        %v6117 = vmul.f32 %v5965, 0.01
        %v6118 = vmul.f32 %v5968, 0.01
        %v6119 = vmul.f32 %v5970, 0.01
        %v6120 = vmul.f32 %v5973, 0.01
        %v6121 = vmul.f32 %v5975, 0.01
        %v6122 = vmul.f32 %v5978, 0.01
        %v6123 = vmul.f32 %v5980, 0.01
        %v6124 = vmul.f32 %v5983, 0.01
        %v6125 = vmul.f32 %v5985, 0.01
        %v6126 = vmul.f32 %v5988, 0.01
        %v6127 = vmul.f32 %v5990, 0.01
        %v6128 = vmul.f32 %v5993, 0.01
        %v6129 = vmul.f32 %v5995, 0.01
        %v6130 = vmul.f32 %v5998, 0.01
        %v6131 = vmul.f32 %v6000, 0.01
        %v6132 = vmul.f32 %v6003, 0.01
        %v6133 = vmul.f32 %v6005, 0.01
        %v6134 = vmul.f32 %v6008, 0.01
        %v6135 = vmul.f32 %v6010, 0.01
        %v6136 = vmul.f32 %v6013, 0.01
        %v6137 = vmul.f32 %v6015, 0.01
        %v6138 = vmax.f32 %v5938, %v6106
        %v6139 = vmax.f32 %v5940, %v6107
        %v6140 = vmax.f32 %v5943, %v6108
        %v6141 = vmax.f32 %v5945, %v6109
        %v6142 = vmax.f32 %v5948, %v6110
        %v6143 = vmax.f32 %v5950, %v6111
        %v6144 = vmax.f32 %v5953, %v6112
        %v6145 = vmax.f32 %v5955, %v6113
        %v6146 = vmax.f32 %v5958, %v6114
        %v6147 = vmax.f32 %v5960, %v6115
        %v6148 = vmax.f32 %v5963, %v6116
        %v6149 = vmax.f32 %v5965, %v6117
        %v6150 = vmax.f32 %v5968, %v6118
        %v6151 = vmax.f32 %v5970, %v6119
        %v6152 = vmax.f32 %v5973, %v6120
        %v6153 = vmax.f32 %v5975, %v6121
        %v6154 = vmax.f32 %v5978, %v6122
        %v6155 = vmax.f32 %v5980, %v6123
        %v6156 = vmax.f32 %v5983, %v6124
        %v6157 = vmax.f32 %v5985, %v6125
        %v6158 = vmax.f32 %v5988, %v6126
        %v6159 = vmax.f32 %v5990, %v6127
        %v6160 = vmax.f32 %v5993, %v6128
        %v6161 = vmax.f32 %v5995, %v6129
        %v6162 = vmax.f32 %v5998, %v6130
        %v6163 = vmax.f32 %v6000, %v6131
        %v6164 = vmax.f32 %v6003, %v6132
        %v6165 = vmax.f32 %v6005, %v6133
        %v6166 = vmax.f32 %v6008, %v6134
        %v6167 = vmax.f32 %v6010, %v6135
        %v6168 = vmax.f32 %v6013, %v6136
        %v6169 = vmax.f32 %v6015, %v6137
        %v6170 = vpack.c.bf16 %v5851, %v5849
        %v6171 = vpack.c.bf16 %v5856, %v5854
        %v6172 = vpack.c.bf16 %v5861, %v5859
        %v6173 = vpack.c.bf16 %v5866, %v5864
        %v6174 = vpack.c.bf16 %v5871, %v5869
        %v6175 = vpack.c.bf16 %v5876, %v5874
        %v6176 = vpack.c.bf16 %v5881, %v5879
        %v6177 = vpack.c.bf16 %v5886, %v5884
        %v6178 = vpack.c.bf16 %v5891, %v5889
        %v6179 = vpack.c.bf16 %v5896, %v5894
        %v6180 = vpack.c.bf16 %v5901, %v5899
        %v6181 = vpack.c.bf16 %v5906, %v5904
        %v6182 = vpack.c.bf16 %v5911, %v5909
        %v6183 = vpack.c.bf16 %v5916, %v5914
        %v6184 = vpack.c.bf16 %v5921, %v5919
        %v6185 = vpack.c.bf16 %v5926, %v5924
        %v6186 = vpack.c.bf16 %v6029, %v6027
        %v6187 = vpack.c.bf16 %v6034, %v6032
        %v6188 = vpack.c.bf16 %v6039, %v6037
        %v6189 = vpack.c.bf16 %v6044, %v6042
        %v6190 = vpack.c.bf16 %v6049, %v6047
        %v6191 = vpack.c.bf16 %v6054, %v6052
        %v6192 = vpack.c.bf16 %v6059, %v6057
        %v6193 = vpack.c.bf16 %v6064, %v6062
        %v6194 = vpack.c.bf16 %v6069, %v6067
        %v6195 = vpack.c.bf16 %v6074, %v6072
        %v6196 = vpack.c.bf16 %v6079, %v6077
        %v6197 = vpack.c.bf16 %v6084, %v6082
        %v6198 = vpack.c.bf16 %v6089, %v6087
        %v6199 = vpack.c.bf16 %v6094, %v6092
        %v6200 = vpack.c.bf16 %v6099, %v6097
        %v6201 = vpack.c.bf16 %v6104, %v6102
        %6202 = vmatpush.bf16.msra.mxu0 %v6193
        %6203 = vmatpush.bf16.msra.mxu0 %v6192
        %6204 = vmatpush.bf16.msra.mxu0 %v6191
        %6205 = vmatpush.bf16.msra.mxu0 %v6190
        %6206 = vmatpush.bf16.msra.mxu0 %v6189
        %6207 = vmatpush.bf16.msra.mxu0 %v6188
        %6208 = vmatpush.bf16.msra.mxu0 %v6187
        %6209 = vmatpush.bf16.msra.mxu0 %v6186
        %6210 = vmatmul.bf16.gmra.mxu0 %v2456
        %v6211 = vpop.f32.mrf.mxu0
        %v6212 = vadd.f32 0.0, %v6211
        %v6213 = vpop.f32.mrf.mxu0
        %v6214 = vadd.f32 0.0, %v6213
        %6215 = vmatmul.bf16.gmra.mxu0 %v2458
        %v6216 = vpop.f32.mrf.mxu0
        %v6217 = vadd.f32 0.0, %v6216
        %v6218 = vpop.f32.mrf.mxu0
        %v6219 = vadd.f32 0.0, %v6218
        %6220 = vmatmul.bf16.gmra.mxu0 %v2460
        %v6221 = vpop.f32.mrf.mxu0
        %v6222 = vadd.f32 0.0, %v6221
        %v6223 = vpop.f32.mrf.mxu0
        %v6224 = vadd.f32 0.0, %v6223
        %6225 = vmatmul.bf16.gmra.mxu0 %v2462
        %v6226 = vpop.f32.mrf.mxu0
        %v6227 = vadd.f32 0.0, %v6226
        %v6228 = vpop.f32.mrf.mxu0
        %v6229 = vadd.f32 0.0, %v6228
        %6230 = vmatmul.bf16.gmra.mxu0 %v2464
        %v6231 = vpop.f32.mrf.mxu0
        %v6232 = vadd.f32 0.0, %v6231
        %v6233 = vpop.f32.mrf.mxu0
        %v6234 = vadd.f32 0.0, %v6233
        %6235 = vmatmul.bf16.gmra.mxu0 %v2466
        %v6236 = vpop.f32.mrf.mxu0
        %v6237 = vadd.f32 0.0, %v6236
        %v6238 = vpop.f32.mrf.mxu0
        %v6239 = vadd.f32 0.0, %v6238
        %6240 = vmatmul.bf16.gmra.mxu0 %v2468
        %v6241 = vpop.f32.mrf.mxu0
        %v6242 = vadd.f32 0.0, %v6241
        %v6243 = vpop.f32.mrf.mxu0
        %v6244 = vadd.f32 0.0, %v6243
        %6245 = vmatmul.bf16.gmra.mxu0 %v2470
        %v6246 = vpop.f32.mrf.mxu0
        %v6247 = vadd.f32 0.0, %v6246
        %v6248 = vpop.f32.mrf.mxu0
        %v6249 = vadd.f32 0.0, %v6248
        %6250 = vdwg.mxu0
        %6251 = vmatpush.bf16.msra.mxu0 %v6201
        %6252 = vmatpush.bf16.msra.mxu0 %v6200
        %6253 = vmatpush.bf16.msra.mxu0 %v6199
        %6254 = vmatpush.bf16.msra.mxu0 %v6198
        %6255 = vmatpush.bf16.msra.mxu0 %v6197
        %6256 = vmatpush.bf16.msra.mxu0 %v6196
        %6257 = vmatpush.bf16.msra.mxu0 %v6195
        %6258 = vmatpush.bf16.msra.mxu0 %v6194
        %6259 = vmatmul.bf16.gmra.mxu0 %v2457
        %v6260 = vpop.f32.mrf.mxu0
        %v6261 = vadd.f32 %v6212, %v6260
        %v6262 = vpop.f32.mrf.mxu0
        %v6263 = vadd.f32 %v6214, %v6262
        %6264 = vmatmul.bf16.gmra.mxu0 %v2459
        %v6265 = vpop.f32.mrf.mxu0
        %v6266 = vadd.f32 %v6217, %v6265
        %v6267 = vpop.f32.mrf.mxu0
        %v6268 = vadd.f32 %v6219, %v6267
        %6269 = vmatmul.bf16.gmra.mxu0 %v2461
        %v6270 = vpop.f32.mrf.mxu0
        %v6271 = vadd.f32 %v6222, %v6270
        %v6272 = vpop.f32.mrf.mxu0
        %v6273 = vadd.f32 %v6224, %v6272
        %6274 = vmatmul.bf16.gmra.mxu0 %v2463
        %v6275 = vpop.f32.mrf.mxu0
        %v6276 = vadd.f32 %v6227, %v6275
        %v6277 = vpop.f32.mrf.mxu0
        %v6278 = vadd.f32 %v6229, %v6277
        %6279 = vmatmul.bf16.gmra.mxu0 %v2465
        %v6280 = vpop.f32.mrf.mxu0
        %v6281 = vadd.f32 %v6232, %v6280
        %v6282 = vpop.f32.mrf.mxu0
        %v6283 = vadd.f32 %v6234, %v6282
        %6284 = vmatmul.bf16.gmra.mxu0 %v2467
        %v6285 = vpop.f32.mrf.mxu0
        %v6286 = vadd.f32 %v6237, %v6285
        %v6287 = vpop.f32.mrf.mxu0
        %v6288 = vadd.f32 %v6239, %v6287
        %6289 = vmatmul.bf16.gmra.mxu0 %v2469
        %v6290 = vpop.f32.mrf.mxu0
        %v6291 = vadd.f32 %v6242, %v6290
        %v6292 = vpop.f32.mrf.mxu0
        %v6293 = vadd.f32 %v6244, %v6292
        %6294 = vmatmul.bf16.gmra.mxu0 %v2471
        %v6295 = vpop.f32.mrf.mxu0
        %v6296 = vadd.f32 %v6247, %v6295
        %v6297 = vpop.f32.mrf.mxu0
        %v6298 = vadd.f32 %v6249, %v6297
        %6299 = vdwg.mxu0
        %6300 = vmatpush.bf16.msra.mxu0 %v6177
        %6301 = vmatpush.bf16.msra.mxu0 %v6176
        %6302 = vmatpush.bf16.msra.mxu0 %v6175
        %6303 = vmatpush.bf16.msra.mxu0 %v6174
        %6304 = vmatpush.bf16.msra.mxu0 %v6173
        %6305 = vmatpush.bf16.msra.mxu0 %v6172
        %6306 = vmatpush.bf16.msra.mxu0 %v6171
        %6307 = vmatpush.bf16.msra.mxu0 %v6170
        %6308 = vmatmul.bf16.gmra.mxu0 %v2634
        %v6309 = vpop.f32.mrf.mxu0
        %v6310 = vadd.f32 %v6261, %v6309
        %v6311 = vpop.f32.mrf.mxu0
        %v6312 = vadd.f32 %v6263, %v6311
        %6313 = vmatmul.bf16.gmra.mxu0 %v2636
        %v6314 = vpop.f32.mrf.mxu0
        %v6315 = vadd.f32 %v6266, %v6314
        %v6316 = vpop.f32.mrf.mxu0
        %v6317 = vadd.f32 %v6268, %v6316
        %6318 = vmatmul.bf16.gmra.mxu0 %v2638
        %v6319 = vpop.f32.mrf.mxu0
        %v6320 = vadd.f32 %v6271, %v6319
        %v6321 = vpop.f32.mrf.mxu0
        %v6322 = vadd.f32 %v6273, %v6321
        %6323 = vmatmul.bf16.gmra.mxu0 %v2640
        %v6324 = vpop.f32.mrf.mxu0
        %v6325 = vadd.f32 %v6276, %v6324
        %v6326 = vpop.f32.mrf.mxu0
        %v6327 = vadd.f32 %v6278, %v6326
        %6328 = vmatmul.bf16.gmra.mxu0 %v2642
        %v6329 = vpop.f32.mrf.mxu0
        %v6330 = vadd.f32 %v6281, %v6329
        %v6331 = vpop.f32.mrf.mxu0
        %v6332 = vadd.f32 %v6283, %v6331
        %6333 = vmatmul.bf16.gmra.mxu0 %v2644
        %v6334 = vpop.f32.mrf.mxu0
        %v6335 = vadd.f32 %v6286, %v6334
        %v6336 = vpop.f32.mrf.mxu0
        %v6337 = vadd.f32 %v6288, %v6336
        %6338 = vmatmul.bf16.gmra.mxu0 %v2646
        %v6339 = vpop.f32.mrf.mxu0
        %v6340 = vadd.f32 %v6291, %v6339
        %v6341 = vpop.f32.mrf.mxu0
        %v6342 = vadd.f32 %v6293, %v6341
        %6343 = vmatmul.bf16.gmra.mxu0 %v2648
        %v6344 = vpop.f32.mrf.mxu0
        %v6345 = vadd.f32 %v6296, %v6344
        %v6346 = vpop.f32.mrf.mxu0
        %v6347 = vadd.f32 %v6298, %v6346
        %6348 = vdwg.mxu0
        %6349 = vmatpush.bf16.msra.mxu0 %v6185
        %6350 = vmatpush.bf16.msra.mxu0 %v6184
        %6351 = vmatpush.bf16.msra.mxu0 %v6183
        %6352 = vmatpush.bf16.msra.mxu0 %v6182
        %6353 = vmatpush.bf16.msra.mxu0 %v6181
        %6354 = vmatpush.bf16.msra.mxu0 %v6180
        %6355 = vmatpush.bf16.msra.mxu0 %v6179
        %6356 = vmatpush.bf16.msra.mxu0 %v6178
        %6357 = vmatmul.bf16.gmra.mxu0 %v2635
        %v6358 = vpop.f32.mrf.mxu0
        %v6359 = vadd.f32 %v6310, %v6358
        %v6360 = vpop.f32.mrf.mxu0
        %v6361 = vadd.f32 %v6312, %v6360
        %6362 = vmatmul.bf16.gmra.mxu0 %v2637
        %v6363 = vpop.f32.mrf.mxu0
        %v6364 = vadd.f32 %v6315, %v6363
        %v6365 = vpop.f32.mrf.mxu0
        %v6366 = vadd.f32 %v6317, %v6365
        %6367 = vmatmul.bf16.gmra.mxu0 %v2639
        %v6368 = vpop.f32.mrf.mxu0
        %v6369 = vadd.f32 %v6320, %v6368
        %v6370 = vpop.f32.mrf.mxu0
        %v6371 = vadd.f32 %v6322, %v6370
        %6372 = vmatmul.bf16.gmra.mxu0 %v2641
        %v6373 = vpop.f32.mrf.mxu0
        %v6374 = vadd.f32 %v6325, %v6373
        %v6375 = vpop.f32.mrf.mxu0
        %v6376 = vadd.f32 %v6327, %v6375
        %6377 = vmatmul.bf16.gmra.mxu0 %v2643
        %v6378 = vpop.f32.mrf.mxu0
        %v6379 = vadd.f32 %v6330, %v6378
        %v6380 = vpop.f32.mrf.mxu0
        %v6381 = vadd.f32 %v6332, %v6380
        %6382 = vmatmul.bf16.gmra.mxu0 %v2645
        %v6383 = vpop.f32.mrf.mxu0
        %v6384 = vadd.f32 %v6335, %v6383
        %v6385 = vpop.f32.mrf.mxu0
        %v6386 = vadd.f32 %v6337, %v6385
        %6387 = vmatmul.bf16.gmra.mxu0 %v2647
        %v6388 = vpop.f32.mrf.mxu0
        %v6389 = vadd.f32 %v6340, %v6388
        %v6390 = vpop.f32.mrf.mxu0
        %v6391 = vadd.f32 %v6342, %v6390
        %6392 = vmatmul.bf16.gmra.mxu0 %v2649
        %v6393 = vpop.f32.mrf.mxu0
        %v6394 = vadd.f32 %v6345, %v6393
        %v6395 = vpop.f32.mrf.mxu0
        %v6396 = vadd.f32 %v6347, %v6395
        %6397 = vdwg.mxu0
        %v6398 = vmul.f32 %v6359, %v2767
        %v6399 = vmul.f32 %v6361, %v2772
        %v6400 = vmul.f32 %v6364, %v2777
        %v6401 = vmul.f32 %v6366, %v2782
        %v6402 = vmul.f32 %v6369, %v2787
        %v6403 = vmul.f32 %v6371, %v2792
        %v6404 = vmul.f32 %v6374, %v2797
        %v6405 = vmul.f32 %v6376, %v2802
        %v6406 = vmul.f32 %v6379, %v2807
        %v6407 = vmul.f32 %v6381, %v2812
        %v6408 = vmul.f32 %v6384, %v2817
        %v6409 = vmul.f32 %v6386, %v2822
        %v6410 = vmul.f32 %v6389, %v2827
        %v6411 = vmul.f32 %v6391, %v2832
        %v6412 = vmul.f32 %v6394, %v2837
        %v6413 = vmul.f32 %v6396, %v2842
        %v6414 = vmul.f32 %v6398, 0.01
        %v6415 = vmul.f32 %v6399, 0.01
        %v6416 = vmul.f32 %v6400, 0.01
        %v6417 = vmul.f32 %v6401, 0.01
        %v6418 = vmul.f32 %v6402, 0.01
        %v6419 = vmul.f32 %v6403, 0.01
        %v6420 = vmul.f32 %v6404, 0.01
        %v6421 = vmul.f32 %v6405, 0.01
        %v6422 = vmul.f32 %v6406, 0.01
        %v6423 = vmul.f32 %v6407, 0.01
        %v6424 = vmul.f32 %v6408, 0.01
        %v6425 = vmul.f32 %v6409, 0.01
        %v6426 = vmul.f32 %v6410, 0.01
        %v6427 = vmul.f32 %v6411, 0.01
        %v6428 = vmul.f32 %v6412, 0.01
        %v6429 = vmul.f32 %v6413, 0.01
        %v6430 = vmax.f32 %v6398, %v6414
        %v6431 = vmax.f32 %v6399, %v6415
        %v6432 = vmax.f32 %v6400, %v6416
        %v6433 = vmax.f32 %v6401, %v6417
        %v6434 = vmax.f32 %v6402, %v6418
        %v6435 = vmax.f32 %v6403, %v6419
        %v6436 = vmax.f32 %v6404, %v6420
        %v6437 = vmax.f32 %v6405, %v6421
        %v6438 = vmax.f32 %v6406, %v6422
        %v6439 = vmax.f32 %v6407, %v6423
        %v6440 = vmax.f32 %v6408, %v6424
        %v6441 = vmax.f32 %v6409, %v6425
        %v6442 = vmax.f32 %v6410, %v6426
        %v6443 = vmax.f32 %v6411, %v6427
        %v6444 = vmax.f32 %v6412, %v6428
        %v6445 = vmax.f32 %v6413, %v6429
        %v6446 = vpack.c.bf16 %v6431, %v6430
        %v6447 = vpack.c.bf16 %v6433, %v6432
        %v6448 = vpack.c.bf16 %v6435, %v6434
        %v6449 = vpack.c.bf16 %v6437, %v6436
        %v6450 = vpack.c.bf16 %v6439, %v6438
        %v6451 = vpack.c.bf16 %v6441, %v6440
        %v6452 = vpack.c.bf16 %v6443, %v6442
        %v6453 = vpack.c.bf16 %v6445, %v6444
        %s6454 = scalar_lea.vmem [#allocation11], 128
        %v6455 = vld [vmem:[%s6454] sm:$0xf]
        %v6456 = vld [vmem:[%s6454 + $0x4] sm:$0xf]
        %v6457 = vld [vmem:[%s6454 + $0x8] sm:$0xf]
        %v6458 = vld [vmem:[%s6454 + $0xc] sm:$0xf]
        %v6459 = vld [vmem:[%s6454 + $0x10] sm:$0xf]
        %v6460 = vld [vmem:[%s6454 + $0x14] sm:$0xf]
        %v6461 = vld [vmem:[%s6454 + $0x18] sm:$0xf]
        %v6462 = vld [vmem:[%s6454 + $0x1c] sm:$0xf]
        %v6463 = vld [vmem:[%s6454 + $0x20] sm:$0xf]
        %v6464 = vld [vmem:[%s6454 + $0x24] sm:$0xf]
        %v6465 = vld [vmem:[%s6454 + $0x28] sm:$0xf]
        %v6466 = vld [vmem:[%s6454 + $0x2c] sm:$0xf]
        %v6467 = vld [vmem:[%s6454 + $0x30] sm:$0xf]
        %v6468 = vld [vmem:[%s6454 + $0x34] sm:$0xf]
        %v6469 = vld [vmem:[%s6454 + $0x38] sm:$0xf]
        %v6470 = vld [vmem:[%s6454 + $0x3c] sm:$0xf]
        %s6471 = scalar_lea.vmem %s13, 2
        %v6472 = vld [vmem:[%s6471] sm:$0x1]
        %v6474 = vperm.slane %v6472, 0
        %v6492 = vunpack.c.l.b16 %v6455
        %v6493 = vunpack.c.l.b16 %v6456
        %v6494 = vunpack.c.l.b16 %v6457
        %v6495 = vunpack.c.l.b16 %v6458
        %v6496 = vunpack.c.l.b16 %v6459
        %v6497 = vunpack.c.l.b16 %v6460
        %v6498 = vunpack.c.l.b16 %v6461
        %v6499 = vunpack.c.l.b16 %v6462
        %v6500 = vunpack.c.l.b16 %v6463
        %v6501 = vunpack.c.l.b16 %v6464
        %v6502 = vunpack.c.l.b16 %v6465
        %v6503 = vunpack.c.l.b16 %v6466
        %v6504 = vunpack.c.l.b16 %v6467
        %v6505 = vunpack.c.l.b16 %v6468
        %v6506 = vunpack.c.l.b16 %v6469
        %v6507 = vunpack.c.l.b16 %v6470
        %v6508 = vpack.c.b16 %v6493, %v6492
        %v6509 = vpack.c.b16 %v6495, %v6494
        %v6510 = vpack.c.b16 %v6497, %v6496
        %v6511 = vpack.c.b16 %v6499, %v6498
        %v6512 = vpack.c.b16 %v6501, %v6500
        %v6513 = vpack.c.b16 %v6503, %v6502
        %v6514 = vpack.c.b16 %v6505, %v6504
        %v6515 = vpack.c.b16 %v6507, %v6506
        %6524 = vmatpush.bf16.msra.mxu0 %v6515
        %6525 = vmatpush.bf16.msra.mxu0 %v6514
        %6526 = vmatpush.bf16.msra.mxu0 %v6513
        %6527 = vmatpush.bf16.msra.mxu0 %v6512
        %6528 = vmatpush.bf16.msra.mxu0 %v6511
        %6529 = vmatpush.bf16.msra.mxu0 %v6510
        %6530 = vmatpush.bf16.msra.mxu0 %v6509
        %6531 = vmatpush.bf16.msra.mxu0 %v6508
        %6532 = vmatmul.bf16.gmra.mxu0 %v6446
        %v6533 = vpop.f32.mrf.mxu0
        %v6534 = vadd.f32 %v6474, %v6533
        %v6535 = vpop.f32.mrf.mxu0
        %v6536 = vadd.f32 %v6474, %v6535
        %6537 = vmatmul.bf16.gmra.mxu0 %v6447
        %v6538 = vpop.f32.mrf.mxu0
        %v6539 = vadd.f32 %v6474, %v6538
        %v6540 = vpop.f32.mrf.mxu0
        %v6541 = vadd.f32 %v6474, %v6540
        %6542 = vmatmul.bf16.gmra.mxu0 %v6448
        %v6543 = vpop.f32.mrf.mxu0
        %v6544 = vadd.f32 %v6474, %v6543
        %v6545 = vpop.f32.mrf.mxu0
        %v6546 = vadd.f32 %v6474, %v6545
        %6547 = vmatmul.bf16.gmra.mxu0 %v6449
        %v6548 = vpop.f32.mrf.mxu0
        %v6549 = vadd.f32 %v6474, %v6548
        %v6550 = vpop.f32.mrf.mxu0
        %v6551 = vadd.f32 %v6474, %v6550
        %6552 = vmatmul.bf16.gmra.mxu0 %v6450
        %v6553 = vpop.f32.mrf.mxu0
        %v6554 = vadd.f32 %v6474, %v6553
        %v6555 = vpop.f32.mrf.mxu0
        %v6556 = vadd.f32 %v6474, %v6555
        %6557 = vmatmul.bf16.gmra.mxu0 %v6451
        %v6558 = vpop.f32.mrf.mxu0
        %v6559 = vadd.f32 %v6474, %v6558
        %v6560 = vpop.f32.mrf.mxu0
        %v6561 = vadd.f32 %v6474, %v6560
        %6562 = vmatmul.bf16.gmra.mxu0 %v6452
        %v6563 = vpop.f32.mrf.mxu0
        %v6564 = vadd.f32 %v6474, %v6563
        %v6565 = vpop.f32.mrf.mxu0
        %v6566 = vadd.f32 %v6474, %v6565
        %6567 = vmatmul.bf16.gmra.mxu0 %v6453
        %v6568 = vpop.f32.mrf.mxu0
        %v6569 = vadd.f32 %v6474, %v6568
        %v6570 = vpop.f32.mrf.mxu0
        %v6571 = vadd.f32 %v6474, %v6570
        %6572 = vdwg.mxu0
        %v6573 = vmul.f32 %v6534, 0.01
        %v6574 = vmul.f32 %v6536, 0.01
        %v6575 = vmul.f32 %v6539, 0.01
        %v6576 = vmul.f32 %v6541, 0.01
        %v6577 = vmul.f32 %v6544, 0.01
        %v6578 = vmul.f32 %v6546, 0.01
        %v6579 = vmul.f32 %v6549, 0.01
        %v6580 = vmul.f32 %v6551, 0.01
        %v6581 = vmul.f32 %v6554, 0.01
        %v6582 = vmul.f32 %v6556, 0.01
        %v6583 = vmul.f32 %v6559, 0.01
        %v6584 = vmul.f32 %v6561, 0.01
        %v6585 = vmul.f32 %v6564, 0.01
        %v6586 = vmul.f32 %v6566, 0.01
        %v6587 = vmul.f32 %v6569, 0.01
        %v6588 = vmul.f32 %v6571, 0.01
        %v6589 = vmax.f32 %v6534, %v6573
        %v6590 = vmax.f32 %v6536, %v6574
        %v6591 = vmax.f32 %v6539, %v6575
        %v6592 = vmax.f32 %v6541, %v6576
        %v6593 = vmax.f32 %v6544, %v6577
        %v6594 = vmax.f32 %v6546, %v6578
        %v6595 = vmax.f32 %v6549, %v6579
        %v6596 = vmax.f32 %v6551, %v6580
        %v6597 = vmax.f32 %v6554, %v6581
        %v6598 = vmax.f32 %v6556, %v6582
        %v6599 = vmax.f32 %v6559, %v6583
        %v6600 = vmax.f32 %v6561, %v6584
        %v6601 = vmax.f32 %v6564, %v6585
        %v6602 = vmax.f32 %v6566, %v6586
        %v6603 = vmax.f32 %v6569, %v6587
        %v6604 = vmax.f32 %v6571, %v6588
        %v6605 = vpack.c.bf16 %v6590, %v6589
        %v6606 = vpack.c.bf16 %v6592, %v6591
        %v6607 = vpack.c.bf16 %v6594, %v6593
        %v6608 = vpack.c.bf16 %v6596, %v6595
        %v6609 = vpack.c.bf16 %v6598, %v6597
        %v6610 = vpack.c.bf16 %v6600, %v6599
        %v6611 = vpack.c.bf16 %v6602, %v6601
        %v6612 = vpack.c.bf16 %v6604, %v6603
        %s6613 = scalar_lea.vmem [#allocation13], 128
        %v6614 = vld [vmem:[%s6613] sm:$0xf]
        %v6615 = vld [vmem:[%s6613 + $0x4] sm:$0xf]
        %v6616 = vld [vmem:[%s6613 + $0x8] sm:$0xf]
        %v6617 = vld [vmem:[%s6613 + $0xc] sm:$0xf]
        %v6618 = vld [vmem:[%s6613 + $0x10] sm:$0xf]
        %v6619 = vld [vmem:[%s6613 + $0x14] sm:$0xf]
        %v6620 = vld [vmem:[%s6613 + $0x18] sm:$0xf]
        %v6621 = vld [vmem:[%s6613 + $0x1c] sm:$0xf]
        %v6622 = vld [vmem:[%s6613 + $0x20] sm:$0xf]
        %v6623 = vld [vmem:[%s6613 + $0x24] sm:$0xf]
        %v6624 = vld [vmem:[%s6613 + $0x28] sm:$0xf]
        %v6625 = vld [vmem:[%s6613 + $0x2c] sm:$0xf]
        %v6626 = vld [vmem:[%s6613 + $0x30] sm:$0xf]
        %v6627 = vld [vmem:[%s6613 + $0x34] sm:$0xf]
        %v6628 = vld [vmem:[%s6613 + $0x38] sm:$0xf]
        %v6629 = vld [vmem:[%s6613 + $0x3c] sm:$0xf]
        %s6630 = scalar_lea.vmem %s15, 2
        %v6631 = vld [vmem:[%s6630] sm:$0x1]
        %v6633 = vperm.slane %v6631, 0
        %v6651 = vunpack.c.l.b16 %v6614
        %v6652 = vunpack.c.l.b16 %v6615
        %v6653 = vunpack.c.l.b16 %v6616
        %v6654 = vunpack.c.l.b16 %v6617
        %v6655 = vunpack.c.l.b16 %v6618
        %v6656 = vunpack.c.l.b16 %v6619
        %v6657 = vunpack.c.l.b16 %v6620
        %v6658 = vunpack.c.l.b16 %v6621
        %v6659 = vunpack.c.l.b16 %v6622
        %v6660 = vunpack.c.l.b16 %v6623
        %v6661 = vunpack.c.l.b16 %v6624
        %v6662 = vunpack.c.l.b16 %v6625
        %v6663 = vunpack.c.l.b16 %v6626
        %v6664 = vunpack.c.l.b16 %v6627
        %v6665 = vunpack.c.l.b16 %v6628
        %v6666 = vunpack.c.l.b16 %v6629
        %v6667 = vpack.c.b16 %v6652, %v6651
        %v6668 = vpack.c.b16 %v6654, %v6653
        %v6669 = vpack.c.b16 %v6656, %v6655
        %v6670 = vpack.c.b16 %v6658, %v6657
        %v6671 = vpack.c.b16 %v6660, %v6659
        %v6672 = vpack.c.b16 %v6662, %v6661
        %v6673 = vpack.c.b16 %v6664, %v6663
        %v6674 = vpack.c.b16 %v6666, %v6665
        %6683 = vmatpush.bf16.msra.mxu0 %v6674
        %6684 = vmatpush.bf16.msra.mxu0 %v6673
        %6685 = vmatpush.bf16.msra.mxu0 %v6672
        %6686 = vmatpush.bf16.msra.mxu0 %v6671
        %6687 = vmatpush.bf16.msra.mxu0 %v6670
        %6688 = vmatpush.bf16.msra.mxu0 %v6669
        %6689 = vmatpush.bf16.msra.mxu0 %v6668
        %6690 = vmatpush.bf16.msra.mxu0 %v6667
        %6691 = vmatmul.bf16.gmra.mxu0 %v6605
        %v6692 = vpop.f32.mrf.mxu0
        %v6693 = vadd.f32 %v6633, %v6692
        %v6694 = vpop.f32.mrf.mxu0
        %v6695 = vadd.f32 %v6633, %v6694
        %6696 = vmatmul.bf16.gmra.mxu0 %v6606
        %v6697 = vpop.f32.mrf.mxu0
        %v6698 = vadd.f32 %v6633, %v6697
        %v6699 = vpop.f32.mrf.mxu0
        %v6700 = vadd.f32 %v6633, %v6699
        %6701 = vmatmul.bf16.gmra.mxu0 %v6607
        %v6702 = vpop.f32.mrf.mxu0
        %v6703 = vadd.f32 %v6633, %v6702
        %v6704 = vpop.f32.mrf.mxu0
        %v6705 = vadd.f32 %v6633, %v6704
        %6706 = vmatmul.bf16.gmra.mxu0 %v6608
        %v6707 = vpop.f32.mrf.mxu0
        %v6708 = vadd.f32 %v6633, %v6707
        %v6709 = vpop.f32.mrf.mxu0
        %v6710 = vadd.f32 %v6633, %v6709
        %6711 = vmatmul.bf16.gmra.mxu0 %v6609
        %v6712 = vpop.f32.mrf.mxu0
        %v6713 = vadd.f32 %v6633, %v6712
        %v6714 = vpop.f32.mrf.mxu0
        %v6715 = vadd.f32 %v6633, %v6714
        %6716 = vmatmul.bf16.gmra.mxu0 %v6610
        %v6717 = vpop.f32.mrf.mxu0
        %v6718 = vadd.f32 %v6633, %v6717
        %v6719 = vpop.f32.mrf.mxu0
        %v6720 = vadd.f32 %v6633, %v6719
        %6721 = vmatmul.bf16.gmra.mxu0 %v6611
        %v6722 = vpop.f32.mrf.mxu0
        %v6723 = vadd.f32 %v6633, %v6722
        %v6724 = vpop.f32.mrf.mxu0
        %v6725 = vadd.f32 %v6633, %v6724
        %6726 = vmatmul.bf16.gmra.mxu0 %v6612
        %v6727 = vpop.f32.mrf.mxu0
        %v6728 = vadd.f32 %v6633, %v6727
        %v6729 = vpop.f32.mrf.mxu0
        %v6730 = vadd.f32 %v6633, %v6729
        %6731 = vdwg.mxu0
        %6732 = vst [vmem:[%s789] sm:$0xff] %v6693
        %6733 = vst [vmem:[%s789 + $0x8] sm:$0xff] %v6695
        %6734 = vst [vmem:[%s789 + $0x10] sm:$0xff] %v6698
        %6735 = vst [vmem:[%s789 + $0x18] sm:$0xff] %v6700
        %6736 = vst [vmem:[%s789 + $0x20] sm:$0xff] %v6703
        %6737 = vst [vmem:[%s789 + $0x28] sm:$0xff] %v6705
        %6738 = vst [vmem:[%s789 + $0x30] sm:$0xff] %v6708
        %6739 = vst [vmem:[%s789 + $0x38] sm:$0xff] %v6710
        %6740 = vst [vmem:[%s789 + $0x40] sm:$0xff] %v6713
        %6741 = vst [vmem:[%s789 + $0x48] sm:$0xff] %v6715
        %6742 = vst [vmem:[%s789 + $0x50] sm:$0xff] %v6718
        %6743 = vst [vmem:[%s789 + $0x58] sm:$0xff] %v6720
        %6744 = vst [vmem:[%s789 + $0x60] sm:$0xff] %v6723
        %6745 = vst [vmem:[%s789 + $0x68] sm:$0xff] %v6725
        %6746 = vst [vmem:[%s789 + $0x70] sm:$0xff] %v6728
        %6747 = vst [vmem:[%s789 + $0x78] sm:$0xff] %v6730
        %6748 = vst [vmem:[%s796] sm:$0xff] %v6138
        %6749 = vst [vmem:[%s796 + $0x8] sm:$0xff] %v6139
        %6750 = vst [vmem:[%s796 + $0x10] sm:$0xff] %v6140
        %6751 = vst [vmem:[%s796 + $0x18] sm:$0xff] %v6141
        %6752 = vst [vmem:[%s796 + $0x20] sm:$0xff] %v6142
        %6753 = vst [vmem:[%s796 + $0x28] sm:$0xff] %v6143
        %6754 = vst [vmem:[%s796 + $0x30] sm:$0xff] %v6144
        %6755 = vst [vmem:[%s796 + $0x38] sm:$0xff] %v6145
        %6756 = vst [vmem:[%s796 + $0x40] sm:$0xff] %v6146
        %6757 = vst [vmem:[%s796 + $0x48] sm:$0xff] %v6147
        %6758 = vst [vmem:[%s796 + $0x50] sm:$0xff] %v6148
        %6759 = vst [vmem:[%s796 + $0x58] sm:$0xff] %v6149
        %6760 = vst [vmem:[%s796 + $0x60] sm:$0xff] %v6150
        %6761 = vst [vmem:[%s796 + $0x68] sm:$0xff] %v6151
        %6762 = vst [vmem:[%s796 + $0x70] sm:$0xff] %v6152
        %6763 = vst [vmem:[%s796 + $0x78] sm:$0xff] %v6153
        %6764 = vst [vmem:[%s796 + $0x80] sm:$0xff] %v6154
        %6765 = vst [vmem:[%s796 + $0x88] sm:$0xff] %v6155
        %6766 = vst [vmem:[%s796 + $0x90] sm:$0xff] %v6156
        %6767 = vst [vmem:[%s796 + $0x98] sm:$0xff] %v6157
        %6768 = vst [vmem:[%s796 + $0xa0] sm:$0xff] %v6158
        %6769 = vst [vmem:[%s796 + $0xa8] sm:$0xff] %v6159
        %6770 = vst [vmem:[%s796 + $0xb0] sm:$0xff] %v6160
        %6771 = vst [vmem:[%s796 + $0xb8] sm:$0xff] %v6161
        %6772 = vst [vmem:[%s796 + $0xc0] sm:$0xff] %v6162
        %6773 = vst [vmem:[%s796 + $0xc8] sm:$0xff] %v6163
        %6774 = vst [vmem:[%s796 + $0xd0] sm:$0xff] %v6164
        %6775 = vst [vmem:[%s796 + $0xd8] sm:$0xff] %v6165
        %6776 = vst [vmem:[%s796 + $0xe0] sm:$0xff] %v6166
        %6777 = vst [vmem:[%s796 + $0xe8] sm:$0xff] %v6167
        %6778 = vst [vmem:[%s796 + $0xf0] sm:$0xff] %v6168
        %6779 = vst [vmem:[%s796 + $0xf8] sm:$0xff] %v6169
        %s6780 = sand.u32 %s424, 1
        %s6781 = scalar_lea.sflag [#allocation4], %s6780
        %s6782 = sand.u32 %s424, 1
        %s6783 = smul.addr %s6782, 128
        %s6784 = scalar_lea.vmem [#allocation14], %s6783
        %s6785 = sand.u32 %s450, 1
        %s6786 = scalar_lea.sflag [#allocation16], %s6785
        %s6787 = sand.u32 %s450, 1
        %s6788 = smul.addr %s6787, 256
        %s6789 = scalar_lea.vmem [#allocation15], %s6788
        // Predicated region
        $region113: #{tpu_custom_call.1} parent=83 // pred_check
          %p6790 = pneg %p434
        $region114: #{tpu_custom_call.1} parent=83 // pred_check_branch
          %6792 = sbr.rel (%p6790) target = $region116
        $region115: #{tpu_custom_call.1} parent=83 // pred_region
          %6794 = vsyncadd %s6781, 0
          %s6795 = smul.addr %s45, 16
          %s6796 = smul.addr %s6795, 8
          %s6797 = scalar_lea.hbm %s16, %s6796
          %s6798 = sshll.u32 %s6784, 4
          %s6799 = int_to_ptr.vmem [resolvable:$true] %s6798
          %s6800 = sshll.u32 %s6797, 4
          %s6801 = int_to_ptr.hbm [resolvable:$true] %s6800
          %6806 = dma.vmem_to_hbm [thread:$0]  %s6799, 2048, %s6801, %s6781, 128, 128, 8
        $region116: #{tpu_custom_call.1} parent=83 // pred_fallthru
          _
        // Predicated region
        $region117: #{tpu_custom_call.1} parent=83 // pred_check
          %p6807 = pneg %p460
        $region118: #{tpu_custom_call.1} parent=83 // pred_check_branch
          %6809 = sbr.rel (%p6807) target = $region120
        $region119: #{tpu_custom_call.1} parent=83 // pred_region
          %6811 = vsyncadd %s6786, 0
          %s6812 = smul.addr %s45, 32
          %s6813 = smul.addr %s6812, 8
          %s6814 = scalar_lea.hbm %s17, %s6813
          %s6815 = sshll.u32 %s6789, 4
          %s6816 = int_to_ptr.vmem [resolvable:$true] %s6815
          %s6817 = sshll.u32 %s6814, 4
          %s6818 = int_to_ptr.hbm [resolvable:$true] %s6817
          %6823 = dma.vmem_to_hbm [thread:$0]  %s6816, 4096, %s6818, %s6786, 128, 128, 8
        $region120: #{tpu_custom_call.1} parent=83 // pred_fallthru
          _
      $region84: #{tpu_custom_call.1} parent=5 // pred_fallthru
        _
      %p6824 = scmp.le.s32.totalorder 2, %s40
      // Predicated region
      $region121: #{tpu_custom_call.1} parent=5 // pred_check
        %p6825 = pneg %p6824
      $region122: #{tpu_custom_call.1} parent=5 // pred_check_branch
        %6827 = sbr.rel (%p6825) target = $region124
      $region123: #{tpu_custom_call.1} parent=5 // pred_region
        %s6828 = ssub.s32 %s40, 2
        // Predicated region
        $region125: #{tpu_custom_call.1} parent=123 // pred_check
          %p6829 = pneg %p440
        $region126: #{tpu_custom_call.1} parent=123 // pred_check_branch
          %6831 = sbr.rel (%p6829) target = $region128
        $region127: #{tpu_custom_call.1} parent=123 // pred_region
          %s6832 = sand.u32 %s425, 1
          %s6833 = scalar_lea.sflag [#allocation4], %s6832
          %s6834 = sand.u32 %s425, 1
          %s6835 = smul.addr %s6834, 128
          %s6836 = scalar_lea.vmem [#allocation14], %s6835
          %6838 = dma.done %s6833, 2048
        $region128: #{tpu_custom_call.1} parent=123 // pred_fallthru
          _
        // Predicated region
        $region129: #{tpu_custom_call.1} parent=123 // pred_check
          %p6839 = pneg %p466
        $region130: #{tpu_custom_call.1} parent=123 // pred_check_branch
          %6841 = sbr.rel (%p6839) target = $region132
        $region131: #{tpu_custom_call.1} parent=123 // pred_region
          %s6842 = sand.u32 %s451, 1
          %s6843 = scalar_lea.sflag [#allocation16], %s6842
          %s6844 = sand.u32 %s451, 1
          %s6845 = smul.addr %s6844, 256
          %s6846 = scalar_lea.vmem [#allocation15], %s6845
          %6848 = dma.done %s6843, 4096
        $region132: #{tpu_custom_call.1} parent=123 // pred_fallthru
          _
      $region124: #{tpu_custom_call.1} parent=5 // pred_fallthru
        _
    $region6: #{tpu_custom_call.1} parent=1 // loop_footer
      %s44 = sadd.s32 1, %s40
    $region7: #{tpu_custom_call.1} parent=1 // loop_footer_branch
      %39 = sbr.rel target = $region3
    $region8: #{tpu_custom_call.1} parent=1 // loop_exit
      _
    %6849 = vsyncpa [#allocation3], 1
    %s6850 = scalar_lea.sflag [#allocation3], 1
    %6851 = vsyncpa %s6850, 1
    %6852 = vsyncpa [#allocation6], 1
    %s6853 = scalar_lea.sflag [#allocation6], 1
    %6854 = vsyncpa %s6853, 1
    %6855 = vsyncpa [#allocation9], 1
    %s6856 = scalar_lea.sflag [#allocation9], 1
    %6857 = vsyncpa %s6856, 1
    %6858 = vsyncpa [#allocation12], 1
    %6859 = vsyncpa [#allocation4], 1
    %s6860 = scalar_lea.sflag [#allocation4], 1
    %6861 = vsyncpa %s6860, 1
    %6862 = vsyncpa [#allocation16], 1
    %s6863 = scalar_lea.sflag [#allocation16], 1
    %6864 = vsyncpa %s6863, 1

</llo_original>
